<compile_context>
chip_gen: v7x
topology: tpu7x:2x2x1
jax: 0.10.0
libtpu: 0.0.40
codegen_flags: <defaults>
</compile_context>

<pallas_src>
import functools
import math

import jax
import jax.numpy as jnp
from jax.experimental import pallas as pl
from jax.experimental.pallas import tpu as pltpu


# ----------------------------- configuration -----------------------------
PATCH = 8          # patch size (Voltron uses 16 @ 224px; scaled down here)
EMBED_DIM = 64     # token embed dim (Voltron v-cond base uses 768)
DEPTH = 2          # number of transformer blocks
NUM_HEADS = 4
HEAD_DIM = EMBED_DIM // NUM_HEADS
MLP_DIM = 4 * EMBED_DIM
LN_EPS = 1e-6
IN_CHANNELS = 3

# ImageNet normalization used by the Voltron preprocess transform (folded
# into the patch-projection weights at param-prep time).
_IMNET_MEAN = jnp.array([0.485, 0.456, 0.406], dtype=jnp.float32)
_IMNET_STD = jnp.array([0.229, 0.224, 0.225], dtype=jnp.float32)

_NEG_INF = -1e30


# ------------------------------ Pallas kernel -----------------------------
def _layernorm(x, g, b, eps=LN_EPS):
    mu = jnp.mean(x, axis=-1, keepdims=True)
    var = jnp.mean((x - mu) ** 2, axis=-1, keepdims=True)
    return (x - mu) * jax.lax.rsqrt(var + eps) * g + b


def _encoder_kernel(patches_ref, w_patch_ref, pos_ref,
                    ln1_g_ref, ln1_b_ref, w_qkv_ref, b_qkv_ref,
                    w_o_ref, b_o_ref, ln2_g_ref, ln2_b_ref,
                    w_fc1_ref, b_fc1_ref, w_fc2_ref, b_fc2_ref,
                    lnf_g_ref, lnf_b_ref, out_ref,
                    *, depth, num_heads, head_dim, tokens_per_image,
                    images_per_block, gelu_bf16):
    d_model = num_heads * head_dim
    rows = tokens_per_image * images_per_block

    # Patch embedding (== Conv2d(C, D, P, P, stride=P) on channel-major
    # flattened patches). ImageNet normalize + conv bias are pre-folded into
    # w_patch / pos_ref; patches already arrive bf16 from the wrapper.
    x = jnp.dot(patches_ref[...], w_patch_ref[...],
                preferred_element_type=jnp.float32)
    x = x + pos_ref[...]                                    # (rows, D) f32

    # Same-image (block-diagonal) additive attention bias generated in-kernel
    # (no (R,R) HBM input / DMA).  Rows are token-major / image-minor, so the
    # image id of row r is r % images_per_block.  Statically skipped when one
    # image fills the block (production dims: N >= 128 -> Bt == 1).
    if images_per_block > 1:
        rid = jax.lax.broadcasted_iota(jnp.int32, (rows, rows), 0)
        cid = jax.lax.broadcasted_iota(jnp.int32, (rows, rows), 1)
        same = (rid % images_per_block) == (cid % images_per_block)
        attn_bias = jnp.where(same, 0.0, _NEG_INF)
    else:
        attn_bias = None

    # TODO(synk): at real Voltron dims (D=768, depth=12, ~170MB bf16 weights)
    # this unrolled depth loop with all-resident weights must become a layer
    # grid axis / emit_pipeline weight stream (fp8 weights on v7x, int8 on
    # v5e/v6e) with the residual carried in VMEM scratch; at these toy dims
    # weight residency is tiny.
    for l in range(depth):
        # ---- pre-LN multi-head self-attention ----
        h = _layernorm(x, ln1_g_ref[l], ln1_b_ref[l])
        # 1/sqrt(head_dim) is already folded into the Q third of w_qkv/b_qkv.
        qkv = jnp.dot(h.astype(jnp.bfloat16), w_qkv_ref[l],
                      preferred_element_type=jnp.float32) + b_qkv_ref[l]
        heads = []
        for hh in range(num_heads):
            lo = hh * head_dim
            hi = lo + head_dim
            qh = qkv[:, lo:hi].astype(jnp.bfloat16)
            kh = qkv[:, d_model + lo:d_model + hi].astype(jnp.bfloat16)
            vh = qkv[:, 2 * d_model + lo:2 * d_model + hi].astype(jnp.bfloat16)
            # (rows, hd) x (rows, hd) -> (rows, rows): full-height MXU pushes.
            s = jax.lax.dot_general(
                qh, kh, dimension_numbers=(((1,), (1,)), ((), ())),
                preferred_element_type=jnp.float32)
            if attn_bias is not None:
                s = s + attn_bias
            s = s - jnp.max(s, axis=-1, keepdims=True)
            e = jnp.exp(s)
            a = e * pl.reciprocal(jnp.sum(e, axis=-1, keepdims=True),
                                  approx=True)
            heads.append(jnp.dot(a.astype(jnp.bfloat16), vh,
                                 preferred_element_type=jnp.float32))
        # Concatenate heads once, then a single K=D output projection: fills
        # the MXU contraction depth instead of num_heads tiny K=head_dim
        # pushes, and removes the per-head full-tile f32 accumulation adds.
        o_cat = jnp.concatenate(heads, axis=-1).astype(jnp.bfloat16)
        attn = jnp.dot(o_cat, w_o_ref[l], preferred_element_type=jnp.float32)
        x = x + attn + b_o_ref[l]

        # ---- pre-LN MLP ----
        h = _layernorm(x, ln2_g_ref[l], ln2_b_ref[l])
        h = jnp.dot(h.astype(jnp.bfloat16), w_fc1_ref[l],
                    preferred_element_type=jnp.float32) + b_fc1_ref[l]
        # TODO(synk): PyTorch nn.GELU is the exact erf GELU; tanh approximation
        # used here for Mosaic-safe lowering.
        if gelu_bf16:   # v6e/v7x have bf16 VPU/EUP paths; f32 kept on v5e.
            h = jax.nn.gelu(h.astype(jnp.bfloat16), approximate=True)
        else:
            h = jax.nn.gelu(h, approximate=True).astype(jnp.bfloat16)
        h = jnp.dot(h, w_fc2_ref[l],
                    preferred_element_type=jnp.float32) + b_fc2_ref[l]
        x = x + h

    y = _layernorm(x, lnf_g_ref[...], lnf_b_ref[...])        # (rows, D) f32

    # Lane-dense output slab: rows are token-major / image-minor, so image b's
    # tokens are y[n*Bt + b] for n = 0..N-1; contiguous sublane slices + lane
    # concat give (Bt, N*D) with an unmasked, 128-lane-aligned store.
    pieces = [y[n * images_per_block:(n + 1) * images_per_block, :]
              for n in range(tokens_per_image)]
    out_ref[...] = jnp.concatenate(pieces, axis=-1)


# ------------------------------ wrapper ----------------------------------
def _full_spec(shape):
    """Full-array (un-tiled) BlockSpec replicated across the batch grid."""
    nd = len(shape)
    return pl.BlockSpec(shape, lambda i, _nd=nd: (0,) * _nd)


def _gelu_in_bf16():
    """bf16 elementwise math only pays off on v6e/v7x (v5e VPU/EUP are f32)."""
    try:
        kind = jax.devices()[0].device_kind.lower()
    except Exception:
        return False
    return any(tag in kind for tag in ("v6", "v7", "7x"))


def _choose_images_per_block(batch, n_tokens):
    """Images packed per grid block: target ~256 rows (then ~128), but only if
    the grid stays >= 2 steps (v7x two-TC sharding / megacore + pipelining);
    otherwise put the whole (padded) batch in one block."""
    fallback = None
    for target_rows in (256, 128):
        bt = max(1, target_rows // n_tokens)
        if bt < batch:
            bt = ((bt + 7) // 8) * 8      # sublane-tiled blocks when grid > 1
        bt = min(bt, batch)
        if fallback is None:
            fallback = bt
        if pl.cdiv(batch, bt) >= 2:
            return bt
    return min(fallback, batch)


def _prepare_params(params):
    """Fold ImageNet normalization into the patch projection, fold the
    attention scale into the Q columns of w_qkv, and cast all matmul weights
    to bf16 (MXU operands). LN params / biases stay f32."""
    p = PATCH
    d = EMBED_DIM
    # per flattened patch element (channel-major order: c, py, px)
    std_vec = jnp.repeat(_IMNET_STD, p * p)                  # (C*P*P,)
    mean_vec = jnp.repeat(_IMNET_MEAN, p * p)
    w_raw = params["w_patch"].astype(jnp.float32)
    w_patch = w_raw / std_vec[:, None]
    b_patch = params["b_patch"] - (mean_vec / std_vec) @ w_raw

    # Fold 1/sqrt(head_dim) into the Q third of w_qkv / b_qkv.
    scale = 1.0 / math.sqrt(HEAD_DIM)
    qkv_scale = jnp.concatenate(
        [jnp.full((d,), scale, jnp.float32), jnp.ones((2 * d,), jnp.float32)])
    w_qkv = params["w_qkv"].astype(jnp.float32) * qkv_scale
    b_qkv = params["b_qkv"].astype(jnp.float32) * qkv_scale

    return {
        "w_patch": w_patch.astype(jnp.bfloat16),
        "b_patch": b_patch.astype(jnp.float32),
        "pos": params["pos"].astype(jnp.float32),
        "ln1_g": params["ln1_g"].astype(jnp.float32),
        "ln1_b": params["ln1_b"].astype(jnp.float32),
        "w_qkv": w_qkv.astype(jnp.bfloat16),
        "b_qkv": b_qkv,
        "w_o": params["w_o"].astype(jnp.bfloat16),
        "b_o": params["b_o"].astype(jnp.float32),
        "ln2_g": params["ln2_g"].astype(jnp.float32),
        "ln2_b": params["ln2_b"].astype(jnp.float32),
        "w_fc1": params["w_fc1"].astype(jnp.bfloat16),
        "b_fc1": params["b_fc1"].astype(jnp.float32),
        "w_fc2": params["w_fc2"].astype(jnp.bfloat16),
        "b_fc2": params["b_fc2"].astype(jnp.float32),
        "lnf_g": params["lnf_g"].astype(jnp.float32),
        "lnf_b": params["lnf_b"].astype(jnp.float32),
    }


def voltron_token_encoder(x, params, lang=None):
    """Forward pass of VoltronTokenEncoder (visual mode).

    x: float images, NCHW (B, 3, H, W) or (B, T, 3, H, W).
    Returns patch-token representations of shape ((B*T), N_patches, EMBED_DIM).
    """
    # TODO(synk): multimodal branch (lang is not None) needs the pretrained
    # language tokenizer / distilbert conditioning; only the visual path is
    # implemented.
    del lang

    if x.ndim == 5:  # (b t c h w) -> ((b t) c h w), like the einops rearrange
        b, t = x.shape[:2]
        x = x.reshape(b * t, *x.shape[2:])
    x = x.astype(jnp.float32)

    B, C, H, W = x.shape
    P = PATCH
    D = EMBED_DIM
    assert H % P == 0 and W % P == 0, "H, W must be multiples of PATCH"
    # TODO(synk): real Voltron preprocess also resizes to 224x224; inputs here
    # are assumed already at the working resolution.
    nH, nW = H // P, W // P
    N = nH * nW
    pdim = C * P * P

    # Patchify (channel-major flattening, matching Conv2d weight reshape).
    # TODO(synk): this transpose could be fused into the pallas_call input
    # (allow_input_fusion / gather index_map) to drop one image-sized HBM pass.
    patches = x.reshape(B, C, nH, P, nW, P)
    patches = patches.transpose(0, 2, 4, 1, 3, 5).reshape(B, N, pdim)

    # ---- block sizing: pack Bt images per grid step (target 256/128 rows),
    # keeping the grid >= 2 whenever the batch allows (megacore / v7x 2 TCs).
    Bt = _choose_images_per_block(B, N)
    G = pl.cdiv(B, Bt)
    B_pad = G * Bt
    if B_pad != B:
        patches = jnp.pad(patches, ((0, B_pad - B), (0, 0), (0, 0)))
    R = Bt * N                          # rows per block

    # Token-major / image-minor row ordering inside each block: row r of block
    # i is token (r // Bt) of image (i*Bt + r % Bt).  This makes the final
    # lane-dense (Bt, N*D) output assembly a set of contiguous slices.
    # Cast to bf16 here (fuses with the transpose) so the streamed DMA is half
    # width and the kernel needs no per-step cast.
    patches = patches.reshape(G, Bt, N, pdim).transpose(0, 2, 1, 3)
    patches = patches.reshape(G * R, pdim).astype(jnp.bfloat16)

    prep = _prepare_params(params)
    # positional embedding (+ folded conv bias), pre-tiled to the row order
    pos_bias = jnp.repeat(prep["pos"], Bt, axis=0) + prep["b_patch"]   # (R, D)

    kernel = functools.partial(
        _encoder_kernel, depth=DEPTH, num_heads=NUM_HEADS, head_dim=HEAD_DIM,
        tokens_per_image=N, images_per_block=Bt, gelu_bf16=_gelu_in_bf16())

    in_arrays = (
        patches, prep["w_patch"], pos_bias,
        prep["ln1_g"], prep["ln1_b"], prep["w_qkv"], prep["b_qkv"],
        prep["w_o"], prep["b_o"], prep["ln2_g"], prep["ln2_b"],
        prep["w_fc1"], prep["b_fc1"], prep["w_fc2"], prep["b_fc2"],
        prep["lnf_g"], prep["lnf_b"],
    )
    in_specs = [pl.BlockSpec((R, pdim), lambda i: (i, 0))]
    in_specs += [_full_spec(a.shape) for a in in_arrays[1:]]

    out = pl.pallas_call(
        kernel,
        out_shape=jax.ShapeDtypeStruct((B_pad, N * D), jnp.float32),
        grid_spec=pltpu.PrefetchScalarGridSpec(
            num_scalar_prefetch=0,
            grid=(G,),
            in_specs=in_specs,
            out_specs=pl.BlockSpec((Bt, N * D), lambda i: (i, 0)),
        ),
        compiler_params=pltpu.CompilerParams(
            dimension_semantics=("parallel",)),
    )(*in_arrays)

    return out[:B].reshape(B, N, D)


# --------------------------- parameter init -------------------------------
def init_params(key, img_size=16):
    P = PATCH
    C = IN_CHANNELS
    N = (img_size // P) ** 2
    D = EMBED_DIM
    M = MLP_DIM
    L = DEPTH
    pdim = C * P * P

    ks = jax.random.split(key, 8)
    s = 0.02
    return {
        "w_patch": s * jax.random.normal(ks[0], (pdim, D), jnp.float32),
        "b_patch": jnp.zeros((1, D), jnp.float32),
        "pos": s * jax.random.normal(ks[1], (N, D), jnp.float32),
        "ln1_g": jnp.ones((L, 1, D), jnp.float32),
        "ln1_b": jnp.zeros((L, 1, D), jnp.float32),
        "w_qkv": s * jax.random.normal(ks[2], (L, D, 3 * D), jnp.float32),
        "b_qkv": jnp.zeros((L, 1, 3 * D), jnp.float32),
        "w_o": s * jax.random.normal(ks[3], (L, D, D), jnp.float32),
        "b_o": jnp.zeros((L, 1, D), jnp.float32),
        "ln2_g": jnp.ones((L, 1, D), jnp.float32),
        "ln2_b": jnp.zeros((L, 1, D), jnp.float32),
        "w_fc1": s * jax.random.normal(ks[4], (L, D, M), jnp.float32),
        "b_fc1": jnp.zeros((L, 1, M), jnp.float32),
        "w_fc2": s * jax.random.normal(ks[5], (L, M, D), jnp.float32),
        "b_fc2": jnp.zeros((L, 1, D), jnp.float32),
        "lnf_g": jnp.ones((1, D), jnp.float32),
        "lnf_b": jnp.zeros((1, D), jnp.float32),
    }


if __name__ == "__main__":
    key = jax.random.PRNGKey(0)
    k_img, k_par = jax.random.split(key)

    params = init_params(k_par, img_size=16)

    # deterministic "image" batch: B=64, C=3, H=W=16, values in [0, 1].
    # 64 images x 4 patches each -> two grid steps of 128-row blocks.
    B = 64
    x = jax.random.uniform(k_img, (B, 3, 16, 16), dtype=jnp.float32)

    tokens = voltron_token_encoder(x, params)               # (64, 4, 64)
    jax.block_until_ready(tokens)

    assert tokens.shape == (B, (16 // PATCH) ** 2, EMBED_DIM)
    assert tokens.dtype == jnp.float32
    assert bool(jnp.all(jnp.isfinite(tokens)))
    print("KERNEL_OK")
</pallas_src>

<mosaic_0001>
module attributes {stable_mosaic.version = 11 : i64} {
  func.func @_encoder_kernel(%arg0: i32, %arg1: memref<128x192xbf16, #tpu.memory_space<vmem>>, %arg2: memref<192x64xbf16, #tpu.memory_space<vmem>>, %arg3: memref<128x64xf32, #tpu.memory_space<vmem>>, %arg4: memref<2x1x64xf32, #tpu.memory_space<vmem>>, %arg5: memref<2x1x64xf32, #tpu.memory_space<vmem>>, %arg6: memref<2x64x192xbf16, #tpu.memory_space<vmem>>, %arg7: memref<2x1x192xf32, #tpu.memory_space<vmem>>, %arg8: memref<2x64x64xbf16, #tpu.memory_space<vmem>>, %arg9: memref<2x1x64xf32, #tpu.memory_space<vmem>>, %arg10: memref<2x1x64xf32, #tpu.memory_space<vmem>>, %arg11: memref<2x1x64xf32, #tpu.memory_space<vmem>>, %arg12: memref<2x64x256xbf16, #tpu.memory_space<vmem>>, %arg13: memref<2x1x256xf32, #tpu.memory_space<vmem>>, %arg14: memref<2x256x64xbf16, #tpu.memory_space<vmem>>, %arg15: memref<2x1x64xf32, #tpu.memory_space<vmem>>, %arg16: memref<1x64xf32, #tpu.memory_space<vmem>>, %arg17: memref<1x64xf32, #tpu.memory_space<vmem>>, %arg18: memref<32x256xf32, #tpu.memory_space<vmem>>) attributes {dimension_semantics = [#tpu.dimension_semantics<parallel>], iteration_bounds = array<i64: 2>, scalar_prefetch = 0 : i64, scratch_operands = 0 : i64, tpu.core_type = #tpu.core_type<tc>, window_params = [{transform_indices = @transform_0, window_bounds = array<i64: 128, 192>}, {pipeline_mode = #tpu.pipeline_mode<synchronous>, transform_indices = @transform_1, window_bounds = array<i64: 192, 64>}, {pipeline_mode = #tpu.pipeline_mode<synchronous>, transform_indices = @transform_2, window_bounds = array<i64: 128, 64>}, {pipeline_mode = #tpu.pipeline_mode<synchronous>, transform_indices = @transform_3, window_bounds = array<i64: 2, 1, 64>}, {pipeline_mode = #tpu.pipeline_mode<synchronous>, transform_indices = @transform_4, window_bounds = array<i64: 2, 1, 64>}, {pipeline_mode = #tpu.pipeline_mode<synchronous>, transform_indices = @transform_5, window_bounds = array<i64: 2, 64, 192>}, {pipeline_mode = #tpu.pipeline_mode<synchronous>, transform_indices = @transform_6, window_bounds = array<i64: 2, 1, 192>}, {pipeline_mode = #tpu.pipeline_mode<synchronous>, transform_indices = @transform_7, window_bounds = array<i64: 2, 64, 64>}, {pipeline_mode = #tpu.pipeline_mode<synchronous>, transform_indices = @transform_8, window_bounds = array<i64: 2, 1, 64>}, {pipeline_mode = #tpu.pipeline_mode<synchronous>, transform_indices = @transform_9, window_bounds = array<i64: 2, 1, 64>}, {pipeline_mode = #tpu.pipeline_mode<synchronous>, transform_indices = @transform_10, window_bounds = array<i64: 2, 1, 64>}, {pipeline_mode = #tpu.pipeline_mode<synchronous>, transform_indices = @transform_11, window_bounds = array<i64: 2, 64, 256>}, {pipeline_mode = #tpu.pipeline_mode<synchronous>, transform_indices = @transform_12, window_bounds = array<i64: 2, 1, 256>}, {pipeline_mode = #tpu.pipeline_mode<synchronous>, transform_indices = @transform_13, window_bounds = array<i64: 2, 256, 64>}, {pipeline_mode = #tpu.pipeline_mode<synchronous>, transform_indices = @transform_14, window_bounds = array<i64: 2, 1, 64>}, {pipeline_mode = #tpu.pipeline_mode<synchronous>, transform_indices = @transform_15, window_bounds = array<i64: 1, 64>}, {pipeline_mode = #tpu.pipeline_mode<synchronous>, transform_indices = @transform_16, window_bounds = array<i64: 1, 64>}, {transform_indices = @transform_17, window_bounds = array<i64: 32, 256>}]} {
    %c0 = arith.constant 0 : index
    %c0_0 = arith.constant 0 : index
    %0 = vector.load %arg1[%c0, %c0_0] : memref<128x192xbf16, #tpu.memory_space<vmem>>, vector<128x192xbf16>
    %c0_1 = arith.constant 0 : index
    %c0_2 = arith.constant 0 : index
    %1 = vector.load %arg2[%c0_1, %c0_2] : memref<192x64xbf16, #tpu.memory_space<vmem>>, vector<192x64xbf16>
    %cst = arith.constant dense<0.000000e+00> : vector<128x64xf32>
    %2 = tpu.matmul %0, %1, %cst {dimension_numbers = #tpu.dot_dimension_numbers<[1], [0], [0], [1], [0, 0, 1, 1], [], []>} : vector<128x192xbf16>, vector<192x64xbf16>, vector<128x64xf32> -> vector<128x64xf32>
    %c0_3 = arith.constant 0 : index
    %c0_4 = arith.constant 0 : index
    %3 = vector.load %arg3[%c0_3, %c0_4] : memref<128x64xf32, #tpu.memory_space<vmem>>, vector<128x64xf32>
    %4 = arith.addf %2, %3 : vector<128x64xf32>
    %5 = tpu.iota {dimensions = array<i32: 0>} : vector<128x128xi32>
    %6 = tpu.iota {dimensions = array<i32: 1>} : vector<128x128xi32>
    %c32_i32 = arith.constant 32 : i32
    %c0_i32 = arith.constant 0 : i32
    %7 = arith.cmpi eq, %c32_i32, %c0_i32 : i32
    %c1_i32 = arith.constant 1 : i32
    %8 = arith.select %7, %c1_i32, %c32_i32 : i32
    %9 = vector.broadcast %8 : i32 to vector<128x128xi32>
    %10 = arith.remsi %5, %9 : vector<128x128xi32>
    %c0_i32_5 = arith.constant 0 : i32
    %11 = vector.broadcast %c0_i32_5 : i32 to vector<128x128xi32>
    %12 = arith.cmpi ne, %10, %11 : vector<128x128xi32>
    %c0_i32_6 = arith.constant 0 : i32
    %13 = vector.broadcast %c0_i32_6 : i32 to vector<128x128xi32>
    %14 = arith.cmpi slt, %10, %13 : vector<128x128xi32>
    %c0_i32_7 = arith.constant 0 : i32
    %15 = arith.cmpi slt, %8, %c0_i32_7 : i32
    %16 = vector.broadcast %15 : i1 to vector<128x128xi1>
    %17 = vector.broadcast %16 : vector<128x128xi1> to vector<128x128xi1>
    %18 = arith.xori %14, %17 : vector<128x128xi1>
    %19 = arith.andi %18, %12 : vector<128x128xi1>
    %20 = vector.broadcast %8 : i32 to vector<128x128xi32>
    %21 = arith.addi %10, %20 : vector<128x128xi32>
    %22 = arith.select %19, %21, %10 : vector<128x128xi1>, vector<128x128xi32>
    %c32_i32_8 = arith.constant 32 : i32
    %c0_i32_9 = arith.constant 0 : i32
    %23 = arith.cmpi eq, %c32_i32_8, %c0_i32_9 : i32
    %c1_i32_10 = arith.constant 1 : i32
    %24 = arith.select %23, %c1_i32_10, %c32_i32_8 : i32
    %25 = vector.broadcast %24 : i32 to vector<128x128xi32>
    %26 = arith.remsi %6, %25 : vector<128x128xi32>
    %c0_i32_11 = arith.constant 0 : i32
    %27 = vector.broadcast %c0_i32_11 : i32 to vector<128x128xi32>
    %28 = arith.cmpi ne, %26, %27 : vector<128x128xi32>
    %c0_i32_12 = arith.constant 0 : i32
    %29 = vector.broadcast %c0_i32_12 : i32 to vector<128x128xi32>
    %30 = arith.cmpi slt, %26, %29 : vector<128x128xi32>
    %c0_i32_13 = arith.constant 0 : i32
    %31 = arith.cmpi slt, %24, %c0_i32_13 : i32
    %32 = vector.broadcast %31 : i1 to vector<128x128xi1>
    %33 = vector.broadcast %32 : vector<128x128xi1> to vector<128x128xi1>
    %34 = arith.xori %30, %33 : vector<128x128xi1>
    %35 = arith.andi %34, %28 : vector<128x128xi1>
    %36 = vector.broadcast %24 : i32 to vector<128x128xi32>
    %37 = arith.addi %26, %36 : vector<128x128xi32>
    %38 = arith.select %35, %37, %26 : vector<128x128xi1>, vector<128x128xi32>
    %39 = arith.cmpi eq, %22, %38 : vector<128x128xi32>
    %cst_14 = arith.constant 0.000000e+00 : f32
    %cst_15 = arith.constant -1.000000e+30 : f32
    %40 = vector.broadcast %cst_14 : f32 to vector<128x128xf32>
    %41 = vector.broadcast %cst_15 : f32 to vector<128x128xf32>
    %42 = arith.select %39, %40, %41 : vector<128x128xi1>, vector<128x128xf32>
    %c0_16 = arith.constant 0 : index
    %c0_17 = arith.constant 0 : index
    %c0_18 = arith.constant 0 : index
    %43 = vector.load %arg4[%c0_16, %c0_17, %c0_18] : memref<2x1x64xf32, #tpu.memory_space<vmem>>, vector<1x1x64xf32>
    %44 = vector.shape_cast %43 : vector<1x1x64xf32> to vector<1x64xf32>
    %c0_19 = arith.constant 0 : index
    %c0_20 = arith.constant 0 : index
    %c0_21 = arith.constant 0 : index
    %45 = vector.load %arg5[%c0_19, %c0_20, %c0_21] : memref<2x1x64xf32, #tpu.memory_space<vmem>>, vector<1x1x64xf32>
    %46 = vector.shape_cast %45 : vector<1x1x64xf32> to vector<1x64xf32>
    %cst_22 = arith.constant dense<0.000000e+00> : vector<128xf32>
    %47 = vector.multi_reduction <add>, %4, %cst_22 [1] : vector<128x64xf32> to vector<128xf32>
    %48 = vector.shape_cast %47 : vector<128xf32> to vector<128x1xf32>
    %cst_23 = arith.constant 6.400000e+01 : f32
    %49 = vector.broadcast %cst_23 : f32 to vector<128x1xf32>
    %50 = arith.divf %48, %49 : vector<128x1xf32>
    %51 = vector.broadcast %50 : vector<128x1xf32> to vector<128x64xf32>
    %52 = arith.subf %4, %51 : vector<128x64xf32>
    %53 = arith.mulf %52, %52 : vector<128x64xf32>
    %cst_24 = arith.constant dense<0.000000e+00> : vector<128xf32>
    %54 = vector.multi_reduction <add>, %53, %cst_24 [1] : vector<128x64xf32> to vector<128xf32>
    %55 = vector.shape_cast %54 : vector<128xf32> to vector<128x1xf32>
    %cst_25 = arith.constant 6.400000e+01 : f32
    %56 = vector.broadcast %cst_25 : f32 to vector<128x1xf32>
    %57 = arith.divf %55, %56 : vector<128x1xf32>
    %58 = vector.broadcast %50 : vector<128x1xf32> to vector<128x64xf32>
    %59 = arith.subf %4, %58 : vector<128x64xf32>
    %cst_26 = arith.constant 9.99999997E-7 : f32
    %60 = vector.broadcast %cst_26 : f32 to vector<128x1xf32>
    %61 = arith.addf %57, %60 : vector<128x1xf32>
    %62 = math.rsqrt %61 : vector<128x1xf32>
    %63 = vector.broadcast %62 : vector<128x1xf32> to vector<128x64xf32>
    %64 = arith.mulf %59, %63 : vector<128x64xf32>
    %65 = vector.broadcast %44 : vector<1x64xf32> to vector<128x64xf32>
    %66 = arith.mulf %64, %65 : vector<128x64xf32>
    %67 = vector.broadcast %46 : vector<1x64xf32> to vector<128x64xf32>
    %68 = arith.addf %66, %67 : vector<128x64xf32>
    %69 = arith.truncf %68 : vector<128x64xf32> to vector<128x64xbf16>
    %c0_27 = arith.constant 0 : index
    %c0_28 = arith.constant 0 : index
    %c0_29 = arith.constant 0 : index
    %70 = vector.load %arg6[%c0_27, %c0_28, %c0_29] : memref<2x64x192xbf16, #tpu.memory_space<vmem>>, vector<1x64x192xbf16>
    %71 = vector.shape_cast %70 : vector<1x64x192xbf16> to vector<64x192xbf16>
    %cst_30 = arith.constant dense<0.000000e+00> : vector<128x192xf32>
    %72 = tpu.matmul %69, %71, %cst_30 {dimension_numbers = #tpu.dot_dimension_numbers<[1], [0], [0], [1], [0, 0, 1, 1], [], []>} : vector<128x64xbf16>, vector<64x192xbf16>, vector<128x192xf32> -> vector<128x192xf32>
    %c0_31 = arith.constant 0 : index
    %c0_32 = arith.constant 0 : index
    %c0_33 = arith.constant 0 : index
    %73 = vector.load %arg7[%c0_31, %c0_32, %c0_33] : memref<2x1x192xf32, #tpu.memory_space<vmem>>, vector<1x1x192xf32>
    %74 = vector.shape_cast %73 : vector<1x1x192xf32> to vector<1x192xf32>
    %75 = vector.broadcast %74 : vector<1x192xf32> to vector<128x192xf32>
    %76 = arith.addf %72, %75 : vector<128x192xf32>
    %77 = vector.extract_strided_slice %76 {offsets = [0, 0], sizes = [128, 16], strides = [1, 1]} : vector<128x192xf32> to vector<128x16xf32>
    %78 = arith.truncf %77 : vector<128x16xf32> to vector<128x16xbf16>
    %79 = vector.extract_strided_slice %76 {offsets = [0, 64], sizes = [128, 16], strides = [1, 1]} : vector<128x192xf32> to vector<128x16xf32>
    %80 = arith.truncf %79 : vector<128x16xf32> to vector<128x16xbf16>
    %81 = vector.extract_strided_slice %76 {offsets = [0, 128], sizes = [128, 16], strides = [1, 1]} : vector<128x192xf32> to vector<128x16xf32>
    %82 = arith.truncf %81 : vector<128x16xf32> to vector<128x16xbf16>
    %cst_34 = arith.constant dense<0.000000e+00> : vector<128x128xf32>
    %83 = tpu.matmul %78, %80, %cst_34 {dimension_numbers = #tpu.dot_dimension_numbers<[1], [1], [0], [0], [0, 0, 1, 0], [], []>} : vector<128x16xbf16>, vector<128x16xbf16>, vector<128x128xf32> -> vector<128x128xf32>
    %84 = arith.addf %83, %42 : vector<128x128xf32>
    %cst_35 = arith.constant dense<0xFF800000> : vector<128xf32>
    %85 = vector.multi_reduction <maximumf>, %84, %cst_35 [1] : vector<128x128xf32> to vector<128xf32>
    %86 = vector.shape_cast %85 : vector<128xf32> to vector<128x1xf32>
    %87 = vector.broadcast %86 : vector<128x1xf32> to vector<128x128xf32>
    %88 = arith.subf %84, %87 : vector<128x128xf32>
    %89 = math.exp %88 : vector<128x128xf32>
    %cst_36 = arith.constant dense<0.000000e+00> : vector<128xf32>
    %90 = vector.multi_reduction <add>, %89, %cst_36 [1] : vector<128x128xf32> to vector<128xf32>
    %91 = vector.shape_cast %90 : vector<128xf32> to vector<128x1xf32>
    %92 = tpu.reciprocal %91 {approx = true} : vector<128x1xf32> -> vector<128x1xf32>
    %93 = vector.broadcast %92 : vector<128x1xf32> to vector<128x128xf32>
    %94 = arith.mulf %89, %93 : vector<128x128xf32>
    %95 = arith.truncf %94 : vector<128x128xf32> to vector<128x128xbf16>
    %cst_37 = arith.constant dense<0.000000e+00> : vector<128x16xf32>
    %96 = tpu.matmul %95, %82, %cst_37 {dimension_numbers = #tpu.dot_dimension_numbers<[1], [0], [0], [1], [0, 0, 1, 1], [], []>} : vector<128x128xbf16>, vector<128x16xbf16>, vector<128x16xf32> -> vector<128x16xf32>
    %97 = vector.extract_strided_slice %76 {offsets = [0, 16], sizes = [128, 16], strides = [1, 1]} : vector<128x192xf32> to vector<128x16xf32>
    %98 = arith.truncf %97 : vector<128x16xf32> to vector<128x16xbf16>
    %99 = vector.extract_strided_slice %76 {offsets = [0, 80], sizes = [128, 16], strides = [1, 1]} : vector<128x192xf32> to vector<128x16xf32>
    %100 = arith.truncf %99 : vector<128x16xf32> to vector<128x16xbf16>
    %101 = vector.extract_strided_slice %76 {offsets = [0, 144], sizes = [128, 16], strides = [1, 1]} : vector<128x192xf32> to vector<128x16xf32>
    %102 = arith.truncf %101 : vector<128x16xf32> to vector<128x16xbf16>
    %cst_38 = arith.constant dense<0.000000e+00> : vector<128x128xf32>
    %103 = tpu.matmul %98, %100, %cst_38 {dimension_numbers = #tpu.dot_dimension_numbers<[1], [1], [0], [0], [0, 0, 1, 0], [], []>} : vector<128x16xbf16>, vector<128x16xbf16>, vector<128x128xf32> -> vector<128x128xf32>
    %104 = arith.addf %103, %42 : vector<128x128xf32>
    %cst_39 = arith.constant dense<0xFF800000> : vector<128xf32>
    %105 = vector.multi_reduction <maximumf>, %104, %cst_39 [1] : vector<128x128xf32> to vector<128xf32>
    %106 = vector.shape_cast %105 : vector<128xf32> to vector<128x1xf32>
    %107 = vector.broadcast %106 : vector<128x1xf32> to vector<128x128xf32>
    %108 = arith.subf %104, %107 : vector<128x128xf32>
    %109 = math.exp %108 : vector<128x128xf32>
    %cst_40 = arith.constant dense<0.000000e+00> : vector<128xf32>
    %110 = vector.multi_reduction <add>, %109, %cst_40 [1] : vector<128x128xf32> to vector<128xf32>
    %111 = vector.shape_cast %110 : vector<128xf32> to vector<128x1xf32>
    %112 = tpu.reciprocal %111 {approx = true} : vector<128x1xf32> -> vector<128x1xf32>
    %113 = vector.broadcast %112 : vector<128x1xf32> to vector<128x128xf32>
    %114 = arith.mulf %109, %113 : vector<128x128xf32>
    %115 = arith.truncf %114 : vector<128x128xf32> to vector<128x128xbf16>
    %cst_41 = arith.constant dense<0.000000e+00> : vector<128x16xf32>
    %116 = tpu.matmul %115, %102, %cst_41 {dimension_numbers = #tpu.dot_dimension_numbers<[1], [0], [0], [1], [0, 0, 1, 1], [], []>} : vector<128x128xbf16>, vector<128x16xbf16>, vector<128x16xf32> -> vector<128x16xf32>
    %117 = vector.extract_strided_slice %76 {offsets = [0, 32], sizes = [128, 16], strides = [1, 1]} : vector<128x192xf32> to vector<128x16xf32>
    %118 = arith.truncf %117 : vector<128x16xf32> to vector<128x16xbf16>
    %119 = vector.extract_strided_slice %76 {offsets = [0, 96], sizes = [128, 16], strides = [1, 1]} : vector<128x192xf32> to vector<128x16xf32>
    %120 = arith.truncf %119 : vector<128x16xf32> to vector<128x16xbf16>
    %121 = vector.extract_strided_slice %76 {offsets = [0, 160], sizes = [128, 16], strides = [1, 1]} : vector<128x192xf32> to vector<128x16xf32>
    %122 = arith.truncf %121 : vector<128x16xf32> to vector<128x16xbf16>
    %cst_42 = arith.constant dense<0.000000e+00> : vector<128x128xf32>
    %123 = tpu.matmul %118, %120, %cst_42 {dimension_numbers = #tpu.dot_dimension_numbers<[1], [1], [0], [0], [0, 0, 1, 0], [], []>} : vector<128x16xbf16>, vector<128x16xbf16>, vector<128x128xf32> -> vector<128x128xf32>
    %124 = arith.addf %123, %42 : vector<128x128xf32>
    %cst_43 = arith.constant dense<0xFF800000> : vector<128xf32>
    %125 = vector.multi_reduction <maximumf>, %124, %cst_43 [1] : vector<128x128xf32> to vector<128xf32>
    %126 = vector.shape_cast %125 : vector<128xf32> to vector<128x1xf32>
    %127 = vector.broadcast %126 : vector<128x1xf32> to vector<128x128xf32>
    %128 = arith.subf %124, %127 : vector<128x128xf32>
    %129 = math.exp %128 : vector<128x128xf32>
    %cst_44 = arith.constant dense<0.000000e+00> : vector<128xf32>
    %130 = vector.multi_reduction <add>, %129, %cst_44 [1] : vector<128x128xf32> to vector<128xf32>
    %131 = vector.shape_cast %130 : vector<128xf32> to vector<128x1xf32>
    %132 = tpu.reciprocal %131 {approx = true} : vector<128x1xf32> -> vector<128x1xf32>
    %133 = vector.broadcast %132 : vector<128x1xf32> to vector<128x128xf32>
    %134 = arith.mulf %129, %133 : vector<128x128xf32>
    %135 = arith.truncf %134 : vector<128x128xf32> to vector<128x128xbf16>
    %cst_45 = arith.constant dense<0.000000e+00> : vector<128x16xf32>
    %136 = tpu.matmul %135, %122, %cst_45 {dimension_numbers = #tpu.dot_dimension_numbers<[1], [0], [0], [1], [0, 0, 1, 1], [], []>} : vector<128x128xbf16>, vector<128x16xbf16>, vector<128x16xf32> -> vector<128x16xf32>
    %137 = vector.extract_strided_slice %76 {offsets = [0, 48], sizes = [128, 16], strides = [1, 1]} : vector<128x192xf32> to vector<128x16xf32>
    %138 = arith.truncf %137 : vector<128x16xf32> to vector<128x16xbf16>
    %139 = vector.extract_strided_slice %76 {offsets = [0, 112], sizes = [128, 16], strides = [1, 1]} : vector<128x192xf32> to vector<128x16xf32>
    %140 = arith.truncf %139 : vector<128x16xf32> to vector<128x16xbf16>
    %141 = vector.extract_strided_slice %76 {offsets = [0, 176], sizes = [128, 16], strides = [1, 1]} : vector<128x192xf32> to vector<128x16xf32>
    %142 = arith.truncf %141 : vector<128x16xf32> to vector<128x16xbf16>
    %cst_46 = arith.constant dense<0.000000e+00> : vector<128x128xf32>
    %143 = tpu.matmul %138, %140, %cst_46 {dimension_numbers = #tpu.dot_dimension_numbers<[1], [1], [0], [0], [0, 0, 1, 0], [], []>} : vector<128x16xbf16>, vector<128x16xbf16>, vector<128x128xf32> -> vector<128x128xf32>
    %144 = arith.addf %143, %42 : vector<128x128xf32>
    %cst_47 = arith.constant dense<0xFF800000> : vector<128xf32>
    %145 = vector.multi_reduction <maximumf>, %144, %cst_47 [1] : vector<128x128xf32> to vector<128xf32>
    %146 = vector.shape_cast %145 : vector<128xf32> to vector<128x1xf32>
    %147 = vector.broadcast %146 : vector<128x1xf32> to vector<128x128xf32>
    %148 = arith.subf %144, %147 : vector<128x128xf32>
    %149 = math.exp %148 : vector<128x128xf32>
    %cst_48 = arith.constant dense<0.000000e+00> : vector<128xf32>
    %150 = vector.multi_reduction <add>, %149, %cst_48 [1] : vector<128x128xf32> to vector<128xf32>
    %151 = vector.shape_cast %150 : vector<128xf32> to vector<128x1xf32>
    %152 = tpu.reciprocal %151 {approx = true} : vector<128x1xf32> -> vector<128x1xf32>
    %153 = vector.broadcast %152 : vector<128x1xf32> to vector<128x128xf32>
    %154 = arith.mulf %149, %153 : vector<128x128xf32>
    %155 = arith.truncf %154 : vector<128x128xf32> to vector<128x128xbf16>
    %cst_49 = arith.constant dense<0.000000e+00> : vector<128x16xf32>
    %156 = tpu.matmul %155, %142, %cst_49 {dimension_numbers = #tpu.dot_dimension_numbers<[1], [0], [0], [1], [0, 0, 1, 1], [], []>} : vector<128x128xbf16>, vector<128x16xbf16>, vector<128x16xf32> -> vector<128x16xf32>
    %157 = tpu.concatenate %96, %116, %136, %156 in 1 : vector<128x16xf32>, vector<128x16xf32>, vector<128x16xf32>, vector<128x16xf32> -> vector<128x64xf32>
    %158 = arith.truncf %157 : vector<128x64xf32> to vector<128x64xbf16>
    %c0_50 = arith.constant 0 : index
    %c0_51 = arith.constant 0 : index
    %c0_52 = arith.constant 0 : index
    %159 = vector.load %arg8[%c0_50, %c0_51, %c0_52] : memref<2x64x64xbf16, #tpu.memory_space<vmem>>, vector<1x64x64xbf16>
    %160 = vector.shape_cast %159 : vector<1x64x64xbf16> to vector<64x64xbf16>
    %cst_53 = arith.constant dense<0.000000e+00> : vector<128x64xf32>
    %161 = tpu.matmul %158, %160, %cst_53 {dimension_numbers = #tpu.dot_dimension_numbers<[1], [0], [0], [1], [0, 0, 1, 1], [], []>} : vector<128x64xbf16>, vector<64x64xbf16>, vector<128x64xf32> -> vector<128x64xf32>
    %162 = arith.addf %4, %161 : vector<128x64xf32>
    %c0_54 = arith.constant 0 : index
    %c0_55 = arith.constant 0 : index
    %c0_56 = arith.constant 0 : index
    %163 = vector.load %arg9[%c0_54, %c0_55, %c0_56] : memref<2x1x64xf32, #tpu.memory_space<vmem>>, vector<1x1x64xf32>
    %164 = vector.shape_cast %163 : vector<1x1x64xf32> to vector<1x64xf32>
    %165 = vector.broadcast %164 : vector<1x64xf32> to vector<128x64xf32>
    %166 = arith.addf %162, %165 : vector<128x64xf32>
    %c0_57 = arith.constant 0 : index
    %c0_58 = arith.constant 0 : index
    %c0_59 = arith.constant 0 : index
    %167 = vector.load %arg10[%c0_57, %c0_58, %c0_59] : memref<2x1x64xf32, #tpu.memory_space<vmem>>, vector<1x1x64xf32>
    %168 = vector.shape_cast %167 : vector<1x1x64xf32> to vector<1x64xf32>
    %c0_60 = arith.constant 0 : index
    %c0_61 = arith.constant 0 : index
    %c0_62 = arith.constant 0 : index
    %169 = vector.load %arg11[%c0_60, %c0_61, %c0_62] : memref<2x1x64xf32, #tpu.memory_space<vmem>>, vector<1x1x64xf32>
    %170 = vector.shape_cast %169 : vector<1x1x64xf32> to vector<1x64xf32>
    %cst_63 = arith.constant dense<0.000000e+00> : vector<128xf32>
    %171 = vector.multi_reduction <add>, %166, %cst_63 [1] : vector<128x64xf32> to vector<128xf32>
    %172 = vector.shape_cast %171 : vector<128xf32> to vector<128x1xf32>
    %cst_64 = arith.constant 6.400000e+01 : f32
    %173 = vector.broadcast %cst_64 : f32 to vector<128x1xf32>
    %174 = arith.divf %172, %173 : vector<128x1xf32>
    %175 = vector.broadcast %174 : vector<128x1xf32> to vector<128x64xf32>
    %176 = arith.subf %166, %175 : vector<128x64xf32>
    %177 = arith.mulf %176, %176 : vector<128x64xf32>
    %cst_65 = arith.constant dense<0.000000e+00> : vector<128xf32>
    %178 = vector.multi_reduction <add>, %177, %cst_65 [1] : vector<128x64xf32> to vector<128xf32>
    %179 = vector.shape_cast %178 : vector<128xf32> to vector<128x1xf32>
    %cst_66 = arith.constant 6.400000e+01 : f32
    %180 = vector.broadcast %cst_66 : f32 to vector<128x1xf32>
    %181 = arith.divf %179, %180 : vector<128x1xf32>
    %182 = vector.broadcast %174 : vector<128x1xf32> to vector<128x64xf32>
    %183 = arith.subf %166, %182 : vector<128x64xf32>
    %cst_67 = arith.constant 9.99999997E-7 : f32
    %184 = vector.broadcast %cst_67 : f32 to vector<128x1xf32>
    %185 = arith.addf %181, %184 : vector<128x1xf32>
    %186 = math.rsqrt %185 : vector<128x1xf32>
    %187 = vector.broadcast %186 : vector<128x1xf32> to vector<128x64xf32>
    %188 = arith.mulf %183, %187 : vector<128x64xf32>
    %189 = vector.broadcast %168 : vector<1x64xf32> to vector<128x64xf32>
    %190 = arith.mulf %188, %189 : vector<128x64xf32>
    %191 = vector.broadcast %170 : vector<1x64xf32> to vector<128x64xf32>
    %192 = arith.addf %190, %191 : vector<128x64xf32>
    %193 = arith.truncf %192 : vector<128x64xf32> to vector<128x64xbf16>
    %c0_68 = arith.constant 0 : index
    %c0_69 = arith.constant 0 : index
    %c0_70 = arith.constant 0 : index
    %194 = vector.load %arg12[%c0_68, %c0_69, %c0_70] : memref<2x64x256xbf16, #tpu.memory_space<vmem>>, vector<1x64x256xbf16>
    %195 = vector.shape_cast %194 : vector<1x64x256xbf16> to vector<64x256xbf16>
    %cst_71 = arith.constant dense<0.000000e+00> : vector<128x256xf32>
    %196 = tpu.matmul %193, %195, %cst_71 {dimension_numbers = #tpu.dot_dimension_numbers<[1], [0], [0], [1], [0, 0, 1, 1], [], []>} : vector<128x64xbf16>, vector<64x256xbf16>, vector<128x256xf32> -> vector<128x256xf32>
    %c0_72 = arith.constant 0 : index
    %c0_73 = arith.constant 0 : index
    %c0_74 = arith.constant 0 : index
    %197 = vector.load %arg13[%c0_72, %c0_73, %c0_74] : memref<2x1x256xf32, #tpu.memory_space<vmem>>, vector<1x1x256xf32>
    %198 = vector.shape_cast %197 : vector<1x1x256xf32> to vector<1x256xf32>
    %199 = vector.broadcast %198 : vector<1x256xf32> to vector<128x256xf32>
    %200 = arith.addf %196, %199 : vector<128x256xf32>
    %201 = arith.mulf %200, %200 : vector<128x256xf32>
    %202 = arith.mulf %200, %201 : vector<128x256xf32>
    %cst_75 = arith.constant 4.471500e-02 : f32
    %203 = vector.broadcast %cst_75 : f32 to vector<128x256xf32>
    %204 = arith.mulf %203, %202 : vector<128x256xf32>
    %205 = arith.addf %200, %204 : vector<128x256xf32>
    %cst_76 = arith.constant 0.797884583 : f32
    %206 = vector.broadcast %cst_76 : f32 to vector<128x256xf32>
    %207 = arith.mulf %206, %205 : vector<128x256xf32>
    %208 = math.tanh %207 : vector<128x256xf32>
    %cst_77 = arith.constant 1.000000e+00 : f32
    %209 = vector.broadcast %cst_77 : f32 to vector<128x256xf32>
    %210 = arith.addf %209, %208 : vector<128x256xf32>
    %cst_78 = arith.constant 5.000000e-01 : f32
    %211 = vector.broadcast %cst_78 : f32 to vector<128x256xf32>
    %212 = arith.mulf %211, %210 : vector<128x256xf32>
    %213 = arith.mulf %200, %212 : vector<128x256xf32>
    %214 = arith.truncf %213 : vector<128x256xf32> to vector<128x256xbf16>
    %c0_79 = arith.constant 0 : index
    %c0_80 = arith.constant 0 : index
    %c0_81 = arith.constant 0 : index
    %215 = vector.load %arg14[%c0_79, %c0_80, %c0_81] : memref<2x256x64xbf16, #tpu.memory_space<vmem>>, vector<1x256x64xbf16>
    %216 = vector.shape_cast %215 : vector<1x256x64xbf16> to vector<256x64xbf16>
    %cst_82 = arith.constant dense<0.000000e+00> : vector<128x64xf32>
    %217 = tpu.matmul %214, %216, %cst_82 {dimension_numbers = #tpu.dot_dimension_numbers<[1], [0], [0], [1], [0, 0, 1, 1], [], []>} : vector<128x256xbf16>, vector<256x64xbf16>, vector<128x64xf32> -> vector<128x64xf32>
    %c0_83 = arith.constant 0 : index
    %c0_84 = arith.constant 0 : index
    %c0_85 = arith.constant 0 : index
    %218 = vector.load %arg15[%c0_83, %c0_84, %c0_85] : memref<2x1x64xf32, #tpu.memory_space<vmem>>, vector<1x1x64xf32>
    %219 = vector.shape_cast %218 : vector<1x1x64xf32> to vector<1x64xf32>
    %220 = vector.broadcast %219 : vector<1x64xf32> to vector<128x64xf32>
    %221 = arith.addf %217, %220 : vector<128x64xf32>
    %222 = arith.addf %166, %221 : vector<128x64xf32>
    %c1 = arith.constant 1 : index
    %c0_86 = arith.constant 0 : index
    %c0_87 = arith.constant 0 : index
    %223 = vector.load %arg4[%c1, %c0_86, %c0_87] : memref<2x1x64xf32, #tpu.memory_space<vmem>>, vector<1x1x64xf32>
    %224 = vector.shape_cast %223 : vector<1x1x64xf32> to vector<1x64xf32>
    %c1_88 = arith.constant 1 : index
    %c0_89 = arith.constant 0 : index
    %c0_90 = arith.constant 0 : index
    %225 = vector.load %arg5[%c1_88, %c0_89, %c0_90] : memref<2x1x64xf32, #tpu.memory_space<vmem>>, vector<1x1x64xf32>
    %226 = vector.shape_cast %225 : vector<1x1x64xf32> to vector<1x64xf32>
    %cst_91 = arith.constant dense<0.000000e+00> : vector<128xf32>
    %227 = vector.multi_reduction <add>, %222, %cst_91 [1] : vector<128x64xf32> to vector<128xf32>
    %228 = vector.shape_cast %227 : vector<128xf32> to vector<128x1xf32>
    %cst_92 = arith.constant 6.400000e+01 : f32
    %229 = vector.broadcast %cst_92 : f32 to vector<128x1xf32>
    %230 = arith.divf %228, %229 : vector<128x1xf32>
    %231 = vector.broadcast %230 : vector<128x1xf32> to vector<128x64xf32>
    %232 = arith.subf %222, %231 : vector<128x64xf32>
    %233 = arith.mulf %232, %232 : vector<128x64xf32>
    %cst_93 = arith.constant dense<0.000000e+00> : vector<128xf32>
    %234 = vector.multi_reduction <add>, %233, %cst_93 [1] : vector<128x64xf32> to vector<128xf32>
    %235 = vector.shape_cast %234 : vector<128xf32> to vector<128x1xf32>
    %cst_94 = arith.constant 6.400000e+01 : f32
    %236 = vector.broadcast %cst_94 : f32 to vector<128x1xf32>
    %237 = arith.divf %235, %236 : vector<128x1xf32>
    %238 = vector.broadcast %230 : vector<128x1xf32> to vector<128x64xf32>
    %239 = arith.subf %222, %238 : vector<128x64xf32>
    %cst_95 = arith.constant 9.99999997E-7 : f32
    %240 = vector.broadcast %cst_95 : f32 to vector<128x1xf32>
    %241 = arith.addf %237, %240 : vector<128x1xf32>
    %242 = math.rsqrt %241 : vector<128x1xf32>
    %243 = vector.broadcast %242 : vector<128x1xf32> to vector<128x64xf32>
    %244 = arith.mulf %239, %243 : vector<128x64xf32>
    %245 = vector.broadcast %224 : vector<1x64xf32> to vector<128x64xf32>
    %246 = arith.mulf %244, %245 : vector<128x64xf32>
    %247 = vector.broadcast %226 : vector<1x64xf32> to vector<128x64xf32>
    %248 = arith.addf %246, %247 : vector<128x64xf32>
    %249 = arith.truncf %248 : vector<128x64xf32> to vector<128x64xbf16>
    %c1_96 = arith.constant 1 : index
    %c0_97 = arith.constant 0 : index
    %c0_98 = arith.constant 0 : index
    %250 = vector.load %arg6[%c1_96, %c0_97, %c0_98] : memref<2x64x192xbf16, #tpu.memory_space<vmem>>, vector<1x64x192xbf16>
    %251 = vector.shape_cast %250 : vector<1x64x192xbf16> to vector<64x192xbf16>
    %cst_99 = arith.constant dense<0.000000e+00> : vector<128x192xf32>
    %252 = tpu.matmul %249, %251, %cst_99 {dimension_numbers = #tpu.dot_dimension_numbers<[1], [0], [0], [1], [0, 0, 1, 1], [], []>} : vector<128x64xbf16>, vector<64x192xbf16>, vector<128x192xf32> -> vector<128x192xf32>
    %c1_100 = arith.constant 1 : index
    %c0_101 = arith.constant 0 : index
    %c0_102 = arith.constant 0 : index
    %253 = vector.load %arg7[%c1_100, %c0_101, %c0_102] : memref<2x1x192xf32, #tpu.memory_space<vmem>>, vector<1x1x192xf32>
    %254 = vector.shape_cast %253 : vector<1x1x192xf32> to vector<1x192xf32>
    %255 = vector.broadcast %254 : vector<1x192xf32> to vector<128x192xf32>
    %256 = arith.addf %252, %255 : vector<128x192xf32>
    %257 = vector.extract_strided_slice %256 {offsets = [0, 0], sizes = [128, 16], strides = [1, 1]} : vector<128x192xf32> to vector<128x16xf32>
    %258 = arith.truncf %257 : vector<128x16xf32> to vector<128x16xbf16>
    %259 = vector.extract_strided_slice %256 {offsets = [0, 64], sizes = [128, 16], strides = [1, 1]} : vector<128x192xf32> to vector<128x16xf32>
    %260 = arith.truncf %259 : vector<128x16xf32> to vector<128x16xbf16>
    %261 = vector.extract_strided_slice %256 {offsets = [0, 128], sizes = [128, 16], strides = [1, 1]} : vector<128x192xf32> to vector<128x16xf32>
    %262 = arith.truncf %261 : vector<128x16xf32> to vector<128x16xbf16>
    %cst_103 = arith.constant dense<0.000000e+00> : vector<128x128xf32>
    %263 = tpu.matmul %258, %260, %cst_103 {dimension_numbers = #tpu.dot_dimension_numbers<[1], [1], [0], [0], [0, 0, 1, 0], [], []>} : vector<128x16xbf16>, vector<128x16xbf16>, vector<128x128xf32> -> vector<128x128xf32>
    %264 = arith.addf %263, %42 : vector<128x128xf32>
    %cst_104 = arith.constant dense<0xFF800000> : vector<128xf32>
    %265 = vector.multi_reduction <maximumf>, %264, %cst_104 [1] : vector<128x128xf32> to vector<128xf32>
    %266 = vector.shape_cast %265 : vector<128xf32> to vector<128x1xf32>
    %267 = vector.broadcast %266 : vector<128x1xf32> to vector<128x128xf32>
    %268 = arith.subf %264, %267 : vector<128x128xf32>
    %269 = math.exp %268 : vector<128x128xf32>
    %cst_105 = arith.constant dense<0.000000e+00> : vector<128xf32>
    %270 = vector.multi_reduction <add>, %269, %cst_105 [1] : vector<128x128xf32> to vector<128xf32>
    %271 = vector.shape_cast %270 : vector<128xf32> to vector<128x1xf32>
    %272 = tpu.reciprocal %271 {approx = true} : vector<128x1xf32> -> vector<128x1xf32>
    %273 = vector.broadcast %272 : vector<128x1xf32> to vector<128x128xf32>
    %274 = arith.mulf %269, %273 : vector<128x128xf32>
    %275 = arith.truncf %274 : vector<128x128xf32> to vector<128x128xbf16>
    %cst_106 = arith.constant dense<0.000000e+00> : vector<128x16xf32>
    %276 = tpu.matmul %275, %262, %cst_106 {dimension_numbers = #tpu.dot_dimension_numbers<[1], [0], [0], [1], [0, 0, 1, 1], [], []>} : vector<128x128xbf16>, vector<128x16xbf16>, vector<128x16xf32> -> vector<128x16xf32>
    %277 = vector.extract_strided_slice %256 {offsets = [0, 16], sizes = [128, 16], strides = [1, 1]} : vector<128x192xf32> to vector<128x16xf32>
    %278 = arith.truncf %277 : vector<128x16xf32> to vector<128x16xbf16>
    %279 = vector.extract_strided_slice %256 {offsets = [0, 80], sizes = [128, 16], strides = [1, 1]} : vector<128x192xf32> to vector<128x16xf32>
    %280 = arith.truncf %279 : vector<128x16xf32> to vector<128x16xbf16>
    %281 = vector.extract_strided_slice %256 {offsets = [0, 144], sizes = [128, 16], strides = [1, 1]} : vector<128x192xf32> to vector<128x16xf32>
    %282 = arith.truncf %281 : vector<128x16xf32> to vector<128x16xbf16>
    %cst_107 = arith.constant dense<0.000000e+00> : vector<128x128xf32>
    %283 = tpu.matmul %278, %280, %cst_107 {dimension_numbers = #tpu.dot_dimension_numbers<[1], [1], [0], [0], [0, 0, 1, 0], [], []>} : vector<128x16xbf16>, vector<128x16xbf16>, vector<128x128xf32> -> vector<128x128xf32>
    %284 = arith.addf %283, %42 : vector<128x128xf32>
    %cst_108 = arith.constant dense<0xFF800000> : vector<128xf32>
    %285 = vector.multi_reduction <maximumf>, %284, %cst_108 [1] : vector<128x128xf32> to vector<128xf32>
    %286 = vector.shape_cast %285 : vector<128xf32> to vector<128x1xf32>
    %287 = vector.broadcast %286 : vector<128x1xf32> to vector<128x128xf32>
    %288 = arith.subf %284, %287 : vector<128x128xf32>
    %289 = math.exp %288 : vector<128x128xf32>
    %cst_109 = arith.constant dense<0.000000e+00> : vector<128xf32>
    %290 = vector.multi_reduction <add>, %289, %cst_109 [1] : vector<128x128xf32> to vector<128xf32>
    %291 = vector.shape_cast %290 : vector<128xf32> to vector<128x1xf32>
    %292 = tpu.reciprocal %291 {approx = true} : vector<128x1xf32> -> vector<128x1xf32>
    %293 = vector.broadcast %292 : vector<128x1xf32> to vector<128x128xf32>
    %294 = arith.mulf %289, %293 : vector<128x128xf32>
    %295 = arith.truncf %294 : vector<128x128xf32> to vector<128x128xbf16>
    %cst_110 = arith.constant dense<0.000000e+00> : vector<128x16xf32>
    %296 = tpu.matmul %295, %282, %cst_110 {dimension_numbers = #tpu.dot_dimension_numbers<[1], [0], [0], [1], [0, 0, 1, 1], [], []>} : vector<128x128xbf16>, vector<128x16xbf16>, vector<128x16xf32> -> vector<128x16xf32>
    %297 = vector.extract_strided_slice %256 {offsets = [0, 32], sizes = [128, 16], strides = [1, 1]} : vector<128x192xf32> to vector<128x16xf32>
    %298 = arith.truncf %297 : vector<128x16xf32> to vector<128x16xbf16>
    %299 = vector.extract_strided_slice %256 {offsets = [0, 96], sizes = [128, 16], strides = [1, 1]} : vector<128x192xf32> to vector<128x16xf32>
    %300 = arith.truncf %299 : vector<128x16xf32> to vector<128x16xbf16>
    %301 = vector.extract_strided_slice %256 {offsets = [0, 160], sizes = [128, 16], strides = [1, 1]} : vector<128x192xf32> to vector<128x16xf32>
    %302 = arith.truncf %301 : vector<128x16xf32> to vector<128x16xbf16>
    %cst_111 = arith.constant dense<0.000000e+00> : vector<128x128xf32>
    %303 = tpu.matmul %298, %300, %cst_111 {dimension_numbers = #tpu.dot_dimension_numbers<[1], [1], [0], [0], [0, 0, 1, 0], [], []>} : vector<128x16xbf16>, vector<128x16xbf16>, vector<128x128xf32> -> vector<128x128xf32>
    %304 = arith.addf %303, %42 : vector<128x128xf32>
    %cst_112 = arith.constant dense<0xFF800000> : vector<128xf32>
    %305 = vector.multi_reduction <maximumf>, %304, %cst_112 [1] : vector<128x128xf32> to vector<128xf32>
    %306 = vector.shape_cast %305 : vector<128xf32> to vector<128x1xf32>
    %307 = vector.broadcast %306 : vector<128x1xf32> to vector<128x128xf32>
    %308 = arith.subf %304, %307 : vector<128x128xf32>
    %309 = math.exp %308 : vector<128x128xf32>
    %cst_113 = arith.constant dense<0.000000e+00> : vector<128xf32>
    %310 = vector.multi_reduction <add>, %309, %cst_113 [1] : vector<128x128xf32> to vector<128xf32>
    %311 = vector.shape_cast %310 : vector<128xf32> to vector<128x1xf32>
    %312 = tpu.reciprocal %311 {approx = true} : vector<128x1xf32> -> vector<128x1xf32>
    %313 = vector.broadcast %312 : vector<128x1xf32> to vector<128x128xf32>
    %314 = arith.mulf %309, %313 : vector<128x128xf32>
    %315 = arith.truncf %314 : vector<128x128xf32> to vector<128x128xbf16>
    %cst_114 = arith.constant dense<0.000000e+00> : vector<128x16xf32>
    %316 = tpu.matmul %315, %302, %cst_114 {dimension_numbers = #tpu.dot_dimension_numbers<[1], [0], [0], [1], [0, 0, 1, 1], [], []>} : vector<128x128xbf16>, vector<128x16xbf16>, vector<128x16xf32> -> vector<128x16xf32>
    %317 = vector.extract_strided_slice %256 {offsets = [0, 48], sizes = [128, 16], strides = [1, 1]} : vector<128x192xf32> to vector<128x16xf32>
    %318 = arith.truncf %317 : vector<128x16xf32> to vector<128x16xbf16>
    %319 = vector.extract_strided_slice %256 {offsets = [0, 112], sizes = [128, 16], strides = [1, 1]} : vector<128x192xf32> to vector<128x16xf32>
    %320 = arith.truncf %319 : vector<128x16xf32> to vector<128x16xbf16>
    %321 = vector.extract_strided_slice %256 {offsets = [0, 176], sizes = [128, 16], strides = [1, 1]} : vector<128x192xf32> to vector<128x16xf32>
    %322 = arith.truncf %321 : vector<128x16xf32> to vector<128x16xbf16>
    %cst_115 = arith.constant dense<0.000000e+00> : vector<128x128xf32>
    %323 = tpu.matmul %318, %320, %cst_115 {dimension_numbers = #tpu.dot_dimension_numbers<[1], [1], [0], [0], [0, 0, 1, 0], [], []>} : vector<128x16xbf16>, vector<128x16xbf16>, vector<128x128xf32> -> vector<128x128xf32>
    %324 = arith.addf %323, %42 : vector<128x128xf32>
    %cst_116 = arith.constant dense<0xFF800000> : vector<128xf32>
    %325 = vector.multi_reduction <maximumf>, %324, %cst_116 [1] : vector<128x128xf32> to vector<128xf32>
    %326 = vector.shape_cast %325 : vector<128xf32> to vector<128x1xf32>
    %327 = vector.broadcast %326 : vector<128x1xf32> to vector<128x128xf32>
    %328 = arith.subf %324, %327 : vector<128x128xf32>
    %329 = math.exp %328 : vector<128x128xf32>
    %cst_117 = arith.constant dense<0.000000e+00> : vector<128xf32>
    %330 = vector.multi_reduction <add>, %329, %cst_117 [1] : vector<128x128xf32> to vector<128xf32>
    %331 = vector.shape_cast %330 : vector<128xf32> to vector<128x1xf32>
    %332 = tpu.reciprocal %331 {approx = true} : vector<128x1xf32> -> vector<128x1xf32>
    %333 = vector.broadcast %332 : vector<128x1xf32> to vector<128x128xf32>
    %334 = arith.mulf %329, %333 : vector<128x128xf32>
    %335 = arith.truncf %334 : vector<128x128xf32> to vector<128x128xbf16>
    %cst_118 = arith.constant dense<0.000000e+00> : vector<128x16xf32>
    %336 = tpu.matmul %335, %322, %cst_118 {dimension_numbers = #tpu.dot_dimension_numbers<[1], [0], [0], [1], [0, 0, 1, 1], [], []>} : vector<128x128xbf16>, vector<128x16xbf16>, vector<128x16xf32> -> vector<128x16xf32>
    %337 = tpu.concatenate %276, %296, %316, %336 in 1 : vector<128x16xf32>, vector<128x16xf32>, vector<128x16xf32>, vector<128x16xf32> -> vector<128x64xf32>
    %338 = arith.truncf %337 : vector<128x64xf32> to vector<128x64xbf16>
    %c1_119 = arith.constant 1 : index
    %c0_120 = arith.constant 0 : index
    %c0_121 = arith.constant 0 : index
    %339 = vector.load %arg8[%c1_119, %c0_120, %c0_121] : memref<2x64x64xbf16, #tpu.memory_space<vmem>>, vector<1x64x64xbf16>
    %340 = vector.shape_cast %339 : vector<1x64x64xbf16> to vector<64x64xbf16>
    %cst_122 = arith.constant dense<0.000000e+00> : vector<128x64xf32>
    %341 = tpu.matmul %338, %340, %cst_122 {dimension_numbers = #tpu.dot_dimension_numbers<[1], [0], [0], [1], [0, 0, 1, 1], [], []>} : vector<128x64xbf16>, vector<64x64xbf16>, vector<128x64xf32> -> vector<128x64xf32>
    %342 = arith.addf %222, %341 : vector<128x64xf32>
    %c1_123 = arith.constant 1 : index
    %c0_124 = arith.constant 0 : index
    %c0_125 = arith.constant 0 : index
    %343 = vector.load %arg9[%c1_123, %c0_124, %c0_125] : memref<2x1x64xf32, #tpu.memory_space<vmem>>, vector<1x1x64xf32>
    %344 = vector.shape_cast %343 : vector<1x1x64xf32> to vector<1x64xf32>
    %345 = vector.broadcast %344 : vector<1x64xf32> to vector<128x64xf32>
    %346 = arith.addf %342, %345 : vector<128x64xf32>
    %c1_126 = arith.constant 1 : index
    %c0_127 = arith.constant 0 : index
    %c0_128 = arith.constant 0 : index
    %347 = vector.load %arg10[%c1_126, %c0_127, %c0_128] : memref<2x1x64xf32, #tpu.memory_space<vmem>>, vector<1x1x64xf32>
    %348 = vector.shape_cast %347 : vector<1x1x64xf32> to vector<1x64xf32>
    %c1_129 = arith.constant 1 : index
    %c0_130 = arith.constant 0 : index
    %c0_131 = arith.constant 0 : index
    %349 = vector.load %arg11[%c1_129, %c0_130, %c0_131] : memref<2x1x64xf32, #tpu.memory_space<vmem>>, vector<1x1x64xf32>
    %350 = vector.shape_cast %349 : vector<1x1x64xf32> to vector<1x64xf32>
    %cst_132 = arith.constant dense<0.000000e+00> : vector<128xf32>
    %351 = vector.multi_reduction <add>, %346, %cst_132 [1] : vector<128x64xf32> to vector<128xf32>
    %352 = vector.shape_cast %351 : vector<128xf32> to vector<128x1xf32>
    %cst_133 = arith.constant 6.400000e+01 : f32
    %353 = vector.broadcast %cst_133 : f32 to vector<128x1xf32>
    %354 = arith.divf %352, %353 : vector<128x1xf32>
    %355 = vector.broadcast %354 : vector<128x1xf32> to vector<128x64xf32>
    %356 = arith.subf %346, %355 : vector<128x64xf32>
    %357 = arith.mulf %356, %356 : vector<128x64xf32>
    %cst_134 = arith.constant dense<0.000000e+00> : vector<128xf32>
    %358 = vector.multi_reduction <add>, %357, %cst_134 [1] : vector<128x64xf32> to vector<128xf32>
    %359 = vector.shape_cast %358 : vector<128xf32> to vector<128x1xf32>
    %cst_135 = arith.constant 6.400000e+01 : f32
    %360 = vector.broadcast %cst_135 : f32 to vector<128x1xf32>
    %361 = arith.divf %359, %360 : vector<128x1xf32>
    %362 = vector.broadcast %354 : vector<128x1xf32> to vector<128x64xf32>
    %363 = arith.subf %346, %362 : vector<128x64xf32>
    %cst_136 = arith.constant 9.99999997E-7 : f32
    %364 = vector.broadcast %cst_136 : f32 to vector<128x1xf32>
    %365 = arith.addf %361, %364 : vector<128x1xf32>
    %366 = math.rsqrt %365 : vector<128x1xf32>
    %367 = vector.broadcast %366 : vector<128x1xf32> to vector<128x64xf32>
    %368 = arith.mulf %363, %367 : vector<128x64xf32>
    %369 = vector.broadcast %348 : vector<1x64xf32> to vector<128x64xf32>
    %370 = arith.mulf %368, %369 : vector<128x64xf32>
    %371 = vector.broadcast %350 : vector<1x64xf32> to vector<128x64xf32>
    %372 = arith.addf %370, %371 : vector<128x64xf32>
    %373 = arith.truncf %372 : vector<128x64xf32> to vector<128x64xbf16>
    %c1_137 = arith.constant 1 : index
    %c0_138 = arith.constant 0 : index
    %c0_139 = arith.constant 0 : index
    %374 = vector.load %arg12[%c1_137, %c0_138, %c0_139] : memref<2x64x256xbf16, #tpu.memory_space<vmem>>, vector<1x64x256xbf16>
    %375 = vector.shape_cast %374 : vector<1x64x256xbf16> to vector<64x256xbf16>
    %cst_140 = arith.constant dense<0.000000e+00> : vector<128x256xf32>
    %376 = tpu.matmul %373, %375, %cst_140 {dimension_numbers = #tpu.dot_dimension_numbers<[1], [0], [0], [1], [0, 0, 1, 1], [], []>} : vector<128x64xbf16>, vector<64x256xbf16>, vector<128x256xf32> -> vector<128x256xf32>
    %c1_141 = arith.constant 1 : index
    %c0_142 = arith.constant 0 : index
    %c0_143 = arith.constant 0 : index
    %377 = vector.load %arg13[%c1_141, %c0_142, %c0_143] : memref<2x1x256xf32, #tpu.memory_space<vmem>>, vector<1x1x256xf32>
    %378 = vector.shape_cast %377 : vector<1x1x256xf32> to vector<1x256xf32>
    %379 = vector.broadcast %378 : vector<1x256xf32> to vector<128x256xf32>
    %380 = arith.addf %376, %379 : vector<128x256xf32>
    %381 = arith.mulf %380, %380 : vector<128x256xf32>
    %382 = arith.mulf %380, %381 : vector<128x256xf32>
    %cst_144 = arith.constant 4.471500e-02 : f32
    %383 = vector.broadcast %cst_144 : f32 to vector<128x256xf32>
    %384 = arith.mulf %383, %382 : vector<128x256xf32>
    %385 = arith.addf %380, %384 : vector<128x256xf32>
    %cst_145 = arith.constant 0.797884583 : f32
    %386 = vector.broadcast %cst_145 : f32 to vector<128x256xf32>
    %387 = arith.mulf %386, %385 : vector<128x256xf32>
    %388 = math.tanh %387 : vector<128x256xf32>
    %cst_146 = arith.constant 1.000000e+00 : f32
    %389 = vector.broadcast %cst_146 : f32 to vector<128x256xf32>
    %390 = arith.addf %389, %388 : vector<128x256xf32>
    %cst_147 = arith.constant 5.000000e-01 : f32
    %391 = vector.broadcast %cst_147 : f32 to vector<128x256xf32>
    %392 = arith.mulf %391, %390 : vector<128x256xf32>
    %393 = arith.mulf %380, %392 : vector<128x256xf32>
    %394 = arith.truncf %393 : vector<128x256xf32> to vector<128x256xbf16>
    %c1_148 = arith.constant 1 : index
    %c0_149 = arith.constant 0 : index
    %c0_150 = arith.constant 0 : index
    %395 = vector.load %arg14[%c1_148, %c0_149, %c0_150] : memref<2x256x64xbf16, #tpu.memory_space<vmem>>, vector<1x256x64xbf16>
    %396 = vector.shape_cast %395 : vector<1x256x64xbf16> to vector<256x64xbf16>
    %cst_151 = arith.constant dense<0.000000e+00> : vector<128x64xf32>
    %397 = tpu.matmul %394, %396, %cst_151 {dimension_numbers = #tpu.dot_dimension_numbers<[1], [0], [0], [1], [0, 0, 1, 1], [], []>} : vector<128x256xbf16>, vector<256x64xbf16>, vector<128x64xf32> -> vector<128x64xf32>
    %c1_152 = arith.constant 1 : index
    %c0_153 = arith.constant 0 : index
    %c0_154 = arith.constant 0 : index
    %398 = vector.load %arg15[%c1_152, %c0_153, %c0_154] : memref<2x1x64xf32, #tpu.memory_space<vmem>>, vector<1x1x64xf32>
    %399 = vector.shape_cast %398 : vector<1x1x64xf32> to vector<1x64xf32>
    %400 = vector.broadcast %399 : vector<1x64xf32> to vector<128x64xf32>
    %401 = arith.addf %397, %400 : vector<128x64xf32>
    %402 = arith.addf %346, %401 : vector<128x64xf32>
    %c0_155 = arith.constant 0 : index
    %c0_156 = arith.constant 0 : index
    %403 = vector.load %arg16[%c0_155, %c0_156] : memref<1x64xf32, #tpu.memory_space<vmem>>, vector<1x64xf32>
    %c0_157 = arith.constant 0 : index
    %c0_158 = arith.constant 0 : index
    %404 = vector.load %arg17[%c0_157, %c0_158] : memref<1x64xf32, #tpu.memory_space<vmem>>, vector<1x64xf32>
    %cst_159 = arith.constant dense<0.000000e+00> : vector<128xf32>
    %405 = vector.multi_reduction <add>, %402, %cst_159 [1] : vector<128x64xf32> to vector<128xf32>
    %406 = vector.shape_cast %405 : vector<128xf32> to vector<128x1xf32>
    %cst_160 = arith.constant 6.400000e+01 : f32
    %407 = vector.broadcast %cst_160 : f32 to vector<128x1xf32>
    %408 = arith.divf %406, %407 : vector<128x1xf32>
    %409 = vector.broadcast %408 : vector<128x1xf32> to vector<128x64xf32>
    %410 = arith.subf %402, %409 : vector<128x64xf32>
    %411 = arith.mulf %410, %410 : vector<128x64xf32>
    %cst_161 = arith.constant dense<0.000000e+00> : vector<128xf32>
    %412 = vector.multi_reduction <add>, %411, %cst_161 [1] : vector<128x64xf32> to vector<128xf32>
    %413 = vector.shape_cast %412 : vector<128xf32> to vector<128x1xf32>
    %cst_162 = arith.constant 6.400000e+01 : f32
    %414 = vector.broadcast %cst_162 : f32 to vector<128x1xf32>
    %415 = arith.divf %413, %414 : vector<128x1xf32>
    %416 = vector.broadcast %408 : vector<128x1xf32> to vector<128x64xf32>
    %417 = arith.subf %402, %416 : vector<128x64xf32>
    %cst_163 = arith.constant 9.99999997E-7 : f32
    %418 = vector.broadcast %cst_163 : f32 to vector<128x1xf32>
    %419 = arith.addf %415, %418 : vector<128x1xf32>
    %420 = math.rsqrt %419 : vector<128x1xf32>
    %421 = vector.broadcast %420 : vector<128x1xf32> to vector<128x64xf32>
    %422 = arith.mulf %417, %421 : vector<128x64xf32>
    %423 = vector.broadcast %403 : vector<1x64xf32> to vector<128x64xf32>
    %424 = arith.mulf %422, %423 : vector<128x64xf32>
    %425 = vector.broadcast %404 : vector<1x64xf32> to vector<128x64xf32>
    %426 = arith.addf %424, %425 : vector<128x64xf32>
    %427 = vector.extract_strided_slice %426 {offsets = [0, 0], sizes = [32, 64], strides = [1, 1]} : vector<128x64xf32> to vector<32x64xf32>
    %428 = vector.extract_strided_slice %426 {offsets = [32, 0], sizes = [32, 64], strides = [1, 1]} : vector<128x64xf32> to vector<32x64xf32>
    %429 = vector.extract_strided_slice %426 {offsets = [64, 0], sizes = [32, 64], strides = [1, 1]} : vector<128x64xf32> to vector<32x64xf32>
    %430 = vector.extract_strided_slice %426 {offsets = [96, 0], sizes = [32, 64], strides = [1, 1]} : vector<128x64xf32> to vector<32x64xf32>
    %431 = tpu.concatenate %427, %428, %429, %430 in 1 : vector<32x64xf32>, vector<32x64xf32>, vector<32x64xf32>, vector<32x64xf32> -> vector<32x256xf32>
    %c0_164 = arith.constant 0 : index
    %c0_165 = arith.constant 0 : index
    %432 = vector.load %arg18[%c0_164, %c0_165] : memref<32x256xf32, #tpu.memory_space<vmem>>, vector<32x256xf32>
    tpu.vector_store %arg18[%c0_164, %c0_165], %431 {strides = array<i32>} : memref<32x256xf32, #tpu.memory_space<vmem>>, vector<32x256xf32>,
    return
  }
  func.func @transform_0(%arg0: i32) -> (i32, i32) {
    %c0_i32 = arith.constant 0 : i32
    %c0_i32_0 = arith.constant 0 : i32
    return %arg0, %c0_i32 : i32, i32
  }
  func.func @transform_1(%arg0: i32) -> (i32, i32) {
    %c0_i32 = arith.constant 0 : i32
    %c0_i32_0 = arith.constant 0 : i32
    %c0_i32_1 = arith.constant 0 : i32
    return %c0_i32, %c0_i32_0 : i32, i32
  }
  func.func @transform_2(%arg0: i32) -> (i32, i32) {
    %c0_i32 = arith.constant 0 : i32
    %c0_i32_0 = arith.constant 0 : i32
    %c0_i32_1 = arith.constant 0 : i32
    return %c0_i32, %c0_i32_0 : i32, i32
  }
  func.func @transform_3(%arg0: i32) -> (i32, i32, i32) {
    %c0_i32 = arith.constant 0 : i32
    %c0_i32_0 = arith.constant 0 : i32
    %c0_i32_1 = arith.constant 0 : i32
    %c0_i32_2 = arith.constant 0 : i32
    return %c0_i32, %c0_i32_0, %c0_i32_1 : i32, i32, i32
  }
  func.func @transform_4(%arg0: i32) -> (i32, i32, i32) {
    %c0_i32 = arith.constant 0 : i32
    %c0_i32_0 = arith.constant 0 : i32
    %c0_i32_1 = arith.constant 0 : i32
    %c0_i32_2 = arith.constant 0 : i32
    return %c0_i32, %c0_i32_0, %c0_i32_1 : i32, i32, i32
  }
  func.func @transform_5(%arg0: i32) -> (i32, i32, i32) {
    %c0_i32 = arith.constant 0 : i32
    %c0_i32_0 = arith.constant 0 : i32
    %c0_i32_1 = arith.constant 0 : i32
    %c0_i32_2 = arith.constant 0 : i32
    return %c0_i32, %c0_i32_0, %c0_i32_1 : i32, i32, i32
  }
  func.func @transform_6(%arg0: i32) -> (i32, i32, i32) {
    %c0_i32 = arith.constant 0 : i32
    %c0_i32_0 = arith.constant 0 : i32
    %c0_i32_1 = arith.constant 0 : i32
    %c0_i32_2 = arith.constant 0 : i32
    return %c0_i32, %c0_i32_0, %c0_i32_1 : i32, i32, i32
  }
  func.func @transform_7(%arg0: i32) -> (i32, i32, i32) {
    %c0_i32 = arith.constant 0 : i32
    %c0_i32_0 = arith.constant 0 : i32
    %c0_i32_1 = arith.constant 0 : i32
    %c0_i32_2 = arith.constant 0 : i32
    return %c0_i32, %c0_i32_0, %c0_i32_1 : i32, i32, i32
  }
  func.func @transform_8(%arg0: i32) -> (i32, i32, i32) {
    %c0_i32 = arith.constant 0 : i32
    %c0_i32_0 = arith.constant 0 : i32
    %c0_i32_1 = arith.constant 0 : i32
    %c0_i32_2 = arith.constant 0 : i32
    return %c0_i32, %c0_i32_0, %c0_i32_1 : i32, i32, i32
  }
  func.func @transform_9(%arg0: i32) -> (i32, i32, i32) {
    %c0_i32 = arith.constant 0 : i32
    %c0_i32_0 = arith.constant 0 : i32
    %c0_i32_1 = arith.constant 0 : i32
    %c0_i32_2 = arith.constant 0 : i32
    return %c0_i32, %c0_i32_0, %c0_i32_1 : i32, i32, i32
  }
  func.func @transform_10(%arg0: i32) -> (i32, i32, i32) {
    %c0_i32 = arith.constant 0 : i32
    %c0_i32_0 = arith.constant 0 : i32
    %c0_i32_1 = arith.constant 0 : i32
    %c0_i32_2 = arith.constant 0 : i32
    return %c0_i32, %c0_i32_0, %c0_i32_1 : i32, i32, i32
  }
  func.func @transform_11(%arg0: i32) -> (i32, i32, i32) {
    %c0_i32 = arith.constant 0 : i32
    %c0_i32_0 = arith.constant 0 : i32
    %c0_i32_1 = arith.constant 0 : i32
    %c0_i32_2 = arith.constant 0 : i32
    return %c0_i32, %c0_i32_0, %c0_i32_1 : i32, i32, i32
  }
  func.func @transform_12(%arg0: i32) -> (i32, i32, i32) {
    %c0_i32 = arith.constant 0 : i32
    %c0_i32_0 = arith.constant 0 : i32
    %c0_i32_1 = arith.constant 0 : i32
    %c0_i32_2 = arith.constant 0 : i32
    return %c0_i32, %c0_i32_0, %c0_i32_1 : i32, i32, i32
  }
  func.func @transform_13(%arg0: i32) -> (i32, i32, i32) {
    %c0_i32 = arith.constant 0 : i32
    %c0_i32_0 = arith.constant 0 : i32
    %c0_i32_1 = arith.constant 0 : i32
    %c0_i32_2 = arith.constant 0 : i32
    return %c0_i32, %c0_i32_0, %c0_i32_1 : i32, i32, i32
  }
  func.func @transform_14(%arg0: i32) -> (i32, i32, i32) {
    %c0_i32 = arith.constant 0 : i32
    %c0_i32_0 = arith.constant 0 : i32
    %c0_i32_1 = arith.constant 0 : i32
    %c0_i32_2 = arith.constant 0 : i32
    return %c0_i32, %c0_i32_0, %c0_i32_1 : i32, i32, i32
  }
  func.func @transform_15(%arg0: i32) -> (i32, i32) {
    %c0_i32 = arith.constant 0 : i32
    %c0_i32_0 = arith.constant 0 : i32
    %c0_i32_1 = arith.constant 0 : i32
    return %c0_i32, %c0_i32_0 : i32, i32
  }
  func.func @transform_16(%arg0: i32) -> (i32, i32) {
    %c0_i32 = arith.constant 0 : i32
    %c0_i32_0 = arith.constant 0 : i32
    %c0_i32_1 = arith.constant 0 : i32
    return %c0_i32, %c0_i32_0 : i32, i32
  }
  func.func @transform_17(%arg0: i32) -> (i32, i32) {
    %c0_i32 = arith.constant 0 : i32
    %c0_i32_0 = arith.constant 0 : i32
    return %arg0, %c0_i32 : i32, i32
  }
}

</mosaic_0001>

<llo_original>
// kernel: tpu_custom_call.1
$region0: #{tpu_custom_call.1}
  #allocation0 [shape = 'u32[]', space=smem, size = 0x4, offset = 0x4, fixed_abs, tag = 'smem constant byte address 0x4 - core index']
  #allocation1 [shape = 'u32[144,128]{1,0:T(1,128)}', space=vmem, size = 0x12000, scoped, tag = 'internal scratch']
  %s0 = inlined_call_operand.vmem [shape: bf16[256,192], index: 0, kind: input, shape index: {}]
  %s1 = inlined_call_operand.vmem [shape: bf16[192,64], index: 1, kind: input, shape index: {}]
  %s2 = inlined_call_operand.vmem [shape: f32[128,64], index: 2, kind: input, shape index: {}]
  %s3 = inlined_call_operand.vmem [shape: f32[2,1,64], index: 3, kind: input, shape index: {}]
  %s4 = inlined_call_operand.vmem [shape: f32[2,1,64], index: 4, kind: input, shape index: {}]
  %s5 = inlined_call_operand.vmem [shape: bf16[2,64,192], index: 5, kind: input, shape index: {}]
  %s6 = inlined_call_operand.vmem [shape: f32[2,1,192], index: 6, kind: input, shape index: {}]
  %s7 = inlined_call_operand.vmem [shape: bf16[2,64,64], index: 7, kind: input, shape index: {}]
  %s8 = inlined_call_operand.vmem [shape: f32[2,1,64], index: 8, kind: input, shape index: {}]
  %s9 = inlined_call_operand.vmem [shape: f32[2,1,64], index: 9, kind: input, shape index: {}]
  %s10 = inlined_call_operand.vmem [shape: f32[2,1,64], index: 10, kind: input, shape index: {}]
  %s11 = inlined_call_operand.vmem [shape: bf16[2,64,256], index: 11, kind: input, shape index: {}]
  %s12 = inlined_call_operand.vmem [shape: f32[2,1,256], index: 12, kind: input, shape index: {}]
  %s13 = inlined_call_operand.vmem [shape: bf16[2,256,64], index: 13, kind: input, shape index: {}]
  %s14 = inlined_call_operand.vmem [shape: f32[2,1,64], index: 14, kind: input, shape index: {}]
  %s15 = inlined_call_operand.vmem [shape: f32[1,64], index: 15, kind: input, shape index: {}]
  %s16 = inlined_call_operand.vmem [shape: f32[1,64], index: 16, kind: input, shape index: {}]
  %s17 = inlined_call_operand.hbm [shape: f32[64,256], index: 17, kind: output, shape index: {}]
  %s18 = sld [smem:[#allocation0]]
  $region101: #{tpu_custom_call.1} parent=0
    _
  %s20 = ssub.s32 1, %s18
  %s21 = scalar_select 0, %s20, %s18
  $region1: #{tpu_custom_call.1} parent=0
    #allocation2 [shape = 'u8[65536]{0}', space=vmem, size = 0x10000, scoped, tag = 'output window, operand 0']
    #allocation3 [shape = 's32[2]{0}', space=sflag, size = 0x8, scoped, tag = 'scoped memory for tpu_custom_call.1']
    %22 = vsyncpa [#allocation3], 0
    %s23 = scalar_lea.sflag [#allocation3], 1
    %24 = vsyncpa %s23, 0
    loop: start=0, step=1, limit=4
    $region2: #{tpu_custom_call.1} parent=1 // loop_pre_header
      _
    $region3: #{tpu_custom_call.1} parent=1 // loop_header
      %s26 = sphi 0, %s30
      %p27 = scmp.ge.s32.totalorder %s26, 4
      %s36 = sphi 0, %s38
      %s39 = sphi 0, %s36
      %s40 = sphi 0, %s39
      %s56 = sphi 0, %s40
      %s60 = sphi 0, %s60
      %s62 = sphi 0, %s60
      %s63 = sphi 0, %s62
      %s77 = sphi 0, %s63
      %s81 = sphi 0, %s81
      %s83 = sphi 0, %s81
      %s84 = sphi 0, %s83
      %s98 = sphi 0, %s84
      %s102 = sphi 0, %s102
      %s104 = sphi 0, %s102
      %s105 = sphi 0, %s104
      %s119 = sphi 0, %s105
      %s123 = sphi 0, %s123
      %s125 = sphi 0, %s123
      %s126 = sphi 0, %s125
      %s140 = sphi 0, %s126
      %s144 = sphi 0, %s144
      %s146 = sphi 0, %s144
      %s147 = sphi 0, %s146
      %s161 = sphi 0, %s147
      %s165 = sphi 0, %s165
      %s167 = sphi 0, %s165
      %s168 = sphi 0, %s167
      %s182 = sphi 0, %s168
      %s186 = sphi 0, %s186
      %s188 = sphi 0, %s186
      %s189 = sphi 0, %s188
      %s203 = sphi 0, %s189
      %s207 = sphi 0, %s207
      %s209 = sphi 0, %s207
      %s210 = sphi 0, %s209
      %s224 = sphi 0, %s210
      %s228 = sphi 0, %s228
      %s230 = sphi 0, %s228
      %s231 = sphi 0, %s230
      %s245 = sphi 0, %s231
      %s249 = sphi 0, %s249
      %s251 = sphi 0, %s249
      %s252 = sphi 0, %s251
      %s266 = sphi 0, %s252
      %s270 = sphi 0, %s270
      %s272 = sphi 0, %s270
      %s273 = sphi 0, %s272
      %s287 = sphi 0, %s273
      %s291 = sphi 0, %s291
      %s293 = sphi 0, %s291
      %s294 = sphi 0, %s293
      %s308 = sphi 0, %s294
      %s312 = sphi 0, %s312
      %s314 = sphi 0, %s312
      %s315 = sphi 0, %s314
      %s329 = sphi 0, %s315
      %s333 = sphi 0, %s333
      %s335 = sphi 0, %s333
      %s336 = sphi 0, %s335
      %s350 = sphi 0, %s336
      %s354 = sphi 0, %s354
      %s356 = sphi 0, %s354
      %s357 = sphi 0, %s356
      %s371 = sphi 0, %s357
      %s375 = sphi 0, %s375
      %s377 = sphi 0, %s375
      %s378 = sphi 0, %s377
      %s392 = sphi 0, %s378
      %s398 = sphi 0, %s400
      %s401 = sphi 0, %s398
      %s402 = sphi 0, %s401
      %s418 = sphi 0, %s402
    $region4: #{tpu_custom_call.1} parent=1 // loop_header_branch
      %29 = sbr.rel (%p27) target = $region8
    $region5: #{tpu_custom_call.1} parent=1 // loop_body
      %s31 = ssub.s32 %s26, 1
      %s32 = ssub.s32 %s26, 2
      %s33 = sadd.s32 %s26, 1
      %s34 = ssub.s32 %s26, %s33
      %p35 = scmp.eq.s32.totalorder %s34, 0
      %s37 = sadd.s32 %s36, 1
      %s38 = scalar_select %p35, %s36, %s37
      %p41 = pneg %p35
      %p42 = scmp.eq.s32.totalorder %s26, 1
      %p43 = por %p41, %p42
      %p44 = scmp.ne.s32.totalorder %s36, %s39
      %p45 = scmp.eq.s32.totalorder %s26, 0
      %p46 = por %p44, %p45
      %p47 = scmp.ne.s32.totalorder %s36, %s39
      %p48 = scmp.eq.s32.totalorder %s31, 1
      %p49 = por %p47, %p48
      %p50 = scmp.ne.s32.totalorder %s39, %s40
      %p51 = scmp.eq.s32.totalorder %s31, 0
      %p52 = por %p50, %p51
      %p53 = scmp.ne.s32.totalorder %s39, %s40
      %p54 = scmp.eq.s32.totalorder %s32, 1
      %p55 = por %p53, %p54
      %p57 = scmp.ne.s32.totalorder %s40, %s56
      %p58 = scmp.eq.s32.totalorder %s32, 0
      %p59 = por %p57, %p58
      %s61 = sadd.s32 %s60, 1
      %p64 = scmp.eq.s32.totalorder %s26, 1
      %p65 = scmp.ne.s32.totalorder %s60, %s62
      %p66 = scmp.eq.s32.totalorder %s26, 0
      %p67 = por %p65, %p66
      %p68 = scmp.ne.s32.totalorder %s60, %s62
      %p69 = scmp.eq.s32.totalorder %s31, 1
      %p70 = por %p68, %p69
      %p71 = scmp.ne.s32.totalorder %s62, %s63
      %p72 = scmp.eq.s32.totalorder %s31, 0
      %p73 = por %p71, %p72
      %p74 = scmp.ne.s32.totalorder %s62, %s63
      %p75 = scmp.eq.s32.totalorder %s32, 1
      %p76 = por %p74, %p75
      %p78 = scmp.ne.s32.totalorder %s63, %s77
      %p79 = scmp.eq.s32.totalorder %s32, 0
      %p80 = por %p78, %p79
      %s82 = sadd.s32 %s81, 1
      %p85 = scmp.eq.s32.totalorder %s26, 1
      %p86 = scmp.ne.s32.totalorder %s81, %s83
      %p87 = scmp.eq.s32.totalorder %s26, 0
      %p88 = por %p86, %p87
      %p89 = scmp.ne.s32.totalorder %s81, %s83
      %p90 = scmp.eq.s32.totalorder %s31, 1
      %p91 = por %p89, %p90
      %p92 = scmp.ne.s32.totalorder %s83, %s84
      %p93 = scmp.eq.s32.totalorder %s31, 0
      %p94 = por %p92, %p93
      %p95 = scmp.ne.s32.totalorder %s83, %s84
      %p96 = scmp.eq.s32.totalorder %s32, 1
      %p97 = por %p95, %p96
      %p99 = scmp.ne.s32.totalorder %s84, %s98
      %p100 = scmp.eq.s32.totalorder %s32, 0
      %p101 = por %p99, %p100
      %s103 = sadd.s32 %s102, 1
      %p106 = scmp.eq.s32.totalorder %s26, 1
      %p107 = scmp.ne.s32.totalorder %s102, %s104
      %p108 = scmp.eq.s32.totalorder %s26, 0
      %p109 = por %p107, %p108
      %p110 = scmp.ne.s32.totalorder %s102, %s104
      %p111 = scmp.eq.s32.totalorder %s31, 1
      %p112 = por %p110, %p111
      %p113 = scmp.ne.s32.totalorder %s104, %s105
      %p114 = scmp.eq.s32.totalorder %s31, 0
      %p115 = por %p113, %p114
      %p116 = scmp.ne.s32.totalorder %s104, %s105
      %p117 = scmp.eq.s32.totalorder %s32, 1
      %p118 = por %p116, %p117
      %p120 = scmp.ne.s32.totalorder %s105, %s119
      %p121 = scmp.eq.s32.totalorder %s32, 0
      %p122 = por %p120, %p121
      %s124 = sadd.s32 %s123, 1
      %p127 = scmp.eq.s32.totalorder %s26, 1
      %p128 = scmp.ne.s32.totalorder %s123, %s125
      %p129 = scmp.eq.s32.totalorder %s26, 0
      %p130 = por %p128, %p129
      %p131 = scmp.ne.s32.totalorder %s123, %s125
      %p132 = scmp.eq.s32.totalorder %s31, 1
      %p133 = por %p131, %p132
      %p134 = scmp.ne.s32.totalorder %s125, %s126
      %p135 = scmp.eq.s32.totalorder %s31, 0
      %p136 = por %p134, %p135
      %p137 = scmp.ne.s32.totalorder %s125, %s126
      %p138 = scmp.eq.s32.totalorder %s32, 1
      %p139 = por %p137, %p138
      %p141 = scmp.ne.s32.totalorder %s126, %s140
      %p142 = scmp.eq.s32.totalorder %s32, 0
      %p143 = por %p141, %p142
      %s145 = sadd.s32 %s144, 1
      %p148 = scmp.eq.s32.totalorder %s26, 1
      %p149 = scmp.ne.s32.totalorder %s144, %s146
      %p150 = scmp.eq.s32.totalorder %s26, 0
      %p151 = por %p149, %p150
      %p152 = scmp.ne.s32.totalorder %s144, %s146
      %p153 = scmp.eq.s32.totalorder %s31, 1
      %p154 = por %p152, %p153
      %p155 = scmp.ne.s32.totalorder %s146, %s147
      %p156 = scmp.eq.s32.totalorder %s31, 0
      %p157 = por %p155, %p156
      %p158 = scmp.ne.s32.totalorder %s146, %s147
      %p159 = scmp.eq.s32.totalorder %s32, 1
      %p160 = por %p158, %p159
      %p162 = scmp.ne.s32.totalorder %s147, %s161
      %p163 = scmp.eq.s32.totalorder %s32, 0
      %p164 = por %p162, %p163
      %s166 = sadd.s32 %s165, 1
      %p169 = scmp.eq.s32.totalorder %s26, 1
      %p170 = scmp.ne.s32.totalorder %s165, %s167
      %p171 = scmp.eq.s32.totalorder %s26, 0
      %p172 = por %p170, %p171
      %p173 = scmp.ne.s32.totalorder %s165, %s167
      %p174 = scmp.eq.s32.totalorder %s31, 1
      %p175 = por %p173, %p174
      %p176 = scmp.ne.s32.totalorder %s167, %s168
      %p177 = scmp.eq.s32.totalorder %s31, 0
      %p178 = por %p176, %p177
      %p179 = scmp.ne.s32.totalorder %s167, %s168
      %p180 = scmp.eq.s32.totalorder %s32, 1
      %p181 = por %p179, %p180
      %p183 = scmp.ne.s32.totalorder %s168, %s182
      %p184 = scmp.eq.s32.totalorder %s32, 0
      %p185 = por %p183, %p184
      %s187 = sadd.s32 %s186, 1
      %p190 = scmp.eq.s32.totalorder %s26, 1
      %p191 = scmp.ne.s32.totalorder %s186, %s188
      %p192 = scmp.eq.s32.totalorder %s26, 0
      %p193 = por %p191, %p192
      %p194 = scmp.ne.s32.totalorder %s186, %s188
      %p195 = scmp.eq.s32.totalorder %s31, 1
      %p196 = por %p194, %p195
      %p197 = scmp.ne.s32.totalorder %s188, %s189
      %p198 = scmp.eq.s32.totalorder %s31, 0
      %p199 = por %p197, %p198
      %p200 = scmp.ne.s32.totalorder %s188, %s189
      %p201 = scmp.eq.s32.totalorder %s32, 1
      %p202 = por %p200, %p201
      %p204 = scmp.ne.s32.totalorder %s189, %s203
      %p205 = scmp.eq.s32.totalorder %s32, 0
      %p206 = por %p204, %p205
      %s208 = sadd.s32 %s207, 1
      %p211 = scmp.eq.s32.totalorder %s26, 1
      %p212 = scmp.ne.s32.totalorder %s207, %s209
      %p213 = scmp.eq.s32.totalorder %s26, 0
      %p214 = por %p212, %p213
      %p215 = scmp.ne.s32.totalorder %s207, %s209
      %p216 = scmp.eq.s32.totalorder %s31, 1
      %p217 = por %p215, %p216
      %p218 = scmp.ne.s32.totalorder %s209, %s210
      %p219 = scmp.eq.s32.totalorder %s31, 0
      %p220 = por %p218, %p219
      %p221 = scmp.ne.s32.totalorder %s209, %s210
      %p222 = scmp.eq.s32.totalorder %s32, 1
      %p223 = por %p221, %p222
      %p225 = scmp.ne.s32.totalorder %s210, %s224
      %p226 = scmp.eq.s32.totalorder %s32, 0
      %p227 = por %p225, %p226
      %s229 = sadd.s32 %s228, 1
      %p232 = scmp.eq.s32.totalorder %s26, 1
      %p233 = scmp.ne.s32.totalorder %s228, %s230
      %p234 = scmp.eq.s32.totalorder %s26, 0
      %p235 = por %p233, %p234
      %p236 = scmp.ne.s32.totalorder %s228, %s230
      %p237 = scmp.eq.s32.totalorder %s31, 1
      %p238 = por %p236, %p237
      %p239 = scmp.ne.s32.totalorder %s230, %s231
      %p240 = scmp.eq.s32.totalorder %s31, 0
      %p241 = por %p239, %p240
      %p242 = scmp.ne.s32.totalorder %s230, %s231
      %p243 = scmp.eq.s32.totalorder %s32, 1
      %p244 = por %p242, %p243
      %p246 = scmp.ne.s32.totalorder %s231, %s245
      %p247 = scmp.eq.s32.totalorder %s32, 0
      %p248 = por %p246, %p247
      %s250 = sadd.s32 %s249, 1
      %p253 = scmp.eq.s32.totalorder %s26, 1
      %p254 = scmp.ne.s32.totalorder %s249, %s251
      %p255 = scmp.eq.s32.totalorder %s26, 0
      %p256 = por %p254, %p255
      %p257 = scmp.ne.s32.totalorder %s249, %s251
      %p258 = scmp.eq.s32.totalorder %s31, 1
      %p259 = por %p257, %p258
      %p260 = scmp.ne.s32.totalorder %s251, %s252
      %p261 = scmp.eq.s32.totalorder %s31, 0
      %p262 = por %p260, %p261
      %p263 = scmp.ne.s32.totalorder %s251, %s252
      %p264 = scmp.eq.s32.totalorder %s32, 1
      %p265 = por %p263, %p264
      %p267 = scmp.ne.s32.totalorder %s252, %s266
      %p268 = scmp.eq.s32.totalorder %s32, 0
      %p269 = por %p267, %p268
      %s271 = sadd.s32 %s270, 1
      %p274 = scmp.eq.s32.totalorder %s26, 1
      %p275 = scmp.ne.s32.totalorder %s270, %s272
      %p276 = scmp.eq.s32.totalorder %s26, 0
      %p277 = por %p275, %p276
      %p278 = scmp.ne.s32.totalorder %s270, %s272
      %p279 = scmp.eq.s32.totalorder %s31, 1
      %p280 = por %p278, %p279
      %p281 = scmp.ne.s32.totalorder %s272, %s273
      %p282 = scmp.eq.s32.totalorder %s31, 0
      %p283 = por %p281, %p282
      %p284 = scmp.ne.s32.totalorder %s272, %s273
      %p285 = scmp.eq.s32.totalorder %s32, 1
      %p286 = por %p284, %p285
      %p288 = scmp.ne.s32.totalorder %s273, %s287
      %p289 = scmp.eq.s32.totalorder %s32, 0
      %p290 = por %p288, %p289
      %s292 = sadd.s32 %s291, 1
      %p295 = scmp.eq.s32.totalorder %s26, 1
      %p296 = scmp.ne.s32.totalorder %s291, %s293
      %p297 = scmp.eq.s32.totalorder %s26, 0
      %p298 = por %p296, %p297
      %p299 = scmp.ne.s32.totalorder %s291, %s293
      %p300 = scmp.eq.s32.totalorder %s31, 1
      %p301 = por %p299, %p300
      %p302 = scmp.ne.s32.totalorder %s293, %s294
      %p303 = scmp.eq.s32.totalorder %s31, 0
      %p304 = por %p302, %p303
      %p305 = scmp.ne.s32.totalorder %s293, %s294
      %p306 = scmp.eq.s32.totalorder %s32, 1
      %p307 = por %p305, %p306
      %p309 = scmp.ne.s32.totalorder %s294, %s308
      %p310 = scmp.eq.s32.totalorder %s32, 0
      %p311 = por %p309, %p310
      %s313 = sadd.s32 %s312, 1
      %p316 = scmp.eq.s32.totalorder %s26, 1
      %p317 = scmp.ne.s32.totalorder %s312, %s314
      %p318 = scmp.eq.s32.totalorder %s26, 0
      %p319 = por %p317, %p318
      %p320 = scmp.ne.s32.totalorder %s312, %s314
      %p321 = scmp.eq.s32.totalorder %s31, 1
      %p322 = por %p320, %p321
      %p323 = scmp.ne.s32.totalorder %s314, %s315
      %p324 = scmp.eq.s32.totalorder %s31, 0
      %p325 = por %p323, %p324
      %p326 = scmp.ne.s32.totalorder %s314, %s315
      %p327 = scmp.eq.s32.totalorder %s32, 1
      %p328 = por %p326, %p327
      %p330 = scmp.ne.s32.totalorder %s315, %s329
      %p331 = scmp.eq.s32.totalorder %s32, 0
      %p332 = por %p330, %p331
      %s334 = sadd.s32 %s333, 1
      %p337 = scmp.eq.s32.totalorder %s26, 1
      %p338 = scmp.ne.s32.totalorder %s333, %s335
      %p339 = scmp.eq.s32.totalorder %s26, 0
      %p340 = por %p338, %p339
      %p341 = scmp.ne.s32.totalorder %s333, %s335
      %p342 = scmp.eq.s32.totalorder %s31, 1
      %p343 = por %p341, %p342
      %p344 = scmp.ne.s32.totalorder %s335, %s336
      %p345 = scmp.eq.s32.totalorder %s31, 0
      %p346 = por %p344, %p345
      %p347 = scmp.ne.s32.totalorder %s335, %s336
      %p348 = scmp.eq.s32.totalorder %s32, 1
      %p349 = por %p347, %p348
      %p351 = scmp.ne.s32.totalorder %s336, %s350
      %p352 = scmp.eq.s32.totalorder %s32, 0
      %p353 = por %p351, %p352
      %s355 = sadd.s32 %s354, 1
      %p358 = scmp.eq.s32.totalorder %s26, 1
      %p359 = scmp.ne.s32.totalorder %s354, %s356
      %p360 = scmp.eq.s32.totalorder %s26, 0
      %p361 = por %p359, %p360
      %p362 = scmp.ne.s32.totalorder %s354, %s356
      %p363 = scmp.eq.s32.totalorder %s31, 1
      %p364 = por %p362, %p363
      %p365 = scmp.ne.s32.totalorder %s356, %s357
      %p366 = scmp.eq.s32.totalorder %s31, 0
      %p367 = por %p365, %p366
      %p368 = scmp.ne.s32.totalorder %s356, %s357
      %p369 = scmp.eq.s32.totalorder %s32, 1
      %p370 = por %p368, %p369
      %p372 = scmp.ne.s32.totalorder %s357, %s371
      %p373 = scmp.eq.s32.totalorder %s32, 0
      %p374 = por %p372, %p373
      %s376 = sadd.s32 %s375, 1
      %p379 = scmp.eq.s32.totalorder %s26, 1
      %p380 = scmp.ne.s32.totalorder %s375, %s377
      %p381 = scmp.eq.s32.totalorder %s26, 0
      %p382 = por %p380, %p381
      %p383 = scmp.ne.s32.totalorder %s375, %s377
      %p384 = scmp.eq.s32.totalorder %s31, 1
      %p385 = por %p383, %p384
      %p386 = scmp.ne.s32.totalorder %s377, %s378
      %p387 = scmp.eq.s32.totalorder %s31, 0
      %p388 = por %p386, %p387
      %p389 = scmp.ne.s32.totalorder %s377, %s378
      %p390 = scmp.eq.s32.totalorder %s32, 1
      %p391 = por %p389, %p390
      %p393 = scmp.ne.s32.totalorder %s378, %s392
      %p394 = scmp.eq.s32.totalorder %s32, 0
      %p395 = por %p393, %p394
      %s396 = ssub.s32 %s26, %s33
      %p397 = scmp.eq.s32.totalorder %s396, 0
      %s399 = sadd.s32 %s398, 1
      %s400 = scalar_select %p397, %s398, %s399
      %p403 = pneg %p397
      %p404 = scmp.eq.s32.totalorder %s26, 1
      %p405 = por %p403, %p404
      %p406 = scmp.ne.s32.totalorder %s398, %s401
      %p407 = scmp.eq.s32.totalorder %s26, 0
      %p408 = por %p406, %p407
      %p409 = scmp.ne.s32.totalorder %s398, %s401
      %p410 = scmp.eq.s32.totalorder %s31, 1
      %p411 = por %p409, %p410
      %p412 = scmp.ne.s32.totalorder %s401, %s402
      %p413 = scmp.eq.s32.totalorder %s31, 0
      %p414 = por %p412, %p413
      %p415 = scmp.ne.s32.totalorder %s401, %s402
      %p416 = scmp.eq.s32.totalorder %s32, 1
      %p417 = por %p415, %p416
      %p419 = scmp.ne.s32.totalorder %s402, %s418
      %p420 = scmp.eq.s32.totalorder %s32, 0
      %p421 = por %p419, %p420
      %p422 = scmp.le.s32.totalorder 1, %s26
      %p423 = scmp.lt.s32.totalorder %s26, 3
      %p424 = pnand %p422, %p423
      %p425 = pneg %p424
      // Predicated region
      $region9: #{tpu_custom_call.1} parent=5 // pred_check
        _
      $region10: #{tpu_custom_call.1} parent=5 // pred_check_branch
        %427 = sbr.rel (%p424) target = $region12
      $region11: #{tpu_custom_call.1} parent=5 // pred_region
        %s428 = ssub.s32 %s26, 1
        // Predicated region
        $region13: #{tpu_custom_call.1} parent=11 // pred_check
          %p429 = pneg %p73
        $region14: #{tpu_custom_call.1} parent=11 // pred_check_branch
          %431 = sbr.rel (%p429) target = $region16
        $region15: #{tpu_custom_call.1} parent=11 // pred_region
          _
        $region16: #{tpu_custom_call.1} parent=11 // pred_fallthru
          _
        // Predicated region
        $region17: #{tpu_custom_call.1} parent=11 // pred_check
          %p432 = pneg %p94
        $region18: #{tpu_custom_call.1} parent=11 // pred_check_branch
          %434 = sbr.rel (%p432) target = $region20
        $region19: #{tpu_custom_call.1} parent=11 // pred_region
          _
        $region20: #{tpu_custom_call.1} parent=11 // pred_fallthru
          _
        // Predicated region
        $region21: #{tpu_custom_call.1} parent=11 // pred_check
          %p435 = pneg %p115
        $region22: #{tpu_custom_call.1} parent=11 // pred_check_branch
          %437 = sbr.rel (%p435) target = $region24
        $region23: #{tpu_custom_call.1} parent=11 // pred_region
          _
        $region24: #{tpu_custom_call.1} parent=11 // pred_fallthru
          _
        // Predicated region
        $region25: #{tpu_custom_call.1} parent=11 // pred_check
          %p438 = pneg %p136
        $region26: #{tpu_custom_call.1} parent=11 // pred_check_branch
          %440 = sbr.rel (%p438) target = $region28
        $region27: #{tpu_custom_call.1} parent=11 // pred_region
          _
        $region28: #{tpu_custom_call.1} parent=11 // pred_fallthru
          _
        // Predicated region
        $region29: #{tpu_custom_call.1} parent=11 // pred_check
          %p441 = pneg %p157
        $region30: #{tpu_custom_call.1} parent=11 // pred_check_branch
          %443 = sbr.rel (%p441) target = $region32
        $region31: #{tpu_custom_call.1} parent=11 // pred_region
          _
        $region32: #{tpu_custom_call.1} parent=11 // pred_fallthru
          _
        // Predicated region
        $region33: #{tpu_custom_call.1} parent=11 // pred_check
          %p444 = pneg %p178
        $region34: #{tpu_custom_call.1} parent=11 // pred_check_branch
          %446 = sbr.rel (%p444) target = $region36
        $region35: #{tpu_custom_call.1} parent=11 // pred_region
          _
        $region36: #{tpu_custom_call.1} parent=11 // pred_fallthru
          _
        // Predicated region
        $region37: #{tpu_custom_call.1} parent=11 // pred_check
          %p447 = pneg %p199
        $region38: #{tpu_custom_call.1} parent=11 // pred_check_branch
          %449 = sbr.rel (%p447) target = $region40
        $region39: #{tpu_custom_call.1} parent=11 // pred_region
          _
        $region40: #{tpu_custom_call.1} parent=11 // pred_fallthru
          _
        // Predicated region
        $region41: #{tpu_custom_call.1} parent=11 // pred_check
          %p450 = pneg %p220
        $region42: #{tpu_custom_call.1} parent=11 // pred_check_branch
          %452 = sbr.rel (%p450) target = $region44
        $region43: #{tpu_custom_call.1} parent=11 // pred_region
          _
        $region44: #{tpu_custom_call.1} parent=11 // pred_fallthru
          _
        // Predicated region
        $region45: #{tpu_custom_call.1} parent=11 // pred_check
          %p453 = pneg %p241
        $region46: #{tpu_custom_call.1} parent=11 // pred_check_branch
          %455 = sbr.rel (%p453) target = $region48
        $region47: #{tpu_custom_call.1} parent=11 // pred_region
          _
        $region48: #{tpu_custom_call.1} parent=11 // pred_fallthru
          _
        // Predicated region
        $region49: #{tpu_custom_call.1} parent=11 // pred_check
          %p456 = pneg %p262
        $region50: #{tpu_custom_call.1} parent=11 // pred_check_branch
          %458 = sbr.rel (%p456) target = $region52
        $region51: #{tpu_custom_call.1} parent=11 // pred_region
          _
        $region52: #{tpu_custom_call.1} parent=11 // pred_fallthru
          _
        // Predicated region
        $region53: #{tpu_custom_call.1} parent=11 // pred_check
          %p459 = pneg %p283
        $region54: #{tpu_custom_call.1} parent=11 // pred_check_branch
          %461 = sbr.rel (%p459) target = $region56
        $region55: #{tpu_custom_call.1} parent=11 // pred_region
          _
        $region56: #{tpu_custom_call.1} parent=11 // pred_fallthru
          _
        // Predicated region
        $region57: #{tpu_custom_call.1} parent=11 // pred_check
          %p462 = pneg %p304
        $region58: #{tpu_custom_call.1} parent=11 // pred_check_branch
          %464 = sbr.rel (%p462) target = $region60
        $region59: #{tpu_custom_call.1} parent=11 // pred_region
          _
        $region60: #{tpu_custom_call.1} parent=11 // pred_fallthru
          _
        // Predicated region
        $region61: #{tpu_custom_call.1} parent=11 // pred_check
          %p465 = pneg %p325
        $region62: #{tpu_custom_call.1} parent=11 // pred_check_branch
          %467 = sbr.rel (%p465) target = $region64
        $region63: #{tpu_custom_call.1} parent=11 // pred_region
          _
        $region64: #{tpu_custom_call.1} parent=11 // pred_fallthru
          _
        // Predicated region
        $region65: #{tpu_custom_call.1} parent=11 // pred_check
          %p468 = pneg %p346
        $region66: #{tpu_custom_call.1} parent=11 // pred_check_branch
          %470 = sbr.rel (%p468) target = $region68
        $region67: #{tpu_custom_call.1} parent=11 // pred_region
          _
        $region68: #{tpu_custom_call.1} parent=11 // pred_fallthru
          _
        // Predicated region
        $region69: #{tpu_custom_call.1} parent=11 // pred_check
          %p471 = pneg %p367
        $region70: #{tpu_custom_call.1} parent=11 // pred_check_branch
          %473 = sbr.rel (%p471) target = $region72
        $region71: #{tpu_custom_call.1} parent=11 // pred_region
          _
        $region72: #{tpu_custom_call.1} parent=11 // pred_fallthru
          _
        // Predicated region
        $region73: #{tpu_custom_call.1} parent=11 // pred_check
          %p474 = pneg %p388
        $region74: #{tpu_custom_call.1} parent=11 // pred_check_branch
          %476 = sbr.rel (%p474) target = $region76
        $region75: #{tpu_custom_call.1} parent=11 // pred_region
          _
        $region76: #{tpu_custom_call.1} parent=11 // pred_fallthru
          _
      $region12: #{tpu_custom_call.1} parent=5 // pred_fallthru
        _
      %p477 = scmp.lt.s32.totalorder %s26, 2
      // Predicated region
      $region77: #{tpu_custom_call.1} parent=5 // pred_check
        %p478 = pneg %p477
      $region78: #{tpu_custom_call.1} parent=5 // pred_check_branch
        %480 = sbr.rel (%p478) target = $region80
      $region79: #{tpu_custom_call.1} parent=5 // pred_region
        // Predicated region
        $region81: #{tpu_custom_call.1} parent=79 // pred_check
          %p481 = pneg %p46
        $region82: #{tpu_custom_call.1} parent=79 // pred_check_branch
          %483 = sbr.rel (%p481) target = $region84
        $region83: #{tpu_custom_call.1} parent=79 // pred_region
          %s484 = smul.u32 16, %s26
          %p485 = scmp.lt.s32.totalorder %s484, 31
          %s486 = scalar_select %p485, %s484, 31
          %s487 = smul.addr %s486, 2
          %s488 = smul.addr %s487, 4
          %s489 = scalar_lea.vmem %s0, %s488
          %s490 = smul.u32 16, %s26
        $region84: #{tpu_custom_call.1} parent=79 // pred_fallthru
          _
      $region80: #{tpu_custom_call.1} parent=5 // pred_fallthru
        _
      %p491 = scmp.le.s32.totalorder 1, %s26
      %p492 = scmp.lt.s32.totalorder %s26, 3
      %p493 = pnand %p491, %p492
      %p494 = pneg %p493
      // Predicated region
      $region85: #{tpu_custom_call.1} parent=5 // pred_check
        _
      $region86: #{tpu_custom_call.1} parent=5 // pred_check_branch
        %496 = sbr.rel (%p493) target = $region88
      $region87: #{tpu_custom_call.1} parent=5 // pred_region
        %s497 = ssub.s32 %s26, 1
        %s498 = smul.u32 16, %s31
        %p499 = scmp.lt.s32.totalorder %s498, 31
        %s500 = scalar_select %p499, %s498, 31
        %s501 = smul.addr %s500, 2
        %s502 = smul.addr %s501, 4
        %s503 = scalar_lea.vmem %s0, %s502
        %p504 = pneg %p52
        %p505 = pneg %p49
        %p506 = pneg %p73
        %p507 = pneg %p70
        %p508 = pneg %p94
        %p509 = pneg %p91
        %p510 = pneg %p115
        %p511 = pneg %p112
        %p512 = pneg %p136
        %p513 = pneg %p133
        %p514 = pneg %p157
        %p515 = pneg %p154
        %p516 = pneg %p178
        %p517 = pneg %p175
        %p518 = pneg %p199
        %p519 = pneg %p196
        %p520 = pneg %p220
        %p521 = pneg %p217
        %p522 = pneg %p241
        %p523 = pneg %p238
        %p524 = pneg %p262
        %p525 = pneg %p259
        %p526 = pneg %p283
        %p527 = pneg %p280
        %p528 = pneg %p304
        %p529 = pneg %p301
        %p530 = pneg %p325
        %p531 = pneg %p322
        %p532 = pneg %p346
        %p533 = pneg %p343
        %p534 = pneg %p367
        %p535 = pneg %p364
        %p536 = pneg %p388
        %p537 = pneg %p385
        %p538 = pneg %p414
        %p539 = pneg %p411
        %s540 = sand.u32 %s401, 1
        %s541 = scalar_lea.sflag [#allocation3], %s540
        %s542 = sand.u32 %s401, 1
        %s543 = smul.addr %s542, 64
        %s544 = scalar_lea.vmem [#allocation2], %s543
        %s545 = smul.u32 16, %s31
        %p546 = scmp.lt.s32.totalorder %s545, 31
        %s547 = scalar_select %p546, %s545, 31
        %s548 = smul.addr %s547, 2
        %s549 = smul.addr %s548, 4
        %s550 = scalar_lea.vmem %s0, %s549
        %s551 = smul.u32 16, %s31
        %s552 = smul.u32 4, %s31
        %v554 = vld [vmem:[%s550] sm:$0xff]
        %v555 = vld [vmem:[%s550 + $0x8] sm:$0xff]
        %v556 = vld [vmem:[%s550 + $0x10] sm:$0xff]
        %v557 = vld [vmem:[%s550 + $0x18] sm:$0xff]
        %v558 = vld [vmem:[%s550 + $0x20] sm:$0xff]
        %v559 = vld [vmem:[%s550 + $0x28] sm:$0xff]
        %v560 = vld [vmem:[%s550 + $0x30] sm:$0xff]
        %v561 = vld [vmem:[%s550 + $0x38] sm:$0xff]
        %v562 = vld [vmem:[%s550 + $0x40] sm:$0xff]
        %v563 = vld [vmem:[%s550 + $0x48] sm:$0xff]
        %v564 = vld [vmem:[%s550 + $0x50] sm:$0xff]
        %v565 = vld [vmem:[%s550 + $0x58] sm:$0xff]
        %v566 = vld [vmem:[%s550 + $0x60] sm:$0xff]
        %v567 = vld [vmem:[%s550 + $0x68] sm:$0xff]
        %v568 = vld [vmem:[%s550 + $0x70] sm:$0xff]
        %v569 = vld [vmem:[%s550 + $0x78] sm:$0xff]
        %v570 = vld [vmem:[%s1] sm:$0xf]
        %v571 = vld [vmem:[%s1 + $0x4] sm:$0xf]
        %v572 = vld [vmem:[%s1 + $0x8] sm:$0xf]
        %v573 = vld [vmem:[%s1 + $0xc] sm:$0xf]
        %v574 = vld [vmem:[%s1 + $0x10] sm:$0xf]
        %v575 = vld [vmem:[%s1 + $0x14] sm:$0xf]
        %v576 = vld [vmem:[%s1 + $0x18] sm:$0xf]
        %v577 = vld [vmem:[%s1 + $0x1c] sm:$0xf]
        %v578 = vld [vmem:[%s1 + $0x20] sm:$0xf]
        %v579 = vld [vmem:[%s1 + $0x24] sm:$0xf]
        %v580 = vld [vmem:[%s1 + $0x28] sm:$0xf]
        %v581 = vld [vmem:[%s1 + $0x2c] sm:$0xf]
        %v582 = vld [vmem:[%s1 + $0x30] sm:$0xf]
        %v583 = vld [vmem:[%s1 + $0x34] sm:$0xf]
        %v584 = vld [vmem:[%s1 + $0x38] sm:$0xf]
        %v585 = vld [vmem:[%s1 + $0x3c] sm:$0xf]
        %v586 = vld [vmem:[%s1 + $0x40] sm:$0xf]
        %v587 = vld [vmem:[%s1 + $0x44] sm:$0xf]
        %v588 = vld [vmem:[%s1 + $0x48] sm:$0xf]
        %v589 = vld [vmem:[%s1 + $0x4c] sm:$0xf]
        %v590 = vld [vmem:[%s1 + $0x50] sm:$0xf]
        %v591 = vld [vmem:[%s1 + $0x54] sm:$0xf]
        %v592 = vld [vmem:[%s1 + $0x58] sm:$0xf]
        %v593 = vld [vmem:[%s1 + $0x5c] sm:$0xf]
        %v594 = vld [vmem:[%s2] sm:$0xff]
        %v595 = vld [vmem:[%s2 + $0x8] sm:$0xff]
        %v596 = vld [vmem:[%s2 + $0x10] sm:$0xff]
        %v597 = vld [vmem:[%s2 + $0x18] sm:$0xff]
        %v598 = vld [vmem:[%s2 + $0x20] sm:$0xff]
        %v599 = vld [vmem:[%s2 + $0x28] sm:$0xff]
        %v600 = vld [vmem:[%s2 + $0x30] sm:$0xff]
        %v601 = vld [vmem:[%s2 + $0x38] sm:$0xff]
        %v602 = vld [vmem:[%s2 + $0x40] sm:$0xff]
        %v603 = vld [vmem:[%s2 + $0x48] sm:$0xff]
        %v604 = vld [vmem:[%s2 + $0x50] sm:$0xff]
        %v605 = vld [vmem:[%s2 + $0x58] sm:$0xff]
        %v606 = vld [vmem:[%s2 + $0x60] sm:$0xff]
        %v607 = vld [vmem:[%s2 + $0x68] sm:$0xff]
        %v608 = vld [vmem:[%s2 + $0x70] sm:$0xff]
        %v609 = vld [vmem:[%s2 + $0x78] sm:$0xff]
        %v626 = vunpack.c.l.b16 %v554
        %v627 = vunpack.c.h.b16 %v554
        %v628 = vunpack.c.l.b16 %v555
        %v629 = vunpack.c.h.b16 %v555
        %v630 = vunpack.c.l.b16 %v556
        %v631 = vunpack.c.h.b16 %v556
        %v632 = vunpack.c.l.b16 %v557
        %v633 = vunpack.c.h.b16 %v557
        %v634 = vunpack.c.l.b16 %v558
        %v635 = vunpack.c.h.b16 %v558
        %v636 = vunpack.c.l.b16 %v559
        %v637 = vunpack.c.h.b16 %v559
        %v638 = vunpack.c.l.b16 %v560
        %v639 = vunpack.c.h.b16 %v560
        %v640 = vunpack.c.l.b16 %v561
        %v641 = vunpack.c.h.b16 %v561
        %v642 = vunpack.c.l.b16 %v562
        %v643 = vunpack.c.h.b16 %v562
        %v644 = vunpack.c.l.b16 %v563
        %v645 = vunpack.c.h.b16 %v563
        %v646 = vunpack.c.l.b16 %v564
        %v647 = vunpack.c.h.b16 %v564
        %v648 = vunpack.c.l.b16 %v565
        %v649 = vunpack.c.h.b16 %v565
        %v650 = vunpack.c.l.b16 %v566
        %v651 = vunpack.c.h.b16 %v566
        %v652 = vunpack.c.l.b16 %v567
        %v653 = vunpack.c.h.b16 %v567
        %v654 = vunpack.c.l.b16 %v568
        %v655 = vunpack.c.h.b16 %v568
        %v656 = vunpack.c.l.b16 %v569
        %v657 = vunpack.c.h.b16 %v569
        %v658 = vpack.c.b16 %v628, %v626
        %v659 = vpack.c.b16 %v629, %v627
        %v660 = vpack.c.b16 %v632, %v630
        %v661 = vpack.c.b16 %v633, %v631
        %v662 = vpack.c.b16 %v636, %v634
        %v663 = vpack.c.b16 %v637, %v635
        %v664 = vpack.c.b16 %v640, %v638
        %v665 = vpack.c.b16 %v641, %v639
        %v666 = vpack.c.b16 %v644, %v642
        %v667 = vpack.c.b16 %v645, %v643
        %v668 = vpack.c.b16 %v648, %v646
        %v669 = vpack.c.b16 %v649, %v647
        %v670 = vpack.c.b16 %v652, %v650
        %v671 = vpack.c.b16 %v653, %v651
        %v672 = vpack.c.b16 %v656, %v654
        %v673 = vpack.c.b16 %v657, %v655
        %v706 = vunpack.c.l.b16 %v570
        %v707 = vunpack.c.l.b16 %v571
        %v708 = vunpack.c.l.b16 %v572
        %v709 = vunpack.c.l.b16 %v573
        %v710 = vunpack.c.l.b16 %v574
        %v711 = vunpack.c.l.b16 %v575
        %v712 = vunpack.c.l.b16 %v576
        %v713 = vunpack.c.l.b16 %v577
        %v714 = vunpack.c.l.b16 %v578
        %v715 = vunpack.c.l.b16 %v579
        %v716 = vunpack.c.l.b16 %v580
        %v717 = vunpack.c.l.b16 %v581
        %v718 = vunpack.c.l.b16 %v582
        %v719 = vunpack.c.l.b16 %v583
        %v720 = vunpack.c.l.b16 %v584
        %v721 = vunpack.c.l.b16 %v585
        %v722 = vunpack.c.l.b16 %v586
        %v723 = vunpack.c.l.b16 %v587
        %v724 = vunpack.c.l.b16 %v588
        %v725 = vunpack.c.l.b16 %v589
        %v726 = vunpack.c.l.b16 %v590
        %v727 = vunpack.c.l.b16 %v591
        %v728 = vunpack.c.l.b16 %v592
        %v729 = vunpack.c.l.b16 %v593
        %v730 = vpack.c.b16 %v707, %v706
        %v731 = vpack.c.b16 %v709, %v708
        %v732 = vpack.c.b16 %v711, %v710
        %v733 = vpack.c.b16 %v713, %v712
        %v734 = vpack.c.b16 %v715, %v714
        %v735 = vpack.c.b16 %v717, %v716
        %v736 = vpack.c.b16 %v719, %v718
        %v737 = vpack.c.b16 %v721, %v720
        %v738 = vpack.c.b16 %v723, %v722
        %v739 = vpack.c.b16 %v725, %v724
        %v740 = vpack.c.b16 %v727, %v726
        %v741 = vpack.c.b16 %v729, %v728
        %vm754 = vcmask 523264
        %v756 = vsel %vm754, %v659, 0
        %v759 = vsel %vm754, %v661, 0
        %v762 = vsel %vm754, %v663, 0
        %v765 = vsel %vm754, %v665, 0
        %v768 = vsel %vm754, %v667, 0
        %v771 = vsel %vm754, %v669, 0
        %v774 = vsel %vm754, %v671, 0
        %v777 = vsel %vm754, %v673, 0
        %779 = vmatprep.subr.bf16.mxu0 0
        %780 = vmatpush1.bf16.msra.mxu0 %v730
        %781 = vmatprep.subr.bf16.mxu0 0
        %782 = vmatpush1.bf16.msra.mxu0 %v731
        %783 = vmatprep.subr.bf16.mxu0 0
        %784 = vmatpush1.bf16.msra.mxu0 %v732
        %785 = vmatprep.subr.bf16.mxu0 0
        %786 = vmatpush1.bf16.msra.mxu0 %v733
        %787 = vmatprep.subr.bf16.mxu0 0
        %788 = vmatpush1.bf16.msra.mxu0 %v734
        %789 = vmatprep.subr.bf16.mxu0 0
        %790 = vmatpush1.bf16.msra.mxu0 %v735
        %791 = vmatprep.subr.bf16.mxu0 0
        %792 = vmatpush1.bf16.msra.mxu0 %v736
        %793 = vmatprep.subr.bf16.mxu0 0
        %794 = vmatpush1.bf16.msra.mxu0 %v737
        %795 = vmatprep.subr.bf16.mxu0 0
        %796 = vmatpush1.bf16.msra.mxu0 %v738
        %797 = vmatprep.subr.bf16.mxu0 0
        %798 = vmatpush1.bf16.msra.mxu0 %v739
        %799 = vmatprep.subr.bf16.mxu0 0
        %800 = vmatpush1.bf16.msra.mxu0 %v740
        %801 = vmatprep.subr.bf16.mxu0 0
        %802 = vmatpush1.bf16.msra.mxu0 %v741
        %803 = vmatprep.subr.bf16.mxu0 0
        %804 = vmatpush1.bf16.msra.mxu0 0
        %805 = vmatprep.subr.bf16.mxu0 0
        %806 = vmatpush1.bf16.msra.mxu0 0
        %807 = vmatprep.subr.bf16.mxu0 0
        %808 = vmatpush1.bf16.msra.mxu0 0
        %809 = vmatprep.subr.bf16.mxu0 0
        %810 = vmatpush1.bf16.msra.mxu0 0
        %811 = vmatprep.mubr.bf16.mxu0 %v756
        %812 = vmatmul.mubr.bf16.gmra.mrb[0].mxu0 %v658
        %v813 = vpop.f32.mrb[0].mxu0
        %v814 = vadd.f32 %v594, %v813
        %v815 = vpop.f32.mrb[0].mxu0
        %v816 = vpop.f32.mrb[0].mxu0
        %v817 = vadd.f32 %v595, %v816
        %v818 = vpop.f32.mrb[0].mxu0
        %819 = vmatprep.mubr.bf16.mxu0 %v759
        %820 = vmatmul.mubr.bf16.gmra.mrb[0].mxu0 %v660
        %v821 = vpop.f32.mrb[0].mxu0
        %v822 = vadd.f32 %v596, %v821
        %v823 = vpop.f32.mrb[0].mxu0
        %v824 = vpop.f32.mrb[0].mxu0
        %v825 = vadd.f32 %v597, %v824
        %v826 = vpop.f32.mrb[0].mxu0
        %827 = vmatprep.mubr.bf16.mxu0 %v762
        %828 = vmatmul.mubr.bf16.gmra.mrb[0].mxu0 %v662
        %v829 = vpop.f32.mrb[0].mxu0
        %v830 = vadd.f32 %v598, %v829
        %v831 = vpop.f32.mrb[0].mxu0
        %v832 = vpop.f32.mrb[0].mxu0
        %v833 = vadd.f32 %v599, %v832
        %v834 = vpop.f32.mrb[0].mxu0
        %835 = vmatprep.mubr.bf16.mxu0 %v765
        %836 = vmatmul.mubr.bf16.gmra.mrb[0].mxu0 %v664
        %v837 = vpop.f32.mrb[0].mxu0
        %v838 = vadd.f32 %v600, %v837
        %v839 = vpop.f32.mrb[0].mxu0
        %v840 = vpop.f32.mrb[0].mxu0
        %v841 = vadd.f32 %v601, %v840
        %v842 = vpop.f32.mrb[0].mxu0
        %843 = vmatprep.mubr.bf16.mxu0 %v768
        %844 = vmatmul.mubr.bf16.gmra.mrb[0].mxu0 %v666
        %v845 = vpop.f32.mrb[0].mxu0
        %v846 = vadd.f32 %v602, %v845
        %v847 = vpop.f32.mrb[0].mxu0
        %v848 = vpop.f32.mrb[0].mxu0
        %v849 = vadd.f32 %v603, %v848
        %v850 = vpop.f32.mrb[0].mxu0
        %851 = vmatprep.mubr.bf16.mxu0 %v771
        %852 = vmatmul.mubr.bf16.gmra.mrb[0].mxu0 %v668
        %v853 = vpop.f32.mrb[0].mxu0
        %v854 = vadd.f32 %v604, %v853
        %v855 = vpop.f32.mrb[0].mxu0
        %v856 = vpop.f32.mrb[0].mxu0
        %v857 = vadd.f32 %v605, %v856
        %v858 = vpop.f32.mrb[0].mxu0
        %859 = vmatprep.mubr.bf16.mxu0 %v774
        %860 = vmatmul.mubr.bf16.gmra.mrb[0].mxu0 %v670
        %v861 = vpop.f32.mrb[0].mxu0
        %v862 = vadd.f32 %v606, %v861
        %v863 = vpop.f32.mrb[0].mxu0
        %v864 = vpop.f32.mrb[0].mxu0
        %v865 = vadd.f32 %v607, %v864
        %v866 = vpop.f32.mrb[0].mxu0
        %867 = vmatprep.mubr.bf16.mxu0 %v777
        %868 = vmatmul.mubr.bf16.gmra.mrb[0].mxu0 %v672
        %v869 = vpop.f32.mrb[0].mxu0
        %v870 = vadd.f32 %v608, %v869
        %v871 = vpop.f32.mrb[0].mxu0
        %v872 = vpop.f32.mrb[0].mxu0
        %v873 = vadd.f32 %v609, %v872
        %v874 = vpop.f32.mrb[0].mxu0
        %875 = vdwg.mxu0
        %v876 = vlaneseq
        %v877 = vshrl.u32 %v876, 7
        %v878 = vadd.s32 %v877, 8
        %v879 = vadd.s32 %v877, 16
        %v880 = vadd.s32 %v877, 24
        %v881 = vadd.s32 %v877, 32
        %v882 = vadd.s32 %v877, 40
        %v883 = vadd.s32 %v877, 48
        %v884 = vadd.s32 %v877, 56
        %v885 = vadd.s32 %v877, 64
        %v886 = vadd.s32 %v877, 72
        %v887 = vadd.s32 %v877, 80
        %v888 = vadd.s32 %v877, 88
        %v889 = vadd.s32 %v877, 96
        %v890 = vadd.s32 %v877, 104
        %v891 = vadd.s32 %v877, 112
        %v892 = vadd.s32 %v877, 120
        %v893 = vlaneseq
        %v894 = vand.u32 %v893, 127
        %vm895 = vcmp.lt.s32.totalorder %v877, 0
        %v896 = vsub.s32 0, %v877
        %v897 = vsel %vm895, %v896, %v877
        %v898 = vshrl.u32 %v897, 5
        %v899 = vand.u32 %v897, 31
        %v900 = vsub.s32 0, %v899
        %v901 = vsel %vm895, %v900, %v899
        %vm902 = vcmp.lt.s32.totalorder %v878, 0
        %v903 = vsub.s32 0, %v878
        %v904 = vsel %vm902, %v903, %v878
        %v905 = vshrl.u32 %v904, 5
        %v906 = vand.u32 %v904, 31
        %v907 = vsub.s32 0, %v906
        %v908 = vsel %vm902, %v907, %v906
        %vm909 = vcmp.lt.s32.totalorder %v879, 0
        %v910 = vsub.s32 0, %v879
        %v911 = vsel %vm909, %v910, %v879
        %v912 = vshrl.u32 %v911, 5
        %v913 = vand.u32 %v911, 31
        %v914 = vsub.s32 0, %v913
        %v915 = vsel %vm909, %v914, %v913
        %vm916 = vcmp.lt.s32.totalorder %v880, 0
        %v917 = vsub.s32 0, %v880
        %v918 = vsel %vm916, %v917, %v880
        %v919 = vshrl.u32 %v918, 5
        %v920 = vand.u32 %v918, 31
        %v921 = vsub.s32 0, %v920
        %v922 = vsel %vm916, %v921, %v920
        %vm923 = vcmp.lt.s32.totalorder %v881, 0
        %v924 = vsub.s32 0, %v881
        %v925 = vsel %vm923, %v924, %v881
        %v926 = vshrl.u32 %v925, 5
        %v927 = vand.u32 %v925, 31
        %v928 = vsub.s32 0, %v927
        %v929 = vsel %vm923, %v928, %v927
        %vm930 = vcmp.lt.s32.totalorder %v882, 0
        %v931 = vsub.s32 0, %v882
        %v932 = vsel %vm930, %v931, %v882
        %v933 = vshrl.u32 %v932, 5
        %v934 = vand.u32 %v932, 31
        %v935 = vsub.s32 0, %v934
        %v936 = vsel %vm930, %v935, %v934
        %vm937 = vcmp.lt.s32.totalorder %v883, 0
        %v938 = vsub.s32 0, %v883
        %v939 = vsel %vm937, %v938, %v883
        %v940 = vshrl.u32 %v939, 5
        %v941 = vand.u32 %v939, 31
        %v942 = vsub.s32 0, %v941
        %v943 = vsel %vm937, %v942, %v941
        %vm944 = vcmp.lt.s32.totalorder %v884, 0
        %v945 = vsub.s32 0, %v884
        %v946 = vsel %vm944, %v945, %v884
        %v947 = vshrl.u32 %v946, 5
        %v948 = vand.u32 %v946, 31
        %v949 = vsub.s32 0, %v948
        %v950 = vsel %vm944, %v949, %v948
        %vm951 = vcmp.lt.s32.totalorder %v885, 0
        %v952 = vsub.s32 0, %v885
        %v953 = vsel %vm951, %v952, %v885
        %v954 = vshrl.u32 %v953, 5
        %v955 = vand.u32 %v953, 31
        %v956 = vsub.s32 0, %v955
        %v957 = vsel %vm951, %v956, %v955
        %vm958 = vcmp.lt.s32.totalorder %v886, 0
        %v959 = vsub.s32 0, %v886
        %v960 = vsel %vm958, %v959, %v886
        %v961 = vshrl.u32 %v960, 5
        %v962 = vand.u32 %v960, 31
        %v963 = vsub.s32 0, %v962
        %v964 = vsel %vm958, %v963, %v962
        %vm965 = vcmp.lt.s32.totalorder %v887, 0
        %v966 = vsub.s32 0, %v887
        %v967 = vsel %vm965, %v966, %v887
        %v968 = vshrl.u32 %v967, 5
        %v969 = vand.u32 %v967, 31
        %v970 = vsub.s32 0, %v969
        %v971 = vsel %vm965, %v970, %v969
        %vm972 = vcmp.lt.s32.totalorder %v888, 0
        %v973 = vsub.s32 0, %v888
        %v974 = vsel %vm972, %v973, %v888
        %v975 = vshrl.u32 %v974, 5
        %v976 = vand.u32 %v974, 31
        %v977 = vsub.s32 0, %v976
        %v978 = vsel %vm972, %v977, %v976
        %vm979 = vcmp.lt.s32.totalorder %v889, 0
        %v980 = vsub.s32 0, %v889
        %v981 = vsel %vm979, %v980, %v889
        %v982 = vshrl.u32 %v981, 5
        %v983 = vand.u32 %v981, 31
        %v984 = vsub.s32 0, %v983
        %v985 = vsel %vm979, %v984, %v983
        %vm986 = vcmp.lt.s32.totalorder %v890, 0
        %v987 = vsub.s32 0, %v890
        %v988 = vsel %vm986, %v987, %v890
        %v989 = vshrl.u32 %v988, 5
        %v990 = vand.u32 %v988, 31
        %v991 = vsub.s32 0, %v990
        %v992 = vsel %vm986, %v991, %v990
        %vm993 = vcmp.lt.s32.totalorder %v891, 0
        %v994 = vsub.s32 0, %v891
        %v995 = vsel %vm993, %v994, %v891
        %v996 = vshrl.u32 %v995, 5
        %v997 = vand.u32 %v995, 31
        %v998 = vsub.s32 0, %v997
        %v999 = vsel %vm993, %v998, %v997
        %vm1000 = vcmp.lt.s32.totalorder %v892, 0
        %v1001 = vsub.s32 0, %v892
        %v1002 = vsel %vm1000, %v1001, %v892
        %v1003 = vshrl.u32 %v1002, 5
        %v1004 = vand.u32 %v1002, 31
        %v1005 = vsub.s32 0, %v1004
        %v1006 = vsel %vm1000, %v1005, %v1004
        %vm1007 = vcmp.ne.s32.totalorder %v901, 0
        %vm1008 = vcmp.ne.s32.totalorder %v908, 0
        %vm1009 = vcmp.ne.s32.totalorder %v915, 0
        %vm1010 = vcmp.ne.s32.totalorder %v922, 0
        %vm1011 = vcmp.ne.s32.totalorder %v929, 0
        %vm1012 = vcmp.ne.s32.totalorder %v936, 0
        %vm1013 = vcmp.ne.s32.totalorder %v943, 0
        %vm1014 = vcmp.ne.s32.totalorder %v950, 0
        %vm1015 = vcmp.ne.s32.totalorder %v957, 0
        %vm1016 = vcmp.ne.s32.totalorder %v964, 0
        %vm1017 = vcmp.ne.s32.totalorder %v971, 0
        %vm1018 = vcmp.ne.s32.totalorder %v978, 0
        %vm1019 = vcmp.ne.s32.totalorder %v985, 0
        %vm1020 = vcmp.ne.s32.totalorder %v992, 0
        %vm1021 = vcmp.ne.s32.totalorder %v999, 0
        %vm1022 = vcmp.ne.s32.totalorder %v1006, 0
        %vm1023 = vcmp.lt.s32.totalorder %v901, 0
        %vm1024 = vcmp.lt.s32.totalorder %v908, 0
        %vm1025 = vcmp.lt.s32.totalorder %v915, 0
        %vm1026 = vcmp.lt.s32.totalorder %v922, 0
        %vm1027 = vcmp.lt.s32.totalorder %v929, 0
        %vm1028 = vcmp.lt.s32.totalorder %v936, 0
        %vm1029 = vcmp.lt.s32.totalorder %v943, 0
        %vm1030 = vcmp.lt.s32.totalorder %v950, 0
        %vm1031 = vcmp.lt.s32.totalorder %v957, 0
        %vm1032 = vcmp.lt.s32.totalorder %v964, 0
        %vm1033 = vcmp.lt.s32.totalorder %v971, 0
        %vm1034 = vcmp.lt.s32.totalorder %v978, 0
        %vm1035 = vcmp.lt.s32.totalorder %v985, 0
        %vm1036 = vcmp.lt.s32.totalorder %v992, 0
        %vm1037 = vcmp.lt.s32.totalorder %v999, 0
        %vm1038 = vcmp.lt.s32.totalorder %v1006, 0
        %vm1039 = vmand %vm1023, %vm1007
        %vm1040 = vmand %vm1024, %vm1008
        %vm1041 = vmand %vm1025, %vm1009
        %vm1042 = vmand %vm1026, %vm1010
        %vm1043 = vmand %vm1027, %vm1011
        %vm1044 = vmand %vm1028, %vm1012
        %vm1045 = vmand %vm1029, %vm1013
        %vm1046 = vmand %vm1030, %vm1014
        %vm1047 = vmand %vm1031, %vm1015
        %vm1048 = vmand %vm1032, %vm1016
        %vm1049 = vmand %vm1033, %vm1017
        %vm1050 = vmand %vm1034, %vm1018
        %vm1051 = vmand %vm1035, %vm1019
        %vm1052 = vmand %vm1036, %vm1020
        %vm1053 = vmand %vm1037, %vm1021
        %vm1054 = vmand %vm1038, %vm1022
        %v1055 = vadd.s32 %v901, 32
        %v1056 = vadd.s32 %v908, 32
        %v1057 = vadd.s32 %v915, 32
        %v1058 = vadd.s32 %v922, 32
        %v1059 = vadd.s32 %v929, 32
        %v1060 = vadd.s32 %v936, 32
        %v1061 = vadd.s32 %v943, 32
        %v1062 = vadd.s32 %v950, 32
        %v1063 = vadd.s32 %v957, 32
        %v1064 = vadd.s32 %v964, 32
        %v1065 = vadd.s32 %v971, 32
        %v1066 = vadd.s32 %v978, 32
        %v1067 = vadd.s32 %v985, 32
        %v1068 = vadd.s32 %v992, 32
        %v1069 = vadd.s32 %v999, 32
        %v1070 = vadd.s32 %v1006, 32
        %v1071 = vsel %vm1039, %v1055, %v901
        %v1072 = vsel %vm1040, %v1056, %v908
        %v1073 = vsel %vm1041, %v1057, %v915
        %v1074 = vsel %vm1042, %v1058, %v922
        %v1075 = vsel %vm1043, %v1059, %v929
        %v1076 = vsel %vm1044, %v1060, %v936
        %v1077 = vsel %vm1045, %v1061, %v943
        %v1078 = vsel %vm1046, %v1062, %v950
        %v1079 = vsel %vm1047, %v1063, %v957
        %v1080 = vsel %vm1048, %v1064, %v964
        %v1081 = vsel %vm1049, %v1065, %v971
        %v1082 = vsel %vm1050, %v1066, %v978
        %v1083 = vsel %vm1051, %v1067, %v985
        %v1084 = vsel %vm1052, %v1068, %v992
        %v1085 = vsel %vm1053, %v1069, %v999
        %v1086 = vsel %vm1054, %v1070, %v1006
        %vm1087 = vcmp.lt.s32.totalorder %v894, 0
        %v1088 = vsub.s32 0, %v894
        %v1089 = vsel %vm1087, %v1088, %v894
        %v1090 = vshrl.u32 %v1089, 5
        %v1091 = vand.u32 %v1089, 31
        %v1092 = vsub.s32 0, %v1091
        %v1093 = vsel %vm1087, %v1092, %v1091
        %vm1094 = vcmp.ne.s32.totalorder %v1093, 0
        %vm1095 = vcmp.lt.s32.totalorder %v1093, 0
        %vm1096 = vmand %vm1095, %vm1094
        %v1097 = vadd.s32 %v1093, 32
        %v1098 = vsel %vm1096, %v1097, %v1093
        %vm1099 = vcmp.eq.s32.totalorder %v1071, %v1098
        %vm1100 = vcmp.eq.s32.totalorder %v1072, %v1098
        %vm1101 = vcmp.eq.s32.totalorder %v1073, %v1098
        %vm1102 = vcmp.eq.s32.totalorder %v1074, %v1098
        %vm1103 = vcmp.eq.s32.totalorder %v1075, %v1098
        %vm1104 = vcmp.eq.s32.totalorder %v1076, %v1098
        %vm1105 = vcmp.eq.s32.totalorder %v1077, %v1098
        %vm1106 = vcmp.eq.s32.totalorder %v1078, %v1098
        %vm1107 = vcmp.eq.s32.totalorder %v1079, %v1098
        %vm1108 = vcmp.eq.s32.totalorder %v1080, %v1098
        %vm1109 = vcmp.eq.s32.totalorder %v1081, %v1098
        %vm1110 = vcmp.eq.s32.totalorder %v1082, %v1098
        %vm1111 = vcmp.eq.s32.totalorder %v1083, %v1098
        %vm1112 = vcmp.eq.s32.totalorder %v1084, %v1098
        %vm1113 = vcmp.eq.s32.totalorder %v1085, %v1098
        %vm1114 = vcmp.eq.s32.totalorder %v1086, %v1098
        %v1115 = vsel %vm1099, 0.0, -1e+30
        %v1116 = vsel %vm1100, 0.0, -1e+30
        %v1117 = vsel %vm1101, 0.0, -1e+30
        %v1118 = vsel %vm1102, 0.0, -1e+30
        %v1119 = vsel %vm1103, 0.0, -1e+30
        %v1120 = vsel %vm1104, 0.0, -1e+30
        %v1121 = vsel %vm1105, 0.0, -1e+30
        %v1122 = vsel %vm1106, 0.0, -1e+30
        %v1123 = vsel %vm1107, 0.0, -1e+30
        %v1124 = vsel %vm1108, 0.0, -1e+30
        %v1125 = vsel %vm1109, 0.0, -1e+30
        %v1126 = vsel %vm1110, 0.0, -1e+30
        %v1127 = vsel %vm1111, 0.0, -1e+30
        %v1128 = vsel %vm1112, 0.0, -1e+30
        %v1129 = vsel %vm1113, 0.0, -1e+30
        %v1130 = vsel %vm1114, 0.0, -1e+30
        %v1131 = vld [vmem:[%s3] sm:$0x1]
        %v1132 = vld [vmem:[%s4] sm:$0x1]
        %v1133 = vsel %vm754, %v814, 0.0
        %1134 = vadd.xlane.f32.xlu0 %v1133
        %v1135 = vpop.xlane.xlu0 %1134
        %v1136 = vsel %vm754, %v817, 0.0
        %1137 = vadd.xlane.f32.xlu0 %v1136
        %v1138 = vpop.xlane.xlu0 %1137
        %v1139 = vsel %vm754, %v822, 0.0
        %1140 = vadd.xlane.f32.xlu0 %v1139
        %v1141 = vpop.xlane.xlu0 %1140
        %v1142 = vsel %vm754, %v825, 0.0
        %1143 = vadd.xlane.f32.xlu0 %v1142
        %v1144 = vpop.xlane.xlu0 %1143
        %v1145 = vsel %vm754, %v830, 0.0
        %1146 = vadd.xlane.f32.xlu0 %v1145
        %v1147 = vpop.xlane.xlu0 %1146
        %v1148 = vsel %vm754, %v833, 0.0
        %1149 = vadd.xlane.f32.xlu0 %v1148
        %v1150 = vpop.xlane.xlu0 %1149
        %v1151 = vsel %vm754, %v838, 0.0
        %1152 = vadd.xlane.f32.xlu0 %v1151
        %v1153 = vpop.xlane.xlu0 %1152
        %v1154 = vsel %vm754, %v841, 0.0
        %1155 = vadd.xlane.f32.xlu0 %v1154
        %v1156 = vpop.xlane.xlu0 %1155
        %v1157 = vsel %vm754, %v846, 0.0
        %1158 = vadd.xlane.f32.xlu0 %v1157
        %v1159 = vpop.xlane.xlu0 %1158
        %v1160 = vsel %vm754, %v849, 0.0
        %1161 = vadd.xlane.f32.xlu0 %v1160
        %v1162 = vpop.xlane.xlu0 %1161
        %v1163 = vsel %vm754, %v854, 0.0
        %1164 = vadd.xlane.f32.xlu0 %v1163
        %v1165 = vpop.xlane.xlu0 %1164
        %v1166 = vsel %vm754, %v857, 0.0
        %1167 = vadd.xlane.f32.xlu0 %v1166
        %v1168 = vpop.xlane.xlu0 %1167
        %v1169 = vsel %vm754, %v862, 0.0
        %1170 = vadd.xlane.f32.xlu0 %v1169
        %v1171 = vpop.xlane.xlu0 %1170
        %v1172 = vsel %vm754, %v865, 0.0
        %1173 = vadd.xlane.f32.xlu0 %v1172
        %v1174 = vpop.xlane.xlu0 %1173
        %v1175 = vsel %vm754, %v870, 0.0
        %1176 = vadd.xlane.f32.xlu0 %v1175
        %v1177 = vpop.xlane.xlu0 %1176
        %v1178 = vsel %vm754, %v873, 0.0
        %1179 = vadd.xlane.f32.xlu0 %v1178
        %v1180 = vpop.xlane.xlu0 %1179
        %v1181 = vrcp.pop 64.0
        %v1182 = vmul.f32 %v1135, %v1181
        %v1183 = vmul.f32 %v1138, %v1181
        %v1184 = vmul.f32 %v1141, %v1181
        %v1185 = vmul.f32 %v1144, %v1181
        %v1186 = vmul.f32 %v1147, %v1181
        %v1187 = vmul.f32 %v1150, %v1181
        %v1188 = vmul.f32 %v1153, %v1181
        %v1189 = vmul.f32 %v1156, %v1181
        %v1190 = vmul.f32 %v1159, %v1181
        %v1191 = vmul.f32 %v1162, %v1181
        %v1192 = vmul.f32 %v1165, %v1181
        %v1193 = vmul.f32 %v1168, %v1181
        %v1194 = vmul.f32 %v1171, %v1181
        %v1195 = vmul.f32 %v1174, %v1181
        %v1196 = vmul.f32 %v1177, %v1181
        %v1197 = vmul.f32 %v1180, %v1181
        %v1198 = vsub.f32 %v814, %v1182
        %v1199 = vsub.f32 %v817, %v1183
        %v1200 = vsub.f32 %v822, %v1184
        %v1201 = vsub.f32 %v825, %v1185
        %v1202 = vsub.f32 %v830, %v1186
        %v1203 = vsub.f32 %v833, %v1187
        %v1204 = vsub.f32 %v838, %v1188
        %v1205 = vsub.f32 %v841, %v1189
        %v1206 = vsub.f32 %v846, %v1190
        %v1207 = vsub.f32 %v849, %v1191
        %v1208 = vsub.f32 %v854, %v1192
        %v1209 = vsub.f32 %v857, %v1193
        %v1210 = vsub.f32 %v862, %v1194
        %v1211 = vsub.f32 %v865, %v1195
        %v1212 = vsub.f32 %v870, %v1196
        %v1213 = vsub.f32 %v873, %v1197
        %v1214 = vmul.f32 %v1198, %v1198
        %v1215 = vmul.f32 %v1199, %v1199
        %v1216 = vmul.f32 %v1200, %v1200
        %v1217 = vmul.f32 %v1201, %v1201
        %v1218 = vmul.f32 %v1202, %v1202
        %v1219 = vmul.f32 %v1203, %v1203
        %v1220 = vmul.f32 %v1204, %v1204
        %v1221 = vmul.f32 %v1205, %v1205
        %v1222 = vmul.f32 %v1206, %v1206
        %v1223 = vmul.f32 %v1207, %v1207
        %v1224 = vmul.f32 %v1208, %v1208
        %v1225 = vmul.f32 %v1209, %v1209
        %v1226 = vmul.f32 %v1210, %v1210
        %v1227 = vmul.f32 %v1211, %v1211
        %v1228 = vmul.f32 %v1212, %v1212
        %v1229 = vmul.f32 %v1213, %v1213
        %v1230 = vsel %vm754, %v1214, 0.0
        %1231 = vadd.xlane.f32.xlu0 %v1230
        %v1232 = vpop.xlane.xlu0 %1231
        %v1233 = vsel %vm754, %v1215, 0.0
        %1234 = vadd.xlane.f32.xlu0 %v1233
        %v1235 = vpop.xlane.xlu0 %1234
        %v1236 = vsel %vm754, %v1216, 0.0
        %1237 = vadd.xlane.f32.xlu0 %v1236
        %v1238 = vpop.xlane.xlu0 %1237
        %v1239 = vsel %vm754, %v1217, 0.0
        %1240 = vadd.xlane.f32.xlu0 %v1239
        %v1241 = vpop.xlane.xlu0 %1240
        %v1242 = vsel %vm754, %v1218, 0.0
        %1243 = vadd.xlane.f32.xlu0 %v1242
        %v1244 = vpop.xlane.xlu0 %1243
        %v1245 = vsel %vm754, %v1219, 0.0
        %1246 = vadd.xlane.f32.xlu0 %v1245
        %v1247 = vpop.xlane.xlu0 %1246
        %v1248 = vsel %vm754, %v1220, 0.0
        %1249 = vadd.xlane.f32.xlu0 %v1248
        %v1250 = vpop.xlane.xlu0 %1249
        %v1251 = vsel %vm754, %v1221, 0.0
        %1252 = vadd.xlane.f32.xlu0 %v1251
        %v1253 = vpop.xlane.xlu0 %1252
        %v1254 = vsel %vm754, %v1222, 0.0
        %1255 = vadd.xlane.f32.xlu0 %v1254
        %v1256 = vpop.xlane.xlu0 %1255
        %v1257 = vsel %vm754, %v1223, 0.0
        %1258 = vadd.xlane.f32.xlu0 %v1257
        %v1259 = vpop.xlane.xlu0 %1258
        %v1260 = vsel %vm754, %v1224, 0.0
        %1261 = vadd.xlane.f32.xlu0 %v1260
        %v1262 = vpop.xlane.xlu0 %1261
        %v1263 = vsel %vm754, %v1225, 0.0
        %1264 = vadd.xlane.f32.xlu0 %v1263
        %v1265 = vpop.xlane.xlu0 %1264
        %v1266 = vsel %vm754, %v1226, 0.0
        %1267 = vadd.xlane.f32.xlu0 %v1266
        %v1268 = vpop.xlane.xlu0 %1267
        %v1269 = vsel %vm754, %v1227, 0.0
        %1270 = vadd.xlane.f32.xlu0 %v1269
        %v1271 = vpop.xlane.xlu0 %1270
        %v1272 = vsel %vm754, %v1228, 0.0
        %1273 = vadd.xlane.f32.xlu0 %v1272
        %v1274 = vpop.xlane.xlu0 %1273
        %v1275 = vsel %vm754, %v1229, 0.0
        %1276 = vadd.xlane.f32.xlu0 %v1275
        %v1277 = vpop.xlane.xlu0 %1276
        %v1278 = vmul.f32 %v1232, %v1181
        %v1279 = vmul.f32 %v1235, %v1181
        %v1280 = vmul.f32 %v1238, %v1181
        %v1281 = vmul.f32 %v1241, %v1181
        %v1282 = vmul.f32 %v1244, %v1181
        %v1283 = vmul.f32 %v1247, %v1181
        %v1284 = vmul.f32 %v1250, %v1181
        %v1285 = vmul.f32 %v1253, %v1181
        %v1286 = vmul.f32 %v1256, %v1181
        %v1287 = vmul.f32 %v1259, %v1181
        %v1288 = vmul.f32 %v1262, %v1181
        %v1289 = vmul.f32 %v1265, %v1181
        %v1290 = vmul.f32 %v1268, %v1181
        %v1291 = vmul.f32 %v1271, %v1181
        %v1292 = vmul.f32 %v1274, %v1181
        %v1293 = vmul.f32 %v1277, %v1181
        %v1294 = vadd.f32 %v1278, 1e-06
        %v1295 = vadd.f32 %v1279, 1e-06
        %v1296 = vadd.f32 %v1280, 1e-06
        %v1297 = vadd.f32 %v1281, 1e-06
        %v1298 = vadd.f32 %v1282, 1e-06
        %v1299 = vadd.f32 %v1283, 1e-06
        %v1300 = vadd.f32 %v1284, 1e-06
        %v1301 = vadd.f32 %v1285, 1e-06
        %v1302 = vadd.f32 %v1286, 1e-06
        %v1303 = vadd.f32 %v1287, 1e-06
        %v1304 = vadd.f32 %v1288, 1e-06
        %v1305 = vadd.f32 %v1289, 1e-06
        %v1306 = vadd.f32 %v1290, 1e-06
        %v1307 = vadd.f32 %v1291, 1e-06
        %v1308 = vadd.f32 %v1292, 1e-06
        %v1309 = vadd.f32 %v1293, 1e-06
        %v1310 = vrsqrt.pop %v1294
        %v1311 = vrsqrt.pop %v1295
        %v1312 = vrsqrt.pop %v1296
        %v1313 = vrsqrt.pop %v1297
        %v1314 = vrsqrt.pop %v1298
        %v1315 = vrsqrt.pop %v1299
        %v1316 = vrsqrt.pop %v1300
        %v1317 = vrsqrt.pop %v1301
        %v1318 = vrsqrt.pop %v1302
        %v1319 = vrsqrt.pop %v1303
        %v1320 = vrsqrt.pop %v1304
        %v1321 = vrsqrt.pop %v1305
        %v1322 = vrsqrt.pop %v1306
        %v1323 = vrsqrt.pop %v1307
        %v1324 = vrsqrt.pop %v1308
        %v1325 = vrsqrt.pop %v1309
        %v1326 = vmul.f32 %v1198, %v1310
        %v1327 = vmul.f32 %v1199, %v1311
        %v1328 = vmul.f32 %v1200, %v1312
        %v1329 = vmul.f32 %v1201, %v1313
        %v1330 = vmul.f32 %v1202, %v1314
        %v1331 = vmul.f32 %v1203, %v1315
        %v1332 = vmul.f32 %v1204, %v1316
        %v1333 = vmul.f32 %v1205, %v1317
        %v1334 = vmul.f32 %v1206, %v1318
        %v1335 = vmul.f32 %v1207, %v1319
        %v1336 = vmul.f32 %v1208, %v1320
        %v1337 = vmul.f32 %v1209, %v1321
        %v1338 = vmul.f32 %v1210, %v1322
        %v1339 = vmul.f32 %v1211, %v1323
        %v1340 = vmul.f32 %v1212, %v1324
        %v1341 = vmul.f32 %v1213, %v1325
        %v1343 = vlaneseq
        %v1344 = vshrl.u32 %v1343, 7
        %v1345 = vsub.s32 0, %v1344
        %v1346 = vrot.slane %v1131, %v1345
        %v1348 = vmul.f32 %v1326, %v1346
        %v1349 = vmul.f32 %v1327, %v1346
        %v1350 = vmul.f32 %v1328, %v1346
        %v1351 = vmul.f32 %v1329, %v1346
        %v1352 = vmul.f32 %v1330, %v1346
        %v1353 = vmul.f32 %v1331, %v1346
        %v1354 = vmul.f32 %v1332, %v1346
        %v1355 = vmul.f32 %v1333, %v1346
        %v1356 = vmul.f32 %v1334, %v1346
        %v1357 = vmul.f32 %v1335, %v1346
        %v1358 = vmul.f32 %v1336, %v1346
        %v1359 = vmul.f32 %v1337, %v1346
        %v1360 = vmul.f32 %v1338, %v1346
        %v1361 = vmul.f32 %v1339, %v1346
        %v1362 = vmul.f32 %v1340, %v1346
        %v1363 = vmul.f32 %v1341, %v1346
        %v1365 = vlaneseq
        %v1366 = vshrl.u32 %v1365, 7
        %v1367 = vsub.s32 0, %v1366
        %v1368 = vrot.slane %v1132, %v1367
        %v1370 = vadd.f32 %v1348, %v1368
        %v1371 = vadd.f32 %v1349, %v1368
        %v1372 = vadd.f32 %v1350, %v1368
        %v1373 = vadd.f32 %v1351, %v1368
        %v1374 = vadd.f32 %v1352, %v1368
        %v1375 = vadd.f32 %v1353, %v1368
        %v1376 = vadd.f32 %v1354, %v1368
        %v1377 = vadd.f32 %v1355, %v1368
        %v1378 = vadd.f32 %v1356, %v1368
        %v1379 = vadd.f32 %v1357, %v1368
        %v1380 = vadd.f32 %v1358, %v1368
        %v1381 = vadd.f32 %v1359, %v1368
        %v1382 = vadd.f32 %v1360, %v1368
        %v1383 = vadd.f32 %v1361, %v1368
        %v1384 = vadd.f32 %v1362, %v1368
        %v1385 = vadd.f32 %v1363, %v1368
        %v1386 = vpack.c.bf16 %v1371, %v1370
        %v1387 = vpack.c.bf16 %v1373, %v1372
        %v1388 = vpack.c.bf16 %v1375, %v1374
        %v1389 = vpack.c.bf16 %v1377, %v1376
        %v1390 = vpack.c.bf16 %v1379, %v1378
        %v1391 = vpack.c.bf16 %v1381, %v1380
        %v1392 = vpack.c.bf16 %v1383, %v1382
        %v1393 = vpack.c.bf16 %v1385, %v1384
        %v1394 = vld [vmem:[%s5] sm:$0xff]
        %v1395 = vld [vmem:[%s5 + $0x8] sm:$0xff]
        %v1396 = vld [vmem:[%s5 + $0x10] sm:$0xff]
        %v1397 = vld [vmem:[%s5 + $0x18] sm:$0xff]
        %v1398 = vld [vmem:[%s5 + $0x20] sm:$0xff]
        %v1399 = vld [vmem:[%s5 + $0x28] sm:$0xff]
        %v1400 = vld [vmem:[%s5 + $0x30] sm:$0xff]
        %v1401 = vld [vmem:[%s5 + $0x38] sm:$0xff]
        %v1402 = vld [vmem:[%s6] sm:$0x3]
        %v1404 = vlaneseq
        %v1405 = vshrl.u32 %v1404, 7
        %v1406 = vsub.s32 0, %v1405
        %v1407 = vrot.slane %v1402, %v1406
        %v1408 = vlaneseq
        %v1409 = vshrl.u32 %v1408, 7
        %v1410 = vsub.s32 1, %v1409
        %v1411 = vrot.slane %v1402, %v1410
        %v1422 = vunpack.c.l.b16 %v1394
        %v1423 = vunpack.c.h.b16 %v1394
        %v1424 = vunpack.c.l.b16 %v1395
        %v1425 = vunpack.c.h.b16 %v1395
        %v1426 = vunpack.c.l.b16 %v1396
        %v1427 = vunpack.c.h.b16 %v1396
        %v1428 = vunpack.c.l.b16 %v1397
        %v1429 = vunpack.c.h.b16 %v1397
        %v1430 = vunpack.c.l.b16 %v1398
        %v1431 = vunpack.c.h.b16 %v1398
        %v1432 = vunpack.c.l.b16 %v1399
        %v1433 = vunpack.c.h.b16 %v1399
        %v1434 = vunpack.c.l.b16 %v1400
        %v1435 = vunpack.c.h.b16 %v1400
        %v1436 = vunpack.c.l.b16 %v1401
        %v1437 = vunpack.c.h.b16 %v1401
        %v1438 = vpack.c.b16 %v1424, %v1422
        %v1439 = vpack.c.b16 %v1425, %v1423
        %v1440 = vpack.c.b16 %v1428, %v1426
        %v1441 = vpack.c.b16 %v1429, %v1427
        %v1442 = vpack.c.b16 %v1432, %v1430
        %v1443 = vpack.c.b16 %v1433, %v1431
        %v1444 = vpack.c.b16 %v1436, %v1434
        %v1445 = vpack.c.b16 %v1437, %v1435
        %v1455 = vsel %vm754, %v1386, 0
        %v1458 = vsel %vm754, %v1387, 0
        %v1461 = vsel %vm754, %v1388, 0
        %v1464 = vsel %vm754, %v1389, 0
        %v1467 = vsel %vm754, %v1390, 0
        %v1470 = vsel %vm754, %v1391, 0
        %v1473 = vsel %vm754, %v1392, 0
        %v1476 = vsel %vm754, %v1393, 0
        %1478 = vmatprep.subr.bf16.mxu0 %v1439
        %1479 = vmatpush1.bf16.msra.mxu0 %v1438
        %1480 = vmatprep.subr.bf16.mxu0 %v1441
        %1481 = vmatpush1.bf16.msra.mxu0 %v1440
        %1482 = vmatprep.subr.bf16.mxu0 %v1443
        %1483 = vmatpush1.bf16.msra.mxu0 %v1442
        %1484 = vmatprep.subr.bf16.mxu0 %v1445
        %1485 = vmatpush1.bf16.msra.mxu0 %v1444
        %1486 = vmatprep.subr.bf16.mxu0 0
        %1487 = vmatpush1.bf16.msra.mxu0 0
        %1488 = vmatprep.subr.bf16.mxu0 0
        %1489 = vmatpush1.bf16.msra.mxu0 0
        %1490 = vmatprep.subr.bf16.mxu0 0
        %1491 = vmatpush1.bf16.msra.mxu0 0
        %1492 = vmatprep.subr.bf16.mxu0 0
        %1493 = vmatpush1.bf16.msra.mxu0 0
        %1494 = vmatprep.subr.bf16.mxu0 0
        %1495 = vmatpush1.bf16.msra.mxu0 0
        %1496 = vmatprep.subr.bf16.mxu0 0
        %1497 = vmatpush1.bf16.msra.mxu0 0
        %1498 = vmatprep.subr.bf16.mxu0 0
        %1499 = vmatpush1.bf16.msra.mxu0 0
        %1500 = vmatprep.subr.bf16.mxu0 0
        %1501 = vmatpush1.bf16.msra.mxu0 0
        %1502 = vmatprep.subr.bf16.mxu0 0
        %1503 = vmatpush1.bf16.msra.mxu0 0
        %1504 = vmatprep.subr.bf16.mxu0 0
        %1505 = vmatpush1.bf16.msra.mxu0 0
        %1506 = vmatprep.subr.bf16.mxu0 0
        %1507 = vmatpush1.bf16.msra.mxu0 0
        %1508 = vmatprep.subr.bf16.mxu0 0
        %1509 = vmatpush1.bf16.msra.mxu0 0
        %1510 = vmatprep.mubr.bf16.mxu0 0
        %1511 = vmatmul.mubr.bf16.gmra.mrb[0].mxu0 %v1455
        %v1512 = vpop.f32.mrb[0].mxu0
        %v1513 = vadd.f32 %v1407, %v1512
        %v1514 = vpop.f32.mrb[0].mxu0
        %v1515 = vadd.f32 %v1411, %v1514
        %v1516 = vpop.f32.mrb[0].mxu0
        %v1517 = vadd.f32 %v1407, %v1516
        %v1518 = vpop.f32.mrb[0].mxu0
        %v1519 = vadd.f32 %v1411, %v1518
        %1520 = vmatprep.mubr.bf16.mxu0 0
        %1521 = vmatmul.mubr.bf16.gmra.mrb[0].mxu0 %v1458
        %v1522 = vpop.f32.mrb[0].mxu0
        %v1523 = vadd.f32 %v1407, %v1522
        %v1524 = vpop.f32.mrb[0].mxu0
        %v1525 = vadd.f32 %v1411, %v1524
        %v1526 = vpop.f32.mrb[0].mxu0
        %v1527 = vadd.f32 %v1407, %v1526
        %v1528 = vpop.f32.mrb[0].mxu0
        %v1529 = vadd.f32 %v1411, %v1528
        %1530 = vmatprep.mubr.bf16.mxu0 0
        %1531 = vmatmul.mubr.bf16.gmra.mrb[0].mxu0 %v1461
        %v1532 = vpop.f32.mrb[0].mxu0
        %v1533 = vadd.f32 %v1407, %v1532
        %v1534 = vpop.f32.mrb[0].mxu0
        %v1535 = vadd.f32 %v1411, %v1534
        %v1536 = vpop.f32.mrb[0].mxu0
        %v1537 = vadd.f32 %v1407, %v1536
        %v1538 = vpop.f32.mrb[0].mxu0
        %v1539 = vadd.f32 %v1411, %v1538
        %1540 = vmatprep.mubr.bf16.mxu0 0
        %1541 = vmatmul.mubr.bf16.gmra.mrb[0].mxu0 %v1464
        %v1542 = vpop.f32.mrb[0].mxu0
        %v1543 = vadd.f32 %v1407, %v1542
        %v1544 = vpop.f32.mrb[0].mxu0
        %v1545 = vadd.f32 %v1411, %v1544
        %v1546 = vpop.f32.mrb[0].mxu0
        %v1547 = vadd.f32 %v1407, %v1546
        %v1548 = vpop.f32.mrb[0].mxu0
        %v1549 = vadd.f32 %v1411, %v1548
        %1550 = vmatprep.mubr.bf16.mxu0 0
        %1551 = vmatmul.mubr.bf16.gmra.mrb[0].mxu0 %v1467
        %v1552 = vpop.f32.mrb[0].mxu0
        %v1553 = vadd.f32 %v1407, %v1552
        %v1554 = vpop.f32.mrb[0].mxu0
        %v1555 = vadd.f32 %v1411, %v1554
        %v1556 = vpop.f32.mrb[0].mxu0
        %v1557 = vadd.f32 %v1407, %v1556
        %v1558 = vpop.f32.mrb[0].mxu0
        %v1559 = vadd.f32 %v1411, %v1558
        %1560 = vmatprep.mubr.bf16.mxu0 0
        %1561 = vmatmul.mubr.bf16.gmra.mrb[0].mxu0 %v1470
        %v1562 = vpop.f32.mrb[0].mxu0
        %v1563 = vadd.f32 %v1407, %v1562
        %v1564 = vpop.f32.mrb[0].mxu0
        %v1565 = vadd.f32 %v1411, %v1564
        %v1566 = vpop.f32.mrb[0].mxu0
        %v1567 = vadd.f32 %v1407, %v1566
        %v1568 = vpop.f32.mrb[0].mxu0
        %v1569 = vadd.f32 %v1411, %v1568
        %1570 = vmatprep.mubr.bf16.mxu0 0
        %1571 = vmatmul.mubr.bf16.gmra.mrb[0].mxu0 %v1473
        %v1572 = vpop.f32.mrb[0].mxu0
        %v1573 = vadd.f32 %v1407, %v1572
        %v1574 = vpop.f32.mrb[0].mxu0
        %v1575 = vadd.f32 %v1411, %v1574
        %v1576 = vpop.f32.mrb[0].mxu0
        %v1577 = vadd.f32 %v1407, %v1576
        %v1578 = vpop.f32.mrb[0].mxu0
        %v1579 = vadd.f32 %v1411, %v1578
        %1580 = vmatprep.mubr.bf16.mxu0 0
        %1581 = vmatmul.mubr.bf16.gmra.mrb[0].mxu0 %v1476
        %v1582 = vpop.f32.mrb[0].mxu0
        %v1583 = vadd.f32 %v1407, %v1582
        %v1584 = vpop.f32.mrb[0].mxu0
        %v1585 = vadd.f32 %v1411, %v1584
        %v1586 = vpop.f32.mrb[0].mxu0
        %v1587 = vadd.f32 %v1407, %v1586
        %v1588 = vpop.f32.mrb[0].mxu0
        %v1589 = vadd.f32 %v1411, %v1588
        %1590 = vdwg.mxu0
        %v1591 = vpack.c.bf16 %v1517, %v1513
        %v1592 = vpack.c.bf16 %v1527, %v1523
        %v1593 = vpack.c.bf16 %v1537, %v1533
        %v1594 = vpack.c.bf16 %v1547, %v1543
        %v1595 = vpack.c.bf16 %v1557, %v1553
        %v1596 = vpack.c.bf16 %v1567, %v1563
        %v1597 = vpack.c.bf16 %v1577, %v1573
        %v1598 = vpack.c.bf16 %v1587, %v1583
        %v1599 = vpack.c.bf16 %v1519, %v1515
        %v1600 = vpack.c.bf16 %v1529, %v1525
        %v1601 = vpack.c.bf16 %v1539, %v1535
        %v1602 = vpack.c.bf16 %v1549, %v1545
        %v1603 = vpack.c.bf16 %v1559, %v1555
        %v1604 = vpack.c.bf16 %v1569, %v1565
        %v1605 = vpack.c.bf16 %v1579, %v1575
        %v1606 = vpack.c.bf16 %v1589, %v1585
        %1615 = vrot.lane.b32.xlu0 %v1591, 64
        %v1616 = vpop.permute.xlu0 %1615
        %1617 = vrot.lane.b32.xlu0 %v1592, 64
        %v1618 = vpop.permute.xlu0 %1617
        %1619 = vrot.lane.b32.xlu0 %v1593, 64
        %v1620 = vpop.permute.xlu0 %1619
        %1621 = vrot.lane.b32.xlu0 %v1594, 64
        %v1622 = vpop.permute.xlu0 %1621
        %1623 = vrot.lane.b32.xlu0 %v1595, 64
        %v1624 = vpop.permute.xlu0 %1623
        %1625 = vrot.lane.b32.xlu0 %v1596, 64
        %v1626 = vpop.permute.xlu0 %1625
        %1627 = vrot.lane.b32.xlu0 %v1597, 64
        %v1628 = vpop.permute.xlu0 %1627
        %1629 = vrot.lane.b32.xlu0 %v1598, 64
        %v1630 = vpop.permute.xlu0 %1629
        %vm1631 = vcmask 130048
        %v1633 = vsel %vm1631, %v1591, 0
        %v1636 = vsel %vm1631, %v1592, 0
        %v1639 = vsel %vm1631, %v1593, 0
        %v1642 = vsel %vm1631, %v1594, 0
        %v1645 = vsel %vm1631, %v1595, 0
        %v1648 = vsel %vm1631, %v1596, 0
        %v1651 = vsel %vm1631, %v1597, 0
        %v1654 = vsel %vm1631, %v1598, 0
        %v1657 = vsel %vm1631, %v1616, 0
        %v1660 = vsel %vm1631, %v1618, 0
        %v1663 = vsel %vm1631, %v1620, 0
        %v1666 = vsel %vm1631, %v1622, 0
        %v1669 = vsel %vm1631, %v1624, 0
        %v1672 = vsel %vm1631, %v1626, 0
        %v1675 = vsel %vm1631, %v1628, 0
        %v1678 = vsel %vm1631, %v1630, 0
        %1680 = vmatprep.subr.bf16.mxu0 0
        %1681 = vmatpush1.bf16.xpose.msra.mxu0 %v1657
        %1682 = vmatprep.subr.bf16.mxu0 0
        %1683 = vmatpush1.bf16.xpose.msra.mxu0 %v1660
        %1684 = vmatprep.subr.bf16.mxu0 0
        %1685 = vmatpush1.bf16.xpose.msra.mxu0 %v1663
        %1686 = vmatprep.subr.bf16.mxu0 0
        %1687 = vmatpush1.bf16.xpose.msra.mxu0 %v1666
        %1688 = vmatprep.subr.bf16.mxu0 0
        %1689 = vmatpush1.bf16.xpose.msra.mxu0 %v1669
        %1690 = vmatprep.subr.bf16.mxu0 0
        %1691 = vmatpush1.bf16.xpose.msra.mxu0 %v1672
        %1692 = vmatprep.subr.bf16.mxu0 0
        %1693 = vmatpush1.bf16.xpose.msra.mxu0 %v1675
        %1694 = vmatprep.subr.bf16.mxu0 0
        %1695 = vmatpush1.bf16.xpose.msra.mxu0 %v1678
        %1696 = vmatprep.subr.bf16.mxu0 0
        %1697 = vmatpush1.bf16.xpose.msra.mxu0 0
        %1698 = vmatprep.subr.bf16.mxu0 0
        %1699 = vmatpush1.bf16.xpose.msra.mxu0 0
        %1700 = vmatprep.subr.bf16.mxu0 0
        %1701 = vmatpush1.bf16.xpose.msra.mxu0 0
        %1702 = vmatprep.subr.bf16.mxu0 0
        %1703 = vmatpush1.bf16.xpose.msra.mxu0 0
        %1704 = vmatprep.subr.bf16.mxu0 0
        %1705 = vmatpush1.bf16.xpose.msra.mxu0 0
        %1706 = vmatprep.subr.bf16.mxu0 0
        %1707 = vmatpush1.bf16.xpose.msra.mxu0 0
        %1708 = vmatprep.subr.bf16.mxu0 0
        %1709 = vmatpush1.bf16.xpose.msra.mxu0 0
        %1710 = vmatprep.subr.bf16.mxu0 0
        %1711 = vmatpush1.bf16.xpose.msra.mxu0 0
        %1712 = vmatprep.mubr.bf16.mxu0 0
        %1713 = vmatmul.mubr.bf16.gmra.mrb[0].mxu0 %v1633
        %v1714 = vpop.f32.mrb[0].mxu0
        %v1715 = vadd.f32 %v1115, %v1714
        %v1716 = vpop.f32.mrb[0].mxu0
        %v1717 = vpop.f32.mrb[0].mxu0
        %v1718 = vadd.f32 %v1116, %v1717
        %v1719 = vpop.f32.mrb[0].mxu0
        %1720 = vmatprep.mubr.bf16.mxu0 0
        %1721 = vmatmul.mubr.bf16.gmra.mrb[0].mxu0 %v1636
        %v1722 = vpop.f32.mrb[0].mxu0
        %v1723 = vadd.f32 %v1117, %v1722
        %v1724 = vpop.f32.mrb[0].mxu0
        %v1725 = vpop.f32.mrb[0].mxu0
        %v1726 = vadd.f32 %v1118, %v1725
        %v1727 = vpop.f32.mrb[0].mxu0
        %1728 = vmatprep.mubr.bf16.mxu0 0
        %1729 = vmatmul.mubr.bf16.gmra.mrb[0].mxu0 %v1639
        %v1730 = vpop.f32.mrb[0].mxu0
        %v1731 = vadd.f32 %v1119, %v1730
        %v1732 = vpop.f32.mrb[0].mxu0
        %v1733 = vpop.f32.mrb[0].mxu0
        %v1734 = vadd.f32 %v1120, %v1733
        %v1735 = vpop.f32.mrb[0].mxu0
        %1736 = vmatprep.mubr.bf16.mxu0 0
        %1737 = vmatmul.mubr.bf16.gmra.mrb[0].mxu0 %v1642
        %v1738 = vpop.f32.mrb[0].mxu0
        %v1739 = vadd.f32 %v1121, %v1738
        %v1740 = vpop.f32.mrb[0].mxu0
        %v1741 = vpop.f32.mrb[0].mxu0
        %v1742 = vadd.f32 %v1122, %v1741
        %v1743 = vpop.f32.mrb[0].mxu0
        %1744 = vmatprep.mubr.bf16.mxu0 0
        %1745 = vmatmul.mubr.bf16.gmra.mrb[0].mxu0 %v1645
        %v1746 = vpop.f32.mrb[0].mxu0
        %v1747 = vadd.f32 %v1123, %v1746
        %v1748 = vpop.f32.mrb[0].mxu0
        %v1749 = vpop.f32.mrb[0].mxu0
        %v1750 = vadd.f32 %v1124, %v1749
        %v1751 = vpop.f32.mrb[0].mxu0
        %1752 = vmatprep.mubr.bf16.mxu0 0
        %1753 = vmatmul.mubr.bf16.gmra.mrb[0].mxu0 %v1648
        %v1754 = vpop.f32.mrb[0].mxu0
        %v1755 = vadd.f32 %v1125, %v1754
        %v1756 = vpop.f32.mrb[0].mxu0
        %v1757 = vpop.f32.mrb[0].mxu0
        %v1758 = vadd.f32 %v1126, %v1757
        %v1759 = vpop.f32.mrb[0].mxu0
        %1760 = vmatprep.mubr.bf16.mxu0 0
        %1761 = vmatmul.mubr.bf16.gmra.mrb[0].mxu0 %v1651
        %v1762 = vpop.f32.mrb[0].mxu0
        %v1763 = vadd.f32 %v1127, %v1762
        %v1764 = vpop.f32.mrb[0].mxu0
        %v1765 = vpop.f32.mrb[0].mxu0
        %v1766 = vadd.f32 %v1128, %v1765
        %v1767 = vpop.f32.mrb[0].mxu0
        %1768 = vmatprep.mubr.bf16.mxu0 0
        %1769 = vmatmul.mubr.bf16.gmra.mrb[0].mxu0 %v1654
        %v1770 = vpop.f32.mrb[0].mxu0
        %v1771 = vadd.f32 %v1129, %v1770
        %v1772 = vpop.f32.mrb[0].mxu0
        %v1773 = vpop.f32.mrb[0].mxu0
        %v1774 = vadd.f32 %v1130, %v1773
        %v1775 = vpop.f32.mrb[0].mxu0
        %1776 = vdwg.mxu0
        %1777 = vmax.xlane.f32.xlu0 %v1715
        %v1778 = vpop.xlane.xlu0 %1777
        %1779 = vmax.xlane.f32.xlu0 %v1718
        %v1780 = vpop.xlane.xlu0 %1779
        %1781 = vmax.xlane.f32.xlu0 %v1723
        %v1782 = vpop.xlane.xlu0 %1781
        %1783 = vmax.xlane.f32.xlu0 %v1726
        %v1784 = vpop.xlane.xlu0 %1783
        %1785 = vmax.xlane.f32.xlu0 %v1731
        %v1786 = vpop.xlane.xlu0 %1785
        %1787 = vmax.xlane.f32.xlu0 %v1734
        %v1788 = vpop.xlane.xlu0 %1787
        %1789 = vmax.xlane.f32.xlu0 %v1739
        %v1790 = vpop.xlane.xlu0 %1789
        %1791 = vmax.xlane.f32.xlu0 %v1742
        %v1792 = vpop.xlane.xlu0 %1791
        %1793 = vmax.xlane.f32.xlu0 %v1747
        %v1794 = vpop.xlane.xlu0 %1793
        %1795 = vmax.xlane.f32.xlu0 %v1750
        %v1796 = vpop.xlane.xlu0 %1795
        %1797 = vmax.xlane.f32.xlu0 %v1755
        %v1798 = vpop.xlane.xlu0 %1797
        %1799 = vmax.xlane.f32.xlu0 %v1758
        %v1800 = vpop.xlane.xlu0 %1799
        %1801 = vmax.xlane.f32.xlu0 %v1763
        %v1802 = vpop.xlane.xlu0 %1801
        %1803 = vmax.xlane.f32.xlu0 %v1766
        %v1804 = vpop.xlane.xlu0 %1803
        %1805 = vmax.xlane.f32.xlu0 %v1771
        %v1806 = vpop.xlane.xlu0 %1805
        %1807 = vmax.xlane.f32.xlu0 %v1774
        %v1808 = vpop.xlane.xlu0 %1807
        %v1809 = vsub.f32 %v1715, %v1778
        %v1810 = vsub.f32 %v1718, %v1780
        %v1811 = vsub.f32 %v1723, %v1782
        %v1812 = vsub.f32 %v1726, %v1784
        %v1813 = vsub.f32 %v1731, %v1786
        %v1814 = vsub.f32 %v1734, %v1788
        %v1815 = vsub.f32 %v1739, %v1790
        %v1816 = vsub.f32 %v1742, %v1792
        %v1817 = vsub.f32 %v1747, %v1794
        %v1818 = vsub.f32 %v1750, %v1796
        %v1819 = vsub.f32 %v1755, %v1798
        %v1820 = vsub.f32 %v1758, %v1800
        %v1821 = vsub.f32 %v1763, %v1802
        %v1822 = vsub.f32 %v1766, %v1804
        %v1823 = vsub.f32 %v1771, %v1806
        %v1824 = vsub.f32 %v1774, %v1808
        %v1825 = vmul.f32 %v1809, 1.442695
        %v1826 = vpow.pop %v1825
        %v1827 = vmul.f32 %v1810, 1.442695
        %v1828 = vpow.pop %v1827
        %v1829 = vmul.f32 %v1811, 1.442695
        %v1830 = vpow.pop %v1829
        %v1831 = vmul.f32 %v1812, 1.442695
        %v1832 = vpow.pop %v1831
        %v1833 = vmul.f32 %v1813, 1.442695
        %v1834 = vpow.pop %v1833
        %v1835 = vmul.f32 %v1814, 1.442695
        %v1836 = vpow.pop %v1835
        %v1837 = vmul.f32 %v1815, 1.442695
        %v1838 = vpow.pop %v1837
        %v1839 = vmul.f32 %v1816, 1.442695
        %v1840 = vpow.pop %v1839
        %v1841 = vmul.f32 %v1817, 1.442695
        %v1842 = vpow.pop %v1841
        %v1843 = vmul.f32 %v1818, 1.442695
        %v1844 = vpow.pop %v1843
        %v1845 = vmul.f32 %v1819, 1.442695
        %v1846 = vpow.pop %v1845
        %v1847 = vmul.f32 %v1820, 1.442695
        %v1848 = vpow.pop %v1847
        %v1849 = vmul.f32 %v1821, 1.442695
        %v1850 = vpow.pop %v1849
        %v1851 = vmul.f32 %v1822, 1.442695
        %v1852 = vpow.pop %v1851
        %v1853 = vmul.f32 %v1823, 1.442695
        %v1854 = vpow.pop %v1853
        %v1855 = vmul.f32 %v1824, 1.442695
        %v1856 = vpow.pop %v1855
        %1857 = vadd.xlane.f32.xlu0 %v1826
        %v1858 = vpop.xlane.xlu0 %1857
        %1859 = vadd.xlane.f32.xlu0 %v1828
        %v1860 = vpop.xlane.xlu0 %1859
        %1861 = vadd.xlane.f32.xlu0 %v1830
        %v1862 = vpop.xlane.xlu0 %1861
        %1863 = vadd.xlane.f32.xlu0 %v1832
        %v1864 = vpop.xlane.xlu0 %1863
        %1865 = vadd.xlane.f32.xlu0 %v1834
        %v1866 = vpop.xlane.xlu0 %1865
        %1867 = vadd.xlane.f32.xlu0 %v1836
        %v1868 = vpop.xlane.xlu0 %1867
        %1869 = vadd.xlane.f32.xlu0 %v1838
        %v1870 = vpop.xlane.xlu0 %1869
        %1871 = vadd.xlane.f32.xlu0 %v1840
        %v1872 = vpop.xlane.xlu0 %1871
        %1873 = vadd.xlane.f32.xlu0 %v1842
        %v1874 = vpop.xlane.xlu0 %1873
        %1875 = vadd.xlane.f32.xlu0 %v1844
        %v1876 = vpop.xlane.xlu0 %1875
        %1877 = vadd.xlane.f32.xlu0 %v1846
        %v1878 = vpop.xlane.xlu0 %1877
        %1879 = vadd.xlane.f32.xlu0 %v1848
        %v1880 = vpop.xlane.xlu0 %1879
        %1881 = vadd.xlane.f32.xlu0 %v1850
        %v1882 = vpop.xlane.xlu0 %1881
        %1883 = vadd.xlane.f32.xlu0 %v1852
        %v1884 = vpop.xlane.xlu0 %1883
        %1885 = vadd.xlane.f32.xlu0 %v1854
        %v1886 = vpop.xlane.xlu0 %1885
        %1887 = vadd.xlane.f32.xlu0 %v1856
        %v1888 = vpop.xlane.xlu0 %1887
        %v1889 = vrcp.pop %v1858
        %v1890 = vrcp.pop %v1860
        %v1891 = vrcp.pop %v1862
        %v1892 = vrcp.pop %v1864
        %v1893 = vrcp.pop %v1866
        %v1894 = vrcp.pop %v1868
        %v1895 = vrcp.pop %v1870
        %v1896 = vrcp.pop %v1872
        %v1897 = vrcp.pop %v1874
        %v1898 = vrcp.pop %v1876
        %v1899 = vrcp.pop %v1878
        %v1900 = vrcp.pop %v1880
        %v1901 = vrcp.pop %v1882
        %v1902 = vrcp.pop %v1884
        %v1903 = vrcp.pop %v1886
        %v1904 = vrcp.pop %v1888
        %v1905 = vmul.f32 %v1826, %v1889
        %v1906 = vmul.f32 %v1828, %v1890
        %v1907 = vmul.f32 %v1830, %v1891
        %v1908 = vmul.f32 %v1832, %v1892
        %v1909 = vmul.f32 %v1834, %v1893
        %v1910 = vmul.f32 %v1836, %v1894
        %v1911 = vmul.f32 %v1838, %v1895
        %v1912 = vmul.f32 %v1840, %v1896
        %v1913 = vmul.f32 %v1842, %v1897
        %v1914 = vmul.f32 %v1844, %v1898
        %v1915 = vmul.f32 %v1846, %v1899
        %v1916 = vmul.f32 %v1848, %v1900
        %v1917 = vmul.f32 %v1850, %v1901
        %v1918 = vmul.f32 %v1852, %v1902
        %v1919 = vmul.f32 %v1854, %v1903
        %v1920 = vmul.f32 %v1856, %v1904
        %v1921 = vpack.c.bf16 %v1906, %v1905
        %v1922 = vpack.c.bf16 %v1908, %v1907
        %v1923 = vpack.c.bf16 %v1910, %v1909
        %v1924 = vpack.c.bf16 %v1912, %v1911
        %v1925 = vpack.c.bf16 %v1914, %v1913
        %v1926 = vpack.c.bf16 %v1916, %v1915
        %v1927 = vpack.c.bf16 %v1918, %v1917
        %v1928 = vpack.c.bf16 %v1920, %v1919
        %1929 = vmatprep.subr.bf16.mxu0 0
        %1930 = vmatpush1.bf16.msra.mxu0 %v1599
        %1931 = vmatprep.subr.bf16.mxu0 0
        %1932 = vmatpush1.bf16.msra.mxu0 %v1600
        %1933 = vmatprep.subr.bf16.mxu0 0
        %1934 = vmatpush1.bf16.msra.mxu0 %v1601
        %1935 = vmatprep.subr.bf16.mxu0 0
        %1936 = vmatpush1.bf16.msra.mxu0 %v1602
        %1937 = vmatprep.subr.bf16.mxu0 0
        %1938 = vmatpush1.bf16.msra.mxu0 %v1603
        %1939 = vmatprep.subr.bf16.mxu0 0
        %1940 = vmatpush1.bf16.msra.mxu0 %v1604
        %1941 = vmatprep.subr.bf16.mxu0 0
        %1942 = vmatpush1.bf16.msra.mxu0 %v1605
        %1943 = vmatprep.subr.bf16.mxu0 0
        %1944 = vmatpush1.bf16.msra.mxu0 %v1606
        %1945 = vmatprep.subr.bf16.mxu0 0
        %1946 = vmatpush1.bf16.msra.mxu0 0
        %1947 = vmatprep.subr.bf16.mxu0 0
        %1948 = vmatpush1.bf16.msra.mxu0 0
        %1949 = vmatprep.subr.bf16.mxu0 0
        %1950 = vmatpush1.bf16.msra.mxu0 0
        %1951 = vmatprep.subr.bf16.mxu0 0
        %1952 = vmatpush1.bf16.msra.mxu0 0
        %1953 = vmatprep.subr.bf16.mxu0 0
        %1954 = vmatpush1.bf16.msra.mxu0 0
        %1955 = vmatprep.subr.bf16.mxu0 0
        %1956 = vmatpush1.bf16.msra.mxu0 0
        %1957 = vmatprep.subr.bf16.mxu0 0
        %1958 = vmatpush1.bf16.msra.mxu0 0
        %1959 = vmatprep.subr.bf16.mxu0 0
        %1960 = vmatpush1.bf16.msra.mxu0 0
        %1961 = vmatprep.mubr.bf16.mxu0 0
        %1962 = vmatmul.mubr.bf16.gmra.mrb[0].mxu0 %v1921
        %v1963 = vpop.f32.mrb[0].mxu0
        %v1964 = vadd.f32 0.0, %v1963
        %v1965 = vpop.f32.mrb[0].mxu0
        %v1966 = vpop.f32.mrb[0].mxu0
        %v1967 = vadd.f32 0.0, %v1966
        %v1968 = vpop.f32.mrb[0].mxu0
        %1969 = vmatprep.mubr.bf16.mxu0 0
        %1970 = vmatmul.mubr.bf16.gmra.mrb[0].mxu0 %v1922
        %v1971 = vpop.f32.mrb[0].mxu0
        %v1972 = vadd.f32 0.0, %v1971
        %v1973 = vpop.f32.mrb[0].mxu0
        %v1974 = vpop.f32.mrb[0].mxu0
        %v1975 = vadd.f32 0.0, %v1974
        %v1976 = vpop.f32.mrb[0].mxu0
        %1977 = vmatprep.mubr.bf16.mxu0 0
        %1978 = vmatmul.mubr.bf16.gmra.mrb[0].mxu0 %v1923
        %v1979 = vpop.f32.mrb[0].mxu0
        %v1980 = vadd.f32 0.0, %v1979
        %v1981 = vpop.f32.mrb[0].mxu0
        %v1982 = vpop.f32.mrb[0].mxu0
        %v1983 = vadd.f32 0.0, %v1982
        %v1984 = vpop.f32.mrb[0].mxu0
        %1985 = vmatprep.mubr.bf16.mxu0 0
        %1986 = vmatmul.mubr.bf16.gmra.mrb[0].mxu0 %v1924
        %v1987 = vpop.f32.mrb[0].mxu0
        %v1988 = vadd.f32 0.0, %v1987
        %v1989 = vpop.f32.mrb[0].mxu0
        %v1990 = vpop.f32.mrb[0].mxu0
        %v1991 = vadd.f32 0.0, %v1990
        %v1992 = vpop.f32.mrb[0].mxu0
        %1993 = vmatprep.mubr.bf16.mxu0 0
        %1994 = vmatmul.mubr.bf16.gmra.mrb[0].mxu0 %v1925
        %v1995 = vpop.f32.mrb[0].mxu0
        %v1996 = vadd.f32 0.0, %v1995
        %v1997 = vpop.f32.mrb[0].mxu0
        %v1998 = vpop.f32.mrb[0].mxu0
        %v1999 = vadd.f32 0.0, %v1998
        %v2000 = vpop.f32.mrb[0].mxu0
        %2001 = vmatprep.mubr.bf16.mxu0 0
        %2002 = vmatmul.mubr.bf16.gmra.mrb[0].mxu0 %v1926
        %v2003 = vpop.f32.mrb[0].mxu0
        %v2004 = vadd.f32 0.0, %v2003
        %v2005 = vpop.f32.mrb[0].mxu0
        %v2006 = vpop.f32.mrb[0].mxu0
        %v2007 = vadd.f32 0.0, %v2006
        %v2008 = vpop.f32.mrb[0].mxu0
        %2009 = vmatprep.mubr.bf16.mxu0 0
        %2010 = vmatmul.mubr.bf16.gmra.mrb[0].mxu0 %v1927
        %v2011 = vpop.f32.mrb[0].mxu0
        %v2012 = vadd.f32 0.0, %v2011
        %v2013 = vpop.f32.mrb[0].mxu0
        %v2014 = vpop.f32.mrb[0].mxu0
        %v2015 = vadd.f32 0.0, %v2014
        %v2016 = vpop.f32.mrb[0].mxu0
        %2017 = vmatprep.mubr.bf16.mxu0 0
        %2018 = vmatmul.mubr.bf16.gmra.mrb[0].mxu0 %v1928
        %v2019 = vpop.f32.mrb[0].mxu0
        %v2020 = vadd.f32 0.0, %v2019
        %v2021 = vpop.f32.mrb[0].mxu0
        %v2022 = vpop.f32.mrb[0].mxu0
        %v2023 = vadd.f32 0.0, %v2022
        %v2024 = vpop.f32.mrb[0].mxu0
        %2025 = vdwg.mxu0
        %2026 = vrot.lane.b32.xlu0 %v1591, 112
        %v2027 = vpop.permute.xlu0 %2026
        %2028 = vrot.lane.b32.xlu0 %v1592, 112
        %v2029 = vpop.permute.xlu0 %2028
        %2030 = vrot.lane.b32.xlu0 %v1593, 112
        %v2031 = vpop.permute.xlu0 %2030
        %2032 = vrot.lane.b32.xlu0 %v1594, 112
        %v2033 = vpop.permute.xlu0 %2032
        %2034 = vrot.lane.b32.xlu0 %v1595, 112
        %v2035 = vpop.permute.xlu0 %2034
        %2036 = vrot.lane.b32.xlu0 %v1596, 112
        %v2037 = vpop.permute.xlu0 %2036
        %2038 = vrot.lane.b32.xlu0 %v1597, 112
        %v2039 = vpop.permute.xlu0 %2038
        %2040 = vrot.lane.b32.xlu0 %v1598, 112
        %v2041 = vpop.permute.xlu0 %2040
        %2042 = vrot.lane.b32.xlu0 %v1591, 48
        %v2043 = vpop.permute.xlu0 %2042
        %2044 = vrot.lane.b32.xlu0 %v1592, 48
        %v2045 = vpop.permute.xlu0 %2044
        %2046 = vrot.lane.b32.xlu0 %v1593, 48
        %v2047 = vpop.permute.xlu0 %2046
        %2048 = vrot.lane.b32.xlu0 %v1594, 48
        %v2049 = vpop.permute.xlu0 %2048
        %2050 = vrot.lane.b32.xlu0 %v1595, 48
        %v2051 = vpop.permute.xlu0 %2050
        %2052 = vrot.lane.b32.xlu0 %v1596, 48
        %v2053 = vpop.permute.xlu0 %2052
        %2054 = vrot.lane.b32.xlu0 %v1597, 48
        %v2055 = vpop.permute.xlu0 %2054
        %2056 = vrot.lane.b32.xlu0 %v1598, 48
        %v2057 = vpop.permute.xlu0 %2056
        %v2059 = vsel %vm1631, %v2027, 0
        %v2062 = vsel %vm1631, %v2029, 0
        %v2065 = vsel %vm1631, %v2031, 0
        %v2068 = vsel %vm1631, %v2033, 0
        %v2071 = vsel %vm1631, %v2035, 0
        %v2074 = vsel %vm1631, %v2037, 0
        %v2077 = vsel %vm1631, %v2039, 0
        %v2080 = vsel %vm1631, %v2041, 0
        %v2083 = vsel %vm1631, %v2043, 0
        %v2086 = vsel %vm1631, %v2045, 0
        %v2089 = vsel %vm1631, %v2047, 0
        %v2092 = vsel %vm1631, %v2049, 0
        %v2095 = vsel %vm1631, %v2051, 0
        %v2098 = vsel %vm1631, %v2053, 0
        %v2101 = vsel %vm1631, %v2055, 0
        %v2104 = vsel %vm1631, %v2057, 0
        %2106 = vmatprep.subr.bf16.mxu0 0
        %2107 = vmatpush1.bf16.xpose.msra.mxu0 %v2083
        %2108 = vmatprep.subr.bf16.mxu0 0
        %2109 = vmatpush1.bf16.xpose.msra.mxu0 %v2086
        %2110 = vmatprep.subr.bf16.mxu0 0
        %2111 = vmatpush1.bf16.xpose.msra.mxu0 %v2089
        %2112 = vmatprep.subr.bf16.mxu0 0
        %2113 = vmatpush1.bf16.xpose.msra.mxu0 %v2092
        %2114 = vmatprep.subr.bf16.mxu0 0
        %2115 = vmatpush1.bf16.xpose.msra.mxu0 %v2095
        %2116 = vmatprep.subr.bf16.mxu0 0
        %2117 = vmatpush1.bf16.xpose.msra.mxu0 %v2098
        %2118 = vmatprep.subr.bf16.mxu0 0
        %2119 = vmatpush1.bf16.xpose.msra.mxu0 %v2101
        %2120 = vmatprep.subr.bf16.mxu0 0
        %2121 = vmatpush1.bf16.xpose.msra.mxu0 %v2104
        %2122 = vmatprep.subr.bf16.mxu0 0
        %2123 = vmatpush1.bf16.xpose.msra.mxu0 0
        %2124 = vmatprep.subr.bf16.mxu0 0
        %2125 = vmatpush1.bf16.xpose.msra.mxu0 0
        %2126 = vmatprep.subr.bf16.mxu0 0
        %2127 = vmatpush1.bf16.xpose.msra.mxu0 0
        %2128 = vmatprep.subr.bf16.mxu0 0
        %2129 = vmatpush1.bf16.xpose.msra.mxu0 0
        %2130 = vmatprep.subr.bf16.mxu0 0
        %2131 = vmatpush1.bf16.xpose.msra.mxu0 0
        %2132 = vmatprep.subr.bf16.mxu0 0
        %2133 = vmatpush1.bf16.xpose.msra.mxu0 0
        %2134 = vmatprep.subr.bf16.mxu0 0
        %2135 = vmatpush1.bf16.xpose.msra.mxu0 0
        %2136 = vmatprep.subr.bf16.mxu0 0
        %2137 = vmatpush1.bf16.xpose.msra.mxu0 0
        %2138 = vmatprep.mubr.bf16.mxu0 0
        %2139 = vmatmul.mubr.bf16.gmra.mrb[0].mxu0 %v2059
        %v2140 = vpop.f32.mrb[0].mxu0
        %v2141 = vadd.f32 %v1115, %v2140
        %v2142 = vpop.f32.mrb[0].mxu0
        %v2143 = vpop.f32.mrb[0].mxu0
        %v2144 = vadd.f32 %v1116, %v2143
        %v2145 = vpop.f32.mrb[0].mxu0
        %2146 = vmatprep.mubr.bf16.mxu0 0
        %2147 = vmatmul.mubr.bf16.gmra.mrb[0].mxu0 %v2062
        %v2148 = vpop.f32.mrb[0].mxu0
        %v2149 = vadd.f32 %v1117, %v2148
        %v2150 = vpop.f32.mrb[0].mxu0
        %v2151 = vpop.f32.mrb[0].mxu0
        %v2152 = vadd.f32 %v1118, %v2151
        %v2153 = vpop.f32.mrb[0].mxu0
        %2154 = vmatprep.mubr.bf16.mxu0 0
        %2155 = vmatmul.mubr.bf16.gmra.mrb[0].mxu0 %v2065
        %v2156 = vpop.f32.mrb[0].mxu0
        %v2157 = vadd.f32 %v1119, %v2156
        %v2158 = vpop.f32.mrb[0].mxu0
        %v2159 = vpop.f32.mrb[0].mxu0
        %v2160 = vadd.f32 %v1120, %v2159
        %v2161 = vpop.f32.mrb[0].mxu0
        %2162 = vmatprep.mubr.bf16.mxu0 0
        %2163 = vmatmul.mubr.bf16.gmra.mrb[0].mxu0 %v2068
        %v2164 = vpop.f32.mrb[0].mxu0
        %v2165 = vadd.f32 %v1121, %v2164
        %v2166 = vpop.f32.mrb[0].mxu0
        %v2167 = vpop.f32.mrb[0].mxu0
        %v2168 = vadd.f32 %v1122, %v2167
        %v2169 = vpop.f32.mrb[0].mxu0
        %2170 = vmatprep.mubr.bf16.mxu0 0
        %2171 = vmatmul.mubr.bf16.gmra.mrb[0].mxu0 %v2071
        %v2172 = vpop.f32.mrb[0].mxu0
        %v2173 = vadd.f32 %v1123, %v2172
        %v2174 = vpop.f32.mrb[0].mxu0
        %v2175 = vpop.f32.mrb[0].mxu0
        %v2176 = vadd.f32 %v1124, %v2175
        %v2177 = vpop.f32.mrb[0].mxu0
        %2178 = vmatprep.mubr.bf16.mxu0 0
        %2179 = vmatmul.mubr.bf16.gmra.mrb[0].mxu0 %v2074
        %v2180 = vpop.f32.mrb[0].mxu0
        %v2181 = vadd.f32 %v1125, %v2180
        %v2182 = vpop.f32.mrb[0].mxu0
        %v2183 = vpop.f32.mrb[0].mxu0
        %v2184 = vadd.f32 %v1126, %v2183
        %v2185 = vpop.f32.mrb[0].mxu0
        %2186 = vmatprep.mubr.bf16.mxu0 0
        %2187 = vmatmul.mubr.bf16.gmra.mrb[0].mxu0 %v2077
        %v2188 = vpop.f32.mrb[0].mxu0
        %v2189 = vadd.f32 %v1127, %v2188
        %v2190 = vpop.f32.mrb[0].mxu0
        %v2191 = vpop.f32.mrb[0].mxu0
        %v2192 = vadd.f32 %v1128, %v2191
        %v2193 = vpop.f32.mrb[0].mxu0
        %2194 = vmatprep.mubr.bf16.mxu0 0
        %2195 = vmatmul.mubr.bf16.gmra.mrb[0].mxu0 %v2080
        %v2196 = vpop.f32.mrb[0].mxu0
        %v2197 = vadd.f32 %v1129, %v2196
        %v2198 = vpop.f32.mrb[0].mxu0
        %v2199 = vpop.f32.mrb[0].mxu0
        %v2200 = vadd.f32 %v1130, %v2199
        %v2201 = vpop.f32.mrb[0].mxu0
        %2202 = vdwg.mxu0
        %2203 = vmax.xlane.f32.xlu0 %v2141
        %v2204 = vpop.xlane.xlu0 %2203
        %2205 = vmax.xlane.f32.xlu0 %v2144
        %v2206 = vpop.xlane.xlu0 %2205
        %2207 = vmax.xlane.f32.xlu0 %v2149
        %v2208 = vpop.xlane.xlu0 %2207
        %2209 = vmax.xlane.f32.xlu0 %v2152
        %v2210 = vpop.xlane.xlu0 %2209
        %2211 = vmax.xlane.f32.xlu0 %v2157
        %v2212 = vpop.xlane.xlu0 %2211
        %2213 = vmax.xlane.f32.xlu0 %v2160
        %v2214 = vpop.xlane.xlu0 %2213
        %2215 = vmax.xlane.f32.xlu0 %v2165
        %v2216 = vpop.xlane.xlu0 %2215
        %2217 = vmax.xlane.f32.xlu0 %v2168
        %v2218 = vpop.xlane.xlu0 %2217
        %2219 = vmax.xlane.f32.xlu0 %v2173
        %v2220 = vpop.xlane.xlu0 %2219
        %2221 = vmax.xlane.f32.xlu0 %v2176
        %v2222 = vpop.xlane.xlu0 %2221
        %2223 = vmax.xlane.f32.xlu0 %v2181
        %v2224 = vpop.xlane.xlu0 %2223
        %2225 = vmax.xlane.f32.xlu0 %v2184
        %v2226 = vpop.xlane.xlu0 %2225
        %2227 = vmax.xlane.f32.xlu0 %v2189
        %v2228 = vpop.xlane.xlu0 %2227
        %2229 = vmax.xlane.f32.xlu0 %v2192
        %v2230 = vpop.xlane.xlu0 %2229
        %2231 = vmax.xlane.f32.xlu0 %v2197
        %v2232 = vpop.xlane.xlu0 %2231
        %2233 = vmax.xlane.f32.xlu0 %v2200
        %v2234 = vpop.xlane.xlu0 %2233
        %v2235 = vsub.f32 %v2141, %v2204
        %v2236 = vsub.f32 %v2144, %v2206
        %v2237 = vsub.f32 %v2149, %v2208
        %v2238 = vsub.f32 %v2152, %v2210
        %v2239 = vsub.f32 %v2157, %v2212
        %v2240 = vsub.f32 %v2160, %v2214
        %v2241 = vsub.f32 %v2165, %v2216
        %v2242 = vsub.f32 %v2168, %v2218
        %v2243 = vsub.f32 %v2173, %v2220
        %v2244 = vsub.f32 %v2176, %v2222
        %v2245 = vsub.f32 %v2181, %v2224
        %v2246 = vsub.f32 %v2184, %v2226
        %v2247 = vsub.f32 %v2189, %v2228
        %v2248 = vsub.f32 %v2192, %v2230
        %v2249 = vsub.f32 %v2197, %v2232
        %v2250 = vsub.f32 %v2200, %v2234
        %v2251 = vmul.f32 %v2235, 1.442695
        %v2252 = vpow.pop %v2251
        %v2253 = vmul.f32 %v2236, 1.442695
        %v2254 = vpow.pop %v2253
        %v2255 = vmul.f32 %v2237, 1.442695
        %v2256 = vpow.pop %v2255
        %v2257 = vmul.f32 %v2238, 1.442695
        %v2258 = vpow.pop %v2257
        %v2259 = vmul.f32 %v2239, 1.442695
        %v2260 = vpow.pop %v2259
        %v2261 = vmul.f32 %v2240, 1.442695
        %v2262 = vpow.pop %v2261
        %v2263 = vmul.f32 %v2241, 1.442695
        %v2264 = vpow.pop %v2263
        %v2265 = vmul.f32 %v2242, 1.442695
        %v2266 = vpow.pop %v2265
        %v2267 = vmul.f32 %v2243, 1.442695
        %v2268 = vpow.pop %v2267
        %v2269 = vmul.f32 %v2244, 1.442695
        %v2270 = vpow.pop %v2269
        %v2271 = vmul.f32 %v2245, 1.442695
        %v2272 = vpow.pop %v2271
        %v2273 = vmul.f32 %v2246, 1.442695
        %v2274 = vpow.pop %v2273
        %v2275 = vmul.f32 %v2247, 1.442695
        %v2276 = vpow.pop %v2275
        %v2277 = vmul.f32 %v2248, 1.442695
        %v2278 = vpow.pop %v2277
        %v2279 = vmul.f32 %v2249, 1.442695
        %v2280 = vpow.pop %v2279
        %v2281 = vmul.f32 %v2250, 1.442695
        %v2282 = vpow.pop %v2281
        %2283 = vadd.xlane.f32.xlu0 %v2252
        %v2284 = vpop.xlane.xlu0 %2283
        %2285 = vadd.xlane.f32.xlu0 %v2254
        %v2286 = vpop.xlane.xlu0 %2285
        %2287 = vadd.xlane.f32.xlu0 %v2256
        %v2288 = vpop.xlane.xlu0 %2287
        %2289 = vadd.xlane.f32.xlu0 %v2258
        %v2290 = vpop.xlane.xlu0 %2289
        %2291 = vadd.xlane.f32.xlu0 %v2260
        %v2292 = vpop.xlane.xlu0 %2291
        %2293 = vadd.xlane.f32.xlu0 %v2262
        %v2294 = vpop.xlane.xlu0 %2293
        %2295 = vadd.xlane.f32.xlu0 %v2264
        %v2296 = vpop.xlane.xlu0 %2295
        %2297 = vadd.xlane.f32.xlu0 %v2266
        %v2298 = vpop.xlane.xlu0 %2297
        %2299 = vadd.xlane.f32.xlu0 %v2268
        %v2300 = vpop.xlane.xlu0 %2299
        %2301 = vadd.xlane.f32.xlu0 %v2270
        %v2302 = vpop.xlane.xlu0 %2301
        %2303 = vadd.xlane.f32.xlu0 %v2272
        %v2304 = vpop.xlane.xlu0 %2303
        %2305 = vadd.xlane.f32.xlu0 %v2274
        %v2306 = vpop.xlane.xlu0 %2305
        %2307 = vadd.xlane.f32.xlu0 %v2276
        %v2308 = vpop.xlane.xlu0 %2307
        %2309 = vadd.xlane.f32.xlu0 %v2278
        %v2310 = vpop.xlane.xlu0 %2309
        %2311 = vadd.xlane.f32.xlu0 %v2280
        %v2312 = vpop.xlane.xlu0 %2311
        %2313 = vadd.xlane.f32.xlu0 %v2282
        %v2314 = vpop.xlane.xlu0 %2313
        %v2315 = vrcp.pop %v2284
        %v2316 = vrcp.pop %v2286
        %v2317 = vrcp.pop %v2288
        %v2318 = vrcp.pop %v2290
        %v2319 = vrcp.pop %v2292
        %v2320 = vrcp.pop %v2294
        %v2321 = vrcp.pop %v2296
        %v2322 = vrcp.pop %v2298
        %v2323 = vrcp.pop %v2300
        %v2324 = vrcp.pop %v2302
        %v2325 = vrcp.pop %v2304
        %v2326 = vrcp.pop %v2306
        %v2327 = vrcp.pop %v2308
        %v2328 = vrcp.pop %v2310
        %v2329 = vrcp.pop %v2312
        %v2330 = vrcp.pop %v2314
        %v2331 = vmul.f32 %v2252, %v2315
        %v2332 = vmul.f32 %v2254, %v2316
        %v2333 = vmul.f32 %v2256, %v2317
        %v2334 = vmul.f32 %v2258, %v2318
        %v2335 = vmul.f32 %v2260, %v2319
        %v2336 = vmul.f32 %v2262, %v2320
        %v2337 = vmul.f32 %v2264, %v2321
        %v2338 = vmul.f32 %v2266, %v2322
        %v2339 = vmul.f32 %v2268, %v2323
        %v2340 = vmul.f32 %v2270, %v2324
        %v2341 = vmul.f32 %v2272, %v2325
        %v2342 = vmul.f32 %v2274, %v2326
        %v2343 = vmul.f32 %v2276, %v2327
        %v2344 = vmul.f32 %v2278, %v2328
        %v2345 = vmul.f32 %v2280, %v2329
        %v2346 = vmul.f32 %v2282, %v2330
        %v2347 = vpack.c.bf16 %v2332, %v2331
        %v2348 = vpack.c.bf16 %v2334, %v2333
        %v2349 = vpack.c.bf16 %v2336, %v2335
        %v2350 = vpack.c.bf16 %v2338, %v2337
        %v2351 = vpack.c.bf16 %v2340, %v2339
        %v2352 = vpack.c.bf16 %v2342, %v2341
        %v2353 = vpack.c.bf16 %v2344, %v2343
        %v2354 = vpack.c.bf16 %v2346, %v2345
        %2363 = vrot.lane.b32.xlu0 %v1599, 112
        %v2364 = vpop.permute.xlu0 %2363
        %2365 = vrot.lane.b32.xlu0 %v1600, 112
        %v2366 = vpop.permute.xlu0 %2365
        %2367 = vrot.lane.b32.xlu0 %v1601, 112
        %v2368 = vpop.permute.xlu0 %2367
        %2369 = vrot.lane.b32.xlu0 %v1602, 112
        %v2370 = vpop.permute.xlu0 %2369
        %2371 = vrot.lane.b32.xlu0 %v1603, 112
        %v2372 = vpop.permute.xlu0 %2371
        %2373 = vrot.lane.b32.xlu0 %v1604, 112
        %v2374 = vpop.permute.xlu0 %2373
        %2375 = vrot.lane.b32.xlu0 %v1605, 112
        %v2376 = vpop.permute.xlu0 %2375
        %2377 = vrot.lane.b32.xlu0 %v1606, 112
        %v2378 = vpop.permute.xlu0 %2377
        %2387 = vmatprep.subr.bf16.mxu0 0
        %2388 = vmatpush1.bf16.msra.mxu0 %v2364
        %2389 = vmatprep.subr.bf16.mxu0 0
        %2390 = vmatpush1.bf16.msra.mxu0 %v2366
        %2391 = vmatprep.subr.bf16.mxu0 0
        %2392 = vmatpush1.bf16.msra.mxu0 %v2368
        %2393 = vmatprep.subr.bf16.mxu0 0
        %2394 = vmatpush1.bf16.msra.mxu0 %v2370
        %2395 = vmatprep.subr.bf16.mxu0 0
        %2396 = vmatpush1.bf16.msra.mxu0 %v2372
        %2397 = vmatprep.subr.bf16.mxu0 0
        %2398 = vmatpush1.bf16.msra.mxu0 %v2374
        %2399 = vmatprep.subr.bf16.mxu0 0
        %2400 = vmatpush1.bf16.msra.mxu0 %v2376
        %2401 = vmatprep.subr.bf16.mxu0 0
        %2402 = vmatpush1.bf16.msra.mxu0 %v2378
        %2403 = vmatprep.subr.bf16.mxu0 0
        %2404 = vmatpush1.bf16.msra.mxu0 0
        %2405 = vmatprep.subr.bf16.mxu0 0
        %2406 = vmatpush1.bf16.msra.mxu0 0
        %2407 = vmatprep.subr.bf16.mxu0 0
        %2408 = vmatpush1.bf16.msra.mxu0 0
        %2409 = vmatprep.subr.bf16.mxu0 0
        %2410 = vmatpush1.bf16.msra.mxu0 0
        %2411 = vmatprep.subr.bf16.mxu0 0
        %2412 = vmatpush1.bf16.msra.mxu0 0
        %2413 = vmatprep.subr.bf16.mxu0 0
        %2414 = vmatpush1.bf16.msra.mxu0 0
        %2415 = vmatprep.subr.bf16.mxu0 0
        %2416 = vmatpush1.bf16.msra.mxu0 0
        %2417 = vmatprep.subr.bf16.mxu0 0
        %2418 = vmatpush1.bf16.msra.mxu0 0
        %2419 = vmatprep.mubr.bf16.mxu0 0
        %2420 = vmatmul.mubr.bf16.gmra.mrb[0].mxu0 %v2347
        %v2421 = vpop.f32.mrb[0].mxu0
        %v2422 = vadd.f32 0.0, %v2421
        %v2423 = vpop.f32.mrb[0].mxu0
        %v2424 = vpop.f32.mrb[0].mxu0
        %v2425 = vadd.f32 0.0, %v2424
        %v2426 = vpop.f32.mrb[0].mxu0
        %2427 = vmatprep.mubr.bf16.mxu0 0
        %2428 = vmatmul.mubr.bf16.gmra.mrb[0].mxu0 %v2348
        %v2429 = vpop.f32.mrb[0].mxu0
        %v2430 = vadd.f32 0.0, %v2429
        %v2431 = vpop.f32.mrb[0].mxu0
        %v2432 = vpop.f32.mrb[0].mxu0
        %v2433 = vadd.f32 0.0, %v2432
        %v2434 = vpop.f32.mrb[0].mxu0
        %2435 = vmatprep.mubr.bf16.mxu0 0
        %2436 = vmatmul.mubr.bf16.gmra.mrb[0].mxu0 %v2349
        %v2437 = vpop.f32.mrb[0].mxu0
        %v2438 = vadd.f32 0.0, %v2437
        %v2439 = vpop.f32.mrb[0].mxu0
        %v2440 = vpop.f32.mrb[0].mxu0
        %v2441 = vadd.f32 0.0, %v2440
        %v2442 = vpop.f32.mrb[0].mxu0
        %2443 = vmatprep.mubr.bf16.mxu0 0
        %2444 = vmatmul.mubr.bf16.gmra.mrb[0].mxu0 %v2350
        %v2445 = vpop.f32.mrb[0].mxu0
        %v2446 = vadd.f32 0.0, %v2445
        %v2447 = vpop.f32.mrb[0].mxu0
        %v2448 = vpop.f32.mrb[0].mxu0
        %v2449 = vadd.f32 0.0, %v2448
        %v2450 = vpop.f32.mrb[0].mxu0
        %2451 = vmatprep.mubr.bf16.mxu0 0
        %2452 = vmatmul.mubr.bf16.gmra.mrb[0].mxu0 %v2351
        %v2453 = vpop.f32.mrb[0].mxu0
        %v2454 = vadd.f32 0.0, %v2453
        %v2455 = vpop.f32.mrb[0].mxu0
        %v2456 = vpop.f32.mrb[0].mxu0
        %v2457 = vadd.f32 0.0, %v2456
        %v2458 = vpop.f32.mrb[0].mxu0
        %2459 = vmatprep.mubr.bf16.mxu0 0
        %2460 = vmatmul.mubr.bf16.gmra.mrb[0].mxu0 %v2352
        %v2461 = vpop.f32.mrb[0].mxu0
        %v2462 = vadd.f32 0.0, %v2461
        %v2463 = vpop.f32.mrb[0].mxu0
        %v2464 = vpop.f32.mrb[0].mxu0
        %v2465 = vadd.f32 0.0, %v2464
        %v2466 = vpop.f32.mrb[0].mxu0
        %2467 = vmatprep.mubr.bf16.mxu0 0
        %2468 = vmatmul.mubr.bf16.gmra.mrb[0].mxu0 %v2353
        %v2469 = vpop.f32.mrb[0].mxu0
        %v2470 = vadd.f32 0.0, %v2469
        %v2471 = vpop.f32.mrb[0].mxu0
        %v2472 = vpop.f32.mrb[0].mxu0
        %v2473 = vadd.f32 0.0, %v2472
        %v2474 = vpop.f32.mrb[0].mxu0
        %2475 = vmatprep.mubr.bf16.mxu0 0
        %2476 = vmatmul.mubr.bf16.gmra.mrb[0].mxu0 %v2354
        %v2477 = vpop.f32.mrb[0].mxu0
        %v2478 = vadd.f32 0.0, %v2477
        %v2479 = vpop.f32.mrb[0].mxu0
        %v2480 = vpop.f32.mrb[0].mxu0
        %v2481 = vadd.f32 0.0, %v2480
        %v2482 = vpop.f32.mrb[0].mxu0
        %2483 = vdwg.mxu0
        %2484 = vrot.lane.b32.xlu0 %v1591, 96
        %v2485 = vpop.permute.xlu0 %2484
        %2486 = vrot.lane.b32.xlu0 %v1592, 96
        %v2487 = vpop.permute.xlu0 %2486
        %2488 = vrot.lane.b32.xlu0 %v1593, 96
        %v2489 = vpop.permute.xlu0 %2488
        %2490 = vrot.lane.b32.xlu0 %v1594, 96
        %v2491 = vpop.permute.xlu0 %2490
        %2492 = vrot.lane.b32.xlu0 %v1595, 96
        %v2493 = vpop.permute.xlu0 %2492
        %2494 = vrot.lane.b32.xlu0 %v1596, 96
        %v2495 = vpop.permute.xlu0 %2494
        %2496 = vrot.lane.b32.xlu0 %v1597, 96
        %v2497 = vpop.permute.xlu0 %2496
        %2498 = vrot.lane.b32.xlu0 %v1598, 96
        %v2499 = vpop.permute.xlu0 %2498
        %2500 = vrot.lane.b32.xlu0 %v1591, 32
        %v2501 = vpop.permute.xlu0 %2500
        %2502 = vrot.lane.b32.xlu0 %v1592, 32
        %v2503 = vpop.permute.xlu0 %2502
        %2504 = vrot.lane.b32.xlu0 %v1593, 32
        %v2505 = vpop.permute.xlu0 %2504
        %2506 = vrot.lane.b32.xlu0 %v1594, 32
        %v2507 = vpop.permute.xlu0 %2506
        %2508 = vrot.lane.b32.xlu0 %v1595, 32
        %v2509 = vpop.permute.xlu0 %2508
        %2510 = vrot.lane.b32.xlu0 %v1596, 32
        %v2511 = vpop.permute.xlu0 %2510
        %2512 = vrot.lane.b32.xlu0 %v1597, 32
        %v2513 = vpop.permute.xlu0 %2512
        %2514 = vrot.lane.b32.xlu0 %v1598, 32
        %v2515 = vpop.permute.xlu0 %2514
        %v2517 = vsel %vm1631, %v2485, 0
        %v2520 = vsel %vm1631, %v2487, 0
        %v2523 = vsel %vm1631, %v2489, 0
        %v2526 = vsel %vm1631, %v2491, 0
        %v2529 = vsel %vm1631, %v2493, 0
        %v2532 = vsel %vm1631, %v2495, 0
        %v2535 = vsel %vm1631, %v2497, 0
        %v2538 = vsel %vm1631, %v2499, 0
        %v2541 = vsel %vm1631, %v2501, 0
        %v2544 = vsel %vm1631, %v2503, 0
        %v2547 = vsel %vm1631, %v2505, 0
        %v2550 = vsel %vm1631, %v2507, 0
        %v2553 = vsel %vm1631, %v2509, 0
        %v2556 = vsel %vm1631, %v2511, 0
        %v2559 = vsel %vm1631, %v2513, 0
        %v2562 = vsel %vm1631, %v2515, 0
        %2564 = vmatprep.subr.bf16.mxu0 0
        %2565 = vmatpush1.bf16.xpose.msra.mxu0 %v2541
        %2566 = vmatprep.subr.bf16.mxu0 0
        %2567 = vmatpush1.bf16.xpose.msra.mxu0 %v2544
        %2568 = vmatprep.subr.bf16.mxu0 0
        %2569 = vmatpush1.bf16.xpose.msra.mxu0 %v2547
        %2570 = vmatprep.subr.bf16.mxu0 0
        %2571 = vmatpush1.bf16.xpose.msra.mxu0 %v2550
        %2572 = vmatprep.subr.bf16.mxu0 0
        %2573 = vmatpush1.bf16.xpose.msra.mxu0 %v2553
        %2574 = vmatprep.subr.bf16.mxu0 0
        %2575 = vmatpush1.bf16.xpose.msra.mxu0 %v2556
        %2576 = vmatprep.subr.bf16.mxu0 0
        %2577 = vmatpush1.bf16.xpose.msra.mxu0 %v2559
        %2578 = vmatprep.subr.bf16.mxu0 0
        %2579 = vmatpush1.bf16.xpose.msra.mxu0 %v2562
        %2580 = vmatprep.subr.bf16.mxu0 0
        %2581 = vmatpush1.bf16.xpose.msra.mxu0 0
        %2582 = vmatprep.subr.bf16.mxu0 0
        %2583 = vmatpush1.bf16.xpose.msra.mxu0 0
        %2584 = vmatprep.subr.bf16.mxu0 0
        %2585 = vmatpush1.bf16.xpose.msra.mxu0 0
        %2586 = vmatprep.subr.bf16.mxu0 0
        %2587 = vmatpush1.bf16.xpose.msra.mxu0 0
        %2588 = vmatprep.subr.bf16.mxu0 0
        %2589 = vmatpush1.bf16.xpose.msra.mxu0 0
        %2590 = vmatprep.subr.bf16.mxu0 0
        %2591 = vmatpush1.bf16.xpose.msra.mxu0 0
        %2592 = vmatprep.subr.bf16.mxu0 0
        %2593 = vmatpush1.bf16.xpose.msra.mxu0 0
        %2594 = vmatprep.subr.bf16.mxu0 0
        %2595 = vmatpush1.bf16.xpose.msra.mxu0 0
        %2596 = vmatprep.mubr.bf16.mxu0 0
        %2597 = vmatmul.mubr.bf16.gmra.mrb[0].mxu0 %v2517
        %v2598 = vpop.f32.mrb[0].mxu0
        %v2599 = vadd.f32 %v1115, %v2598
        %v2600 = vpop.f32.mrb[0].mxu0
        %v2601 = vpop.f32.mrb[0].mxu0
        %v2602 = vadd.f32 %v1116, %v2601
        %v2603 = vpop.f32.mrb[0].mxu0
        %2604 = vmatprep.mubr.bf16.mxu0 0
        %2605 = vmatmul.mubr.bf16.gmra.mrb[0].mxu0 %v2520
        %v2606 = vpop.f32.mrb[0].mxu0
        %v2607 = vadd.f32 %v1117, %v2606
        %v2608 = vpop.f32.mrb[0].mxu0
        %v2609 = vpop.f32.mrb[0].mxu0
        %v2610 = vadd.f32 %v1118, %v2609
        %v2611 = vpop.f32.mrb[0].mxu0
        %2612 = vmatprep.mubr.bf16.mxu0 0
        %2613 = vmatmul.mubr.bf16.gmra.mrb[0].mxu0 %v2523
        %v2614 = vpop.f32.mrb[0].mxu0
        %v2615 = vadd.f32 %v1119, %v2614
        %v2616 = vpop.f32.mrb[0].mxu0
        %v2617 = vpop.f32.mrb[0].mxu0
        %v2618 = vadd.f32 %v1120, %v2617
        %v2619 = vpop.f32.mrb[0].mxu0
        %2620 = vmatprep.mubr.bf16.mxu0 0
        %2621 = vmatmul.mubr.bf16.gmra.mrb[0].mxu0 %v2526
        %v2622 = vpop.f32.mrb[0].mxu0
        %v2623 = vadd.f32 %v1121, %v2622
        %v2624 = vpop.f32.mrb[0].mxu0
        %v2625 = vpop.f32.mrb[0].mxu0
        %v2626 = vadd.f32 %v1122, %v2625
        %v2627 = vpop.f32.mrb[0].mxu0
        %2628 = vmatprep.mubr.bf16.mxu0 0
        %2629 = vmatmul.mubr.bf16.gmra.mrb[0].mxu0 %v2529
        %v2630 = vpop.f32.mrb[0].mxu0
        %v2631 = vadd.f32 %v1123, %v2630
        %v2632 = vpop.f32.mrb[0].mxu0
        %v2633 = vpop.f32.mrb[0].mxu0
        %v2634 = vadd.f32 %v1124, %v2633
        %v2635 = vpop.f32.mrb[0].mxu0
        %2636 = vmatprep.mubr.bf16.mxu0 0
        %2637 = vmatmul.mubr.bf16.gmra.mrb[0].mxu0 %v2532
        %v2638 = vpop.f32.mrb[0].mxu0
        %v2639 = vadd.f32 %v1125, %v2638
        %v2640 = vpop.f32.mrb[0].mxu0
        %v2641 = vpop.f32.mrb[0].mxu0
        %v2642 = vadd.f32 %v1126, %v2641
        %v2643 = vpop.f32.mrb[0].mxu0
        %2644 = vmatprep.mubr.bf16.mxu0 0
        %2645 = vmatmul.mubr.bf16.gmra.mrb[0].mxu0 %v2535
        %v2646 = vpop.f32.mrb[0].mxu0
        %v2647 = vadd.f32 %v1127, %v2646
        %v2648 = vpop.f32.mrb[0].mxu0
        %v2649 = vpop.f32.mrb[0].mxu0
        %v2650 = vadd.f32 %v1128, %v2649
        %v2651 = vpop.f32.mrb[0].mxu0
        %2652 = vmatprep.mubr.bf16.mxu0 0
        %2653 = vmatmul.mubr.bf16.gmra.mrb[0].mxu0 %v2538
        %v2654 = vpop.f32.mrb[0].mxu0
        %v2655 = vadd.f32 %v1129, %v2654
        %v2656 = vpop.f32.mrb[0].mxu0
        %v2657 = vpop.f32.mrb[0].mxu0
        %v2658 = vadd.f32 %v1130, %v2657
        %v2659 = vpop.f32.mrb[0].mxu0
        %2660 = vdwg.mxu0
        %2661 = vmax.xlane.f32.xlu0 %v2599
        %v2662 = vpop.xlane.xlu0 %2661
        %2663 = vmax.xlane.f32.xlu0 %v2602
        %v2664 = vpop.xlane.xlu0 %2663
        %2665 = vmax.xlane.f32.xlu0 %v2607
        %v2666 = vpop.xlane.xlu0 %2665
        %2667 = vmax.xlane.f32.xlu0 %v2610
        %v2668 = vpop.xlane.xlu0 %2667
        %2669 = vmax.xlane.f32.xlu0 %v2615
        %v2670 = vpop.xlane.xlu0 %2669
        %2671 = vmax.xlane.f32.xlu0 %v2618
        %v2672 = vpop.xlane.xlu0 %2671
        %2673 = vmax.xlane.f32.xlu0 %v2623
        %v2674 = vpop.xlane.xlu0 %2673
        %2675 = vmax.xlane.f32.xlu0 %v2626
        %v2676 = vpop.xlane.xlu0 %2675
        %2677 = vmax.xlane.f32.xlu0 %v2631
        %v2678 = vpop.xlane.xlu0 %2677
        %2679 = vmax.xlane.f32.xlu0 %v2634
        %v2680 = vpop.xlane.xlu0 %2679
        %2681 = vmax.xlane.f32.xlu0 %v2639
        %v2682 = vpop.xlane.xlu0 %2681
        %2683 = vmax.xlane.f32.xlu0 %v2642
        %v2684 = vpop.xlane.xlu0 %2683
        %2685 = vmax.xlane.f32.xlu0 %v2647
        %v2686 = vpop.xlane.xlu0 %2685
        %2687 = vmax.xlane.f32.xlu0 %v2650
        %v2688 = vpop.xlane.xlu0 %2687
        %2689 = vmax.xlane.f32.xlu0 %v2655
        %v2690 = vpop.xlane.xlu0 %2689
        %2691 = vmax.xlane.f32.xlu0 %v2658
        %v2692 = vpop.xlane.xlu0 %2691
        %v2693 = vsub.f32 %v2599, %v2662
        %v2694 = vsub.f32 %v2602, %v2664
        %v2695 = vsub.f32 %v2607, %v2666
        %v2696 = vsub.f32 %v2610, %v2668
        %v2697 = vsub.f32 %v2615, %v2670
        %v2698 = vsub.f32 %v2618, %v2672
        %v2699 = vsub.f32 %v2623, %v2674
        %v2700 = vsub.f32 %v2626, %v2676
        %v2701 = vsub.f32 %v2631, %v2678
        %v2702 = vsub.f32 %v2634, %v2680
        %v2703 = vsub.f32 %v2639, %v2682
        %v2704 = vsub.f32 %v2642, %v2684
        %v2705 = vsub.f32 %v2647, %v2686
        %v2706 = vsub.f32 %v2650, %v2688
        %v2707 = vsub.f32 %v2655, %v2690
        %v2708 = vsub.f32 %v2658, %v2692
        %v2709 = vmul.f32 %v2693, 1.442695
        %v2710 = vpow.pop %v2709
        %v2711 = vmul.f32 %v2694, 1.442695
        %v2712 = vpow.pop %v2711
        %v2713 = vmul.f32 %v2695, 1.442695
        %v2714 = vpow.pop %v2713
        %v2715 = vmul.f32 %v2696, 1.442695
        %v2716 = vpow.pop %v2715
        %v2717 = vmul.f32 %v2697, 1.442695
        %v2718 = vpow.pop %v2717
        %v2719 = vmul.f32 %v2698, 1.442695
        %v2720 = vpow.pop %v2719
        %v2721 = vmul.f32 %v2699, 1.442695
        %v2722 = vpow.pop %v2721
        %v2723 = vmul.f32 %v2700, 1.442695
        %v2724 = vpow.pop %v2723
        %v2725 = vmul.f32 %v2701, 1.442695
        %v2726 = vpow.pop %v2725
        %v2727 = vmul.f32 %v2702, 1.442695
        %v2728 = vpow.pop %v2727
        %v2729 = vmul.f32 %v2703, 1.442695
        %v2730 = vpow.pop %v2729
        %v2731 = vmul.f32 %v2704, 1.442695
        %v2732 = vpow.pop %v2731
        %v2733 = vmul.f32 %v2705, 1.442695
        %v2734 = vpow.pop %v2733
        %v2735 = vmul.f32 %v2706, 1.442695
        %v2736 = vpow.pop %v2735
        %v2737 = vmul.f32 %v2707, 1.442695
        %v2738 = vpow.pop %v2737
        %v2739 = vmul.f32 %v2708, 1.442695
        %v2740 = vpow.pop %v2739
        %2741 = vadd.xlane.f32.xlu0 %v2710
        %v2742 = vpop.xlane.xlu0 %2741
        %2743 = vadd.xlane.f32.xlu0 %v2712
        %v2744 = vpop.xlane.xlu0 %2743
        %2745 = vadd.xlane.f32.xlu0 %v2714
        %v2746 = vpop.xlane.xlu0 %2745
        %2747 = vadd.xlane.f32.xlu0 %v2716
        %v2748 = vpop.xlane.xlu0 %2747
        %2749 = vadd.xlane.f32.xlu0 %v2718
        %v2750 = vpop.xlane.xlu0 %2749
        %2751 = vadd.xlane.f32.xlu0 %v2720
        %v2752 = vpop.xlane.xlu0 %2751
        %2753 = vadd.xlane.f32.xlu0 %v2722
        %v2754 = vpop.xlane.xlu0 %2753
        %2755 = vadd.xlane.f32.xlu0 %v2724
        %v2756 = vpop.xlane.xlu0 %2755
        %2757 = vadd.xlane.f32.xlu0 %v2726
        %v2758 = vpop.xlane.xlu0 %2757
        %2759 = vadd.xlane.f32.xlu0 %v2728
        %v2760 = vpop.xlane.xlu0 %2759
        %2761 = vadd.xlane.f32.xlu0 %v2730
        %v2762 = vpop.xlane.xlu0 %2761
        %2763 = vadd.xlane.f32.xlu0 %v2732
        %v2764 = vpop.xlane.xlu0 %2763
        %2765 = vadd.xlane.f32.xlu0 %v2734
        %v2766 = vpop.xlane.xlu0 %2765
        %2767 = vadd.xlane.f32.xlu0 %v2736
        %v2768 = vpop.xlane.xlu0 %2767
        %2769 = vadd.xlane.f32.xlu0 %v2738
        %v2770 = vpop.xlane.xlu0 %2769
        %2771 = vadd.xlane.f32.xlu0 %v2740
        %v2772 = vpop.xlane.xlu0 %2771
        %v2773 = vrcp.pop %v2742
        %v2774 = vrcp.pop %v2744
        %v2775 = vrcp.pop %v2746
        %v2776 = vrcp.pop %v2748
        %v2777 = vrcp.pop %v2750
        %v2778 = vrcp.pop %v2752
        %v2779 = vrcp.pop %v2754
        %v2780 = vrcp.pop %v2756
        %v2781 = vrcp.pop %v2758
        %v2782 = vrcp.pop %v2760
        %v2783 = vrcp.pop %v2762
        %v2784 = vrcp.pop %v2764
        %v2785 = vrcp.pop %v2766
        %v2786 = vrcp.pop %v2768
        %v2787 = vrcp.pop %v2770
        %v2788 = vrcp.pop %v2772
        %v2789 = vmul.f32 %v2710, %v2773
        %v2790 = vmul.f32 %v2712, %v2774
        %v2791 = vmul.f32 %v2714, %v2775
        %v2792 = vmul.f32 %v2716, %v2776
        %v2793 = vmul.f32 %v2718, %v2777
        %v2794 = vmul.f32 %v2720, %v2778
        %v2795 = vmul.f32 %v2722, %v2779
        %v2796 = vmul.f32 %v2724, %v2780
        %v2797 = vmul.f32 %v2726, %v2781
        %v2798 = vmul.f32 %v2728, %v2782
        %v2799 = vmul.f32 %v2730, %v2783
        %v2800 = vmul.f32 %v2732, %v2784
        %v2801 = vmul.f32 %v2734, %v2785
        %v2802 = vmul.f32 %v2736, %v2786
        %v2803 = vmul.f32 %v2738, %v2787
        %v2804 = vmul.f32 %v2740, %v2788
        %v2805 = vpack.c.bf16 %v2790, %v2789
        %v2806 = vpack.c.bf16 %v2792, %v2791
        %v2807 = vpack.c.bf16 %v2794, %v2793
        %v2808 = vpack.c.bf16 %v2796, %v2795
        %v2809 = vpack.c.bf16 %v2798, %v2797
        %v2810 = vpack.c.bf16 %v2800, %v2799
        %v2811 = vpack.c.bf16 %v2802, %v2801
        %v2812 = vpack.c.bf16 %v2804, %v2803
        %2813 = vrot.lane.b32.xlu0 %v1599, 96
        %v2814 = vpop.permute.xlu0 %2813
        %2815 = vrot.lane.b32.xlu0 %v1600, 96
        %v2816 = vpop.permute.xlu0 %2815
        %2817 = vrot.lane.b32.xlu0 %v1601, 96
        %v2818 = vpop.permute.xlu0 %2817
        %2819 = vrot.lane.b32.xlu0 %v1602, 96
        %v2820 = vpop.permute.xlu0 %2819
        %2821 = vrot.lane.b32.xlu0 %v1603, 96
        %v2822 = vpop.permute.xlu0 %2821
        %2823 = vrot.lane.b32.xlu0 %v1604, 96
        %v2824 = vpop.permute.xlu0 %2823
        %2825 = vrot.lane.b32.xlu0 %v1605, 96
        %v2826 = vpop.permute.xlu0 %2825
        %2827 = vrot.lane.b32.xlu0 %v1606, 96
        %v2828 = vpop.permute.xlu0 %2827
        %2837 = vmatprep.subr.bf16.mxu0 0
        %2838 = vmatpush1.bf16.msra.mxu0 %v2814
        %2839 = vmatprep.subr.bf16.mxu0 0
        %2840 = vmatpush1.bf16.msra.mxu0 %v2816
        %2841 = vmatprep.subr.bf16.mxu0 0
        %2842 = vmatpush1.bf16.msra.mxu0 %v2818
        %2843 = vmatprep.subr.bf16.mxu0 0
        %2844 = vmatpush1.bf16.msra.mxu0 %v2820
        %2845 = vmatprep.subr.bf16.mxu0 0
        %2846 = vmatpush1.bf16.msra.mxu0 %v2822
        %2847 = vmatprep.subr.bf16.mxu0 0
        %2848 = vmatpush1.bf16.msra.mxu0 %v2824
        %2849 = vmatprep.subr.bf16.mxu0 0
        %2850 = vmatpush1.bf16.msra.mxu0 %v2826
        %2851 = vmatprep.subr.bf16.mxu0 0
        %2852 = vmatpush1.bf16.msra.mxu0 %v2828
        %2853 = vmatprep.subr.bf16.mxu0 0
        %2854 = vmatpush1.bf16.msra.mxu0 0
        %2855 = vmatprep.subr.bf16.mxu0 0
        %2856 = vmatpush1.bf16.msra.mxu0 0
        %2857 = vmatprep.subr.bf16.mxu0 0
        %2858 = vmatpush1.bf16.msra.mxu0 0
        %2859 = vmatprep.subr.bf16.mxu0 0
        %2860 = vmatpush1.bf16.msra.mxu0 0
        %2861 = vmatprep.subr.bf16.mxu0 0
        %2862 = vmatpush1.bf16.msra.mxu0 0
        %2863 = vmatprep.subr.bf16.mxu0 0
        %2864 = vmatpush1.bf16.msra.mxu0 0
        %2865 = vmatprep.subr.bf16.mxu0 0
        %2866 = vmatpush1.bf16.msra.mxu0 0
        %2867 = vmatprep.subr.bf16.mxu0 0
        %2868 = vmatpush1.bf16.msra.mxu0 0
        %2869 = vmatprep.mubr.bf16.mxu0 0
        %2870 = vmatmul.mubr.bf16.gmra.mrb[0].mxu0 %v2805
        %v2871 = vpop.f32.mrb[0].mxu0
        %v2872 = vadd.f32 0.0, %v2871
        %v2873 = vpop.f32.mrb[0].mxu0
        %v2874 = vpop.f32.mrb[0].mxu0
        %v2875 = vadd.f32 0.0, %v2874
        %v2876 = vpop.f32.mrb[0].mxu0
        %2877 = vmatprep.mubr.bf16.mxu0 0
        %2878 = vmatmul.mubr.bf16.gmra.mrb[0].mxu0 %v2806
        %v2879 = vpop.f32.mrb[0].mxu0
        %v2880 = vadd.f32 0.0, %v2879
        %v2881 = vpop.f32.mrb[0].mxu0
        %v2882 = vpop.f32.mrb[0].mxu0
        %v2883 = vadd.f32 0.0, %v2882
        %v2884 = vpop.f32.mrb[0].mxu0
        %2885 = vmatprep.mubr.bf16.mxu0 0
        %2886 = vmatmul.mubr.bf16.gmra.mrb[0].mxu0 %v2807
        %v2887 = vpop.f32.mrb[0].mxu0
        %v2888 = vadd.f32 0.0, %v2887
        %v2889 = vpop.f32.mrb[0].mxu0
        %v2890 = vpop.f32.mrb[0].mxu0
        %v2891 = vadd.f32 0.0, %v2890
        %v2892 = vpop.f32.mrb[0].mxu0
        %2893 = vmatprep.mubr.bf16.mxu0 0
        %2894 = vmatmul.mubr.bf16.gmra.mrb[0].mxu0 %v2808
        %v2895 = vpop.f32.mrb[0].mxu0
        %v2896 = vadd.f32 0.0, %v2895
        %v2897 = vpop.f32.mrb[0].mxu0
        %v2898 = vpop.f32.mrb[0].mxu0
        %v2899 = vadd.f32 0.0, %v2898
        %v2900 = vpop.f32.mrb[0].mxu0
        %2901 = vmatprep.mubr.bf16.mxu0 0
        %2902 = vmatmul.mubr.bf16.gmra.mrb[0].mxu0 %v2809
        %v2903 = vpop.f32.mrb[0].mxu0
        %v2904 = vadd.f32 0.0, %v2903
        %v2905 = vpop.f32.mrb[0].mxu0
        %v2906 = vpop.f32.mrb[0].mxu0
        %v2907 = vadd.f32 0.0, %v2906
        %v2908 = vpop.f32.mrb[0].mxu0
        %2909 = vmatprep.mubr.bf16.mxu0 0
        %2910 = vmatmul.mubr.bf16.gmra.mrb[0].mxu0 %v2810
        %v2911 = vpop.f32.mrb[0].mxu0
        %v2912 = vadd.f32 0.0, %v2911
        %v2913 = vpop.f32.mrb[0].mxu0
        %v2914 = vpop.f32.mrb[0].mxu0
        %v2915 = vadd.f32 0.0, %v2914
        %v2916 = vpop.f32.mrb[0].mxu0
        %2917 = vmatprep.mubr.bf16.mxu0 0
        %2918 = vmatmul.mubr.bf16.gmra.mrb[0].mxu0 %v2811
        %v2919 = vpop.f32.mrb[0].mxu0
        %v2920 = vadd.f32 0.0, %v2919
        %v2921 = vpop.f32.mrb[0].mxu0
        %v2922 = vpop.f32.mrb[0].mxu0
        %v2923 = vadd.f32 0.0, %v2922
        %v2924 = vpop.f32.mrb[0].mxu0
        %2925 = vmatprep.mubr.bf16.mxu0 0
        %2926 = vmatmul.mubr.bf16.gmra.mrb[0].mxu0 %v2812
        %v2927 = vpop.f32.mrb[0].mxu0
        %v2928 = vadd.f32 0.0, %v2927
        %v2929 = vpop.f32.mrb[0].mxu0
        %v2930 = vpop.f32.mrb[0].mxu0
        %v2931 = vadd.f32 0.0, %v2930
        %v2932 = vpop.f32.mrb[0].mxu0
        %2933 = vdwg.mxu0
        %2934 = vrot.lane.b32.xlu0 %v1591, 80
        %v2935 = vpop.permute.xlu0 %2934
        %2936 = vrot.lane.b32.xlu0 %v1592, 80
        %v2937 = vpop.permute.xlu0 %2936
        %2938 = vrot.lane.b32.xlu0 %v1593, 80
        %v2939 = vpop.permute.xlu0 %2938
        %2940 = vrot.lane.b32.xlu0 %v1594, 80
        %v2941 = vpop.permute.xlu0 %2940
        %2942 = vrot.lane.b32.xlu0 %v1595, 80
        %v2943 = vpop.permute.xlu0 %2942
        %2944 = vrot.lane.b32.xlu0 %v1596, 80
        %v2945 = vpop.permute.xlu0 %2944
        %2946 = vrot.lane.b32.xlu0 %v1597, 80
        %v2947 = vpop.permute.xlu0 %2946
        %2948 = vrot.lane.b32.xlu0 %v1598, 80
        %v2949 = vpop.permute.xlu0 %2948
        %2950 = vrot.lane.b32.xlu0 %v1591, 16
        %v2951 = vpop.permute.xlu0 %2950
        %2952 = vrot.lane.b32.xlu0 %v1592, 16
        %v2953 = vpop.permute.xlu0 %2952
        %2954 = vrot.lane.b32.xlu0 %v1593, 16
        %v2955 = vpop.permute.xlu0 %2954
        %2956 = vrot.lane.b32.xlu0 %v1594, 16
        %v2957 = vpop.permute.xlu0 %2956
        %2958 = vrot.lane.b32.xlu0 %v1595, 16
        %v2959 = vpop.permute.xlu0 %2958
        %2960 = vrot.lane.b32.xlu0 %v1596, 16
        %v2961 = vpop.permute.xlu0 %2960
        %2962 = vrot.lane.b32.xlu0 %v1597, 16
        %v2963 = vpop.permute.xlu0 %2962
        %2964 = vrot.lane.b32.xlu0 %v1598, 16
        %v2965 = vpop.permute.xlu0 %2964
        %v2967 = vsel %vm1631, %v2935, 0
        %v2970 = vsel %vm1631, %v2937, 0
        %v2973 = vsel %vm1631, %v2939, 0
        %v2976 = vsel %vm1631, %v2941, 0
        %v2979 = vsel %vm1631, %v2943, 0
        %v2982 = vsel %vm1631, %v2945, 0
        %v2985 = vsel %vm1631, %v2947, 0
        %v2988 = vsel %vm1631, %v2949, 0
        %v2991 = vsel %vm1631, %v2951, 0
        %v2994 = vsel %vm1631, %v2953, 0
        %v2997 = vsel %vm1631, %v2955, 0
        %v3000 = vsel %vm1631, %v2957, 0
        %v3003 = vsel %vm1631, %v2959, 0
        %v3006 = vsel %vm1631, %v2961, 0
        %v3009 = vsel %vm1631, %v2963, 0
        %v3012 = vsel %vm1631, %v2965, 0
        %3014 = vmatprep.subr.bf16.mxu0 0
        %3015 = vmatpush1.bf16.xpose.msra.mxu0 %v2991
        %3016 = vmatprep.subr.bf16.mxu0 0
        %3017 = vmatpush1.bf16.xpose.msra.mxu0 %v2994
        %3018 = vmatprep.subr.bf16.mxu0 0
        %3019 = vmatpush1.bf16.xpose.msra.mxu0 %v2997
        %3020 = vmatprep.subr.bf16.mxu0 0
        %3021 = vmatpush1.bf16.xpose.msra.mxu0 %v3000
        %3022 = vmatprep.subr.bf16.mxu0 0
        %3023 = vmatpush1.bf16.xpose.msra.mxu0 %v3003
        %3024 = vmatprep.subr.bf16.mxu0 0
        %3025 = vmatpush1.bf16.xpose.msra.mxu0 %v3006
        %3026 = vmatprep.subr.bf16.mxu0 0
        %3027 = vmatpush1.bf16.xpose.msra.mxu0 %v3009
        %3028 = vmatprep.subr.bf16.mxu0 0
        %3029 = vmatpush1.bf16.xpose.msra.mxu0 %v3012
        %3030 = vmatprep.subr.bf16.mxu0 0
        %3031 = vmatpush1.bf16.xpose.msra.mxu0 0
        %3032 = vmatprep.subr.bf16.mxu0 0
        %3033 = vmatpush1.bf16.xpose.msra.mxu0 0
        %3034 = vmatprep.subr.bf16.mxu0 0
        %3035 = vmatpush1.bf16.xpose.msra.mxu0 0
        %3036 = vmatprep.subr.bf16.mxu0 0
        %3037 = vmatpush1.bf16.xpose.msra.mxu0 0
        %3038 = vmatprep.subr.bf16.mxu0 0
        %3039 = vmatpush1.bf16.xpose.msra.mxu0 0
        %3040 = vmatprep.subr.bf16.mxu0 0
        %3041 = vmatpush1.bf16.xpose.msra.mxu0 0
        %3042 = vmatprep.subr.bf16.mxu0 0
        %3043 = vmatpush1.bf16.xpose.msra.mxu0 0
        %3044 = vmatprep.subr.bf16.mxu0 0
        %3045 = vmatpush1.bf16.xpose.msra.mxu0 0
        %3046 = vmatprep.mubr.bf16.mxu0 0
        %3047 = vmatmul.mubr.bf16.gmra.mrb[0].mxu0 %v2967
        %v3048 = vpop.f32.mrb[0].mxu0
        %v3049 = vadd.f32 %v1115, %v3048
        %v3050 = vpop.f32.mrb[0].mxu0
        %v3051 = vpop.f32.mrb[0].mxu0
        %v3052 = vadd.f32 %v1116, %v3051
        %v3053 = vpop.f32.mrb[0].mxu0
        %3054 = vmatprep.mubr.bf16.mxu0 0
        %3055 = vmatmul.mubr.bf16.gmra.mrb[0].mxu0 %v2970
        %v3056 = vpop.f32.mrb[0].mxu0
        %v3057 = vadd.f32 %v1117, %v3056
        %v3058 = vpop.f32.mrb[0].mxu0
        %v3059 = vpop.f32.mrb[0].mxu0
        %v3060 = vadd.f32 %v1118, %v3059
        %v3061 = vpop.f32.mrb[0].mxu0
        %3062 = vmatprep.mubr.bf16.mxu0 0
        %3063 = vmatmul.mubr.bf16.gmra.mrb[0].mxu0 %v2973
        %v3064 = vpop.f32.mrb[0].mxu0
        %v3065 = vadd.f32 %v1119, %v3064
        %v3066 = vpop.f32.mrb[0].mxu0
        %v3067 = vpop.f32.mrb[0].mxu0
        %v3068 = vadd.f32 %v1120, %v3067
        %v3069 = vpop.f32.mrb[0].mxu0
        %3070 = vmatprep.mubr.bf16.mxu0 0
        %3071 = vmatmul.mubr.bf16.gmra.mrb[0].mxu0 %v2976
        %v3072 = vpop.f32.mrb[0].mxu0
        %v3073 = vadd.f32 %v1121, %v3072
        %v3074 = vpop.f32.mrb[0].mxu0
        %v3075 = vpop.f32.mrb[0].mxu0
        %v3076 = vadd.f32 %v1122, %v3075
        %v3077 = vpop.f32.mrb[0].mxu0
        %3078 = vmatprep.mubr.bf16.mxu0 0
        %3079 = vmatmul.mubr.bf16.gmra.mrb[0].mxu0 %v2979
        %v3080 = vpop.f32.mrb[0].mxu0
        %v3081 = vadd.f32 %v1123, %v3080
        %v3082 = vpop.f32.mrb[0].mxu0
        %v3083 = vpop.f32.mrb[0].mxu0
        %v3084 = vadd.f32 %v1124, %v3083
        %v3085 = vpop.f32.mrb[0].mxu0
        %3086 = vmatprep.mubr.bf16.mxu0 0
        %3087 = vmatmul.mubr.bf16.gmra.mrb[0].mxu0 %v2982
        %v3088 = vpop.f32.mrb[0].mxu0
        %v3089 = vadd.f32 %v1125, %v3088
        %v3090 = vpop.f32.mrb[0].mxu0
        %v3091 = vpop.f32.mrb[0].mxu0
        %v3092 = vadd.f32 %v1126, %v3091
        %v3093 = vpop.f32.mrb[0].mxu0
        %3094 = vmatprep.mubr.bf16.mxu0 0
        %3095 = vmatmul.mubr.bf16.gmra.mrb[0].mxu0 %v2985
        %v3096 = vpop.f32.mrb[0].mxu0
        %v3097 = vadd.f32 %v1127, %v3096
        %v3098 = vpop.f32.mrb[0].mxu0
        %v3099 = vpop.f32.mrb[0].mxu0
        %v3100 = vadd.f32 %v1128, %v3099
        %v3101 = vpop.f32.mrb[0].mxu0
        %3102 = vmatprep.mubr.bf16.mxu0 0
        %3103 = vmatmul.mubr.bf16.gmra.mrb[0].mxu0 %v2988
        %v3104 = vpop.f32.mrb[0].mxu0
        %v3105 = vadd.f32 %v1129, %v3104
        %v3106 = vpop.f32.mrb[0].mxu0
        %v3107 = vpop.f32.mrb[0].mxu0
        %v3108 = vadd.f32 %v1130, %v3107
        %v3109 = vpop.f32.mrb[0].mxu0
        %3110 = vdwg.mxu0
        %3111 = vmax.xlane.f32.xlu0 %v3049
        %v3112 = vpop.xlane.xlu0 %3111
        %3113 = vmax.xlane.f32.xlu0 %v3052
        %v3114 = vpop.xlane.xlu0 %3113
        %3115 = vmax.xlane.f32.xlu0 %v3057
        %v3116 = vpop.xlane.xlu0 %3115
        %3117 = vmax.xlane.f32.xlu0 %v3060
        %v3118 = vpop.xlane.xlu0 %3117
        %3119 = vmax.xlane.f32.xlu0 %v3065
        %v3120 = vpop.xlane.xlu0 %3119
        %3121 = vmax.xlane.f32.xlu0 %v3068
        %v3122 = vpop.xlane.xlu0 %3121
        %3123 = vmax.xlane.f32.xlu0 %v3073
        %v3124 = vpop.xlane.xlu0 %3123
        %3125 = vmax.xlane.f32.xlu0 %v3076
        %v3126 = vpop.xlane.xlu0 %3125
        %3127 = vmax.xlane.f32.xlu0 %v3081
        %v3128 = vpop.xlane.xlu0 %3127
        %3129 = vmax.xlane.f32.xlu0 %v3084
        %v3130 = vpop.xlane.xlu0 %3129
        %3131 = vmax.xlane.f32.xlu0 %v3089
        %v3132 = vpop.xlane.xlu0 %3131
        %3133 = vmax.xlane.f32.xlu0 %v3092
        %v3134 = vpop.xlane.xlu0 %3133
        %3135 = vmax.xlane.f32.xlu0 %v3097
        %v3136 = vpop.xlane.xlu0 %3135
        %3137 = vmax.xlane.f32.xlu0 %v3100
        %v3138 = vpop.xlane.xlu0 %3137
        %3139 = vmax.xlane.f32.xlu0 %v3105
        %v3140 = vpop.xlane.xlu0 %3139
        %3141 = vmax.xlane.f32.xlu0 %v3108
        %v3142 = vpop.xlane.xlu0 %3141
        %v3143 = vsub.f32 %v3049, %v3112
        %v3144 = vsub.f32 %v3052, %v3114
        %v3145 = vsub.f32 %v3057, %v3116
        %v3146 = vsub.f32 %v3060, %v3118
        %v3147 = vsub.f32 %v3065, %v3120
        %v3148 = vsub.f32 %v3068, %v3122
        %v3149 = vsub.f32 %v3073, %v3124
        %v3150 = vsub.f32 %v3076, %v3126
        %v3151 = vsub.f32 %v3081, %v3128
        %v3152 = vsub.f32 %v3084, %v3130
        %v3153 = vsub.f32 %v3089, %v3132
        %v3154 = vsub.f32 %v3092, %v3134
        %v3155 = vsub.f32 %v3097, %v3136
        %v3156 = vsub.f32 %v3100, %v3138
        %v3157 = vsub.f32 %v3105, %v3140
        %v3158 = vsub.f32 %v3108, %v3142
        %v3159 = vmul.f32 %v3143, 1.442695
        %v3160 = vpow.pop %v3159
        %v3161 = vmul.f32 %v3144, 1.442695
        %v3162 = vpow.pop %v3161
        %v3163 = vmul.f32 %v3145, 1.442695
        %v3164 = vpow.pop %v3163
        %v3165 = vmul.f32 %v3146, 1.442695
        %v3166 = vpow.pop %v3165
        %v3167 = vmul.f32 %v3147, 1.442695
        %v3168 = vpow.pop %v3167
        %v3169 = vmul.f32 %v3148, 1.442695
        %v3170 = vpow.pop %v3169
        %v3171 = vmul.f32 %v3149, 1.442695
        %v3172 = vpow.pop %v3171
        %v3173 = vmul.f32 %v3150, 1.442695
        %v3174 = vpow.pop %v3173
        %v3175 = vmul.f32 %v3151, 1.442695
        %v3176 = vpow.pop %v3175
        %v3177 = vmul.f32 %v3152, 1.442695
        %v3178 = vpow.pop %v3177
        %v3179 = vmul.f32 %v3153, 1.442695
        %v3180 = vpow.pop %v3179
        %v3181 = vmul.f32 %v3154, 1.442695
        %v3182 = vpow.pop %v3181
        %v3183 = vmul.f32 %v3155, 1.442695
        %v3184 = vpow.pop %v3183
        %v3185 = vmul.f32 %v3156, 1.442695
        %v3186 = vpow.pop %v3185
        %v3187 = vmul.f32 %v3157, 1.442695
        %v3188 = vpow.pop %v3187
        %v3189 = vmul.f32 %v3158, 1.442695
        %v3190 = vpow.pop %v3189
        %3191 = vadd.xlane.f32.xlu0 %v3160
        %v3192 = vpop.xlane.xlu0 %3191
        %3193 = vadd.xlane.f32.xlu0 %v3162
        %v3194 = vpop.xlane.xlu0 %3193
        %3195 = vadd.xlane.f32.xlu0 %v3164
        %v3196 = vpop.xlane.xlu0 %3195
        %3197 = vadd.xlane.f32.xlu0 %v3166
        %v3198 = vpop.xlane.xlu0 %3197
        %3199 = vadd.xlane.f32.xlu0 %v3168
        %v3200 = vpop.xlane.xlu0 %3199
        %3201 = vadd.xlane.f32.xlu0 %v3170
        %v3202 = vpop.xlane.xlu0 %3201
        %3203 = vadd.xlane.f32.xlu0 %v3172
        %v3204 = vpop.xlane.xlu0 %3203
        %3205 = vadd.xlane.f32.xlu0 %v3174
        %v3206 = vpop.xlane.xlu0 %3205
        %3207 = vadd.xlane.f32.xlu0 %v3176
        %v3208 = vpop.xlane.xlu0 %3207
        %3209 = vadd.xlane.f32.xlu0 %v3178
        %v3210 = vpop.xlane.xlu0 %3209
        %3211 = vadd.xlane.f32.xlu0 %v3180
        %v3212 = vpop.xlane.xlu0 %3211
        %3213 = vadd.xlane.f32.xlu0 %v3182
        %v3214 = vpop.xlane.xlu0 %3213
        %3215 = vadd.xlane.f32.xlu0 %v3184
        %v3216 = vpop.xlane.xlu0 %3215
        %3217 = vadd.xlane.f32.xlu0 %v3186
        %v3218 = vpop.xlane.xlu0 %3217
        %3219 = vadd.xlane.f32.xlu0 %v3188
        %v3220 = vpop.xlane.xlu0 %3219
        %3221 = vadd.xlane.f32.xlu0 %v3190
        %v3222 = vpop.xlane.xlu0 %3221
        %v3223 = vrcp.pop %v3192
        %v3224 = vrcp.pop %v3194
        %v3225 = vrcp.pop %v3196
        %v3226 = vrcp.pop %v3198
        %v3227 = vrcp.pop %v3200
        %v3228 = vrcp.pop %v3202
        %v3229 = vrcp.pop %v3204
        %v3230 = vrcp.pop %v3206
        %v3231 = vrcp.pop %v3208
        %v3232 = vrcp.pop %v3210
        %v3233 = vrcp.pop %v3212
        %v3234 = vrcp.pop %v3214
        %v3235 = vrcp.pop %v3216
        %v3236 = vrcp.pop %v3218
        %v3237 = vrcp.pop %v3220
        %v3238 = vrcp.pop %v3222
        %v3239 = vmul.f32 %v3160, %v3223
        %v3240 = vmul.f32 %v3162, %v3224
        %v3241 = vmul.f32 %v3164, %v3225
        %v3242 = vmul.f32 %v3166, %v3226
        %v3243 = vmul.f32 %v3168, %v3227
        %v3244 = vmul.f32 %v3170, %v3228
        %v3245 = vmul.f32 %v3172, %v3229
        %v3246 = vmul.f32 %v3174, %v3230
        %v3247 = vmul.f32 %v3176, %v3231
        %v3248 = vmul.f32 %v3178, %v3232
        %v3249 = vmul.f32 %v3180, %v3233
        %v3250 = vmul.f32 %v3182, %v3234
        %v3251 = vmul.f32 %v3184, %v3235
        %v3252 = vmul.f32 %v3186, %v3236
        %v3253 = vmul.f32 %v3188, %v3237
        %v3254 = vmul.f32 %v3190, %v3238
        %v3255 = vpack.c.bf16 %v3240, %v3239
        %v3256 = vpack.c.bf16 %v3242, %v3241
        %v3257 = vpack.c.bf16 %v3244, %v3243
        %v3258 = vpack.c.bf16 %v3246, %v3245
        %v3259 = vpack.c.bf16 %v3248, %v3247
        %v3260 = vpack.c.bf16 %v3250, %v3249
        %v3261 = vpack.c.bf16 %v3252, %v3251
        %v3262 = vpack.c.bf16 %v3254, %v3253
        %3263 = vrot.lane.b32.xlu0 %v1599, 80
        %v3264 = vpop.permute.xlu0 %3263
        %3265 = vrot.lane.b32.xlu0 %v1600, 80
        %v3266 = vpop.permute.xlu0 %3265
        %3267 = vrot.lane.b32.xlu0 %v1601, 80
        %v3268 = vpop.permute.xlu0 %3267
        %3269 = vrot.lane.b32.xlu0 %v1602, 80
        %v3270 = vpop.permute.xlu0 %3269
        %3271 = vrot.lane.b32.xlu0 %v1603, 80
        %v3272 = vpop.permute.xlu0 %3271
        %3273 = vrot.lane.b32.xlu0 %v1604, 80
        %v3274 = vpop.permute.xlu0 %3273
        %3275 = vrot.lane.b32.xlu0 %v1605, 80
        %v3276 = vpop.permute.xlu0 %3275
        %3277 = vrot.lane.b32.xlu0 %v1606, 80
        %v3278 = vpop.permute.xlu0 %3277
        %3287 = vmatprep.subr.bf16.mxu0 0
        %3288 = vmatpush1.bf16.msra.mxu0 %v3264
        %3289 = vmatprep.subr.bf16.mxu0 0
        %3290 = vmatpush1.bf16.msra.mxu0 %v3266
        %3291 = vmatprep.subr.bf16.mxu0 0
        %3292 = vmatpush1.bf16.msra.mxu0 %v3268
        %3293 = vmatprep.subr.bf16.mxu0 0
        %3294 = vmatpush1.bf16.msra.mxu0 %v3270
        %3295 = vmatprep.subr.bf16.mxu0 0
        %3296 = vmatpush1.bf16.msra.mxu0 %v3272
        %3297 = vmatprep.subr.bf16.mxu0 0
        %3298 = vmatpush1.bf16.msra.mxu0 %v3274
        %3299 = vmatprep.subr.bf16.mxu0 0
        %3300 = vmatpush1.bf16.msra.mxu0 %v3276
        %3301 = vmatprep.subr.bf16.mxu0 0
        %3302 = vmatpush1.bf16.msra.mxu0 %v3278
        %3303 = vmatprep.subr.bf16.mxu0 0
        %3304 = vmatpush1.bf16.msra.mxu0 0
        %3305 = vmatprep.subr.bf16.mxu0 0
        %3306 = vmatpush1.bf16.msra.mxu0 0
        %3307 = vmatprep.subr.bf16.mxu0 0
        %3308 = vmatpush1.bf16.msra.mxu0 0
        %3309 = vmatprep.subr.bf16.mxu0 0
        %3310 = vmatpush1.bf16.msra.mxu0 0
        %3311 = vmatprep.subr.bf16.mxu0 0
        %3312 = vmatpush1.bf16.msra.mxu0 0
        %3313 = vmatprep.subr.bf16.mxu0 0
        %3314 = vmatpush1.bf16.msra.mxu0 0
        %3315 = vmatprep.subr.bf16.mxu0 0
        %3316 = vmatpush1.bf16.msra.mxu0 0
        %3317 = vmatprep.subr.bf16.mxu0 0
        %3318 = vmatpush1.bf16.msra.mxu0 0
        %3319 = vmatprep.mubr.bf16.mxu0 0
        %3320 = vmatmul.mubr.bf16.gmra.mrb[0].mxu0 %v3255
        %v3321 = vpop.f32.mrb[0].mxu0
        %v3322 = vadd.f32 0.0, %v3321
        %v3323 = vpop.f32.mrb[0].mxu0
        %v3324 = vpop.f32.mrb[0].mxu0
        %v3325 = vadd.f32 0.0, %v3324
        %v3326 = vpop.f32.mrb[0].mxu0
        %3327 = vmatprep.mubr.bf16.mxu0 0
        %3328 = vmatmul.mubr.bf16.gmra.mrb[0].mxu0 %v3256
        %v3329 = vpop.f32.mrb[0].mxu0
        %v3330 = vadd.f32 0.0, %v3329
        %v3331 = vpop.f32.mrb[0].mxu0
        %v3332 = vpop.f32.mrb[0].mxu0
        %v3333 = vadd.f32 0.0, %v3332
        %v3334 = vpop.f32.mrb[0].mxu0
        %3335 = vmatprep.mubr.bf16.mxu0 0
        %3336 = vmatmul.mubr.bf16.gmra.mrb[0].mxu0 %v3257
        %v3337 = vpop.f32.mrb[0].mxu0
        %v3338 = vadd.f32 0.0, %v3337
        %v3339 = vpop.f32.mrb[0].mxu0
        %v3340 = vpop.f32.mrb[0].mxu0
        %v3341 = vadd.f32 0.0, %v3340
        %v3342 = vpop.f32.mrb[0].mxu0
        %3343 = vmatprep.mubr.bf16.mxu0 0
        %3344 = vmatmul.mubr.bf16.gmra.mrb[0].mxu0 %v3258
        %v3345 = vpop.f32.mrb[0].mxu0
        %v3346 = vadd.f32 0.0, %v3345
        %v3347 = vpop.f32.mrb[0].mxu0
        %v3348 = vpop.f32.mrb[0].mxu0
        %v3349 = vadd.f32 0.0, %v3348
        %v3350 = vpop.f32.mrb[0].mxu0
        %3351 = vmatprep.mubr.bf16.mxu0 0
        %3352 = vmatmul.mubr.bf16.gmra.mrb[0].mxu0 %v3259
        %v3353 = vpop.f32.mrb[0].mxu0
        %v3354 = vadd.f32 0.0, %v3353
        %v3355 = vpop.f32.mrb[0].mxu0
        %v3356 = vpop.f32.mrb[0].mxu0
        %v3357 = vadd.f32 0.0, %v3356
        %v3358 = vpop.f32.mrb[0].mxu0
        %3359 = vmatprep.mubr.bf16.mxu0 0
        %3360 = vmatmul.mubr.bf16.gmra.mrb[0].mxu0 %v3260
        %v3361 = vpop.f32.mrb[0].mxu0
        %v3362 = vadd.f32 0.0, %v3361
        %v3363 = vpop.f32.mrb[0].mxu0
        %v3364 = vpop.f32.mrb[0].mxu0
        %v3365 = vadd.f32 0.0, %v3364
        %v3366 = vpop.f32.mrb[0].mxu0
        %3367 = vmatprep.mubr.bf16.mxu0 0
        %3368 = vmatmul.mubr.bf16.gmra.mrb[0].mxu0 %v3261
        %v3369 = vpop.f32.mrb[0].mxu0
        %v3370 = vadd.f32 0.0, %v3369
        %v3371 = vpop.f32.mrb[0].mxu0
        %v3372 = vpop.f32.mrb[0].mxu0
        %v3373 = vadd.f32 0.0, %v3372
        %v3374 = vpop.f32.mrb[0].mxu0
        %3375 = vmatprep.mubr.bf16.mxu0 0
        %3376 = vmatmul.mubr.bf16.gmra.mrb[0].mxu0 %v3262
        %v3377 = vpop.f32.mrb[0].mxu0
        %v3378 = vadd.f32 0.0, %v3377
        %v3379 = vpop.f32.mrb[0].mxu0
        %v3380 = vpop.f32.mrb[0].mxu0
        %v3381 = vadd.f32 0.0, %v3380
        %v3382 = vpop.f32.mrb[0].mxu0
        %3383 = vdwg.mxu0
        %3400 = vrot.lane.b32.xlu0 %v2422, 16
        %v3401 = vpop.permute.xlu0 %3400
        %3402 = vrot.lane.b32.xlu0 %v2425, 16
        %v3403 = vpop.permute.xlu0 %3402
        %3404 = vrot.lane.b32.xlu0 %v2430, 16
        %v3405 = vpop.permute.xlu0 %3404
        %3406 = vrot.lane.b32.xlu0 %v2433, 16
        %v3407 = vpop.permute.xlu0 %3406
        %3408 = vrot.lane.b32.xlu0 %v2438, 16
        %v3409 = vpop.permute.xlu0 %3408
        %3410 = vrot.lane.b32.xlu0 %v2441, 16
        %v3411 = vpop.permute.xlu0 %3410
        %3412 = vrot.lane.b32.xlu0 %v2446, 16
        %v3413 = vpop.permute.xlu0 %3412
        %3414 = vrot.lane.b32.xlu0 %v2449, 16
        %v3415 = vpop.permute.xlu0 %3414
        %3416 = vrot.lane.b32.xlu0 %v2454, 16
        %v3417 = vpop.permute.xlu0 %3416
        %3418 = vrot.lane.b32.xlu0 %v2457, 16
        %v3419 = vpop.permute.xlu0 %3418
        %3420 = vrot.lane.b32.xlu0 %v2462, 16
        %v3421 = vpop.permute.xlu0 %3420
        %3422 = vrot.lane.b32.xlu0 %v2465, 16
        %v3423 = vpop.permute.xlu0 %3422
        %3424 = vrot.lane.b32.xlu0 %v2470, 16
        %v3425 = vpop.permute.xlu0 %3424
        %3426 = vrot.lane.b32.xlu0 %v2473, 16
        %v3427 = vpop.permute.xlu0 %3426
        %3428 = vrot.lane.b32.xlu0 %v2478, 16
        %v3429 = vpop.permute.xlu0 %3428
        %3430 = vrot.lane.b32.xlu0 %v2481, 16
        %v3431 = vpop.permute.xlu0 %3430
        %3464 = vrot.lane.b32.xlu0 %v2872, 32
        %v3465 = vpop.permute.xlu0 %3464
        %3466 = vrot.lane.b32.xlu0 %v2875, 32
        %v3467 = vpop.permute.xlu0 %3466
        %3468 = vrot.lane.b32.xlu0 %v2880, 32
        %v3469 = vpop.permute.xlu0 %3468
        %3470 = vrot.lane.b32.xlu0 %v2883, 32
        %v3471 = vpop.permute.xlu0 %3470
        %3472 = vrot.lane.b32.xlu0 %v2888, 32
        %v3473 = vpop.permute.xlu0 %3472
        %3474 = vrot.lane.b32.xlu0 %v2891, 32
        %v3475 = vpop.permute.xlu0 %3474
        %3476 = vrot.lane.b32.xlu0 %v2896, 32
        %v3477 = vpop.permute.xlu0 %3476
        %3478 = vrot.lane.b32.xlu0 %v2899, 32
        %v3479 = vpop.permute.xlu0 %3478
        %3480 = vrot.lane.b32.xlu0 %v2904, 32
        %v3481 = vpop.permute.xlu0 %3480
        %3482 = vrot.lane.b32.xlu0 %v2907, 32
        %v3483 = vpop.permute.xlu0 %3482
        %3484 = vrot.lane.b32.xlu0 %v2912, 32
        %v3485 = vpop.permute.xlu0 %3484
        %3486 = vrot.lane.b32.xlu0 %v2915, 32
        %v3487 = vpop.permute.xlu0 %3486
        %3488 = vrot.lane.b32.xlu0 %v2920, 32
        %v3489 = vpop.permute.xlu0 %3488
        %3490 = vrot.lane.b32.xlu0 %v2923, 32
        %v3491 = vpop.permute.xlu0 %3490
        %3492 = vrot.lane.b32.xlu0 %v2928, 32
        %v3493 = vpop.permute.xlu0 %3492
        %3494 = vrot.lane.b32.xlu0 %v2931, 32
        %v3495 = vpop.permute.xlu0 %3494
        %3528 = vrot.lane.b32.xlu0 %v3322, 48
        %v3529 = vpop.permute.xlu0 %3528
        %3530 = vrot.lane.b32.xlu0 %v3325, 48
        %v3531 = vpop.permute.xlu0 %3530
        %3532 = vrot.lane.b32.xlu0 %v3330, 48
        %v3533 = vpop.permute.xlu0 %3532
        %3534 = vrot.lane.b32.xlu0 %v3333, 48
        %v3535 = vpop.permute.xlu0 %3534
        %3536 = vrot.lane.b32.xlu0 %v3338, 48
        %v3537 = vpop.permute.xlu0 %3536
        %3538 = vrot.lane.b32.xlu0 %v3341, 48
        %v3539 = vpop.permute.xlu0 %3538
        %3540 = vrot.lane.b32.xlu0 %v3346, 48
        %v3541 = vpop.permute.xlu0 %3540
        %3542 = vrot.lane.b32.xlu0 %v3349, 48
        %v3543 = vpop.permute.xlu0 %3542
        %3544 = vrot.lane.b32.xlu0 %v3354, 48
        %v3545 = vpop.permute.xlu0 %3544
        %3546 = vrot.lane.b32.xlu0 %v3357, 48
        %v3547 = vpop.permute.xlu0 %3546
        %3548 = vrot.lane.b32.xlu0 %v3362, 48
        %v3549 = vpop.permute.xlu0 %3548
        %3550 = vrot.lane.b32.xlu0 %v3365, 48
        %v3551 = vpop.permute.xlu0 %3550
        %3552 = vrot.lane.b32.xlu0 %v3370, 48
        %v3553 = vpop.permute.xlu0 %3552
        %3554 = vrot.lane.b32.xlu0 %v3373, 48
        %v3555 = vpop.permute.xlu0 %3554
        %3556 = vrot.lane.b32.xlu0 %v3378, 48
        %v3557 = vpop.permute.xlu0 %3556
        %3558 = vrot.lane.b32.xlu0 %v3381, 48
        %v3559 = vpop.permute.xlu0 %3558
        %v3576 = vsel %vm1631, %v1964, %v3401
        %v3577 = vsel %vm1631, %v1967, %v3403
        %v3578 = vsel %vm1631, %v1972, %v3405
        %v3579 = vsel %vm1631, %v1975, %v3407
        %v3580 = vsel %vm1631, %v1980, %v3409
        %v3581 = vsel %vm1631, %v1983, %v3411
        %v3582 = vsel %vm1631, %v1988, %v3413
        %v3583 = vsel %vm1631, %v1991, %v3415
        %v3584 = vsel %vm1631, %v1996, %v3417
        %v3585 = vsel %vm1631, %v1999, %v3419
        %v3586 = vsel %vm1631, %v2004, %v3421
        %v3587 = vsel %vm1631, %v2007, %v3423
        %v3588 = vsel %vm1631, %v2012, %v3425
        %v3589 = vsel %vm1631, %v2015, %v3427
        %v3590 = vsel %vm1631, %v2020, %v3429
        %v3591 = vsel %vm1631, %v2023, %v3431
        %vm3592 = vcmask 261120
        %v3593 = vsel %vm3592, %v3576, %v3465
        %v3594 = vsel %vm3592, %v3577, %v3467
        %v3595 = vsel %vm3592, %v3578, %v3469
        %v3596 = vsel %vm3592, %v3579, %v3471
        %v3597 = vsel %vm3592, %v3580, %v3473
        %v3598 = vsel %vm3592, %v3581, %v3475
        %v3599 = vsel %vm3592, %v3582, %v3477
        %v3600 = vsel %vm3592, %v3583, %v3479
        %v3601 = vsel %vm3592, %v3584, %v3481
        %v3602 = vsel %vm3592, %v3585, %v3483
        %v3603 = vsel %vm3592, %v3586, %v3485
        %v3604 = vsel %vm3592, %v3587, %v3487
        %v3605 = vsel %vm3592, %v3588, %v3489
        %v3606 = vsel %vm3592, %v3589, %v3491
        %v3607 = vsel %vm3592, %v3590, %v3493
        %v3608 = vsel %vm3592, %v3591, %v3495
        %vm3609 = vcmask 392192
        %v3610 = vsel %vm3609, %v3593, %v3529
        %v3611 = vsel %vm3609, %v3594, %v3531
        %v3612 = vsel %vm3609, %v3595, %v3533
        %v3613 = vsel %vm3609, %v3596, %v3535
        %v3614 = vsel %vm3609, %v3597, %v3537
        %v3615 = vsel %vm3609, %v3598, %v3539
        %v3616 = vsel %vm3609, %v3599, %v3541
        %v3617 = vsel %vm3609, %v3600, %v3543
        %v3618 = vsel %vm3609, %v3601, %v3545
        %v3619 = vsel %vm3609, %v3602, %v3547
        %v3620 = vsel %vm3609, %v3603, %v3549
        %v3621 = vsel %vm3609, %v3604, %v3551
        %v3622 = vsel %vm3609, %v3605, %v3553
        %v3623 = vsel %vm3609, %v3606, %v3555
        %v3624 = vsel %vm3609, %v3607, %v3557
        %v3625 = vsel %vm3609, %v3608, %v3559
        %v3626 = vpack.c.bf16 %v3611, %v3610
        %v3627 = vpack.c.bf16 %v3613, %v3612
        %v3628 = vpack.c.bf16 %v3615, %v3614
        %v3629 = vpack.c.bf16 %v3617, %v3616
        %v3630 = vpack.c.bf16 %v3619, %v3618
        %v3631 = vpack.c.bf16 %v3621, %v3620
        %v3632 = vpack.c.bf16 %v3623, %v3622
        %v3633 = vpack.c.bf16 %v3625, %v3624
        %v3634 = vld [vmem:[%s7] sm:$0xf]
        %v3635 = vld [vmem:[%s7 + $0x4] sm:$0xf]
        %v3636 = vld [vmem:[%s7 + $0x8] sm:$0xf]
        %v3637 = vld [vmem:[%s7 + $0xc] sm:$0xf]
        %v3638 = vld [vmem:[%s7 + $0x10] sm:$0xf]
        %v3639 = vld [vmem:[%s7 + $0x14] sm:$0xf]
        %v3640 = vld [vmem:[%s7 + $0x18] sm:$0xf]
        %v3641 = vld [vmem:[%s7 + $0x1c] sm:$0xf]
        %v3650 = vunpack.c.l.b16 %v3634
        %v3651 = vunpack.c.l.b16 %v3635
        %v3652 = vunpack.c.l.b16 %v3636
        %v3653 = vunpack.c.l.b16 %v3637
        %v3654 = vunpack.c.l.b16 %v3638
        %v3655 = vunpack.c.l.b16 %v3639
        %v3656 = vunpack.c.l.b16 %v3640
        %v3657 = vunpack.c.l.b16 %v3641
        %v3658 = vpack.c.b16 %v3651, %v3650
        %v3659 = vpack.c.b16 %v3653, %v3652
        %v3660 = vpack.c.b16 %v3655, %v3654
        %v3661 = vpack.c.b16 %v3657, %v3656
        %v3667 = vsel %vm754, %v3626, 0
        %v3670 = vsel %vm754, %v3627, 0
        %v3673 = vsel %vm754, %v3628, 0
        %v3676 = vsel %vm754, %v3629, 0
        %v3679 = vsel %vm754, %v3630, 0
        %v3682 = vsel %vm754, %v3631, 0
        %v3685 = vsel %vm754, %v3632, 0
        %v3688 = vsel %vm754, %v3633, 0
        %3690 = vmatprep.subr.bf16.mxu0 0
        %3691 = vmatpush1.bf16.msra.mxu0 %v3658
        %3692 = vmatprep.subr.bf16.mxu0 0
        %3693 = vmatpush1.bf16.msra.mxu0 %v3659
        %3694 = vmatprep.subr.bf16.mxu0 0
        %3695 = vmatpush1.bf16.msra.mxu0 %v3660
        %3696 = vmatprep.subr.bf16.mxu0 0
        %3697 = vmatpush1.bf16.msra.mxu0 %v3661
        %3698 = vmatprep.subr.bf16.mxu0 0
        %3699 = vmatpush1.bf16.msra.mxu0 0
        %3700 = vmatprep.subr.bf16.mxu0 0
        %3701 = vmatpush1.bf16.msra.mxu0 0
        %3702 = vmatprep.subr.bf16.mxu0 0
        %3703 = vmatpush1.bf16.msra.mxu0 0
        %3704 = vmatprep.subr.bf16.mxu0 0
        %3705 = vmatpush1.bf16.msra.mxu0 0
        %3706 = vmatprep.subr.bf16.mxu0 0
        %3707 = vmatpush1.bf16.msra.mxu0 0
        %3708 = vmatprep.subr.bf16.mxu0 0
        %3709 = vmatpush1.bf16.msra.mxu0 0
        %3710 = vmatprep.subr.bf16.mxu0 0
        %3711 = vmatpush1.bf16.msra.mxu0 0
        %3712 = vmatprep.subr.bf16.mxu0 0
        %3713 = vmatpush1.bf16.msra.mxu0 0
        %3714 = vmatprep.subr.bf16.mxu0 0
        %3715 = vmatpush1.bf16.msra.mxu0 0
        %3716 = vmatprep.subr.bf16.mxu0 0
        %3717 = vmatpush1.bf16.msra.mxu0 0
        %3718 = vmatprep.subr.bf16.mxu0 0
        %3719 = vmatpush1.bf16.msra.mxu0 0
        %3720 = vmatprep.subr.bf16.mxu0 0
        %3721 = vmatpush1.bf16.msra.mxu0 0
        %3722 = vmatprep.mubr.bf16.mxu0 0
        %3723 = vmatmul.mubr.bf16.gmra.mrb[0].mxu0 %v3667
        %v3724 = vpop.f32.mrb[0].mxu0
        %v3725 = vadd.f32 0.0, %v3724
        %v3726 = vpop.f32.mrb[0].mxu0
        %v3727 = vpop.f32.mrb[0].mxu0
        %v3728 = vadd.f32 0.0, %v3727
        %v3729 = vpop.f32.mrb[0].mxu0
        %3730 = vmatprep.mubr.bf16.mxu0 0
        %3731 = vmatmul.mubr.bf16.gmra.mrb[0].mxu0 %v3670
        %v3732 = vpop.f32.mrb[0].mxu0
        %v3733 = vadd.f32 0.0, %v3732
        %v3734 = vpop.f32.mrb[0].mxu0
        %v3735 = vpop.f32.mrb[0].mxu0
        %v3736 = vadd.f32 0.0, %v3735
        %v3737 = vpop.f32.mrb[0].mxu0
        %3738 = vmatprep.mubr.bf16.mxu0 0
        %3739 = vmatmul.mubr.bf16.gmra.mrb[0].mxu0 %v3673
        %v3740 = vpop.f32.mrb[0].mxu0
        %v3741 = vadd.f32 0.0, %v3740
        %v3742 = vpop.f32.mrb[0].mxu0
        %v3743 = vpop.f32.mrb[0].mxu0
        %v3744 = vadd.f32 0.0, %v3743
        %v3745 = vpop.f32.mrb[0].mxu0
        %3746 = vmatprep.mubr.bf16.mxu0 0
        %3747 = vmatmul.mubr.bf16.gmra.mrb[0].mxu0 %v3676
        %v3748 = vpop.f32.mrb[0].mxu0
        %v3749 = vadd.f32 0.0, %v3748
        %v3750 = vpop.f32.mrb[0].mxu0
        %v3751 = vpop.f32.mrb[0].mxu0
        %v3752 = vadd.f32 0.0, %v3751
        %v3753 = vpop.f32.mrb[0].mxu0
        %3754 = vmatprep.mubr.bf16.mxu0 0
        %3755 = vmatmul.mubr.bf16.gmra.mrb[0].mxu0 %v3679
        %v3756 = vpop.f32.mrb[0].mxu0
        %v3757 = vadd.f32 0.0, %v3756
        %v3758 = vpop.f32.mrb[0].mxu0
        %v3759 = vpop.f32.mrb[0].mxu0
        %v3760 = vadd.f32 0.0, %v3759
        %v3761 = vpop.f32.mrb[0].mxu0
        %3762 = vmatprep.mubr.bf16.mxu0 0
        %3763 = vmatmul.mubr.bf16.gmra.mrb[0].mxu0 %v3682
        %v3764 = vpop.f32.mrb[0].mxu0
        %v3765 = vadd.f32 0.0, %v3764
        %v3766 = vpop.f32.mrb[0].mxu0
        %v3767 = vpop.f32.mrb[0].mxu0
        %v3768 = vadd.f32 0.0, %v3767
        %v3769 = vpop.f32.mrb[0].mxu0
        %3770 = vmatprep.mubr.bf16.mxu0 0
        %3771 = vmatmul.mubr.bf16.gmra.mrb[0].mxu0 %v3685
        %v3772 = vpop.f32.mrb[0].mxu0
        %v3773 = vadd.f32 0.0, %v3772
        %v3774 = vpop.f32.mrb[0].mxu0
        %v3775 = vpop.f32.mrb[0].mxu0
        %v3776 = vadd.f32 0.0, %v3775
        %v3777 = vpop.f32.mrb[0].mxu0
        %3778 = vmatprep.mubr.bf16.mxu0 0
        %3779 = vmatmul.mubr.bf16.gmra.mrb[0].mxu0 %v3688
        %v3780 = vpop.f32.mrb[0].mxu0
        %v3781 = vadd.f32 0.0, %v3780
        %v3782 = vpop.f32.mrb[0].mxu0
        %v3783 = vpop.f32.mrb[0].mxu0
        %v3784 = vadd.f32 0.0, %v3783
        %v3785 = vpop.f32.mrb[0].mxu0
        %3786 = vdwg.mxu0
        %v3787 = vadd.f32 %v814, %v3725
        %v3788 = vadd.f32 %v817, %v3728
        %v3789 = vadd.f32 %v822, %v3733
        %v3790 = vadd.f32 %v825, %v3736
        %v3791 = vadd.f32 %v830, %v3741
        %v3792 = vadd.f32 %v833, %v3744
        %v3793 = vadd.f32 %v838, %v3749
        %v3794 = vadd.f32 %v841, %v3752
        %v3795 = vadd.f32 %v846, %v3757
        %v3796 = vadd.f32 %v849, %v3760
        %v3797 = vadd.f32 %v854, %v3765
        %v3798 = vadd.f32 %v857, %v3768
        %v3799 = vadd.f32 %v862, %v3773
        %v3800 = vadd.f32 %v865, %v3776
        %v3801 = vadd.f32 %v870, %v3781
        %v3802 = vadd.f32 %v873, %v3784
        %v3803 = vld [vmem:[%s8] sm:$0x1]
        %v3805 = vlaneseq
        %v3806 = vshrl.u32 %v3805, 7
        %v3807 = vsub.s32 0, %v3806
        %v3808 = vrot.slane %v3803, %v3807
        %v3810 = vadd.f32 %v3787, %v3808
        %v3811 = vadd.f32 %v3788, %v3808
        %v3812 = vadd.f32 %v3789, %v3808
        %v3813 = vadd.f32 %v3790, %v3808
        %v3814 = vadd.f32 %v3791, %v3808
        %v3815 = vadd.f32 %v3792, %v3808
        %v3816 = vadd.f32 %v3793, %v3808
        %v3817 = vadd.f32 %v3794, %v3808
        %v3818 = vadd.f32 %v3795, %v3808
        %v3819 = vadd.f32 %v3796, %v3808
        %v3820 = vadd.f32 %v3797, %v3808
        %v3821 = vadd.f32 %v3798, %v3808
        %v3822 = vadd.f32 %v3799, %v3808
        %v3823 = vadd.f32 %v3800, %v3808
        %v3824 = vadd.f32 %v3801, %v3808
        %v3825 = vadd.f32 %v3802, %v3808
        %v3826 = vld [vmem:[%s9] sm:$0x1]
        %v3827 = vld [vmem:[%s10] sm:$0x1]
        %v3828 = vsel %vm754, %v3810, 0.0
        %3829 = vadd.xlane.f32.xlu0 %v3828
        %v3830 = vpop.xlane.xlu0 %3829
        %v3831 = vsel %vm754, %v3811, 0.0
        %3832 = vadd.xlane.f32.xlu0 %v3831
        %v3833 = vpop.xlane.xlu0 %3832
        %v3834 = vsel %vm754, %v3812, 0.0
        %3835 = vadd.xlane.f32.xlu0 %v3834
        %v3836 = vpop.xlane.xlu0 %3835
        %v3837 = vsel %vm754, %v3813, 0.0
        %3838 = vadd.xlane.f32.xlu0 %v3837
        %v3839 = vpop.xlane.xlu0 %3838
        %v3840 = vsel %vm754, %v3814, 0.0
        %3841 = vadd.xlane.f32.xlu0 %v3840
        %v3842 = vpop.xlane.xlu0 %3841
        %v3843 = vsel %vm754, %v3815, 0.0
        %3844 = vadd.xlane.f32.xlu0 %v3843
        %v3845 = vpop.xlane.xlu0 %3844
        %v3846 = vsel %vm754, %v3816, 0.0
        %3847 = vadd.xlane.f32.xlu0 %v3846
        %v3848 = vpop.xlane.xlu0 %3847
        %v3849 = vsel %vm754, %v3817, 0.0
        %3850 = vadd.xlane.f32.xlu0 %v3849
        %v3851 = vpop.xlane.xlu0 %3850
        %v3852 = vsel %vm754, %v3818, 0.0
        %3853 = vadd.xlane.f32.xlu0 %v3852
        %v3854 = vpop.xlane.xlu0 %3853
        %v3855 = vsel %vm754, %v3819, 0.0
        %3856 = vadd.xlane.f32.xlu0 %v3855
        %v3857 = vpop.xlane.xlu0 %3856
        %v3858 = vsel %vm754, %v3820, 0.0
        %3859 = vadd.xlane.f32.xlu0 %v3858
        %v3860 = vpop.xlane.xlu0 %3859
        %v3861 = vsel %vm754, %v3821, 0.0
        %3862 = vadd.xlane.f32.xlu0 %v3861
        %v3863 = vpop.xlane.xlu0 %3862
        %v3864 = vsel %vm754, %v3822, 0.0
        %3865 = vadd.xlane.f32.xlu0 %v3864
        %v3866 = vpop.xlane.xlu0 %3865
        %v3867 = vsel %vm754, %v3823, 0.0
        %3868 = vadd.xlane.f32.xlu0 %v3867
        %v3869 = vpop.xlane.xlu0 %3868
        %v3870 = vsel %vm754, %v3824, 0.0
        %3871 = vadd.xlane.f32.xlu0 %v3870
        %v3872 = vpop.xlane.xlu0 %3871
        %v3873 = vsel %vm754, %v3825, 0.0
        %3874 = vadd.xlane.f32.xlu0 %v3873
        %v3875 = vpop.xlane.xlu0 %3874
        %v3876 = vmul.f32 %v3830, %v1181
        %v3877 = vmul.f32 %v3833, %v1181
        %v3878 = vmul.f32 %v3836, %v1181
        %v3879 = vmul.f32 %v3839, %v1181
        %v3880 = vmul.f32 %v3842, %v1181
        %v3881 = vmul.f32 %v3845, %v1181
        %v3882 = vmul.f32 %v3848, %v1181
        %v3883 = vmul.f32 %v3851, %v1181
        %v3884 = vmul.f32 %v3854, %v1181
        %v3885 = vmul.f32 %v3857, %v1181
        %v3886 = vmul.f32 %v3860, %v1181
        %v3887 = vmul.f32 %v3863, %v1181
        %v3888 = vmul.f32 %v3866, %v1181
        %v3889 = vmul.f32 %v3869, %v1181
        %v3890 = vmul.f32 %v3872, %v1181
        %v3891 = vmul.f32 %v3875, %v1181
        %v3892 = vsub.f32 %v3810, %v3876
        %v3893 = vsub.f32 %v3811, %v3877
        %v3894 = vsub.f32 %v3812, %v3878
        %v3895 = vsub.f32 %v3813, %v3879
        %v3896 = vsub.f32 %v3814, %v3880
        %v3897 = vsub.f32 %v3815, %v3881
        %v3898 = vsub.f32 %v3816, %v3882
        %v3899 = vsub.f32 %v3817, %v3883
        %v3900 = vsub.f32 %v3818, %v3884
        %v3901 = vsub.f32 %v3819, %v3885
        %v3902 = vsub.f32 %v3820, %v3886
        %v3903 = vsub.f32 %v3821, %v3887
        %v3904 = vsub.f32 %v3822, %v3888
        %v3905 = vsub.f32 %v3823, %v3889
        %v3906 = vsub.f32 %v3824, %v3890
        %v3907 = vsub.f32 %v3825, %v3891
        %v3908 = vmul.f32 %v3892, %v3892
        %v3909 = vmul.f32 %v3893, %v3893
        %v3910 = vmul.f32 %v3894, %v3894
        %v3911 = vmul.f32 %v3895, %v3895
        %v3912 = vmul.f32 %v3896, %v3896
        %v3913 = vmul.f32 %v3897, %v3897
        %v3914 = vmul.f32 %v3898, %v3898
        %v3915 = vmul.f32 %v3899, %v3899
        %v3916 = vmul.f32 %v3900, %v3900
        %v3917 = vmul.f32 %v3901, %v3901
        %v3918 = vmul.f32 %v3902, %v3902
        %v3919 = vmul.f32 %v3903, %v3903
        %v3920 = vmul.f32 %v3904, %v3904
        %v3921 = vmul.f32 %v3905, %v3905
        %v3922 = vmul.f32 %v3906, %v3906
        %v3923 = vmul.f32 %v3907, %v3907
        %v3924 = vsel %vm754, %v3908, 0.0
        %3925 = vadd.xlane.f32.xlu0 %v3924
        %v3926 = vpop.xlane.xlu0 %3925
        %v3927 = vsel %vm754, %v3909, 0.0
        %3928 = vadd.xlane.f32.xlu0 %v3927
        %v3929 = vpop.xlane.xlu0 %3928
        %v3930 = vsel %vm754, %v3910, 0.0
        %3931 = vadd.xlane.f32.xlu0 %v3930
        %v3932 = vpop.xlane.xlu0 %3931
        %v3933 = vsel %vm754, %v3911, 0.0
        %3934 = vadd.xlane.f32.xlu0 %v3933
        %v3935 = vpop.xlane.xlu0 %3934
        %v3936 = vsel %vm754, %v3912, 0.0
        %3937 = vadd.xlane.f32.xlu0 %v3936
        %v3938 = vpop.xlane.xlu0 %3937
        %v3939 = vsel %vm754, %v3913, 0.0
        %3940 = vadd.xlane.f32.xlu0 %v3939
        %v3941 = vpop.xlane.xlu0 %3940
        %v3942 = vsel %vm754, %v3914, 0.0
        %3943 = vadd.xlane.f32.xlu0 %v3942
        %v3944 = vpop.xlane.xlu0 %3943
        %v3945 = vsel %vm754, %v3915, 0.0
        %3946 = vadd.xlane.f32.xlu0 %v3945
        %v3947 = vpop.xlane.xlu0 %3946
        %v3948 = vsel %vm754, %v3916, 0.0
        %3949 = vadd.xlane.f32.xlu0 %v3948
        %v3950 = vpop.xlane.xlu0 %3949
        %v3951 = vsel %vm754, %v3917, 0.0
        %3952 = vadd.xlane.f32.xlu0 %v3951
        %v3953 = vpop.xlane.xlu0 %3952
        %v3954 = vsel %vm754, %v3918, 0.0
        %3955 = vadd.xlane.f32.xlu0 %v3954
        %v3956 = vpop.xlane.xlu0 %3955
        %v3957 = vsel %vm754, %v3919, 0.0
        %3958 = vadd.xlane.f32.xlu0 %v3957
        %v3959 = vpop.xlane.xlu0 %3958
        %v3960 = vsel %vm754, %v3920, 0.0
        %3961 = vadd.xlane.f32.xlu0 %v3960
        %v3962 = vpop.xlane.xlu0 %3961
        %v3963 = vsel %vm754, %v3921, 0.0
        %3964 = vadd.xlane.f32.xlu0 %v3963
        %v3965 = vpop.xlane.xlu0 %3964
        %v3966 = vsel %vm754, %v3922, 0.0
        %3967 = vadd.xlane.f32.xlu0 %v3966
        %v3968 = vpop.xlane.xlu0 %3967
        %v3969 = vsel %vm754, %v3923, 0.0
        %3970 = vadd.xlane.f32.xlu0 %v3969
        %v3971 = vpop.xlane.xlu0 %3970
        %v3972 = vmul.f32 %v3926, %v1181
        %v3973 = vmul.f32 %v3929, %v1181
        %v3974 = vmul.f32 %v3932, %v1181
        %v3975 = vmul.f32 %v3935, %v1181
        %v3976 = vmul.f32 %v3938, %v1181
        %v3977 = vmul.f32 %v3941, %v1181
        %v3978 = vmul.f32 %v3944, %v1181
        %v3979 = vmul.f32 %v3947, %v1181
        %v3980 = vmul.f32 %v3950, %v1181
        %v3981 = vmul.f32 %v3953, %v1181
        %v3982 = vmul.f32 %v3956, %v1181
        %v3983 = vmul.f32 %v3959, %v1181
        %v3984 = vmul.f32 %v3962, %v1181
        %v3985 = vmul.f32 %v3965, %v1181
        %v3986 = vmul.f32 %v3968, %v1181
        %v3987 = vmul.f32 %v3971, %v1181
        %v3988 = vadd.f32 %v3972, 1e-06
        %v3989 = vadd.f32 %v3973, 1e-06
        %v3990 = vadd.f32 %v3974, 1e-06
        %v3991 = vadd.f32 %v3975, 1e-06
        %v3992 = vadd.f32 %v3976, 1e-06
        %v3993 = vadd.f32 %v3977, 1e-06
        %v3994 = vadd.f32 %v3978, 1e-06
        %v3995 = vadd.f32 %v3979, 1e-06
        %v3996 = vadd.f32 %v3980, 1e-06
        %v3997 = vadd.f32 %v3981, 1e-06
        %v3998 = vadd.f32 %v3982, 1e-06
        %v3999 = vadd.f32 %v3983, 1e-06
        %v4000 = vadd.f32 %v3984, 1e-06
        %v4001 = vadd.f32 %v3985, 1e-06
        %v4002 = vadd.f32 %v3986, 1e-06
        %v4003 = vadd.f32 %v3987, 1e-06
        %v4004 = vrsqrt.pop %v3988
        %v4005 = vrsqrt.pop %v3989
        %v4006 = vrsqrt.pop %v3990
        %v4007 = vrsqrt.pop %v3991
        %v4008 = vrsqrt.pop %v3992
        %v4009 = vrsqrt.pop %v3993
        %v4010 = vrsqrt.pop %v3994
        %v4011 = vrsqrt.pop %v3995
        %v4012 = vrsqrt.pop %v3996
        %v4013 = vrsqrt.pop %v3997
        %v4014 = vrsqrt.pop %v3998
        %v4015 = vrsqrt.pop %v3999
        %v4016 = vrsqrt.pop %v4000
        %v4017 = vrsqrt.pop %v4001
        %v4018 = vrsqrt.pop %v4002
        %v4019 = vrsqrt.pop %v4003
        %v4020 = vmul.f32 %v3892, %v4004
        %v4021 = vmul.f32 %v3893, %v4005
        %v4022 = vmul.f32 %v3894, %v4006
        %v4023 = vmul.f32 %v3895, %v4007
        %v4024 = vmul.f32 %v3896, %v4008
        %v4025 = vmul.f32 %v3897, %v4009
        %v4026 = vmul.f32 %v3898, %v4010
        %v4027 = vmul.f32 %v3899, %v4011
        %v4028 = vmul.f32 %v3900, %v4012
        %v4029 = vmul.f32 %v3901, %v4013
        %v4030 = vmul.f32 %v3902, %v4014
        %v4031 = vmul.f32 %v3903, %v4015
        %v4032 = vmul.f32 %v3904, %v4016
        %v4033 = vmul.f32 %v3905, %v4017
        %v4034 = vmul.f32 %v3906, %v4018
        %v4035 = vmul.f32 %v3907, %v4019
        %v4037 = vlaneseq
        %v4038 = vshrl.u32 %v4037, 7
        %v4039 = vsub.s32 0, %v4038
        %v4040 = vrot.slane %v3826, %v4039
        %v4042 = vmul.f32 %v4020, %v4040
        %v4043 = vmul.f32 %v4021, %v4040
        %v4044 = vmul.f32 %v4022, %v4040
        %v4045 = vmul.f32 %v4023, %v4040
        %v4046 = vmul.f32 %v4024, %v4040
        %v4047 = vmul.f32 %v4025, %v4040
        %v4048 = vmul.f32 %v4026, %v4040
        %v4049 = vmul.f32 %v4027, %v4040
        %v4050 = vmul.f32 %v4028, %v4040
        %v4051 = vmul.f32 %v4029, %v4040
        %v4052 = vmul.f32 %v4030, %v4040
        %v4053 = vmul.f32 %v4031, %v4040
        %v4054 = vmul.f32 %v4032, %v4040
        %v4055 = vmul.f32 %v4033, %v4040
        %v4056 = vmul.f32 %v4034, %v4040
        %v4057 = vmul.f32 %v4035, %v4040
        %v4059 = vlaneseq
        %v4060 = vshrl.u32 %v4059, 7
        %v4061 = vsub.s32 0, %v4060
        %v4062 = vrot.slane %v3827, %v4061
        %v4064 = vadd.f32 %v4042, %v4062
        %v4065 = vadd.f32 %v4043, %v4062
        %v4066 = vadd.f32 %v4044, %v4062
        %v4067 = vadd.f32 %v4045, %v4062
        %v4068 = vadd.f32 %v4046, %v4062
        %v4069 = vadd.f32 %v4047, %v4062
        %v4070 = vadd.f32 %v4048, %v4062
        %v4071 = vadd.f32 %v4049, %v4062
        %v4072 = vadd.f32 %v4050, %v4062
        %v4073 = vadd.f32 %v4051, %v4062
        %v4074 = vadd.f32 %v4052, %v4062
        %v4075 = vadd.f32 %v4053, %v4062
        %v4076 = vadd.f32 %v4054, %v4062
        %v4077 = vadd.f32 %v4055, %v4062
        %v4078 = vadd.f32 %v4056, %v4062
        %v4079 = vadd.f32 %v4057, %v4062
        %v4080 = vpack.c.bf16 %v4065, %v4064
        %v4081 = vpack.c.bf16 %v4067, %v4066
        %v4082 = vpack.c.bf16 %v4069, %v4068
        %v4083 = vpack.c.bf16 %v4071, %v4070
        %v4084 = vpack.c.bf16 %v4073, %v4072
        %v4085 = vpack.c.bf16 %v4075, %v4074
        %v4086 = vpack.c.bf16 %v4077, %v4076
        %v4087 = vpack.c.bf16 %v4079, %v4078
        %v4088 = vld [vmem:[%s11] sm:$0xff]
        %v4089 = vld [vmem:[%s11 + $0x8] sm:$0xff]
        %v4090 = vld [vmem:[%s11 + $0x10] sm:$0xff]
        %v4091 = vld [vmem:[%s11 + $0x18] sm:$0xff]
        %v4092 = vld [vmem:[%s11 + $0x20] sm:$0xff]
        %v4093 = vld [vmem:[%s11 + $0x28] sm:$0xff]
        %v4094 = vld [vmem:[%s11 + $0x30] sm:$0xff]
        %v4095 = vld [vmem:[%s11 + $0x38] sm:$0xff]
        %v4096 = vld [vmem:[%s12] sm:$0x3]
        %v4098 = vlaneseq
        %v4099 = vshrl.u32 %v4098, 7
        %v4100 = vsub.s32 0, %v4099
        %v4101 = vrot.slane %v4096, %v4100
        %v4102 = vlaneseq
        %v4103 = vshrl.u32 %v4102, 7
        %v4104 = vsub.s32 1, %v4103
        %v4105 = vrot.slane %v4096, %v4104
        %v4116 = vunpack.c.l.b16 %v4088
        %v4117 = vunpack.c.h.b16 %v4088
        %v4118 = vunpack.c.l.b16 %v4089
        %v4119 = vunpack.c.h.b16 %v4089
        %v4120 = vunpack.c.l.b16 %v4090
        %v4121 = vunpack.c.h.b16 %v4090
        %v4122 = vunpack.c.l.b16 %v4091
        %v4123 = vunpack.c.h.b16 %v4091
        %v4124 = vunpack.c.l.b16 %v4092
        %v4125 = vunpack.c.h.b16 %v4092
        %v4126 = vunpack.c.l.b16 %v4093
        %v4127 = vunpack.c.h.b16 %v4093
        %v4128 = vunpack.c.l.b16 %v4094
        %v4129 = vunpack.c.h.b16 %v4094
        %v4130 = vunpack.c.l.b16 %v4095
        %v4131 = vunpack.c.h.b16 %v4095
        %v4132 = vpack.c.b16 %v4118, %v4116
        %v4133 = vpack.c.b16 %v4119, %v4117
        %v4134 = vpack.c.b16 %v4122, %v4120
        %v4135 = vpack.c.b16 %v4123, %v4121
        %v4136 = vpack.c.b16 %v4126, %v4124
        %v4137 = vpack.c.b16 %v4127, %v4125
        %v4138 = vpack.c.b16 %v4130, %v4128
        %v4139 = vpack.c.b16 %v4131, %v4129
        %v4149 = vsel %vm754, %v4080, 0
        %v4152 = vsel %vm754, %v4081, 0
        %v4155 = vsel %vm754, %v4082, 0
        %v4158 = vsel %vm754, %v4083, 0
        %v4161 = vsel %vm754, %v4084, 0
        %v4164 = vsel %vm754, %v4085, 0
        %v4167 = vsel %vm754, %v4086, 0
        %v4170 = vsel %vm754, %v4087, 0
        %4172 = vmatprep.subr.bf16.mxu0 %v4133
        %4173 = vmatpush1.bf16.msra.mxu0 %v4132
        %4174 = vmatprep.subr.bf16.mxu0 %v4135
        %4175 = vmatpush1.bf16.msra.mxu0 %v4134
        %4176 = vmatprep.subr.bf16.mxu0 %v4137
        %4177 = vmatpush1.bf16.msra.mxu0 %v4136
        %4178 = vmatprep.subr.bf16.mxu0 %v4139
        %4179 = vmatpush1.bf16.msra.mxu0 %v4138
        %4180 = vmatprep.subr.bf16.mxu0 0
        %4181 = vmatpush1.bf16.msra.mxu0 0
        %4182 = vmatprep.subr.bf16.mxu0 0
        %4183 = vmatpush1.bf16.msra.mxu0 0
        %4184 = vmatprep.subr.bf16.mxu0 0
        %4185 = vmatpush1.bf16.msra.mxu0 0
        %4186 = vmatprep.subr.bf16.mxu0 0
        %4187 = vmatpush1.bf16.msra.mxu0 0
        %4188 = vmatprep.subr.bf16.mxu0 0
        %4189 = vmatpush1.bf16.msra.mxu0 0
        %4190 = vmatprep.subr.bf16.mxu0 0
        %4191 = vmatpush1.bf16.msra.mxu0 0
        %4192 = vmatprep.subr.bf16.mxu0 0
        %4193 = vmatpush1.bf16.msra.mxu0 0
        %4194 = vmatprep.subr.bf16.mxu0 0
        %4195 = vmatpush1.bf16.msra.mxu0 0
        %4196 = vmatprep.subr.bf16.mxu0 0
        %4197 = vmatpush1.bf16.msra.mxu0 0
        %4198 = vmatprep.subr.bf16.mxu0 0
        %4199 = vmatpush1.bf16.msra.mxu0 0
        %4200 = vmatprep.subr.bf16.mxu0 0
        %4201 = vmatpush1.bf16.msra.mxu0 0
        %4202 = vmatprep.subr.bf16.mxu0 0
        %4203 = vmatpush1.bf16.msra.mxu0 0
        %4204 = vmatprep.mubr.bf16.mxu0 0
        %4205 = vmatmul.mubr.bf16.gmra.mrb[0].mxu0 %v4149
        %v4206 = vpop.f32.mrb[0].mxu0
        %v4207 = vadd.f32 %v4101, %v4206
        %v4208 = vpop.f32.mrb[0].mxu0
        %v4209 = vadd.f32 %v4105, %v4208
        %v4210 = vpop.f32.mrb[0].mxu0
        %v4211 = vadd.f32 %v4101, %v4210
        %v4212 = vpop.f32.mrb[0].mxu0
        %v4213 = vadd.f32 %v4105, %v4212
        %4214 = vmatprep.mubr.bf16.mxu0 0
        %4215 = vmatmul.mubr.bf16.gmra.mrb[0].mxu0 %v4152
        %v4216 = vpop.f32.mrb[0].mxu0
        %v4217 = vadd.f32 %v4101, %v4216
        %v4218 = vpop.f32.mrb[0].mxu0
        %v4219 = vadd.f32 %v4105, %v4218
        %v4220 = vpop.f32.mrb[0].mxu0
        %v4221 = vadd.f32 %v4101, %v4220
        %v4222 = vpop.f32.mrb[0].mxu0
        %v4223 = vadd.f32 %v4105, %v4222
        %4224 = vmatprep.mubr.bf16.mxu0 0
        %4225 = vmatmul.mubr.bf16.gmra.mrb[0].mxu0 %v4155
        %v4226 = vpop.f32.mrb[0].mxu0
        %v4227 = vadd.f32 %v4101, %v4226
        %v4228 = vpop.f32.mrb[0].mxu0
        %v4229 = vadd.f32 %v4105, %v4228
        %v4230 = vpop.f32.mrb[0].mxu0
        %v4231 = vadd.f32 %v4101, %v4230
        %v4232 = vpop.f32.mrb[0].mxu0
        %v4233 = vadd.f32 %v4105, %v4232
        %4234 = vmatprep.mubr.bf16.mxu0 0
        %4235 = vmatmul.mubr.bf16.gmra.mrb[0].mxu0 %v4158
        %v4236 = vpop.f32.mrb[0].mxu0
        %v4237 = vadd.f32 %v4101, %v4236
        %v4238 = vpop.f32.mrb[0].mxu0
        %v4239 = vadd.f32 %v4105, %v4238
        %v4240 = vpop.f32.mrb[0].mxu0
        %v4241 = vadd.f32 %v4101, %v4240
        %v4242 = vpop.f32.mrb[0].mxu0
        %v4243 = vadd.f32 %v4105, %v4242
        %4244 = vmatprep.mubr.bf16.mxu0 0
        %4245 = vmatmul.mubr.bf16.gmra.mrb[0].mxu0 %v4161
        %v4246 = vpop.f32.mrb[0].mxu0
        %v4247 = vadd.f32 %v4101, %v4246
        %v4248 = vpop.f32.mrb[0].mxu0
        %v4249 = vadd.f32 %v4105, %v4248
        %v4250 = vpop.f32.mrb[0].mxu0
        %v4251 = vadd.f32 %v4101, %v4250
        %v4252 = vpop.f32.mrb[0].mxu0
        %v4253 = vadd.f32 %v4105, %v4252
        %4254 = vmatprep.mubr.bf16.mxu0 0
        %4255 = vmatmul.mubr.bf16.gmra.mrb[0].mxu0 %v4164
        %v4256 = vpop.f32.mrb[0].mxu0
        %v4257 = vadd.f32 %v4101, %v4256
        %v4258 = vpop.f32.mrb[0].mxu0
        %v4259 = vadd.f32 %v4105, %v4258
        %v4260 = vpop.f32.mrb[0].mxu0
        %v4261 = vadd.f32 %v4101, %v4260
        %v4262 = vpop.f32.mrb[0].mxu0
        %v4263 = vadd.f32 %v4105, %v4262
        %4264 = vmatprep.mubr.bf16.mxu0 0
        %4265 = vmatmul.mubr.bf16.gmra.mrb[0].mxu0 %v4167
        %v4266 = vpop.f32.mrb[0].mxu0
        %v4267 = vadd.f32 %v4101, %v4266
        %v4268 = vpop.f32.mrb[0].mxu0
        %v4269 = vadd.f32 %v4105, %v4268
        %v4270 = vpop.f32.mrb[0].mxu0
        %v4271 = vadd.f32 %v4101, %v4270
        %v4272 = vpop.f32.mrb[0].mxu0
        %v4273 = vadd.f32 %v4105, %v4272
        %4274 = vmatprep.mubr.bf16.mxu0 0
        %4275 = vmatmul.mubr.bf16.gmra.mrb[0].mxu0 %v4170
        %v4276 = vpop.f32.mrb[0].mxu0
        %v4277 = vadd.f32 %v4101, %v4276
        %v4278 = vpop.f32.mrb[0].mxu0
        %v4279 = vadd.f32 %v4105, %v4278
        %v4280 = vpop.f32.mrb[0].mxu0
        %v4281 = vadd.f32 %v4101, %v4280
        %v4282 = vpop.f32.mrb[0].mxu0
        %v4283 = vadd.f32 %v4105, %v4282
        %4284 = vdwg.mxu0
        %v4285 = vmul.f32 %v4207, %v4207
        %v4286 = vmul.f32 %v4209, %v4209
        %v4287 = vmul.f32 %v4211, %v4211
        %v4288 = vmul.f32 %v4213, %v4213
        %v4289 = vmul.f32 %v4217, %v4217
        %v4290 = vmul.f32 %v4219, %v4219
        %v4291 = vmul.f32 %v4221, %v4221
        %v4292 = vmul.f32 %v4223, %v4223
        %v4293 = vmul.f32 %v4227, %v4227
        %v4294 = vmul.f32 %v4229, %v4229
        %v4295 = vmul.f32 %v4231, %v4231
        %v4296 = vmul.f32 %v4233, %v4233
        %v4297 = vmul.f32 %v4237, %v4237
        %v4298 = vmul.f32 %v4239, %v4239
        %v4299 = vmul.f32 %v4241, %v4241
        %v4300 = vmul.f32 %v4243, %v4243
        %v4301 = vmul.f32 %v4247, %v4247
        %v4302 = vmul.f32 %v4249, %v4249
        %v4303 = vmul.f32 %v4251, %v4251
        %v4304 = vmul.f32 %v4253, %v4253
        %v4305 = vmul.f32 %v4257, %v4257
        %v4306 = vmul.f32 %v4259, %v4259
        %v4307 = vmul.f32 %v4261, %v4261
        %v4308 = vmul.f32 %v4263, %v4263
        %v4309 = vmul.f32 %v4267, %v4267
        %v4310 = vmul.f32 %v4269, %v4269
        %v4311 = vmul.f32 %v4271, %v4271
        %v4312 = vmul.f32 %v4273, %v4273
        %v4313 = vmul.f32 %v4277, %v4277
        %v4314 = vmul.f32 %v4279, %v4279
        %v4315 = vmul.f32 %v4281, %v4281
        %v4316 = vmul.f32 %v4283, %v4283
        %v4317 = vmul.f32 %v4207, %v4285
        %v4318 = vmul.f32 %v4209, %v4286
        %v4319 = vmul.f32 %v4211, %v4287
        %v4320 = vmul.f32 %v4213, %v4288
        %v4321 = vmul.f32 %v4217, %v4289
        %v4322 = vmul.f32 %v4219, %v4290
        %v4323 = vmul.f32 %v4221, %v4291
        %v4324 = vmul.f32 %v4223, %v4292
        %v4325 = vmul.f32 %v4227, %v4293
        %v4326 = vmul.f32 %v4229, %v4294
        %v4327 = vmul.f32 %v4231, %v4295
        %v4328 = vmul.f32 %v4233, %v4296
        %v4329 = vmul.f32 %v4237, %v4297
        %v4330 = vmul.f32 %v4239, %v4298
        %v4331 = vmul.f32 %v4241, %v4299
        %v4332 = vmul.f32 %v4243, %v4300
        %v4333 = vmul.f32 %v4247, %v4301
        %v4334 = vmul.f32 %v4249, %v4302
        %v4335 = vmul.f32 %v4251, %v4303
        %v4336 = vmul.f32 %v4253, %v4304
        %v4337 = vmul.f32 %v4257, %v4305
        %v4338 = vmul.f32 %v4259, %v4306
        %v4339 = vmul.f32 %v4261, %v4307
        %v4340 = vmul.f32 %v4263, %v4308
        %v4341 = vmul.f32 %v4267, %v4309
        %v4342 = vmul.f32 %v4269, %v4310
        %v4343 = vmul.f32 %v4271, %v4311
        %v4344 = vmul.f32 %v4273, %v4312
        %v4345 = vmul.f32 %v4277, %v4313
        %v4346 = vmul.f32 %v4279, %v4314
        %v4347 = vmul.f32 %v4281, %v4315
        %v4348 = vmul.f32 %v4283, %v4316
        %v4349 = vmul.f32 %v4317, 0.044715
        %v4350 = vmul.f32 %v4318, 0.044715
        %v4351 = vmul.f32 %v4319, 0.044715
        %v4352 = vmul.f32 %v4320, 0.044715
        %v4353 = vmul.f32 %v4321, 0.044715
        %v4354 = vmul.f32 %v4322, 0.044715
        %v4355 = vmul.f32 %v4323, 0.044715
        %v4356 = vmul.f32 %v4324, 0.044715
        %v4357 = vmul.f32 %v4325, 0.044715
        %v4358 = vmul.f32 %v4326, 0.044715
        %v4359 = vmul.f32 %v4327, 0.044715
        %v4360 = vmul.f32 %v4328, 0.044715
        %v4361 = vmul.f32 %v4329, 0.044715
        %v4362 = vmul.f32 %v4330, 0.044715
        %v4363 = vmul.f32 %v4331, 0.044715
        %v4364 = vmul.f32 %v4332, 0.044715
        %v4365 = vmul.f32 %v4333, 0.044715
        %v4366 = vmul.f32 %v4334, 0.044715
        %v4367 = vmul.f32 %v4335, 0.044715
        %v4368 = vmul.f32 %v4336, 0.044715
        %v4369 = vmul.f32 %v4337, 0.044715
        %v4370 = vmul.f32 %v4338, 0.044715
        %v4371 = vmul.f32 %v4339, 0.044715
        %v4372 = vmul.f32 %v4340, 0.044715
        %v4373 = vmul.f32 %v4341, 0.044715
        %v4374 = vmul.f32 %v4342, 0.044715
        %v4375 = vmul.f32 %v4343, 0.044715
        %v4376 = vmul.f32 %v4344, 0.044715
        %v4377 = vmul.f32 %v4345, 0.044715
        %v4378 = vmul.f32 %v4346, 0.044715
        %v4379 = vmul.f32 %v4347, 0.044715
        %v4380 = vmul.f32 %v4348, 0.044715
        %v4381 = vadd.f32 %v4207, %v4349
        %v4382 = vadd.f32 %v4209, %v4350
        %v4383 = vadd.f32 %v4211, %v4351
        %v4384 = vadd.f32 %v4213, %v4352
        %v4385 = vadd.f32 %v4217, %v4353
        %v4386 = vadd.f32 %v4219, %v4354
        %v4387 = vadd.f32 %v4221, %v4355
        %v4388 = vadd.f32 %v4223, %v4356
        %v4389 = vadd.f32 %v4227, %v4357
        %v4390 = vadd.f32 %v4229, %v4358
        %v4391 = vadd.f32 %v4231, %v4359
        %v4392 = vadd.f32 %v4233, %v4360
        %v4393 = vadd.f32 %v4237, %v4361
        %v4394 = vadd.f32 %v4239, %v4362
        %v4395 = vadd.f32 %v4241, %v4363
        %v4396 = vadd.f32 %v4243, %v4364
        %v4397 = vadd.f32 %v4247, %v4365
        %v4398 = vadd.f32 %v4249, %v4366
        %v4399 = vadd.f32 %v4251, %v4367
        %v4400 = vadd.f32 %v4253, %v4368
        %v4401 = vadd.f32 %v4257, %v4369
        %v4402 = vadd.f32 %v4259, %v4370
        %v4403 = vadd.f32 %v4261, %v4371
        %v4404 = vadd.f32 %v4263, %v4372
        %v4405 = vadd.f32 %v4267, %v4373
        %v4406 = vadd.f32 %v4269, %v4374
        %v4407 = vadd.f32 %v4271, %v4375
        %v4408 = vadd.f32 %v4273, %v4376
        %v4409 = vadd.f32 %v4277, %v4377
        %v4410 = vadd.f32 %v4279, %v4378
        %v4411 = vadd.f32 %v4281, %v4379
        %v4412 = vadd.f32 %v4283, %v4380
        %v4413 = vmul.f32 %v4381, 0.7978846
        %v4414 = vmul.f32 %v4382, 0.7978846
        %v4415 = vmul.f32 %v4383, 0.7978846
        %v4416 = vmul.f32 %v4384, 0.7978846
        %v4417 = vmul.f32 %v4385, 0.7978846
        %v4418 = vmul.f32 %v4386, 0.7978846
        %v4419 = vmul.f32 %v4387, 0.7978846
        %v4420 = vmul.f32 %v4388, 0.7978846
        %v4421 = vmul.f32 %v4389, 0.7978846
        %v4422 = vmul.f32 %v4390, 0.7978846
        %v4423 = vmul.f32 %v4391, 0.7978846
        %v4424 = vmul.f32 %v4392, 0.7978846
        %v4425 = vmul.f32 %v4393, 0.7978846
        %v4426 = vmul.f32 %v4394, 0.7978846
        %v4427 = vmul.f32 %v4395, 0.7978846
        %v4428 = vmul.f32 %v4396, 0.7978846
        %v4429 = vmul.f32 %v4397, 0.7978846
        %v4430 = vmul.f32 %v4398, 0.7978846
        %v4431 = vmul.f32 %v4399, 0.7978846
        %v4432 = vmul.f32 %v4400, 0.7978846
        %v4433 = vmul.f32 %v4401, 0.7978846
        %v4434 = vmul.f32 %v4402, 0.7978846
        %v4435 = vmul.f32 %v4403, 0.7978846
        %v4436 = vmul.f32 %v4404, 0.7978846
        %v4437 = vmul.f32 %v4405, 0.7978846
        %v4438 = vmul.f32 %v4406, 0.7978846
        %v4439 = vmul.f32 %v4407, 0.7978846
        %v4440 = vmul.f32 %v4408, 0.7978846
        %v4441 = vmul.f32 %v4409, 0.7978846
        %v4442 = vmul.f32 %v4410, 0.7978846
        %v4443 = vmul.f32 %v4411, 0.7978846
        %v4444 = vmul.f32 %v4412, 0.7978846
        %v4445 = vtanh.pop %v4413
        %v4446 = vtanh.pop %v4414
        %v4447 = vtanh.pop %v4415
        %v4448 = vtanh.pop %v4416
        %v4449 = vtanh.pop %v4417
        %v4450 = vtanh.pop %v4418
        %v4451 = vtanh.pop %v4419
        %v4452 = vtanh.pop %v4420
        %v4453 = vtanh.pop %v4421
        %v4454 = vtanh.pop %v4422
        %v4455 = vtanh.pop %v4423
        %v4456 = vtanh.pop %v4424
        %v4457 = vtanh.pop %v4425
        %v4458 = vtanh.pop %v4426
        %v4459 = vtanh.pop %v4427
        %v4460 = vtanh.pop %v4428
        %v4461 = vtanh.pop %v4429
        %v4462 = vtanh.pop %v4430
        %v4463 = vtanh.pop %v4431
        %v4464 = vtanh.pop %v4432
        %v4465 = vtanh.pop %v4433
        %v4466 = vtanh.pop %v4434
        %v4467 = vtanh.pop %v4435
        %v4468 = vtanh.pop %v4436
        %v4469 = vtanh.pop %v4437
        %v4470 = vtanh.pop %v4438
        %v4471 = vtanh.pop %v4439
        %v4472 = vtanh.pop %v4440
        %v4473 = vtanh.pop %v4441
        %v4474 = vtanh.pop %v4442
        %v4475 = vtanh.pop %v4443
        %v4476 = vtanh.pop %v4444
        %v4477 = vadd.f32 %v4445, 1.0
        %v4478 = vadd.f32 %v4446, 1.0
        %v4479 = vadd.f32 %v4447, 1.0
        %v4480 = vadd.f32 %v4448, 1.0
        %v4481 = vadd.f32 %v4449, 1.0
        %v4482 = vadd.f32 %v4450, 1.0
        %v4483 = vadd.f32 %v4451, 1.0
        %v4484 = vadd.f32 %v4452, 1.0
        %v4485 = vadd.f32 %v4453, 1.0
        %v4486 = vadd.f32 %v4454, 1.0
        %v4487 = vadd.f32 %v4455, 1.0
        %v4488 = vadd.f32 %v4456, 1.0
        %v4489 = vadd.f32 %v4457, 1.0
        %v4490 = vadd.f32 %v4458, 1.0
        %v4491 = vadd.f32 %v4459, 1.0
        %v4492 = vadd.f32 %v4460, 1.0
        %v4493 = vadd.f32 %v4461, 1.0
        %v4494 = vadd.f32 %v4462, 1.0
        %v4495 = vadd.f32 %v4463, 1.0
        %v4496 = vadd.f32 %v4464, 1.0
        %v4497 = vadd.f32 %v4465, 1.0
        %v4498 = vadd.f32 %v4466, 1.0
        %v4499 = vadd.f32 %v4467, 1.0
        %v4500 = vadd.f32 %v4468, 1.0
        %v4501 = vadd.f32 %v4469, 1.0
        %v4502 = vadd.f32 %v4470, 1.0
        %v4503 = vadd.f32 %v4471, 1.0
        %v4504 = vadd.f32 %v4472, 1.0
        %v4505 = vadd.f32 %v4473, 1.0
        %v4506 = vadd.f32 %v4474, 1.0
        %v4507 = vadd.f32 %v4475, 1.0
        %v4508 = vadd.f32 %v4476, 1.0
        %v4509 = vmul.f32 %v4477, 0.5
        %v4510 = vmul.f32 %v4478, 0.5
        %v4511 = vmul.f32 %v4479, 0.5
        %v4512 = vmul.f32 %v4480, 0.5
        %v4513 = vmul.f32 %v4481, 0.5
        %v4514 = vmul.f32 %v4482, 0.5
        %v4515 = vmul.f32 %v4483, 0.5
        %v4516 = vmul.f32 %v4484, 0.5
        %v4517 = vmul.f32 %v4485, 0.5
        %v4518 = vmul.f32 %v4486, 0.5
        %v4519 = vmul.f32 %v4487, 0.5
        %v4520 = vmul.f32 %v4488, 0.5
        %v4521 = vmul.f32 %v4489, 0.5
        %v4522 = vmul.f32 %v4490, 0.5
        %v4523 = vmul.f32 %v4491, 0.5
        %v4524 = vmul.f32 %v4492, 0.5
        %v4525 = vmul.f32 %v4493, 0.5
        %v4526 = vmul.f32 %v4494, 0.5
        %v4527 = vmul.f32 %v4495, 0.5
        %v4528 = vmul.f32 %v4496, 0.5
        %v4529 = vmul.f32 %v4497, 0.5
        %v4530 = vmul.f32 %v4498, 0.5
        %v4531 = vmul.f32 %v4499, 0.5
        %v4532 = vmul.f32 %v4500, 0.5
        %v4533 = vmul.f32 %v4501, 0.5
        %v4534 = vmul.f32 %v4502, 0.5
        %v4535 = vmul.f32 %v4503, 0.5
        %v4536 = vmul.f32 %v4504, 0.5
        %v4537 = vmul.f32 %v4505, 0.5
        %v4538 = vmul.f32 %v4506, 0.5
        %v4539 = vmul.f32 %v4507, 0.5
        %v4540 = vmul.f32 %v4508, 0.5
        %v4541 = vmul.f32 %v4207, %v4509
        %v4542 = vmul.f32 %v4209, %v4510
        %v4543 = vmul.f32 %v4211, %v4511
        %v4544 = vmul.f32 %v4213, %v4512
        %v4545 = vmul.f32 %v4217, %v4513
        %v4546 = vmul.f32 %v4219, %v4514
        %v4547 = vmul.f32 %v4221, %v4515
        %v4548 = vmul.f32 %v4223, %v4516
        %v4549 = vmul.f32 %v4227, %v4517
        %v4550 = vmul.f32 %v4229, %v4518
        %v4551 = vmul.f32 %v4231, %v4519
        %v4552 = vmul.f32 %v4233, %v4520
        %v4553 = vmul.f32 %v4237, %v4521
        %v4554 = vmul.f32 %v4239, %v4522
        %v4555 = vmul.f32 %v4241, %v4523
        %v4556 = vmul.f32 %v4243, %v4524
        %v4557 = vmul.f32 %v4247, %v4525
        %v4558 = vmul.f32 %v4249, %v4526
        %v4559 = vmul.f32 %v4251, %v4527
        %v4560 = vmul.f32 %v4253, %v4528
        %v4561 = vmul.f32 %v4257, %v4529
        %v4562 = vmul.f32 %v4259, %v4530
        %v4563 = vmul.f32 %v4261, %v4531
        %v4564 = vmul.f32 %v4263, %v4532
        %v4565 = vmul.f32 %v4267, %v4533
        %v4566 = vmul.f32 %v4269, %v4534
        %v4567 = vmul.f32 %v4271, %v4535
        %v4568 = vmul.f32 %v4273, %v4536
        %v4569 = vmul.f32 %v4277, %v4537
        %v4570 = vmul.f32 %v4279, %v4538
        %v4571 = vmul.f32 %v4281, %v4539
        %v4572 = vmul.f32 %v4283, %v4540
        %v4573 = vpack.c.bf16 %v4543, %v4541
        %v4574 = vpack.c.bf16 %v4544, %v4542
        %v4575 = vpack.c.bf16 %v4547, %v4545
        %v4576 = vpack.c.bf16 %v4548, %v4546
        %v4577 = vpack.c.bf16 %v4551, %v4549
        %v4578 = vpack.c.bf16 %v4552, %v4550
        %v4579 = vpack.c.bf16 %v4555, %v4553
        %v4580 = vpack.c.bf16 %v4556, %v4554
        %v4581 = vpack.c.bf16 %v4559, %v4557
        %v4582 = vpack.c.bf16 %v4560, %v4558
        %v4583 = vpack.c.bf16 %v4563, %v4561
        %v4584 = vpack.c.bf16 %v4564, %v4562
        %v4585 = vpack.c.bf16 %v4567, %v4565
        %v4586 = vpack.c.bf16 %v4568, %v4566
        %v4587 = vpack.c.bf16 %v4571, %v4569
        %v4588 = vpack.c.bf16 %v4572, %v4570
        %v4589 = vld [vmem:[%s13] sm:$0xf]
        %v4590 = vld [vmem:[%s13 + $0x4] sm:$0xf]
        %v4591 = vld [vmem:[%s13 + $0x8] sm:$0xf]
        %v4592 = vld [vmem:[%s13 + $0xc] sm:$0xf]
        %v4593 = vld [vmem:[%s13 + $0x10] sm:$0xf]
        %v4594 = vld [vmem:[%s13 + $0x14] sm:$0xf]
        %v4595 = vld [vmem:[%s13 + $0x18] sm:$0xf]
        %v4596 = vld [vmem:[%s13 + $0x1c] sm:$0xf]
        %v4597 = vld [vmem:[%s13 + $0x20] sm:$0xf]
        %v4598 = vld [vmem:[%s13 + $0x24] sm:$0xf]
        %v4599 = vld [vmem:[%s13 + $0x28] sm:$0xf]
        %v4600 = vld [vmem:[%s13 + $0x2c] sm:$0xf]
        %v4601 = vld [vmem:[%s13 + $0x30] sm:$0xf]
        %v4602 = vld [vmem:[%s13 + $0x34] sm:$0xf]
        %v4603 = vld [vmem:[%s13 + $0x38] sm:$0xf]
        %v4604 = vld [vmem:[%s13 + $0x3c] sm:$0xf]
        %v4605 = vld [vmem:[%s13 + $0x40] sm:$0xf]
        %v4606 = vld [vmem:[%s13 + $0x44] sm:$0xf]
        %v4607 = vld [vmem:[%s13 + $0x48] sm:$0xf]
        %v4608 = vld [vmem:[%s13 + $0x4c] sm:$0xf]
        %v4609 = vld [vmem:[%s13 + $0x50] sm:$0xf]
        %v4610 = vld [vmem:[%s13 + $0x54] sm:$0xf]
        %v4611 = vld [vmem:[%s13 + $0x58] sm:$0xf]
        %v4612 = vld [vmem:[%s13 + $0x5c] sm:$0xf]
        %v4613 = vld [vmem:[%s13 + $0x60] sm:$0xf]
        %v4614 = vld [vmem:[%s13 + $0x64] sm:$0xf]
        %v4615 = vld [vmem:[%s13 + $0x68] sm:$0xf]
        %v4616 = vld [vmem:[%s13 + $0x6c] sm:$0xf]
        %v4617 = vld [vmem:[%s13 + $0x70] sm:$0xf]
        %v4618 = vld [vmem:[%s13 + $0x74] sm:$0xf]
        %v4619 = vld [vmem:[%s13 + $0x78] sm:$0xf]
        %v4620 = vld [vmem:[%s13 + $0x7c] sm:$0xf]
        %v4621 = vld [vmem:[%s14] sm:$0x1]
        %v4623 = vlaneseq
        %v4624 = vshrl.u32 %v4623, 7
        %v4625 = vsub.s32 0, %v4624
        %v4626 = vrot.slane %v4621, %v4625
        %v4660 = vunpack.c.l.b16 %v4589
        %v4661 = vunpack.c.l.b16 %v4590
        %v4662 = vunpack.c.l.b16 %v4591
        %v4663 = vunpack.c.l.b16 %v4592
        %v4664 = vunpack.c.l.b16 %v4593
        %v4665 = vunpack.c.l.b16 %v4594
        %v4666 = vunpack.c.l.b16 %v4595
        %v4667 = vunpack.c.l.b16 %v4596
        %v4668 = vunpack.c.l.b16 %v4597
        %v4669 = vunpack.c.l.b16 %v4598
        %v4670 = vunpack.c.l.b16 %v4599
        %v4671 = vunpack.c.l.b16 %v4600
        %v4672 = vunpack.c.l.b16 %v4601
        %v4673 = vunpack.c.l.b16 %v4602
        %v4674 = vunpack.c.l.b16 %v4603
        %v4675 = vunpack.c.l.b16 %v4604
        %v4676 = vunpack.c.l.b16 %v4605
        %v4677 = vunpack.c.l.b16 %v4606
        %v4678 = vunpack.c.l.b16 %v4607
        %v4679 = vunpack.c.l.b16 %v4608
        %v4680 = vunpack.c.l.b16 %v4609
        %v4681 = vunpack.c.l.b16 %v4610
        %v4682 = vunpack.c.l.b16 %v4611
        %v4683 = vunpack.c.l.b16 %v4612
        %v4684 = vunpack.c.l.b16 %v4613
        %v4685 = vunpack.c.l.b16 %v4614
        %v4686 = vunpack.c.l.b16 %v4615
        %v4687 = vunpack.c.l.b16 %v4616
        %v4688 = vunpack.c.l.b16 %v4617
        %v4689 = vunpack.c.l.b16 %v4618
        %v4690 = vunpack.c.l.b16 %v4619
        %v4691 = vunpack.c.l.b16 %v4620
        %v4692 = vpack.c.b16 %v4661, %v4660
        %v4693 = vpack.c.b16 %v4663, %v4662
        %v4694 = vpack.c.b16 %v4665, %v4664
        %v4695 = vpack.c.b16 %v4667, %v4666
        %v4696 = vpack.c.b16 %v4669, %v4668
        %v4697 = vpack.c.b16 %v4671, %v4670
        %v4698 = vpack.c.b16 %v4673, %v4672
        %v4699 = vpack.c.b16 %v4675, %v4674
        %v4700 = vpack.c.b16 %v4677, %v4676
        %v4701 = vpack.c.b16 %v4679, %v4678
        %v4702 = vpack.c.b16 %v4681, %v4680
        %v4703 = vpack.c.b16 %v4683, %v4682
        %v4704 = vpack.c.b16 %v4685, %v4684
        %v4705 = vpack.c.b16 %v4687, %v4686
        %v4706 = vpack.c.b16 %v4689, %v4688
        %v4707 = vpack.c.b16 %v4691, %v4690
        %4724 = vmatprep.subr.bf16.mxu0 0
        %4725 = vmatpush1.bf16.msra.mxu0 %v4692
        %4726 = vmatprep.subr.bf16.mxu0 0
        %4727 = vmatpush1.bf16.msra.mxu0 %v4693
        %4728 = vmatprep.subr.bf16.mxu0 0
        %4729 = vmatpush1.bf16.msra.mxu0 %v4694
        %4730 = vmatprep.subr.bf16.mxu0 0
        %4731 = vmatpush1.bf16.msra.mxu0 %v4695
        %4732 = vmatprep.subr.bf16.mxu0 0
        %4733 = vmatpush1.bf16.msra.mxu0 %v4696
        %4734 = vmatprep.subr.bf16.mxu0 0
        %4735 = vmatpush1.bf16.msra.mxu0 %v4697
        %4736 = vmatprep.subr.bf16.mxu0 0
        %4737 = vmatpush1.bf16.msra.mxu0 %v4698
        %4738 = vmatprep.subr.bf16.mxu0 0
        %4739 = vmatpush1.bf16.msra.mxu0 %v4699
        %4740 = vmatprep.subr.bf16.mxu0 0
        %4741 = vmatpush1.bf16.msra.mxu0 %v4700
        %4742 = vmatprep.subr.bf16.mxu0 0
        %4743 = vmatpush1.bf16.msra.mxu0 %v4701
        %4744 = vmatprep.subr.bf16.mxu0 0
        %4745 = vmatpush1.bf16.msra.mxu0 %v4702
        %4746 = vmatprep.subr.bf16.mxu0 0
        %4747 = vmatpush1.bf16.msra.mxu0 %v4703
        %4748 = vmatprep.subr.bf16.mxu0 0
        %4749 = vmatpush1.bf16.msra.mxu0 %v4704
        %4750 = vmatprep.subr.bf16.mxu0 0
        %4751 = vmatpush1.bf16.msra.mxu0 %v4705
        %4752 = vmatprep.subr.bf16.mxu0 0
        %4753 = vmatpush1.bf16.msra.mxu0 %v4706
        %4754 = vmatprep.subr.bf16.mxu0 0
        %4755 = vmatpush1.bf16.msra.mxu0 %v4707
        %4756 = vmatprep.mubr.bf16.mxu0 %v4574
        %4757 = vmatmul.mubr.bf16.gmra.mrb[0].mxu0 %v4573
        %v4758 = vpop.f32.mrb[0].mxu0
        %v4759 = vadd.f32 %v4626, %v4758
        %v4760 = vpop.f32.mrb[0].mxu0
        %v4761 = vpop.f32.mrb[0].mxu0
        %v4762 = vadd.f32 %v4626, %v4761
        %v4763 = vpop.f32.mrb[0].mxu0
        %4764 = vmatprep.mubr.bf16.mxu0 %v4576
        %4765 = vmatmul.mubr.bf16.gmra.mrb[0].mxu0 %v4575
        %v4766 = vpop.f32.mrb[0].mxu0
        %v4767 = vadd.f32 %v4626, %v4766
        %v4768 = vpop.f32.mrb[0].mxu0
        %v4769 = vpop.f32.mrb[0].mxu0
        %v4770 = vadd.f32 %v4626, %v4769
        %v4771 = vpop.f32.mrb[0].mxu0
        %4772 = vmatprep.mubr.bf16.mxu0 %v4578
        %4773 = vmatmul.mubr.bf16.gmra.mrb[0].mxu0 %v4577
        %v4774 = vpop.f32.mrb[0].mxu0
        %v4775 = vadd.f32 %v4626, %v4774
        %v4776 = vpop.f32.mrb[0].mxu0
        %v4777 = vpop.f32.mrb[0].mxu0
        %v4778 = vadd.f32 %v4626, %v4777
        %v4779 = vpop.f32.mrb[0].mxu0
        %4780 = vmatprep.mubr.bf16.mxu0 %v4580
        %4781 = vmatmul.mubr.bf16.gmra.mrb[0].mxu0 %v4579
        %v4782 = vpop.f32.mrb[0].mxu0
        %v4783 = vadd.f32 %v4626, %v4782
        %v4784 = vpop.f32.mrb[0].mxu0
        %v4785 = vpop.f32.mrb[0].mxu0
        %v4786 = vadd.f32 %v4626, %v4785
        %v4787 = vpop.f32.mrb[0].mxu0
        %4788 = vmatprep.mubr.bf16.mxu0 %v4582
        %4789 = vmatmul.mubr.bf16.gmra.mrb[0].mxu0 %v4581
        %v4790 = vpop.f32.mrb[0].mxu0
        %v4791 = vadd.f32 %v4626, %v4790
        %v4792 = vpop.f32.mrb[0].mxu0
        %v4793 = vpop.f32.mrb[0].mxu0
        %v4794 = vadd.f32 %v4626, %v4793
        %v4795 = vpop.f32.mrb[0].mxu0
        %4796 = vmatprep.mubr.bf16.mxu0 %v4584
        %4797 = vmatmul.mubr.bf16.gmra.mrb[0].mxu0 %v4583
        %v4798 = vpop.f32.mrb[0].mxu0
        %v4799 = vadd.f32 %v4626, %v4798
        %v4800 = vpop.f32.mrb[0].mxu0
        %v4801 = vpop.f32.mrb[0].mxu0
        %v4802 = vadd.f32 %v4626, %v4801
        %v4803 = vpop.f32.mrb[0].mxu0
        %4804 = vmatprep.mubr.bf16.mxu0 %v4586
        %4805 = vmatmul.mubr.bf16.gmra.mrb[0].mxu0 %v4585
        %v4806 = vpop.f32.mrb[0].mxu0
        %v4807 = vadd.f32 %v4626, %v4806
        %v4808 = vpop.f32.mrb[0].mxu0
        %v4809 = vpop.f32.mrb[0].mxu0
        %v4810 = vadd.f32 %v4626, %v4809
        %v4811 = vpop.f32.mrb[0].mxu0
        %4812 = vmatprep.mubr.bf16.mxu0 %v4588
        %4813 = vmatmul.mubr.bf16.gmra.mrb[0].mxu0 %v4587
        %v4814 = vpop.f32.mrb[0].mxu0
        %v4815 = vadd.f32 %v4626, %v4814
        %v4816 = vpop.f32.mrb[0].mxu0
        %v4817 = vpop.f32.mrb[0].mxu0
        %v4818 = vadd.f32 %v4626, %v4817
        %v4819 = vpop.f32.mrb[0].mxu0
        %4820 = vdwg.mxu0
        %v4821 = vadd.f32 %v3810, %v4759
        %v4822 = vadd.f32 %v3811, %v4762
        %v4823 = vadd.f32 %v3812, %v4767
        %v4824 = vadd.f32 %v3813, %v4770
        %v4825 = vadd.f32 %v3814, %v4775
        %v4826 = vadd.f32 %v3815, %v4778
        %v4827 = vadd.f32 %v3816, %v4783
        %v4828 = vadd.f32 %v3817, %v4786
        %v4829 = vadd.f32 %v3818, %v4791
        %v4830 = vadd.f32 %v3819, %v4794
        %v4831 = vadd.f32 %v3820, %v4799
        %v4832 = vadd.f32 %v3821, %v4802
        %v4833 = vadd.f32 %v3822, %v4807
        %v4834 = vadd.f32 %v3823, %v4810
        %v4835 = vadd.f32 %v3824, %v4815
        %v4836 = vadd.f32 %v3825, %v4818
        %s4837 = scalar_lea.vmem %s3, 1
        %v4838 = vld [vmem:[%s4837] sm:$0x1]
        %s4839 = scalar_lea.vmem %s4, 1
        %v4840 = vld [vmem:[%s4839] sm:$0x1]
        %v4841 = vsel %vm754, %v4821, 0.0
        %4842 = vadd.xlane.f32.xlu0 %v4841
        %v4843 = vpop.xlane.xlu0 %4842
        %v4844 = vsel %vm754, %v4822, 0.0
        %4845 = vadd.xlane.f32.xlu0 %v4844
        %v4846 = vpop.xlane.xlu0 %4845
        %v4847 = vsel %vm754, %v4823, 0.0
        %4848 = vadd.xlane.f32.xlu0 %v4847
        %v4849 = vpop.xlane.xlu0 %4848
        %v4850 = vsel %vm754, %v4824, 0.0
        %4851 = vadd.xlane.f32.xlu0 %v4850
        %v4852 = vpop.xlane.xlu0 %4851
        %v4853 = vsel %vm754, %v4825, 0.0
        %4854 = vadd.xlane.f32.xlu0 %v4853
        %v4855 = vpop.xlane.xlu0 %4854
        %v4856 = vsel %vm754, %v4826, 0.0
        %4857 = vadd.xlane.f32.xlu0 %v4856
        %v4858 = vpop.xlane.xlu0 %4857
        %v4859 = vsel %vm754, %v4827, 0.0
        %4860 = vadd.xlane.f32.xlu0 %v4859
        %v4861 = vpop.xlane.xlu0 %4860
        %v4862 = vsel %vm754, %v4828, 0.0
        %4863 = vadd.xlane.f32.xlu0 %v4862
        %v4864 = vpop.xlane.xlu0 %4863
        %v4865 = vsel %vm754, %v4829, 0.0
        %4866 = vadd.xlane.f32.xlu0 %v4865
        %v4867 = vpop.xlane.xlu0 %4866
        %v4868 = vsel %vm754, %v4830, 0.0
        %4869 = vadd.xlane.f32.xlu0 %v4868
        %v4870 = vpop.xlane.xlu0 %4869
        %v4871 = vsel %vm754, %v4831, 0.0
        %4872 = vadd.xlane.f32.xlu0 %v4871
        %v4873 = vpop.xlane.xlu0 %4872
        %v4874 = vsel %vm754, %v4832, 0.0
        %4875 = vadd.xlane.f32.xlu0 %v4874
        %v4876 = vpop.xlane.xlu0 %4875
        %v4877 = vsel %vm754, %v4833, 0.0
        %4878 = vadd.xlane.f32.xlu0 %v4877
        %v4879 = vpop.xlane.xlu0 %4878
        %v4880 = vsel %vm754, %v4834, 0.0
        %4881 = vadd.xlane.f32.xlu0 %v4880
        %v4882 = vpop.xlane.xlu0 %4881
        %v4883 = vsel %vm754, %v4835, 0.0
        %4884 = vadd.xlane.f32.xlu0 %v4883
        %v4885 = vpop.xlane.xlu0 %4884
        %v4886 = vsel %vm754, %v4836, 0.0
        %4887 = vadd.xlane.f32.xlu0 %v4886
        %v4888 = vpop.xlane.xlu0 %4887
        %v4889 = vmul.f32 %v4843, %v1181
        %v4890 = vmul.f32 %v4846, %v1181
        %v4891 = vmul.f32 %v4849, %v1181
        %v4892 = vmul.f32 %v4852, %v1181
        %v4893 = vmul.f32 %v4855, %v1181
        %v4894 = vmul.f32 %v4858, %v1181
        %v4895 = vmul.f32 %v4861, %v1181
        %v4896 = vmul.f32 %v4864, %v1181
        %v4897 = vmul.f32 %v4867, %v1181
        %v4898 = vmul.f32 %v4870, %v1181
        %v4899 = vmul.f32 %v4873, %v1181
        %v4900 = vmul.f32 %v4876, %v1181
        %v4901 = vmul.f32 %v4879, %v1181
        %v4902 = vmul.f32 %v4882, %v1181
        %v4903 = vmul.f32 %v4885, %v1181
        %v4904 = vmul.f32 %v4888, %v1181
        %v4905 = vsub.f32 %v4821, %v4889
        %v4906 = vsub.f32 %v4822, %v4890
        %v4907 = vsub.f32 %v4823, %v4891
        %v4908 = vsub.f32 %v4824, %v4892
        %v4909 = vsub.f32 %v4825, %v4893
        %v4910 = vsub.f32 %v4826, %v4894
        %v4911 = vsub.f32 %v4827, %v4895
        %v4912 = vsub.f32 %v4828, %v4896
        %v4913 = vsub.f32 %v4829, %v4897
        %v4914 = vsub.f32 %v4830, %v4898
        %v4915 = vsub.f32 %v4831, %v4899
        %v4916 = vsub.f32 %v4832, %v4900
        %v4917 = vsub.f32 %v4833, %v4901
        %v4918 = vsub.f32 %v4834, %v4902
        %v4919 = vsub.f32 %v4835, %v4903
        %v4920 = vsub.f32 %v4836, %v4904
        %v4921 = vmul.f32 %v4905, %v4905
        %v4922 = vmul.f32 %v4906, %v4906
        %v4923 = vmul.f32 %v4907, %v4907
        %v4924 = vmul.f32 %v4908, %v4908
        %v4925 = vmul.f32 %v4909, %v4909
        %v4926 = vmul.f32 %v4910, %v4910
        %v4927 = vmul.f32 %v4911, %v4911
        %v4928 = vmul.f32 %v4912, %v4912
        %v4929 = vmul.f32 %v4913, %v4913
        %v4930 = vmul.f32 %v4914, %v4914
        %v4931 = vmul.f32 %v4915, %v4915
        %v4932 = vmul.f32 %v4916, %v4916
        %v4933 = vmul.f32 %v4917, %v4917
        %v4934 = vmul.f32 %v4918, %v4918
        %v4935 = vmul.f32 %v4919, %v4919
        %v4936 = vmul.f32 %v4920, %v4920
        %v4937 = vsel %vm754, %v4921, 0.0
        %4938 = vadd.xlane.f32.xlu0 %v4937
        %v4939 = vpop.xlane.xlu0 %4938
        %v4940 = vsel %vm754, %v4922, 0.0
        %4941 = vadd.xlane.f32.xlu0 %v4940
        %v4942 = vpop.xlane.xlu0 %4941
        %v4943 = vsel %vm754, %v4923, 0.0
        %4944 = vadd.xlane.f32.xlu0 %v4943
        %v4945 = vpop.xlane.xlu0 %4944
        %v4946 = vsel %vm754, %v4924, 0.0
        %4947 = vadd.xlane.f32.xlu0 %v4946
        %v4948 = vpop.xlane.xlu0 %4947
        %v4949 = vsel %vm754, %v4925, 0.0
        %4950 = vadd.xlane.f32.xlu0 %v4949
        %v4951 = vpop.xlane.xlu0 %4950
        %v4952 = vsel %vm754, %v4926, 0.0
        %4953 = vadd.xlane.f32.xlu0 %v4952
        %v4954 = vpop.xlane.xlu0 %4953
        %v4955 = vsel %vm754, %v4927, 0.0
        %4956 = vadd.xlane.f32.xlu0 %v4955
        %v4957 = vpop.xlane.xlu0 %4956
        %v4958 = vsel %vm754, %v4928, 0.0
        %4959 = vadd.xlane.f32.xlu0 %v4958
        %v4960 = vpop.xlane.xlu0 %4959
        %v4961 = vsel %vm754, %v4929, 0.0
        %4962 = vadd.xlane.f32.xlu0 %v4961
        %v4963 = vpop.xlane.xlu0 %4962
        %v4964 = vsel %vm754, %v4930, 0.0
        %4965 = vadd.xlane.f32.xlu0 %v4964
        %v4966 = vpop.xlane.xlu0 %4965
        %v4967 = vsel %vm754, %v4931, 0.0
        %4968 = vadd.xlane.f32.xlu0 %v4967
        %v4969 = vpop.xlane.xlu0 %4968
        %v4970 = vsel %vm754, %v4932, 0.0
        %4971 = vadd.xlane.f32.xlu0 %v4970
        %v4972 = vpop.xlane.xlu0 %4971
        %v4973 = vsel %vm754, %v4933, 0.0
        %4974 = vadd.xlane.f32.xlu0 %v4973
        %v4975 = vpop.xlane.xlu0 %4974
        %v4976 = vsel %vm754, %v4934, 0.0
        %4977 = vadd.xlane.f32.xlu0 %v4976
        %v4978 = vpop.xlane.xlu0 %4977
        %v4979 = vsel %vm754, %v4935, 0.0
        %4980 = vadd.xlane.f32.xlu0 %v4979
        %v4981 = vpop.xlane.xlu0 %4980
        %v4982 = vsel %vm754, %v4936, 0.0
        %4983 = vadd.xlane.f32.xlu0 %v4982
        %v4984 = vpop.xlane.xlu0 %4983
        %v4985 = vmul.f32 %v4939, %v1181
        %v4986 = vmul.f32 %v4942, %v1181
        %v4987 = vmul.f32 %v4945, %v1181
        %v4988 = vmul.f32 %v4948, %v1181
        %v4989 = vmul.f32 %v4951, %v1181
        %v4990 = vmul.f32 %v4954, %v1181
        %v4991 = vmul.f32 %v4957, %v1181
        %v4992 = vmul.f32 %v4960, %v1181
        %v4993 = vmul.f32 %v4963, %v1181
        %v4994 = vmul.f32 %v4966, %v1181
        %v4995 = vmul.f32 %v4969, %v1181
        %v4996 = vmul.f32 %v4972, %v1181
        %v4997 = vmul.f32 %v4975, %v1181
        %v4998 = vmul.f32 %v4978, %v1181
        %v4999 = vmul.f32 %v4981, %v1181
        %v5000 = vmul.f32 %v4984, %v1181
        %v5001 = vadd.f32 %v4985, 1e-06
        %v5002 = vadd.f32 %v4986, 1e-06
        %v5003 = vadd.f32 %v4987, 1e-06
        %v5004 = vadd.f32 %v4988, 1e-06
        %v5005 = vadd.f32 %v4989, 1e-06
        %v5006 = vadd.f32 %v4990, 1e-06
        %v5007 = vadd.f32 %v4991, 1e-06
        %v5008 = vadd.f32 %v4992, 1e-06
        %v5009 = vadd.f32 %v4993, 1e-06
        %v5010 = vadd.f32 %v4994, 1e-06
        %v5011 = vadd.f32 %v4995, 1e-06
        %v5012 = vadd.f32 %v4996, 1e-06
        %v5013 = vadd.f32 %v4997, 1e-06
        %v5014 = vadd.f32 %v4998, 1e-06
        %v5015 = vadd.f32 %v4999, 1e-06
        %v5016 = vadd.f32 %v5000, 1e-06
        %v5017 = vrsqrt.pop %v5001
        %v5018 = vrsqrt.pop %v5002
        %v5019 = vrsqrt.pop %v5003
        %v5020 = vrsqrt.pop %v5004
        %v5021 = vrsqrt.pop %v5005
        %v5022 = vrsqrt.pop %v5006
        %v5023 = vrsqrt.pop %v5007
        %v5024 = vrsqrt.pop %v5008
        %v5025 = vrsqrt.pop %v5009
        %v5026 = vrsqrt.pop %v5010
        %v5027 = vrsqrt.pop %v5011
        %v5028 = vrsqrt.pop %v5012
        %v5029 = vrsqrt.pop %v5013
        %v5030 = vrsqrt.pop %v5014
        %v5031 = vrsqrt.pop %v5015
        %v5032 = vrsqrt.pop %v5016
        %v5033 = vmul.f32 %v4905, %v5017
        %v5034 = vmul.f32 %v4906, %v5018
        %v5035 = vmul.f32 %v4907, %v5019
        %v5036 = vmul.f32 %v4908, %v5020
        %v5037 = vmul.f32 %v4909, %v5021
        %v5038 = vmul.f32 %v4910, %v5022
        %v5039 = vmul.f32 %v4911, %v5023
        %v5040 = vmul.f32 %v4912, %v5024
        %v5041 = vmul.f32 %v4913, %v5025
        %v5042 = vmul.f32 %v4914, %v5026
        %v5043 = vmul.f32 %v4915, %v5027
        %v5044 = vmul.f32 %v4916, %v5028
        %v5045 = vmul.f32 %v4917, %v5029
        %v5046 = vmul.f32 %v4918, %v5030
        %v5047 = vmul.f32 %v4919, %v5031
        %v5048 = vmul.f32 %v4920, %v5032
        %v5050 = vlaneseq
        %v5051 = vshrl.u32 %v5050, 7
        %v5052 = vsub.s32 0, %v5051
        %v5053 = vrot.slane %v4838, %v5052
        %v5055 = vmul.f32 %v5033, %v5053
        %v5056 = vmul.f32 %v5034, %v5053
        %v5057 = vmul.f32 %v5035, %v5053
        %v5058 = vmul.f32 %v5036, %v5053
        %v5059 = vmul.f32 %v5037, %v5053
        %v5060 = vmul.f32 %v5038, %v5053
        %v5061 = vmul.f32 %v5039, %v5053
        %v5062 = vmul.f32 %v5040, %v5053
        %v5063 = vmul.f32 %v5041, %v5053
        %v5064 = vmul.f32 %v5042, %v5053
        %v5065 = vmul.f32 %v5043, %v5053
        %v5066 = vmul.f32 %v5044, %v5053
        %v5067 = vmul.f32 %v5045, %v5053
        %v5068 = vmul.f32 %v5046, %v5053
        %v5069 = vmul.f32 %v5047, %v5053
        %v5070 = vmul.f32 %v5048, %v5053
        %v5072 = vlaneseq
        %v5073 = vshrl.u32 %v5072, 7
        %v5074 = vsub.s32 0, %v5073
        %v5075 = vrot.slane %v4840, %v5074
        %v5077 = vadd.f32 %v5055, %v5075
        %v5078 = vadd.f32 %v5056, %v5075
        %v5079 = vadd.f32 %v5057, %v5075
        %v5080 = vadd.f32 %v5058, %v5075
        %v5081 = vadd.f32 %v5059, %v5075
        %v5082 = vadd.f32 %v5060, %v5075
        %v5083 = vadd.f32 %v5061, %v5075
        %v5084 = vadd.f32 %v5062, %v5075
        %v5085 = vadd.f32 %v5063, %v5075
        %v5086 = vadd.f32 %v5064, %v5075
        %v5087 = vadd.f32 %v5065, %v5075
        %v5088 = vadd.f32 %v5066, %v5075
        %v5089 = vadd.f32 %v5067, %v5075
        %v5090 = vadd.f32 %v5068, %v5075
        %v5091 = vadd.f32 %v5069, %v5075
        %v5092 = vadd.f32 %v5070, %v5075
        %v5093 = vpack.c.bf16 %v5078, %v5077
        %v5094 = vpack.c.bf16 %v5080, %v5079
        %v5095 = vpack.c.bf16 %v5082, %v5081
        %v5096 = vpack.c.bf16 %v5084, %v5083
        %v5097 = vpack.c.bf16 %v5086, %v5085
        %v5098 = vpack.c.bf16 %v5088, %v5087
        %v5099 = vpack.c.bf16 %v5090, %v5089
        %v5100 = vpack.c.bf16 %v5092, %v5091
        %s5101 = scalar_lea.vmem %s5, 64
        %v5102 = vld [vmem:[%s5101] sm:$0xff]
        %v5103 = vld [vmem:[%s5101 + $0x8] sm:$0xff]
        %v5104 = vld [vmem:[%s5101 + $0x10] sm:$0xff]
        %v5105 = vld [vmem:[%s5101 + $0x18] sm:$0xff]
        %v5106 = vld [vmem:[%s5101 + $0x20] sm:$0xff]
        %v5107 = vld [vmem:[%s5101 + $0x28] sm:$0xff]
        %v5108 = vld [vmem:[%s5101 + $0x30] sm:$0xff]
        %v5109 = vld [vmem:[%s5101 + $0x38] sm:$0xff]
        %s5110 = scalar_lea.vmem %s6, 2
        %v5111 = vld [vmem:[%s5110] sm:$0x3]
        %v5113 = vlaneseq
        %v5114 = vshrl.u32 %v5113, 7
        %v5115 = vsub.s32 0, %v5114
        %v5116 = vrot.slane %v5111, %v5115
        %v5117 = vlaneseq
        %v5118 = vshrl.u32 %v5117, 7
        %v5119 = vsub.s32 1, %v5118
        %v5120 = vrot.slane %v5111, %v5119
        %v5131 = vunpack.c.l.b16 %v5102
        %v5132 = vunpack.c.h.b16 %v5102
        %v5133 = vunpack.c.l.b16 %v5103
        %v5134 = vunpack.c.h.b16 %v5103
        %v5135 = vunpack.c.l.b16 %v5104
        %v5136 = vunpack.c.h.b16 %v5104
        %v5137 = vunpack.c.l.b16 %v5105
        %v5138 = vunpack.c.h.b16 %v5105
        %v5139 = vunpack.c.l.b16 %v5106
        %v5140 = vunpack.c.h.b16 %v5106
        %v5141 = vunpack.c.l.b16 %v5107
        %v5142 = vunpack.c.h.b16 %v5107
        %v5143 = vunpack.c.l.b16 %v5108
        %v5144 = vunpack.c.h.b16 %v5108
        %v5145 = vunpack.c.l.b16 %v5109
        %v5146 = vunpack.c.h.b16 %v5109
        %v5147 = vpack.c.b16 %v5133, %v5131
        %v5148 = vpack.c.b16 %v5134, %v5132
        %v5149 = vpack.c.b16 %v5137, %v5135
        %v5150 = vpack.c.b16 %v5138, %v5136
        %v5151 = vpack.c.b16 %v5141, %v5139
        %v5152 = vpack.c.b16 %v5142, %v5140
        %v5153 = vpack.c.b16 %v5145, %v5143
        %v5154 = vpack.c.b16 %v5146, %v5144
        %v5164 = vsel %vm754, %v5093, 0
        %v5167 = vsel %vm754, %v5094, 0
        %v5170 = vsel %vm754, %v5095, 0
        %v5173 = vsel %vm754, %v5096, 0
        %v5176 = vsel %vm754, %v5097, 0
        %v5179 = vsel %vm754, %v5098, 0
        %v5182 = vsel %vm754, %v5099, 0
        %v5185 = vsel %vm754, %v5100, 0
        %5187 = vmatprep.subr.bf16.mxu0 %v5148
        %5188 = vmatpush1.bf16.msra.mxu0 %v5147
        %5189 = vmatprep.subr.bf16.mxu0 %v5150
        %5190 = vmatpush1.bf16.msra.mxu0 %v5149
        %5191 = vmatprep.subr.bf16.mxu0 %v5152
        %5192 = vmatpush1.bf16.msra.mxu0 %v5151
        %5193 = vmatprep.subr.bf16.mxu0 %v5154
        %5194 = vmatpush1.bf16.msra.mxu0 %v5153
        %5195 = vmatprep.subr.bf16.mxu0 0
        %5196 = vmatpush1.bf16.msra.mxu0 0
        %5197 = vmatprep.subr.bf16.mxu0 0
        %5198 = vmatpush1.bf16.msra.mxu0 0
        %5199 = vmatprep.subr.bf16.mxu0 0
        %5200 = vmatpush1.bf16.msra.mxu0 0
        %5201 = vmatprep.subr.bf16.mxu0 0
        %5202 = vmatpush1.bf16.msra.mxu0 0
        %5203 = vmatprep.subr.bf16.mxu0 0
        %5204 = vmatpush1.bf16.msra.mxu0 0
        %5205 = vmatprep.subr.bf16.mxu0 0
        %5206 = vmatpush1.bf16.msra.mxu0 0
        %5207 = vmatprep.subr.bf16.mxu0 0
        %5208 = vmatpush1.bf16.msra.mxu0 0
        %5209 = vmatprep.subr.bf16.mxu0 0
        %5210 = vmatpush1.bf16.msra.mxu0 0
        %5211 = vmatprep.subr.bf16.mxu0 0
        %5212 = vmatpush1.bf16.msra.mxu0 0
        %5213 = vmatprep.subr.bf16.mxu0 0
        %5214 = vmatpush1.bf16.msra.mxu0 0
        %5215 = vmatprep.subr.bf16.mxu0 0
        %5216 = vmatpush1.bf16.msra.mxu0 0
        %5217 = vmatprep.subr.bf16.mxu0 0
        %5218 = vmatpush1.bf16.msra.mxu0 0
        %5219 = vmatprep.mubr.bf16.mxu0 0
        %5220 = vmatmul.mubr.bf16.gmra.mrb[0].mxu0 %v5164
        %v5221 = vpop.f32.mrb[0].mxu0
        %v5222 = vadd.f32 %v5116, %v5221
        %v5223 = vpop.f32.mrb[0].mxu0
        %v5224 = vadd.f32 %v5120, %v5223
        %v5225 = vpop.f32.mrb[0].mxu0
        %v5226 = vadd.f32 %v5116, %v5225
        %v5227 = vpop.f32.mrb[0].mxu0
        %v5228 = vadd.f32 %v5120, %v5227
        %5229 = vmatprep.mubr.bf16.mxu0 0
        %5230 = vmatmul.mubr.bf16.gmra.mrb[0].mxu0 %v5167
        %v5231 = vpop.f32.mrb[0].mxu0
        %v5232 = vadd.f32 %v5116, %v5231
        %v5233 = vpop.f32.mrb[0].mxu0
        %v5234 = vadd.f32 %v5120, %v5233
        %v5235 = vpop.f32.mrb[0].mxu0
        %v5236 = vadd.f32 %v5116, %v5235
        %v5237 = vpop.f32.mrb[0].mxu0
        %v5238 = vadd.f32 %v5120, %v5237
        %5239 = vmatprep.mubr.bf16.mxu0 0
        %5240 = vmatmul.mubr.bf16.gmra.mrb[0].mxu0 %v5170
        %v5241 = vpop.f32.mrb[0].mxu0
        %v5242 = vadd.f32 %v5116, %v5241
        %v5243 = vpop.f32.mrb[0].mxu0
        %v5244 = vadd.f32 %v5120, %v5243
        %v5245 = vpop.f32.mrb[0].mxu0
        %v5246 = vadd.f32 %v5116, %v5245
        %v5247 = vpop.f32.mrb[0].mxu0
        %v5248 = vadd.f32 %v5120, %v5247
        %5249 = vmatprep.mubr.bf16.mxu0 0
        %5250 = vmatmul.mubr.bf16.gmra.mrb[0].mxu0 %v5173
        %v5251 = vpop.f32.mrb[0].mxu0
        %v5252 = vadd.f32 %v5116, %v5251
        %v5253 = vpop.f32.mrb[0].mxu0
        %v5254 = vadd.f32 %v5120, %v5253
        %v5255 = vpop.f32.mrb[0].mxu0
        %v5256 = vadd.f32 %v5116, %v5255
        %v5257 = vpop.f32.mrb[0].mxu0
        %v5258 = vadd.f32 %v5120, %v5257
        %5259 = vmatprep.mubr.bf16.mxu0 0
        %5260 = vmatmul.mubr.bf16.gmra.mrb[0].mxu0 %v5176
        %v5261 = vpop.f32.mrb[0].mxu0
        %v5262 = vadd.f32 %v5116, %v5261
        %v5263 = vpop.f32.mrb[0].mxu0
        %v5264 = vadd.f32 %v5120, %v5263
        %v5265 = vpop.f32.mrb[0].mxu0
        %v5266 = vadd.f32 %v5116, %v5265
        %v5267 = vpop.f32.mrb[0].mxu0
        %v5268 = vadd.f32 %v5120, %v5267
        %5269 = vmatprep.mubr.bf16.mxu0 0
        %5270 = vmatmul.mubr.bf16.gmra.mrb[0].mxu0 %v5179
        %v5271 = vpop.f32.mrb[0].mxu0
        %v5272 = vadd.f32 %v5116, %v5271
        %v5273 = vpop.f32.mrb[0].mxu0
        %v5274 = vadd.f32 %v5120, %v5273
        %v5275 = vpop.f32.mrb[0].mxu0
        %v5276 = vadd.f32 %v5116, %v5275
        %v5277 = vpop.f32.mrb[0].mxu0
        %v5278 = vadd.f32 %v5120, %v5277
        %5279 = vmatprep.mubr.bf16.mxu0 0
        %5280 = vmatmul.mubr.bf16.gmra.mrb[0].mxu0 %v5182
        %v5281 = vpop.f32.mrb[0].mxu0
        %v5282 = vadd.f32 %v5116, %v5281
        %v5283 = vpop.f32.mrb[0].mxu0
        %v5284 = vadd.f32 %v5120, %v5283
        %v5285 = vpop.f32.mrb[0].mxu0
        %v5286 = vadd.f32 %v5116, %v5285
        %v5287 = vpop.f32.mrb[0].mxu0
        %v5288 = vadd.f32 %v5120, %v5287
        %5289 = vmatprep.mubr.bf16.mxu0 0
        %5290 = vmatmul.mubr.bf16.gmra.mrb[0].mxu0 %v5185
        %v5291 = vpop.f32.mrb[0].mxu0
        %v5292 = vadd.f32 %v5116, %v5291
        %v5293 = vpop.f32.mrb[0].mxu0
        %v5294 = vadd.f32 %v5120, %v5293
        %v5295 = vpop.f32.mrb[0].mxu0
        %v5296 = vadd.f32 %v5116, %v5295
        %v5297 = vpop.f32.mrb[0].mxu0
        %v5298 = vadd.f32 %v5120, %v5297
        %5299 = vdwg.mxu0
        %v5300 = vpack.c.bf16 %v5226, %v5222
        %v5301 = vpack.c.bf16 %v5236, %v5232
        %v5302 = vpack.c.bf16 %v5246, %v5242
        %v5303 = vpack.c.bf16 %v5256, %v5252
        %v5304 = vpack.c.bf16 %v5266, %v5262
        %v5305 = vpack.c.bf16 %v5276, %v5272
        %v5306 = vpack.c.bf16 %v5286, %v5282
        %v5307 = vpack.c.bf16 %v5296, %v5292
        %v5308 = vpack.c.bf16 %v5228, %v5224
        %v5309 = vpack.c.bf16 %v5238, %v5234
        %v5310 = vpack.c.bf16 %v5248, %v5244
        %v5311 = vpack.c.bf16 %v5258, %v5254
        %v5312 = vpack.c.bf16 %v5268, %v5264
        %v5313 = vpack.c.bf16 %v5278, %v5274
        %v5314 = vpack.c.bf16 %v5288, %v5284
        %v5315 = vpack.c.bf16 %v5298, %v5294
        %5324 = vrot.lane.b32.xlu0 %v5300, 64
        %v5325 = vpop.permute.xlu0 %5324
        %5326 = vrot.lane.b32.xlu0 %v5301, 64
        %v5327 = vpop.permute.xlu0 %5326
        %5328 = vrot.lane.b32.xlu0 %v5302, 64
        %v5329 = vpop.permute.xlu0 %5328
        %5330 = vrot.lane.b32.xlu0 %v5303, 64
        %v5331 = vpop.permute.xlu0 %5330
        %5332 = vrot.lane.b32.xlu0 %v5304, 64
        %v5333 = vpop.permute.xlu0 %5332
        %5334 = vrot.lane.b32.xlu0 %v5305, 64
        %v5335 = vpop.permute.xlu0 %5334
        %5336 = vrot.lane.b32.xlu0 %v5306, 64
        %v5337 = vpop.permute.xlu0 %5336
        %5338 = vrot.lane.b32.xlu0 %v5307, 64
        %v5339 = vpop.permute.xlu0 %5338
        %v5341 = vsel %vm1631, %v5300, 0
        %v5344 = vsel %vm1631, %v5301, 0
        %v5347 = vsel %vm1631, %v5302, 0
        %v5350 = vsel %vm1631, %v5303, 0
        %v5353 = vsel %vm1631, %v5304, 0
        %v5356 = vsel %vm1631, %v5305, 0
        %v5359 = vsel %vm1631, %v5306, 0
        %v5362 = vsel %vm1631, %v5307, 0
        %v5365 = vsel %vm1631, %v5325, 0
        %v5368 = vsel %vm1631, %v5327, 0
        %v5371 = vsel %vm1631, %v5329, 0
        %v5374 = vsel %vm1631, %v5331, 0
        %v5377 = vsel %vm1631, %v5333, 0
        %v5380 = vsel %vm1631, %v5335, 0
        %v5383 = vsel %vm1631, %v5337, 0
        %v5386 = vsel %vm1631, %v5339, 0
        %5388 = vmatprep.subr.bf16.mxu0 0
        %5389 = vmatpush1.bf16.xpose.msra.mxu0 %v5365
        %5390 = vmatprep.subr.bf16.mxu0 0
        %5391 = vmatpush1.bf16.xpose.msra.mxu0 %v5368
        %5392 = vmatprep.subr.bf16.mxu0 0
        %5393 = vmatpush1.bf16.xpose.msra.mxu0 %v5371
        %5394 = vmatprep.subr.bf16.mxu0 0
        %5395 = vmatpush1.bf16.xpose.msra.mxu0 %v5374
        %5396 = vmatprep.subr.bf16.mxu0 0
        %5397 = vmatpush1.bf16.xpose.msra.mxu0 %v5377
        %5398 = vmatprep.subr.bf16.mxu0 0
        %5399 = vmatpush1.bf16.xpose.msra.mxu0 %v5380
        %5400 = vmatprep.subr.bf16.mxu0 0
        %5401 = vmatpush1.bf16.xpose.msra.mxu0 %v5383
        %5402 = vmatprep.subr.bf16.mxu0 0
        %5403 = vmatpush1.bf16.xpose.msra.mxu0 %v5386
        %5404 = vmatprep.subr.bf16.mxu0 0
        %5405 = vmatpush1.bf16.xpose.msra.mxu0 0
        %5406 = vmatprep.subr.bf16.mxu0 0
        %5407 = vmatpush1.bf16.xpose.msra.mxu0 0
        %5408 = vmatprep.subr.bf16.mxu0 0
        %5409 = vmatpush1.bf16.xpose.msra.mxu0 0
        %5410 = vmatprep.subr.bf16.mxu0 0
        %5411 = vmatpush1.bf16.xpose.msra.mxu0 0
        %5412 = vmatprep.subr.bf16.mxu0 0
        %5413 = vmatpush1.bf16.xpose.msra.mxu0 0
        %5414 = vmatprep.subr.bf16.mxu0 0
        %5415 = vmatpush1.bf16.xpose.msra.mxu0 0
        %5416 = vmatprep.subr.bf16.mxu0 0
        %5417 = vmatpush1.bf16.xpose.msra.mxu0 0
        %5418 = vmatprep.subr.bf16.mxu0 0
        %5419 = vmatpush1.bf16.xpose.msra.mxu0 0
        %5420 = vmatprep.mubr.bf16.mxu0 0
        %5421 = vmatmul.mubr.bf16.gmra.mrb[0].mxu0 %v5341
        %v5422 = vpop.f32.mrb[0].mxu0
        %v5423 = vadd.f32 %v1115, %v5422
        %v5424 = vpop.f32.mrb[0].mxu0
        %v5425 = vpop.f32.mrb[0].mxu0
        %v5426 = vadd.f32 %v1116, %v5425
        %v5427 = vpop.f32.mrb[0].mxu0
        %5428 = vmatprep.mubr.bf16.mxu0 0
        %5429 = vmatmul.mubr.bf16.gmra.mrb[0].mxu0 %v5344
        %v5430 = vpop.f32.mrb[0].mxu0
        %v5431 = vadd.f32 %v1117, %v5430
        %v5432 = vpop.f32.mrb[0].mxu0
        %v5433 = vpop.f32.mrb[0].mxu0
        %v5434 = vadd.f32 %v1118, %v5433
        %v5435 = vpop.f32.mrb[0].mxu0
        %5436 = vmatprep.mubr.bf16.mxu0 0
        %5437 = vmatmul.mubr.bf16.gmra.mrb[0].mxu0 %v5347
        %v5438 = vpop.f32.mrb[0].mxu0
        %v5439 = vadd.f32 %v1119, %v5438
        %v5440 = vpop.f32.mrb[0].mxu0
        %v5441 = vpop.f32.mrb[0].mxu0
        %v5442 = vadd.f32 %v1120, %v5441
        %v5443 = vpop.f32.mrb[0].mxu0
        %5444 = vmatprep.mubr.bf16.mxu0 0
        %5445 = vmatmul.mubr.bf16.gmra.mrb[0].mxu0 %v5350
        %v5446 = vpop.f32.mrb[0].mxu0
        %v5447 = vadd.f32 %v1121, %v5446
        %v5448 = vpop.f32.mrb[0].mxu0
        %v5449 = vpop.f32.mrb[0].mxu0
        %v5450 = vadd.f32 %v1122, %v5449
        %v5451 = vpop.f32.mrb[0].mxu0
        %5452 = vmatprep.mubr.bf16.mxu0 0
        %5453 = vmatmul.mubr.bf16.gmra.mrb[0].mxu0 %v5353
        %v5454 = vpop.f32.mrb[0].mxu0
        %v5455 = vadd.f32 %v1123, %v5454
        %v5456 = vpop.f32.mrb[0].mxu0
        %v5457 = vpop.f32.mrb[0].mxu0
        %v5458 = vadd.f32 %v1124, %v5457
        %v5459 = vpop.f32.mrb[0].mxu0
        %5460 = vmatprep.mubr.bf16.mxu0 0
        %5461 = vmatmul.mubr.bf16.gmra.mrb[0].mxu0 %v5356
        %v5462 = vpop.f32.mrb[0].mxu0
        %v5463 = vadd.f32 %v1125, %v5462
        %v5464 = vpop.f32.mrb[0].mxu0
        %v5465 = vpop.f32.mrb[0].mxu0
        %v5466 = vadd.f32 %v1126, %v5465
        %v5467 = vpop.f32.mrb[0].mxu0
        %5468 = vmatprep.mubr.bf16.mxu0 0
        %5469 = vmatmul.mubr.bf16.gmra.mrb[0].mxu0 %v5359
        %v5470 = vpop.f32.mrb[0].mxu0
        %v5471 = vadd.f32 %v1127, %v5470
        %v5472 = vpop.f32.mrb[0].mxu0
        %v5473 = vpop.f32.mrb[0].mxu0
        %v5474 = vadd.f32 %v1128, %v5473
        %v5475 = vpop.f32.mrb[0].mxu0
        %5476 = vmatprep.mubr.bf16.mxu0 0
        %5477 = vmatmul.mubr.bf16.gmra.mrb[0].mxu0 %v5362
        %v5478 = vpop.f32.mrb[0].mxu0
        %v5479 = vadd.f32 %v1129, %v5478
        %v5480 = vpop.f32.mrb[0].mxu0
        %v5481 = vpop.f32.mrb[0].mxu0
        %v5482 = vadd.f32 %v1130, %v5481
        %v5483 = vpop.f32.mrb[0].mxu0
        %5484 = vdwg.mxu0
        %5485 = vmax.xlane.f32.xlu0 %v5423
        %v5486 = vpop.xlane.xlu0 %5485
        %5487 = vmax.xlane.f32.xlu0 %v5426
        %v5488 = vpop.xlane.xlu0 %5487
        %5489 = vmax.xlane.f32.xlu0 %v5431
        %v5490 = vpop.xlane.xlu0 %5489
        %5491 = vmax.xlane.f32.xlu0 %v5434
        %v5492 = vpop.xlane.xlu0 %5491
        %5493 = vmax.xlane.f32.xlu0 %v5439
        %v5494 = vpop.xlane.xlu0 %5493
        %5495 = vmax.xlane.f32.xlu0 %v5442
        %v5496 = vpop.xlane.xlu0 %5495
        %5497 = vmax.xlane.f32.xlu0 %v5447
        %v5498 = vpop.xlane.xlu0 %5497
        %5499 = vmax.xlane.f32.xlu0 %v5450
        %v5500 = vpop.xlane.xlu0 %5499
        %5501 = vmax.xlane.f32.xlu0 %v5455
        %v5502 = vpop.xlane.xlu0 %5501
        %5503 = vmax.xlane.f32.xlu0 %v5458
        %v5504 = vpop.xlane.xlu0 %5503
        %5505 = vmax.xlane.f32.xlu0 %v5463
        %v5506 = vpop.xlane.xlu0 %5505
        %5507 = vmax.xlane.f32.xlu0 %v5466
        %v5508 = vpop.xlane.xlu0 %5507
        %5509 = vmax.xlane.f32.xlu0 %v5471
        %v5510 = vpop.xlane.xlu0 %5509
        %5511 = vmax.xlane.f32.xlu0 %v5474
        %v5512 = vpop.xlane.xlu0 %5511
        %5513 = vmax.xlane.f32.xlu0 %v5479
        %v5514 = vpop.xlane.xlu0 %5513
        %5515 = vmax.xlane.f32.xlu0 %v5482
        %v5516 = vpop.xlane.xlu0 %5515
        %v5517 = vsub.f32 %v5423, %v5486
        %v5518 = vsub.f32 %v5426, %v5488
        %v5519 = vsub.f32 %v5431, %v5490
        %v5520 = vsub.f32 %v5434, %v5492
        %v5521 = vsub.f32 %v5439, %v5494
        %v5522 = vsub.f32 %v5442, %v5496
        %v5523 = vsub.f32 %v5447, %v5498
        %v5524 = vsub.f32 %v5450, %v5500
        %v5525 = vsub.f32 %v5455, %v5502
        %v5526 = vsub.f32 %v5458, %v5504
        %v5527 = vsub.f32 %v5463, %v5506
        %v5528 = vsub.f32 %v5466, %v5508
        %v5529 = vsub.f32 %v5471, %v5510
        %v5530 = vsub.f32 %v5474, %v5512
        %v5531 = vsub.f32 %v5479, %v5514
        %v5532 = vsub.f32 %v5482, %v5516
        %v5533 = vmul.f32 %v5517, 1.442695
        %v5534 = vpow.pop %v5533
        %v5535 = vmul.f32 %v5518, 1.442695
        %v5536 = vpow.pop %v5535
        %v5537 = vmul.f32 %v5519, 1.442695
        %v5538 = vpow.pop %v5537
        %v5539 = vmul.f32 %v5520, 1.442695
        %v5540 = vpow.pop %v5539
        %v5541 = vmul.f32 %v5521, 1.442695
        %v5542 = vpow.pop %v5541
        %v5543 = vmul.f32 %v5522, 1.442695
        %v5544 = vpow.pop %v5543
        %v5545 = vmul.f32 %v5523, 1.442695
        %v5546 = vpow.pop %v5545
        %v5547 = vmul.f32 %v5524, 1.442695
        %v5548 = vpow.pop %v5547
        %v5549 = vmul.f32 %v5525, 1.442695
        %v5550 = vpow.pop %v5549
        %v5551 = vmul.f32 %v5526, 1.442695
        %v5552 = vpow.pop %v5551
        %v5553 = vmul.f32 %v5527, 1.442695
        %v5554 = vpow.pop %v5553
        %v5555 = vmul.f32 %v5528, 1.442695
        %v5556 = vpow.pop %v5555
        %v5557 = vmul.f32 %v5529, 1.442695
        %v5558 = vpow.pop %v5557
        %v5559 = vmul.f32 %v5530, 1.442695
        %v5560 = vpow.pop %v5559
        %v5561 = vmul.f32 %v5531, 1.442695
        %v5562 = vpow.pop %v5561
        %v5563 = vmul.f32 %v5532, 1.442695
        %v5564 = vpow.pop %v5563
        %5565 = vadd.xlane.f32.xlu0 %v5534
        %v5566 = vpop.xlane.xlu0 %5565
        %5567 = vadd.xlane.f32.xlu0 %v5536
        %v5568 = vpop.xlane.xlu0 %5567
        %5569 = vadd.xlane.f32.xlu0 %v5538
        %v5570 = vpop.xlane.xlu0 %5569
        %5571 = vadd.xlane.f32.xlu0 %v5540
        %v5572 = vpop.xlane.xlu0 %5571
        %5573 = vadd.xlane.f32.xlu0 %v5542
        %v5574 = vpop.xlane.xlu0 %5573
        %5575 = vadd.xlane.f32.xlu0 %v5544
        %v5576 = vpop.xlane.xlu0 %5575
        %5577 = vadd.xlane.f32.xlu0 %v5546
        %v5578 = vpop.xlane.xlu0 %5577
        %5579 = vadd.xlane.f32.xlu0 %v5548
        %v5580 = vpop.xlane.xlu0 %5579
        %5581 = vadd.xlane.f32.xlu0 %v5550
        %v5582 = vpop.xlane.xlu0 %5581
        %5583 = vadd.xlane.f32.xlu0 %v5552
        %v5584 = vpop.xlane.xlu0 %5583
        %5585 = vadd.xlane.f32.xlu0 %v5554
        %v5586 = vpop.xlane.xlu0 %5585
        %5587 = vadd.xlane.f32.xlu0 %v5556
        %v5588 = vpop.xlane.xlu0 %5587
        %5589 = vadd.xlane.f32.xlu0 %v5558
        %v5590 = vpop.xlane.xlu0 %5589
        %5591 = vadd.xlane.f32.xlu0 %v5560
        %v5592 = vpop.xlane.xlu0 %5591
        %5593 = vadd.xlane.f32.xlu0 %v5562
        %v5594 = vpop.xlane.xlu0 %5593
        %5595 = vadd.xlane.f32.xlu0 %v5564
        %v5596 = vpop.xlane.xlu0 %5595
        %v5597 = vrcp.pop %v5566
        %v5598 = vrcp.pop %v5568
        %v5599 = vrcp.pop %v5570
        %v5600 = vrcp.pop %v5572
        %v5601 = vrcp.pop %v5574
        %v5602 = vrcp.pop %v5576
        %v5603 = vrcp.pop %v5578
        %v5604 = vrcp.pop %v5580
        %v5605 = vrcp.pop %v5582
        %v5606 = vrcp.pop %v5584
        %v5607 = vrcp.pop %v5586
        %v5608 = vrcp.pop %v5588
        %v5609 = vrcp.pop %v5590
        %v5610 = vrcp.pop %v5592
        %v5611 = vrcp.pop %v5594
        %v5612 = vrcp.pop %v5596
        %v5613 = vmul.f32 %v5534, %v5597
        %v5614 = vmul.f32 %v5536, %v5598
        %v5615 = vmul.f32 %v5538, %v5599
        %v5616 = vmul.f32 %v5540, %v5600
        %v5617 = vmul.f32 %v5542, %v5601
        %v5618 = vmul.f32 %v5544, %v5602
        %v5619 = vmul.f32 %v5546, %v5603
        %v5620 = vmul.f32 %v5548, %v5604
        %v5621 = vmul.f32 %v5550, %v5605
        %v5622 = vmul.f32 %v5552, %v5606
        %v5623 = vmul.f32 %v5554, %v5607
        %v5624 = vmul.f32 %v5556, %v5608
        %v5625 = vmul.f32 %v5558, %v5609
        %v5626 = vmul.f32 %v5560, %v5610
        %v5627 = vmul.f32 %v5562, %v5611
        %v5628 = vmul.f32 %v5564, %v5612
        %v5629 = vpack.c.bf16 %v5614, %v5613
        %v5630 = vpack.c.bf16 %v5616, %v5615
        %v5631 = vpack.c.bf16 %v5618, %v5617
        %v5632 = vpack.c.bf16 %v5620, %v5619
        %v5633 = vpack.c.bf16 %v5622, %v5621
        %v5634 = vpack.c.bf16 %v5624, %v5623
        %v5635 = vpack.c.bf16 %v5626, %v5625
        %v5636 = vpack.c.bf16 %v5628, %v5627
        %5637 = vmatprep.subr.bf16.mxu0 0
        %5638 = vmatpush1.bf16.msra.mxu0 %v5308
        %5639 = vmatprep.subr.bf16.mxu0 0
        %5640 = vmatpush1.bf16.msra.mxu0 %v5309
        %5641 = vmatprep.subr.bf16.mxu0 0
        %5642 = vmatpush1.bf16.msra.mxu0 %v5310
        %5643 = vmatprep.subr.bf16.mxu0 0
        %5644 = vmatpush1.bf16.msra.mxu0 %v5311
        %5645 = vmatprep.subr.bf16.mxu0 0
        %5646 = vmatpush1.bf16.msra.mxu0 %v5312
        %5647 = vmatprep.subr.bf16.mxu0 0
        %5648 = vmatpush1.bf16.msra.mxu0 %v5313
        %5649 = vmatprep.subr.bf16.mxu0 0
        %5650 = vmatpush1.bf16.msra.mxu0 %v5314
        %5651 = vmatprep.subr.bf16.mxu0 0
        %5652 = vmatpush1.bf16.msra.mxu0 %v5315
        %5653 = vmatprep.subr.bf16.mxu0 0
        %5654 = vmatpush1.bf16.msra.mxu0 0
        %5655 = vmatprep.subr.bf16.mxu0 0
        %5656 = vmatpush1.bf16.msra.mxu0 0
        %5657 = vmatprep.subr.bf16.mxu0 0
        %5658 = vmatpush1.bf16.msra.mxu0 0
        %5659 = vmatprep.subr.bf16.mxu0 0
        %5660 = vmatpush1.bf16.msra.mxu0 0
        %5661 = vmatprep.subr.bf16.mxu0 0
        %5662 = vmatpush1.bf16.msra.mxu0 0
        %5663 = vmatprep.subr.bf16.mxu0 0
        %5664 = vmatpush1.bf16.msra.mxu0 0
        %5665 = vmatprep.subr.bf16.mxu0 0
        %5666 = vmatpush1.bf16.msra.mxu0 0
        %5667 = vmatprep.subr.bf16.mxu0 0
        %5668 = vmatpush1.bf16.msra.mxu0 0
        %5669 = vmatprep.mubr.bf16.mxu0 0
        %5670 = vmatmul.mubr.bf16.gmra.mrb[0].mxu0 %v5629
        %v5671 = vpop.f32.mrb[0].mxu0
        %v5672 = vadd.f32 0.0, %v5671
        %v5673 = vpop.f32.mrb[0].mxu0
        %v5674 = vpop.f32.mrb[0].mxu0
        %v5675 = vadd.f32 0.0, %v5674
        %v5676 = vpop.f32.mrb[0].mxu0
        %5677 = vmatprep.mubr.bf16.mxu0 0
        %5678 = vmatmul.mubr.bf16.gmra.mrb[0].mxu0 %v5630
        %v5679 = vpop.f32.mrb[0].mxu0
        %v5680 = vadd.f32 0.0, %v5679
        %v5681 = vpop.f32.mrb[0].mxu0
        %v5682 = vpop.f32.mrb[0].mxu0
        %v5683 = vadd.f32 0.0, %v5682
        %v5684 = vpop.f32.mrb[0].mxu0
        %5685 = vmatprep.mubr.bf16.mxu0 0
        %5686 = vmatmul.mubr.bf16.gmra.mrb[0].mxu0 %v5631
        %v5687 = vpop.f32.mrb[0].mxu0
        %v5688 = vadd.f32 0.0, %v5687
        %v5689 = vpop.f32.mrb[0].mxu0
        %v5690 = vpop.f32.mrb[0].mxu0
        %v5691 = vadd.f32 0.0, %v5690
        %v5692 = vpop.f32.mrb[0].mxu0
        %5693 = vmatprep.mubr.bf16.mxu0 0
        %5694 = vmatmul.mubr.bf16.gmra.mrb[0].mxu0 %v5632
        %v5695 = vpop.f32.mrb[0].mxu0
        %v5696 = vadd.f32 0.0, %v5695
        %v5697 = vpop.f32.mrb[0].mxu0
        %v5698 = vpop.f32.mrb[0].mxu0
        %v5699 = vadd.f32 0.0, %v5698
        %v5700 = vpop.f32.mrb[0].mxu0
        %5701 = vmatprep.mubr.bf16.mxu0 0
        %5702 = vmatmul.mubr.bf16.gmra.mrb[0].mxu0 %v5633
        %v5703 = vpop.f32.mrb[0].mxu0
        %v5704 = vadd.f32 0.0, %v5703
        %v5705 = vpop.f32.mrb[0].mxu0
        %v5706 = vpop.f32.mrb[0].mxu0
        %v5707 = vadd.f32 0.0, %v5706
        %v5708 = vpop.f32.mrb[0].mxu0
        %5709 = vmatprep.mubr.bf16.mxu0 0
        %5710 = vmatmul.mubr.bf16.gmra.mrb[0].mxu0 %v5634
        %v5711 = vpop.f32.mrb[0].mxu0
        %v5712 = vadd.f32 0.0, %v5711
        %v5713 = vpop.f32.mrb[0].mxu0
        %v5714 = vpop.f32.mrb[0].mxu0
        %v5715 = vadd.f32 0.0, %v5714
        %v5716 = vpop.f32.mrb[0].mxu0
        %5717 = vmatprep.mubr.bf16.mxu0 0
        %5718 = vmatmul.mubr.bf16.gmra.mrb[0].mxu0 %v5635
        %v5719 = vpop.f32.mrb[0].mxu0
        %v5720 = vadd.f32 0.0, %v5719
        %v5721 = vpop.f32.mrb[0].mxu0
        %v5722 = vpop.f32.mrb[0].mxu0
        %v5723 = vadd.f32 0.0, %v5722
        %v5724 = vpop.f32.mrb[0].mxu0
        %5725 = vmatprep.mubr.bf16.mxu0 0
        %5726 = vmatmul.mubr.bf16.gmra.mrb[0].mxu0 %v5636
        %v5727 = vpop.f32.mrb[0].mxu0
        %v5728 = vadd.f32 0.0, %v5727
        %v5729 = vpop.f32.mrb[0].mxu0
        %v5730 = vpop.f32.mrb[0].mxu0
        %v5731 = vadd.f32 0.0, %v5730
        %v5732 = vpop.f32.mrb[0].mxu0
        %5733 = vdwg.mxu0
        %5734 = vrot.lane.b32.xlu0 %v5300, 112
        %v5735 = vpop.permute.xlu0 %5734
        %5736 = vrot.lane.b32.xlu0 %v5301, 112
        %v5737 = vpop.permute.xlu0 %5736
        %5738 = vrot.lane.b32.xlu0 %v5302, 112
        %v5739 = vpop.permute.xlu0 %5738
        %5740 = vrot.lane.b32.xlu0 %v5303, 112
        %v5741 = vpop.permute.xlu0 %5740
        %5742 = vrot.lane.b32.xlu0 %v5304, 112
        %v5743 = vpop.permute.xlu0 %5742
        %5744 = vrot.lane.b32.xlu0 %v5305, 112
        %v5745 = vpop.permute.xlu0 %5744
        %5746 = vrot.lane.b32.xlu0 %v5306, 112
        %v5747 = vpop.permute.xlu0 %5746
        %5748 = vrot.lane.b32.xlu0 %v5307, 112
        %v5749 = vpop.permute.xlu0 %5748
        %5750 = vrot.lane.b32.xlu0 %v5300, 48
        %v5751 = vpop.permute.xlu0 %5750
        %5752 = vrot.lane.b32.xlu0 %v5301, 48
        %v5753 = vpop.permute.xlu0 %5752
        %5754 = vrot.lane.b32.xlu0 %v5302, 48
        %v5755 = vpop.permute.xlu0 %5754
        %5756 = vrot.lane.b32.xlu0 %v5303, 48
        %v5757 = vpop.permute.xlu0 %5756
        %5758 = vrot.lane.b32.xlu0 %v5304, 48
        %v5759 = vpop.permute.xlu0 %5758
        %5760 = vrot.lane.b32.xlu0 %v5305, 48
        %v5761 = vpop.permute.xlu0 %5760
        %5762 = vrot.lane.b32.xlu0 %v5306, 48
        %v5763 = vpop.permute.xlu0 %5762
        %5764 = vrot.lane.b32.xlu0 %v5307, 48
        %v5765 = vpop.permute.xlu0 %5764
        %v5767 = vsel %vm1631, %v5735, 0
        %v5770 = vsel %vm1631, %v5737, 0
        %v5773 = vsel %vm1631, %v5739, 0
        %v5776 = vsel %vm1631, %v5741, 0
        %v5779 = vsel %vm1631, %v5743, 0
        %v5782 = vsel %vm1631, %v5745, 0
        %v5785 = vsel %vm1631, %v5747, 0
        %v5788 = vsel %vm1631, %v5749, 0
        %v5791 = vsel %vm1631, %v5751, 0
        %v5794 = vsel %vm1631, %v5753, 0
        %v5797 = vsel %vm1631, %v5755, 0
        %v5800 = vsel %vm1631, %v5757, 0
        %v5803 = vsel %vm1631, %v5759, 0
        %v5806 = vsel %vm1631, %v5761, 0
        %v5809 = vsel %vm1631, %v5763, 0
        %v5812 = vsel %vm1631, %v5765, 0
        %5814 = vmatprep.subr.bf16.mxu0 0
        %5815 = vmatpush1.bf16.xpose.msra.mxu0 %v5791
        %5816 = vmatprep.subr.bf16.mxu0 0
        %5817 = vmatpush1.bf16.xpose.msra.mxu0 %v5794
        %5818 = vmatprep.subr.bf16.mxu0 0
        %5819 = vmatpush1.bf16.xpose.msra.mxu0 %v5797
        %5820 = vmatprep.subr.bf16.mxu0 0
        %5821 = vmatpush1.bf16.xpose.msra.mxu0 %v5800
        %5822 = vmatprep.subr.bf16.mxu0 0
        %5823 = vmatpush1.bf16.xpose.msra.mxu0 %v5803
        %5824 = vmatprep.subr.bf16.mxu0 0
        %5825 = vmatpush1.bf16.xpose.msra.mxu0 %v5806
        %5826 = vmatprep.subr.bf16.mxu0 0
        %5827 = vmatpush1.bf16.xpose.msra.mxu0 %v5809
        %5828 = vmatprep.subr.bf16.mxu0 0
        %5829 = vmatpush1.bf16.xpose.msra.mxu0 %v5812
        %5830 = vmatprep.subr.bf16.mxu0 0
        %5831 = vmatpush1.bf16.xpose.msra.mxu0 0
        %5832 = vmatprep.subr.bf16.mxu0 0
        %5833 = vmatpush1.bf16.xpose.msra.mxu0 0
        %5834 = vmatprep.subr.bf16.mxu0 0
        %5835 = vmatpush1.bf16.xpose.msra.mxu0 0
        %5836 = vmatprep.subr.bf16.mxu0 0
        %5837 = vmatpush1.bf16.xpose.msra.mxu0 0
        %5838 = vmatprep.subr.bf16.mxu0 0
        %5839 = vmatpush1.bf16.xpose.msra.mxu0 0
        %5840 = vmatprep.subr.bf16.mxu0 0
        %5841 = vmatpush1.bf16.xpose.msra.mxu0 0
        %5842 = vmatprep.subr.bf16.mxu0 0
        %5843 = vmatpush1.bf16.xpose.msra.mxu0 0
        %5844 = vmatprep.subr.bf16.mxu0 0
        %5845 = vmatpush1.bf16.xpose.msra.mxu0 0
        %5846 = vmatprep.mubr.bf16.mxu0 0
        %5847 = vmatmul.mubr.bf16.gmra.mrb[0].mxu0 %v5767
        %v5848 = vpop.f32.mrb[0].mxu0
        %v5849 = vadd.f32 %v1115, %v5848
        %v5850 = vpop.f32.mrb[0].mxu0
        %v5851 = vpop.f32.mrb[0].mxu0
        %v5852 = vadd.f32 %v1116, %v5851
        %v5853 = vpop.f32.mrb[0].mxu0
        %5854 = vmatprep.mubr.bf16.mxu0 0
        %5855 = vmatmul.mubr.bf16.gmra.mrb[0].mxu0 %v5770
        %v5856 = vpop.f32.mrb[0].mxu0
        %v5857 = vadd.f32 %v1117, %v5856
        %v5858 = vpop.f32.mrb[0].mxu0
        %v5859 = vpop.f32.mrb[0].mxu0
        %v5860 = vadd.f32 %v1118, %v5859
        %v5861 = vpop.f32.mrb[0].mxu0
        %5862 = vmatprep.mubr.bf16.mxu0 0
        %5863 = vmatmul.mubr.bf16.gmra.mrb[0].mxu0 %v5773
        %v5864 = vpop.f32.mrb[0].mxu0
        %v5865 = vadd.f32 %v1119, %v5864
        %v5866 = vpop.f32.mrb[0].mxu0
        %v5867 = vpop.f32.mrb[0].mxu0
        %v5868 = vadd.f32 %v1120, %v5867
        %v5869 = vpop.f32.mrb[0].mxu0
        %5870 = vmatprep.mubr.bf16.mxu0 0
        %5871 = vmatmul.mubr.bf16.gmra.mrb[0].mxu0 %v5776
        %v5872 = vpop.f32.mrb[0].mxu0
        %v5873 = vadd.f32 %v1121, %v5872
        %v5874 = vpop.f32.mrb[0].mxu0
        %v5875 = vpop.f32.mrb[0].mxu0
        %v5876 = vadd.f32 %v1122, %v5875
        %v5877 = vpop.f32.mrb[0].mxu0
        %5878 = vmatprep.mubr.bf16.mxu0 0
        %5879 = vmatmul.mubr.bf16.gmra.mrb[0].mxu0 %v5779
        %v5880 = vpop.f32.mrb[0].mxu0
        %v5881 = vadd.f32 %v1123, %v5880
        %v5882 = vpop.f32.mrb[0].mxu0
        %v5883 = vpop.f32.mrb[0].mxu0
        %v5884 = vadd.f32 %v1124, %v5883
        %v5885 = vpop.f32.mrb[0].mxu0
        %5886 = vmatprep.mubr.bf16.mxu0 0
        %5887 = vmatmul.mubr.bf16.gmra.mrb[0].mxu0 %v5782
        %v5888 = vpop.f32.mrb[0].mxu0
        %v5889 = vadd.f32 %v1125, %v5888
        %v5890 = vpop.f32.mrb[0].mxu0
        %v5891 = vpop.f32.mrb[0].mxu0
        %v5892 = vadd.f32 %v1126, %v5891
        %v5893 = vpop.f32.mrb[0].mxu0
        %5894 = vmatprep.mubr.bf16.mxu0 0
        %5895 = vmatmul.mubr.bf16.gmra.mrb[0].mxu0 %v5785
        %v5896 = vpop.f32.mrb[0].mxu0
        %v5897 = vadd.f32 %v1127, %v5896
        %v5898 = vpop.f32.mrb[0].mxu0
        %v5899 = vpop.f32.mrb[0].mxu0
        %v5900 = vadd.f32 %v1128, %v5899
        %v5901 = vpop.f32.mrb[0].mxu0
        %5902 = vmatprep.mubr.bf16.mxu0 0
        %5903 = vmatmul.mubr.bf16.gmra.mrb[0].mxu0 %v5788
        %v5904 = vpop.f32.mrb[0].mxu0
        %v5905 = vadd.f32 %v1129, %v5904
        %v5906 = vpop.f32.mrb[0].mxu0
        %v5907 = vpop.f32.mrb[0].mxu0
        %v5908 = vadd.f32 %v1130, %v5907
        %v5909 = vpop.f32.mrb[0].mxu0
        %5910 = vdwg.mxu0
        %5911 = vmax.xlane.f32.xlu0 %v5849
        %v5912 = vpop.xlane.xlu0 %5911
        %5913 = vmax.xlane.f32.xlu0 %v5852
        %v5914 = vpop.xlane.xlu0 %5913
        %5915 = vmax.xlane.f32.xlu0 %v5857
        %v5916 = vpop.xlane.xlu0 %5915
        %5917 = vmax.xlane.f32.xlu0 %v5860
        %v5918 = vpop.xlane.xlu0 %5917
        %5919 = vmax.xlane.f32.xlu0 %v5865
        %v5920 = vpop.xlane.xlu0 %5919
        %5921 = vmax.xlane.f32.xlu0 %v5868
        %v5922 = vpop.xlane.xlu0 %5921
        %5923 = vmax.xlane.f32.xlu0 %v5873
        %v5924 = vpop.xlane.xlu0 %5923
        %5925 = vmax.xlane.f32.xlu0 %v5876
        %v5926 = vpop.xlane.xlu0 %5925
        %5927 = vmax.xlane.f32.xlu0 %v5881
        %v5928 = vpop.xlane.xlu0 %5927
        %5929 = vmax.xlane.f32.xlu0 %v5884
        %v5930 = vpop.xlane.xlu0 %5929
        %5931 = vmax.xlane.f32.xlu0 %v5889
        %v5932 = vpop.xlane.xlu0 %5931
        %5933 = vmax.xlane.f32.xlu0 %v5892
        %v5934 = vpop.xlane.xlu0 %5933
        %5935 = vmax.xlane.f32.xlu0 %v5897
        %v5936 = vpop.xlane.xlu0 %5935
        %5937 = vmax.xlane.f32.xlu0 %v5900
        %v5938 = vpop.xlane.xlu0 %5937
        %5939 = vmax.xlane.f32.xlu0 %v5905
        %v5940 = vpop.xlane.xlu0 %5939
        %5941 = vmax.xlane.f32.xlu0 %v5908
        %v5942 = vpop.xlane.xlu0 %5941
        %v5943 = vsub.f32 %v5849, %v5912
        %v5944 = vsub.f32 %v5852, %v5914
        %v5945 = vsub.f32 %v5857, %v5916
        %v5946 = vsub.f32 %v5860, %v5918
        %v5947 = vsub.f32 %v5865, %v5920
        %v5948 = vsub.f32 %v5868, %v5922
        %v5949 = vsub.f32 %v5873, %v5924
        %v5950 = vsub.f32 %v5876, %v5926
        %v5951 = vsub.f32 %v5881, %v5928
        %v5952 = vsub.f32 %v5884, %v5930
        %v5953 = vsub.f32 %v5889, %v5932
        %v5954 = vsub.f32 %v5892, %v5934
        %v5955 = vsub.f32 %v5897, %v5936
        %v5956 = vsub.f32 %v5900, %v5938
        %v5957 = vsub.f32 %v5905, %v5940
        %v5958 = vsub.f32 %v5908, %v5942
        %v5959 = vmul.f32 %v5943, 1.442695
        %v5960 = vpow.pop %v5959
        %v5961 = vmul.f32 %v5944, 1.442695
        %v5962 = vpow.pop %v5961
        %v5963 = vmul.f32 %v5945, 1.442695
        %v5964 = vpow.pop %v5963
        %v5965 = vmul.f32 %v5946, 1.442695
        %v5966 = vpow.pop %v5965
        %v5967 = vmul.f32 %v5947, 1.442695
        %v5968 = vpow.pop %v5967
        %v5969 = vmul.f32 %v5948, 1.442695
        %v5970 = vpow.pop %v5969
        %v5971 = vmul.f32 %v5949, 1.442695
        %v5972 = vpow.pop %v5971
        %v5973 = vmul.f32 %v5950, 1.442695
        %v5974 = vpow.pop %v5973
        %v5975 = vmul.f32 %v5951, 1.442695
        %v5976 = vpow.pop %v5975
        %v5977 = vmul.f32 %v5952, 1.442695
        %v5978 = vpow.pop %v5977
        %v5979 = vmul.f32 %v5953, 1.442695
        %v5980 = vpow.pop %v5979
        %v5981 = vmul.f32 %v5954, 1.442695
        %v5982 = vpow.pop %v5981
        %v5983 = vmul.f32 %v5955, 1.442695
        %v5984 = vpow.pop %v5983
        %v5985 = vmul.f32 %v5956, 1.442695
        %v5986 = vpow.pop %v5985
        %v5987 = vmul.f32 %v5957, 1.442695
        %v5988 = vpow.pop %v5987
        %v5989 = vmul.f32 %v5958, 1.442695
        %v5990 = vpow.pop %v5989
        %5991 = vadd.xlane.f32.xlu0 %v5960
        %v5992 = vpop.xlane.xlu0 %5991
        %5993 = vadd.xlane.f32.xlu0 %v5962
        %v5994 = vpop.xlane.xlu0 %5993
        %5995 = vadd.xlane.f32.xlu0 %v5964
        %v5996 = vpop.xlane.xlu0 %5995
        %5997 = vadd.xlane.f32.xlu0 %v5966
        %v5998 = vpop.xlane.xlu0 %5997
        %5999 = vadd.xlane.f32.xlu0 %v5968
        %v6000 = vpop.xlane.xlu0 %5999
        %6001 = vadd.xlane.f32.xlu0 %v5970
        %v6002 = vpop.xlane.xlu0 %6001
        %6003 = vadd.xlane.f32.xlu0 %v5972
        %v6004 = vpop.xlane.xlu0 %6003
        %6005 = vadd.xlane.f32.xlu0 %v5974
        %v6006 = vpop.xlane.xlu0 %6005
        %6007 = vadd.xlane.f32.xlu0 %v5976
        %v6008 = vpop.xlane.xlu0 %6007
        %6009 = vadd.xlane.f32.xlu0 %v5978
        %v6010 = vpop.xlane.xlu0 %6009
        %6011 = vadd.xlane.f32.xlu0 %v5980
        %v6012 = vpop.xlane.xlu0 %6011
        %6013 = vadd.xlane.f32.xlu0 %v5982
        %v6014 = vpop.xlane.xlu0 %6013
        %6015 = vadd.xlane.f32.xlu0 %v5984
        %v6016 = vpop.xlane.xlu0 %6015
        %6017 = vadd.xlane.f32.xlu0 %v5986
        %v6018 = vpop.xlane.xlu0 %6017
        %6019 = vadd.xlane.f32.xlu0 %v5988
        %v6020 = vpop.xlane.xlu0 %6019
        %6021 = vadd.xlane.f32.xlu0 %v5990
        %v6022 = vpop.xlane.xlu0 %6021
        %v6023 = vrcp.pop %v5992
        %v6024 = vrcp.pop %v5994
        %v6025 = vrcp.pop %v5996
        %v6026 = vrcp.pop %v5998
        %v6027 = vrcp.pop %v6000
        %v6028 = vrcp.pop %v6002
        %v6029 = vrcp.pop %v6004
        %v6030 = vrcp.pop %v6006
        %v6031 = vrcp.pop %v6008
        %v6032 = vrcp.pop %v6010
        %v6033 = vrcp.pop %v6012
        %v6034 = vrcp.pop %v6014
        %v6035 = vrcp.pop %v6016
        %v6036 = vrcp.pop %v6018
        %v6037 = vrcp.pop %v6020
        %v6038 = vrcp.pop %v6022
        %v6039 = vmul.f32 %v5960, %v6023
        %v6040 = vmul.f32 %v5962, %v6024
        %v6041 = vmul.f32 %v5964, %v6025
        %v6042 = vmul.f32 %v5966, %v6026
        %v6043 = vmul.f32 %v5968, %v6027
        %v6044 = vmul.f32 %v5970, %v6028
        %v6045 = vmul.f32 %v5972, %v6029
        %v6046 = vmul.f32 %v5974, %v6030
        %v6047 = vmul.f32 %v5976, %v6031
        %v6048 = vmul.f32 %v5978, %v6032
        %v6049 = vmul.f32 %v5980, %v6033
        %v6050 = vmul.f32 %v5982, %v6034
        %v6051 = vmul.f32 %v5984, %v6035
        %v6052 = vmul.f32 %v5986, %v6036
        %v6053 = vmul.f32 %v5988, %v6037
        %v6054 = vmul.f32 %v5990, %v6038
        %v6055 = vpack.c.bf16 %v6040, %v6039
        %v6056 = vpack.c.bf16 %v6042, %v6041
        %v6057 = vpack.c.bf16 %v6044, %v6043
        %v6058 = vpack.c.bf16 %v6046, %v6045
        %v6059 = vpack.c.bf16 %v6048, %v6047
        %v6060 = vpack.c.bf16 %v6050, %v6049
        %v6061 = vpack.c.bf16 %v6052, %v6051
        %v6062 = vpack.c.bf16 %v6054, %v6053
        %6071 = vrot.lane.b32.xlu0 %v5308, 112
        %v6072 = vpop.permute.xlu0 %6071
        %6073 = vrot.lane.b32.xlu0 %v5309, 112
        %v6074 = vpop.permute.xlu0 %6073
        %6075 = vrot.lane.b32.xlu0 %v5310, 112
        %v6076 = vpop.permute.xlu0 %6075
        %6077 = vrot.lane.b32.xlu0 %v5311, 112
        %v6078 = vpop.permute.xlu0 %6077
        %6079 = vrot.lane.b32.xlu0 %v5312, 112
        %v6080 = vpop.permute.xlu0 %6079
        %6081 = vrot.lane.b32.xlu0 %v5313, 112
        %v6082 = vpop.permute.xlu0 %6081
        %6083 = vrot.lane.b32.xlu0 %v5314, 112
        %v6084 = vpop.permute.xlu0 %6083
        %6085 = vrot.lane.b32.xlu0 %v5315, 112
        %v6086 = vpop.permute.xlu0 %6085
        %6095 = vmatprep.subr.bf16.mxu0 0
        %6096 = vmatpush1.bf16.msra.mxu0 %v6072
        %6097 = vmatprep.subr.bf16.mxu0 0
        %6098 = vmatpush1.bf16.msra.mxu0 %v6074
        %6099 = vmatprep.subr.bf16.mxu0 0
        %6100 = vmatpush1.bf16.msra.mxu0 %v6076
        %6101 = vmatprep.subr.bf16.mxu0 0
        %6102 = vmatpush1.bf16.msra.mxu0 %v6078
        %6103 = vmatprep.subr.bf16.mxu0 0
        %6104 = vmatpush1.bf16.msra.mxu0 %v6080
        %6105 = vmatprep.subr.bf16.mxu0 0
        %6106 = vmatpush1.bf16.msra.mxu0 %v6082
        %6107 = vmatprep.subr.bf16.mxu0 0
        %6108 = vmatpush1.bf16.msra.mxu0 %v6084
        %6109 = vmatprep.subr.bf16.mxu0 0
        %6110 = vmatpush1.bf16.msra.mxu0 %v6086
        %6111 = vmatprep.subr.bf16.mxu0 0
        %6112 = vmatpush1.bf16.msra.mxu0 0
        %6113 = vmatprep.subr.bf16.mxu0 0
        %6114 = vmatpush1.bf16.msra.mxu0 0
        %6115 = vmatprep.subr.bf16.mxu0 0
        %6116 = vmatpush1.bf16.msra.mxu0 0
        %6117 = vmatprep.subr.bf16.mxu0 0
        %6118 = vmatpush1.bf16.msra.mxu0 0
        %6119 = vmatprep.subr.bf16.mxu0 0
        %6120 = vmatpush1.bf16.msra.mxu0 0
        %6121 = vmatprep.subr.bf16.mxu0 0
        %6122 = vmatpush1.bf16.msra.mxu0 0
        %6123 = vmatprep.subr.bf16.mxu0 0
        %6124 = vmatpush1.bf16.msra.mxu0 0
        %6125 = vmatprep.subr.bf16.mxu0 0
        %6126 = vmatpush1.bf16.msra.mxu0 0
        %6127 = vmatprep.mubr.bf16.mxu0 0
        %6128 = vmatmul.mubr.bf16.gmra.mrb[0].mxu0 %v6055
        %v6129 = vpop.f32.mrb[0].mxu0
        %v6130 = vadd.f32 0.0, %v6129
        %v6131 = vpop.f32.mrb[0].mxu0
        %v6132 = vpop.f32.mrb[0].mxu0
        %v6133 = vadd.f32 0.0, %v6132
        %v6134 = vpop.f32.mrb[0].mxu0
        %6135 = vmatprep.mubr.bf16.mxu0 0
        %6136 = vmatmul.mubr.bf16.gmra.mrb[0].mxu0 %v6056
        %v6137 = vpop.f32.mrb[0].mxu0
        %v6138 = vadd.f32 0.0, %v6137
        %v6139 = vpop.f32.mrb[0].mxu0
        %v6140 = vpop.f32.mrb[0].mxu0
        %v6141 = vadd.f32 0.0, %v6140
        %v6142 = vpop.f32.mrb[0].mxu0
        %6143 = vmatprep.mubr.bf16.mxu0 0
        %6144 = vmatmul.mubr.bf16.gmra.mrb[0].mxu0 %v6057
        %v6145 = vpop.f32.mrb[0].mxu0
        %v6146 = vadd.f32 0.0, %v6145
        %v6147 = vpop.f32.mrb[0].mxu0
        %v6148 = vpop.f32.mrb[0].mxu0
        %v6149 = vadd.f32 0.0, %v6148
        %v6150 = vpop.f32.mrb[0].mxu0
        %6151 = vmatprep.mubr.bf16.mxu0 0
        %6152 = vmatmul.mubr.bf16.gmra.mrb[0].mxu0 %v6058
        %v6153 = vpop.f32.mrb[0].mxu0
        %v6154 = vadd.f32 0.0, %v6153
        %v6155 = vpop.f32.mrb[0].mxu0
        %v6156 = vpop.f32.mrb[0].mxu0
        %v6157 = vadd.f32 0.0, %v6156
        %v6158 = vpop.f32.mrb[0].mxu0
        %6159 = vmatprep.mubr.bf16.mxu0 0
        %6160 = vmatmul.mubr.bf16.gmra.mrb[0].mxu0 %v6059
        %v6161 = vpop.f32.mrb[0].mxu0
        %v6162 = vadd.f32 0.0, %v6161
        %v6163 = vpop.f32.mrb[0].mxu0
        %v6164 = vpop.f32.mrb[0].mxu0
        %v6165 = vadd.f32 0.0, %v6164
        %v6166 = vpop.f32.mrb[0].mxu0
        %6167 = vmatprep.mubr.bf16.mxu0 0
        %6168 = vmatmul.mubr.bf16.gmra.mrb[0].mxu0 %v6060
        %v6169 = vpop.f32.mrb[0].mxu0
        %v6170 = vadd.f32 0.0, %v6169
        %v6171 = vpop.f32.mrb[0].mxu0
        %v6172 = vpop.f32.mrb[0].mxu0
        %v6173 = vadd.f32 0.0, %v6172
        %v6174 = vpop.f32.mrb[0].mxu0
        %6175 = vmatprep.mubr.bf16.mxu0 0
        %6176 = vmatmul.mubr.bf16.gmra.mrb[0].mxu0 %v6061
        %v6177 = vpop.f32.mrb[0].mxu0
        %v6178 = vadd.f32 0.0, %v6177
        %v6179 = vpop.f32.mrb[0].mxu0
        %v6180 = vpop.f32.mrb[0].mxu0
        %v6181 = vadd.f32 0.0, %v6180
        %v6182 = vpop.f32.mrb[0].mxu0
        %6183 = vmatprep.mubr.bf16.mxu0 0
        %6184 = vmatmul.mubr.bf16.gmra.mrb[0].mxu0 %v6062
        %v6185 = vpop.f32.mrb[0].mxu0
        %v6186 = vadd.f32 0.0, %v6185
        %v6187 = vpop.f32.mrb[0].mxu0
        %v6188 = vpop.f32.mrb[0].mxu0
        %v6189 = vadd.f32 0.0, %v6188
        %v6190 = vpop.f32.mrb[0].mxu0
        %6191 = vdwg.mxu0
        %6192 = vrot.lane.b32.xlu0 %v5300, 96
        %v6193 = vpop.permute.xlu0 %6192
        %6194 = vrot.lane.b32.xlu0 %v5301, 96
        %v6195 = vpop.permute.xlu0 %6194
        %6196 = vrot.lane.b32.xlu0 %v5302, 96
        %v6197 = vpop.permute.xlu0 %6196
        %6198 = vrot.lane.b32.xlu0 %v5303, 96
        %v6199 = vpop.permute.xlu0 %6198
        %6200 = vrot.lane.b32.xlu0 %v5304, 96
        %v6201 = vpop.permute.xlu0 %6200
        %6202 = vrot.lane.b32.xlu0 %v5305, 96
        %v6203 = vpop.permute.xlu0 %6202
        %6204 = vrot.lane.b32.xlu0 %v5306, 96
        %v6205 = vpop.permute.xlu0 %6204
        %6206 = vrot.lane.b32.xlu0 %v5307, 96
        %v6207 = vpop.permute.xlu0 %6206
        %6208 = vrot.lane.b32.xlu0 %v5300, 32
        %v6209 = vpop.permute.xlu0 %6208
        %6210 = vrot.lane.b32.xlu0 %v5301, 32
        %v6211 = vpop.permute.xlu0 %6210
        %6212 = vrot.lane.b32.xlu0 %v5302, 32
        %v6213 = vpop.permute.xlu0 %6212
        %6214 = vrot.lane.b32.xlu0 %v5303, 32
        %v6215 = vpop.permute.xlu0 %6214
        %6216 = vrot.lane.b32.xlu0 %v5304, 32
        %v6217 = vpop.permute.xlu0 %6216
        %6218 = vrot.lane.b32.xlu0 %v5305, 32
        %v6219 = vpop.permute.xlu0 %6218
        %6220 = vrot.lane.b32.xlu0 %v5306, 32
        %v6221 = vpop.permute.xlu0 %6220
        %6222 = vrot.lane.b32.xlu0 %v5307, 32
        %v6223 = vpop.permute.xlu0 %6222
        %v6225 = vsel %vm1631, %v6193, 0
        %v6228 = vsel %vm1631, %v6195, 0
        %v6231 = vsel %vm1631, %v6197, 0
        %v6234 = vsel %vm1631, %v6199, 0
        %v6237 = vsel %vm1631, %v6201, 0
        %v6240 = vsel %vm1631, %v6203, 0
        %v6243 = vsel %vm1631, %v6205, 0
        %v6246 = vsel %vm1631, %v6207, 0
        %v6249 = vsel %vm1631, %v6209, 0
        %v6252 = vsel %vm1631, %v6211, 0
        %v6255 = vsel %vm1631, %v6213, 0
        %v6258 = vsel %vm1631, %v6215, 0
        %v6261 = vsel %vm1631, %v6217, 0
        %v6264 = vsel %vm1631, %v6219, 0
        %v6267 = vsel %vm1631, %v6221, 0
        %v6270 = vsel %vm1631, %v6223, 0
        %6272 = vmatprep.subr.bf16.mxu0 0
        %6273 = vmatpush1.bf16.xpose.msra.mxu0 %v6249
        %6274 = vmatprep.subr.bf16.mxu0 0
        %6275 = vmatpush1.bf16.xpose.msra.mxu0 %v6252
        %6276 = vmatprep.subr.bf16.mxu0 0
        %6277 = vmatpush1.bf16.xpose.msra.mxu0 %v6255
        %6278 = vmatprep.subr.bf16.mxu0 0
        %6279 = vmatpush1.bf16.xpose.msra.mxu0 %v6258
        %6280 = vmatprep.subr.bf16.mxu0 0
        %6281 = vmatpush1.bf16.xpose.msra.mxu0 %v6261
        %6282 = vmatprep.subr.bf16.mxu0 0
        %6283 = vmatpush1.bf16.xpose.msra.mxu0 %v6264
        %6284 = vmatprep.subr.bf16.mxu0 0
        %6285 = vmatpush1.bf16.xpose.msra.mxu0 %v6267
        %6286 = vmatprep.subr.bf16.mxu0 0
        %6287 = vmatpush1.bf16.xpose.msra.mxu0 %v6270
        %6288 = vmatprep.subr.bf16.mxu0 0
        %6289 = vmatpush1.bf16.xpose.msra.mxu0 0
        %6290 = vmatprep.subr.bf16.mxu0 0
        %6291 = vmatpush1.bf16.xpose.msra.mxu0 0
        %6292 = vmatprep.subr.bf16.mxu0 0
        %6293 = vmatpush1.bf16.xpose.msra.mxu0 0
        %6294 = vmatprep.subr.bf16.mxu0 0
        %6295 = vmatpush1.bf16.xpose.msra.mxu0 0
        %6296 = vmatprep.subr.bf16.mxu0 0
        %6297 = vmatpush1.bf16.xpose.msra.mxu0 0
        %6298 = vmatprep.subr.bf16.mxu0 0
        %6299 = vmatpush1.bf16.xpose.msra.mxu0 0
        %6300 = vmatprep.subr.bf16.mxu0 0
        %6301 = vmatpush1.bf16.xpose.msra.mxu0 0
        %6302 = vmatprep.subr.bf16.mxu0 0
        %6303 = vmatpush1.bf16.xpose.msra.mxu0 0
        %6304 = vmatprep.mubr.bf16.mxu0 0
        %6305 = vmatmul.mubr.bf16.gmra.mrb[0].mxu0 %v6225
        %v6306 = vpop.f32.mrb[0].mxu0
        %v6307 = vadd.f32 %v1115, %v6306
        %v6308 = vpop.f32.mrb[0].mxu0
        %v6309 = vpop.f32.mrb[0].mxu0
        %v6310 = vadd.f32 %v1116, %v6309
        %v6311 = vpop.f32.mrb[0].mxu0
        %6312 = vmatprep.mubr.bf16.mxu0 0
        %6313 = vmatmul.mubr.bf16.gmra.mrb[0].mxu0 %v6228
        %v6314 = vpop.f32.mrb[0].mxu0
        %v6315 = vadd.f32 %v1117, %v6314
        %v6316 = vpop.f32.mrb[0].mxu0
        %v6317 = vpop.f32.mrb[0].mxu0
        %v6318 = vadd.f32 %v1118, %v6317
        %v6319 = vpop.f32.mrb[0].mxu0
        %6320 = vmatprep.mubr.bf16.mxu0 0
        %6321 = vmatmul.mubr.bf16.gmra.mrb[0].mxu0 %v6231
        %v6322 = vpop.f32.mrb[0].mxu0
        %v6323 = vadd.f32 %v1119, %v6322
        %v6324 = vpop.f32.mrb[0].mxu0
        %v6325 = vpop.f32.mrb[0].mxu0
        %v6326 = vadd.f32 %v1120, %v6325
        %v6327 = vpop.f32.mrb[0].mxu0
        %6328 = vmatprep.mubr.bf16.mxu0 0
        %6329 = vmatmul.mubr.bf16.gmra.mrb[0].mxu0 %v6234
        %v6330 = vpop.f32.mrb[0].mxu0
        %v6331 = vadd.f32 %v1121, %v6330
        %v6332 = vpop.f32.mrb[0].mxu0
        %v6333 = vpop.f32.mrb[0].mxu0
        %v6334 = vadd.f32 %v1122, %v6333
        %v6335 = vpop.f32.mrb[0].mxu0
        %6336 = vmatprep.mubr.bf16.mxu0 0
        %6337 = vmatmul.mubr.bf16.gmra.mrb[0].mxu0 %v6237
        %v6338 = vpop.f32.mrb[0].mxu0
        %v6339 = vadd.f32 %v1123, %v6338
        %v6340 = vpop.f32.mrb[0].mxu0
        %v6341 = vpop.f32.mrb[0].mxu0
        %v6342 = vadd.f32 %v1124, %v6341
        %v6343 = vpop.f32.mrb[0].mxu0
        %6344 = vmatprep.mubr.bf16.mxu0 0
        %6345 = vmatmul.mubr.bf16.gmra.mrb[0].mxu0 %v6240
        %v6346 = vpop.f32.mrb[0].mxu0
        %v6347 = vadd.f32 %v1125, %v6346
        %v6348 = vpop.f32.mrb[0].mxu0
        %v6349 = vpop.f32.mrb[0].mxu0
        %v6350 = vadd.f32 %v1126, %v6349
        %v6351 = vpop.f32.mrb[0].mxu0
        %6352 = vmatprep.mubr.bf16.mxu0 0
        %6353 = vmatmul.mubr.bf16.gmra.mrb[0].mxu0 %v6243
        %v6354 = vpop.f32.mrb[0].mxu0
        %v6355 = vadd.f32 %v1127, %v6354
        %v6356 = vpop.f32.mrb[0].mxu0
        %v6357 = vpop.f32.mrb[0].mxu0
        %v6358 = vadd.f32 %v1128, %v6357
        %v6359 = vpop.f32.mrb[0].mxu0
        %6360 = vmatprep.mubr.bf16.mxu0 0
        %6361 = vmatmul.mubr.bf16.gmra.mrb[0].mxu0 %v6246
        %v6362 = vpop.f32.mrb[0].mxu0
        %v6363 = vadd.f32 %v1129, %v6362
        %v6364 = vpop.f32.mrb[0].mxu0
        %v6365 = vpop.f32.mrb[0].mxu0
        %v6366 = vadd.f32 %v1130, %v6365
        %v6367 = vpop.f32.mrb[0].mxu0
        %6368 = vdwg.mxu0
        %6369 = vmax.xlane.f32.xlu0 %v6307
        %v6370 = vpop.xlane.xlu0 %6369
        %6371 = vmax.xlane.f32.xlu0 %v6310
        %v6372 = vpop.xlane.xlu0 %6371
        %6373 = vmax.xlane.f32.xlu0 %v6315
        %v6374 = vpop.xlane.xlu0 %6373
        %6375 = vmax.xlane.f32.xlu0 %v6318
        %v6376 = vpop.xlane.xlu0 %6375
        %6377 = vmax.xlane.f32.xlu0 %v6323
        %v6378 = vpop.xlane.xlu0 %6377
        %6379 = vmax.xlane.f32.xlu0 %v6326
        %v6380 = vpop.xlane.xlu0 %6379
        %6381 = vmax.xlane.f32.xlu0 %v6331
        %v6382 = vpop.xlane.xlu0 %6381
        %6383 = vmax.xlane.f32.xlu0 %v6334
        %v6384 = vpop.xlane.xlu0 %6383
        %6385 = vmax.xlane.f32.xlu0 %v6339
        %v6386 = vpop.xlane.xlu0 %6385
        %6387 = vmax.xlane.f32.xlu0 %v6342
        %v6388 = vpop.xlane.xlu0 %6387
        %6389 = vmax.xlane.f32.xlu0 %v6347
        %v6390 = vpop.xlane.xlu0 %6389
        %6391 = vmax.xlane.f32.xlu0 %v6350
        %v6392 = vpop.xlane.xlu0 %6391
        %6393 = vmax.xlane.f32.xlu0 %v6355
        %v6394 = vpop.xlane.xlu0 %6393
        %6395 = vmax.xlane.f32.xlu0 %v6358
        %v6396 = vpop.xlane.xlu0 %6395
        %6397 = vmax.xlane.f32.xlu0 %v6363
        %v6398 = vpop.xlane.xlu0 %6397
        %6399 = vmax.xlane.f32.xlu0 %v6366
        %v6400 = vpop.xlane.xlu0 %6399
        %v6401 = vsub.f32 %v6307, %v6370
        %v6402 = vsub.f32 %v6310, %v6372
        %v6403 = vsub.f32 %v6315, %v6374
        %v6404 = vsub.f32 %v6318, %v6376
        %v6405 = vsub.f32 %v6323, %v6378
        %v6406 = vsub.f32 %v6326, %v6380
        %v6407 = vsub.f32 %v6331, %v6382
        %v6408 = vsub.f32 %v6334, %v6384
        %v6409 = vsub.f32 %v6339, %v6386
        %v6410 = vsub.f32 %v6342, %v6388
        %v6411 = vsub.f32 %v6347, %v6390
        %v6412 = vsub.f32 %v6350, %v6392
        %v6413 = vsub.f32 %v6355, %v6394
        %v6414 = vsub.f32 %v6358, %v6396
        %v6415 = vsub.f32 %v6363, %v6398
        %v6416 = vsub.f32 %v6366, %v6400
        %v6417 = vmul.f32 %v6401, 1.442695
        %v6418 = vpow.pop %v6417
        %v6419 = vmul.f32 %v6402, 1.442695
        %v6420 = vpow.pop %v6419
        %v6421 = vmul.f32 %v6403, 1.442695
        %v6422 = vpow.pop %v6421
        %v6423 = vmul.f32 %v6404, 1.442695
        %v6424 = vpow.pop %v6423
        %v6425 = vmul.f32 %v6405, 1.442695
        %v6426 = vpow.pop %v6425
        %v6427 = vmul.f32 %v6406, 1.442695
        %v6428 = vpow.pop %v6427
        %v6429 = vmul.f32 %v6407, 1.442695
        %v6430 = vpow.pop %v6429
        %v6431 = vmul.f32 %v6408, 1.442695
        %v6432 = vpow.pop %v6431
        %v6433 = vmul.f32 %v6409, 1.442695
        %v6434 = vpow.pop %v6433
        %v6435 = vmul.f32 %v6410, 1.442695
        %v6436 = vpow.pop %v6435
        %v6437 = vmul.f32 %v6411, 1.442695
        %v6438 = vpow.pop %v6437
        %v6439 = vmul.f32 %v6412, 1.442695
        %v6440 = vpow.pop %v6439
        %v6441 = vmul.f32 %v6413, 1.442695
        %v6442 = vpow.pop %v6441
        %v6443 = vmul.f32 %v6414, 1.442695
        %v6444 = vpow.pop %v6443
        %v6445 = vmul.f32 %v6415, 1.442695
        %v6446 = vpow.pop %v6445
        %v6447 = vmul.f32 %v6416, 1.442695
        %v6448 = vpow.pop %v6447
        %6449 = vadd.xlane.f32.xlu0 %v6418
        %v6450 = vpop.xlane.xlu0 %6449
        %6451 = vadd.xlane.f32.xlu0 %v6420
        %v6452 = vpop.xlane.xlu0 %6451
        %6453 = vadd.xlane.f32.xlu0 %v6422
        %v6454 = vpop.xlane.xlu0 %6453
        %6455 = vadd.xlane.f32.xlu0 %v6424
        %v6456 = vpop.xlane.xlu0 %6455
        %6457 = vadd.xlane.f32.xlu0 %v6426
        %v6458 = vpop.xlane.xlu0 %6457
        %6459 = vadd.xlane.f32.xlu0 %v6428
        %v6460 = vpop.xlane.xlu0 %6459
        %6461 = vadd.xlane.f32.xlu0 %v6430
        %v6462 = vpop.xlane.xlu0 %6461
        %6463 = vadd.xlane.f32.xlu0 %v6432
        %v6464 = vpop.xlane.xlu0 %6463
        %6465 = vadd.xlane.f32.xlu0 %v6434
        %v6466 = vpop.xlane.xlu0 %6465
        %6467 = vadd.xlane.f32.xlu0 %v6436
        %v6468 = vpop.xlane.xlu0 %6467
        %6469 = vadd.xlane.f32.xlu0 %v6438
        %v6470 = vpop.xlane.xlu0 %6469
        %6471 = vadd.xlane.f32.xlu0 %v6440
        %v6472 = vpop.xlane.xlu0 %6471
        %6473 = vadd.xlane.f32.xlu0 %v6442
        %v6474 = vpop.xlane.xlu0 %6473
        %6475 = vadd.xlane.f32.xlu0 %v6444
        %v6476 = vpop.xlane.xlu0 %6475
        %6477 = vadd.xlane.f32.xlu0 %v6446
        %v6478 = vpop.xlane.xlu0 %6477
        %6479 = vadd.xlane.f32.xlu0 %v6448
        %v6480 = vpop.xlane.xlu0 %6479
        %v6481 = vrcp.pop %v6450
        %v6482 = vrcp.pop %v6452
        %v6483 = vrcp.pop %v6454
        %v6484 = vrcp.pop %v6456
        %v6485 = vrcp.pop %v6458
        %v6486 = vrcp.pop %v6460
        %v6487 = vrcp.pop %v6462
        %v6488 = vrcp.pop %v6464
        %v6489 = vrcp.pop %v6466
        %v6490 = vrcp.pop %v6468
        %v6491 = vrcp.pop %v6470
        %v6492 = vrcp.pop %v6472
        %v6493 = vrcp.pop %v6474
        %v6494 = vrcp.pop %v6476
        %v6495 = vrcp.pop %v6478
        %v6496 = vrcp.pop %v6480
        %v6497 = vmul.f32 %v6418, %v6481
        %v6498 = vmul.f32 %v6420, %v6482
        %v6499 = vmul.f32 %v6422, %v6483
        %v6500 = vmul.f32 %v6424, %v6484
        %v6501 = vmul.f32 %v6426, %v6485
        %v6502 = vmul.f32 %v6428, %v6486
        %v6503 = vmul.f32 %v6430, %v6487
        %v6504 = vmul.f32 %v6432, %v6488
        %v6505 = vmul.f32 %v6434, %v6489
        %v6506 = vmul.f32 %v6436, %v6490
        %v6507 = vmul.f32 %v6438, %v6491
        %v6508 = vmul.f32 %v6440, %v6492
        %v6509 = vmul.f32 %v6442, %v6493
        %v6510 = vmul.f32 %v6444, %v6494
        %v6511 = vmul.f32 %v6446, %v6495
        %v6512 = vmul.f32 %v6448, %v6496
        %v6513 = vpack.c.bf16 %v6498, %v6497
        %v6514 = vpack.c.bf16 %v6500, %v6499
        %v6515 = vpack.c.bf16 %v6502, %v6501
        %v6516 = vpack.c.bf16 %v6504, %v6503
        %v6517 = vpack.c.bf16 %v6506, %v6505
        %v6518 = vpack.c.bf16 %v6508, %v6507
        %v6519 = vpack.c.bf16 %v6510, %v6509
        %v6520 = vpack.c.bf16 %v6512, %v6511
        %6521 = vrot.lane.b32.xlu0 %v5308, 96
        %v6522 = vpop.permute.xlu0 %6521
        %6523 = vrot.lane.b32.xlu0 %v5309, 96
        %v6524 = vpop.permute.xlu0 %6523
        %6525 = vrot.lane.b32.xlu0 %v5310, 96
        %v6526 = vpop.permute.xlu0 %6525
        %6527 = vrot.lane.b32.xlu0 %v5311, 96
        %v6528 = vpop.permute.xlu0 %6527
        %6529 = vrot.lane.b32.xlu0 %v5312, 96
        %v6530 = vpop.permute.xlu0 %6529
        %6531 = vrot.lane.b32.xlu0 %v5313, 96
        %v6532 = vpop.permute.xlu0 %6531
        %6533 = vrot.lane.b32.xlu0 %v5314, 96
        %v6534 = vpop.permute.xlu0 %6533
        %6535 = vrot.lane.b32.xlu0 %v5315, 96
        %v6536 = vpop.permute.xlu0 %6535
        %6545 = vmatprep.subr.bf16.mxu0 0
        %6546 = vmatpush1.bf16.msra.mxu0 %v6522
        %6547 = vmatprep.subr.bf16.mxu0 0
        %6548 = vmatpush1.bf16.msra.mxu0 %v6524
        %6549 = vmatprep.subr.bf16.mxu0 0
        %6550 = vmatpush1.bf16.msra.mxu0 %v6526
        %6551 = vmatprep.subr.bf16.mxu0 0
        %6552 = vmatpush1.bf16.msra.mxu0 %v6528
        %6553 = vmatprep.subr.bf16.mxu0 0
        %6554 = vmatpush1.bf16.msra.mxu0 %v6530
        %6555 = vmatprep.subr.bf16.mxu0 0
        %6556 = vmatpush1.bf16.msra.mxu0 %v6532
        %6557 = vmatprep.subr.bf16.mxu0 0
        %6558 = vmatpush1.bf16.msra.mxu0 %v6534
        %6559 = vmatprep.subr.bf16.mxu0 0
        %6560 = vmatpush1.bf16.msra.mxu0 %v6536
        %6561 = vmatprep.subr.bf16.mxu0 0
        %6562 = vmatpush1.bf16.msra.mxu0 0
        %6563 = vmatprep.subr.bf16.mxu0 0
        %6564 = vmatpush1.bf16.msra.mxu0 0
        %6565 = vmatprep.subr.bf16.mxu0 0
        %6566 = vmatpush1.bf16.msra.mxu0 0
        %6567 = vmatprep.subr.bf16.mxu0 0
        %6568 = vmatpush1.bf16.msra.mxu0 0
        %6569 = vmatprep.subr.bf16.mxu0 0
        %6570 = vmatpush1.bf16.msra.mxu0 0
        %6571 = vmatprep.subr.bf16.mxu0 0
        %6572 = vmatpush1.bf16.msra.mxu0 0
        %6573 = vmatprep.subr.bf16.mxu0 0
        %6574 = vmatpush1.bf16.msra.mxu0 0
        %6575 = vmatprep.subr.bf16.mxu0 0
        %6576 = vmatpush1.bf16.msra.mxu0 0
        %6577 = vmatprep.mubr.bf16.mxu0 0
        %6578 = vmatmul.mubr.bf16.gmra.mrb[0].mxu0 %v6513
        %v6579 = vpop.f32.mrb[0].mxu0
        %v6580 = vadd.f32 0.0, %v6579
        %v6581 = vpop.f32.mrb[0].mxu0
        %v6582 = vpop.f32.mrb[0].mxu0
        %v6583 = vadd.f32 0.0, %v6582
        %v6584 = vpop.f32.mrb[0].mxu0
        %6585 = vmatprep.mubr.bf16.mxu0 0
        %6586 = vmatmul.mubr.bf16.gmra.mrb[0].mxu0 %v6514
        %v6587 = vpop.f32.mrb[0].mxu0
        %v6588 = vadd.f32 0.0, %v6587
        %v6589 = vpop.f32.mrb[0].mxu0
        %v6590 = vpop.f32.mrb[0].mxu0
        %v6591 = vadd.f32 0.0, %v6590
        %v6592 = vpop.f32.mrb[0].mxu0
        %6593 = vmatprep.mubr.bf16.mxu0 0
        %6594 = vmatmul.mubr.bf16.gmra.mrb[0].mxu0 %v6515
        %v6595 = vpop.f32.mrb[0].mxu0
        %v6596 = vadd.f32 0.0, %v6595
        %v6597 = vpop.f32.mrb[0].mxu0
        %v6598 = vpop.f32.mrb[0].mxu0
        %v6599 = vadd.f32 0.0, %v6598
        %v6600 = vpop.f32.mrb[0].mxu0
        %6601 = vmatprep.mubr.bf16.mxu0 0
        %6602 = vmatmul.mubr.bf16.gmra.mrb[0].mxu0 %v6516
        %v6603 = vpop.f32.mrb[0].mxu0
        %v6604 = vadd.f32 0.0, %v6603
        %v6605 = vpop.f32.mrb[0].mxu0
        %v6606 = vpop.f32.mrb[0].mxu0
        %v6607 = vadd.f32 0.0, %v6606
        %v6608 = vpop.f32.mrb[0].mxu0
        %6609 = vmatprep.mubr.bf16.mxu0 0
        %6610 = vmatmul.mubr.bf16.gmra.mrb[0].mxu0 %v6517
        %v6611 = vpop.f32.mrb[0].mxu0
        %v6612 = vadd.f32 0.0, %v6611
        %v6613 = vpop.f32.mrb[0].mxu0
        %v6614 = vpop.f32.mrb[0].mxu0
        %v6615 = vadd.f32 0.0, %v6614
        %v6616 = vpop.f32.mrb[0].mxu0
        %6617 = vmatprep.mubr.bf16.mxu0 0
        %6618 = vmatmul.mubr.bf16.gmra.mrb[0].mxu0 %v6518
        %v6619 = vpop.f32.mrb[0].mxu0
        %v6620 = vadd.f32 0.0, %v6619
        %v6621 = vpop.f32.mrb[0].mxu0
        %v6622 = vpop.f32.mrb[0].mxu0
        %v6623 = vadd.f32 0.0, %v6622
        %v6624 = vpop.f32.mrb[0].mxu0
        %6625 = vmatprep.mubr.bf16.mxu0 0
        %6626 = vmatmul.mubr.bf16.gmra.mrb[0].mxu0 %v6519
        %v6627 = vpop.f32.mrb[0].mxu0
        %v6628 = vadd.f32 0.0, %v6627
        %v6629 = vpop.f32.mrb[0].mxu0
        %v6630 = vpop.f32.mrb[0].mxu0
        %v6631 = vadd.f32 0.0, %v6630
        %v6632 = vpop.f32.mrb[0].mxu0
        %6633 = vmatprep.mubr.bf16.mxu0 0
        %6634 = vmatmul.mubr.bf16.gmra.mrb[0].mxu0 %v6520
        %v6635 = vpop.f32.mrb[0].mxu0
        %v6636 = vadd.f32 0.0, %v6635
        %v6637 = vpop.f32.mrb[0].mxu0
        %v6638 = vpop.f32.mrb[0].mxu0
        %v6639 = vadd.f32 0.0, %v6638
        %v6640 = vpop.f32.mrb[0].mxu0
        %6641 = vdwg.mxu0
        %6642 = vrot.lane.b32.xlu0 %v5300, 80
        %v6643 = vpop.permute.xlu0 %6642
        %6644 = vrot.lane.b32.xlu0 %v5301, 80
        %v6645 = vpop.permute.xlu0 %6644
        %6646 = vrot.lane.b32.xlu0 %v5302, 80
        %v6647 = vpop.permute.xlu0 %6646
        %6648 = vrot.lane.b32.xlu0 %v5303, 80
        %v6649 = vpop.permute.xlu0 %6648
        %6650 = vrot.lane.b32.xlu0 %v5304, 80
        %v6651 = vpop.permute.xlu0 %6650
        %6652 = vrot.lane.b32.xlu0 %v5305, 80
        %v6653 = vpop.permute.xlu0 %6652
        %6654 = vrot.lane.b32.xlu0 %v5306, 80
        %v6655 = vpop.permute.xlu0 %6654
        %6656 = vrot.lane.b32.xlu0 %v5307, 80
        %v6657 = vpop.permute.xlu0 %6656
        %6658 = vrot.lane.b32.xlu0 %v5300, 16
        %v6659 = vpop.permute.xlu0 %6658
        %6660 = vrot.lane.b32.xlu0 %v5301, 16
        %v6661 = vpop.permute.xlu0 %6660
        %6662 = vrot.lane.b32.xlu0 %v5302, 16
        %v6663 = vpop.permute.xlu0 %6662
        %6664 = vrot.lane.b32.xlu0 %v5303, 16
        %v6665 = vpop.permute.xlu0 %6664
        %6666 = vrot.lane.b32.xlu0 %v5304, 16
        %v6667 = vpop.permute.xlu0 %6666
        %6668 = vrot.lane.b32.xlu0 %v5305, 16
        %v6669 = vpop.permute.xlu0 %6668
        %6670 = vrot.lane.b32.xlu0 %v5306, 16
        %v6671 = vpop.permute.xlu0 %6670
        %6672 = vrot.lane.b32.xlu0 %v5307, 16
        %v6673 = vpop.permute.xlu0 %6672
        %v6675 = vsel %vm1631, %v6643, 0
        %v6678 = vsel %vm1631, %v6645, 0
        %v6681 = vsel %vm1631, %v6647, 0
        %v6684 = vsel %vm1631, %v6649, 0
        %v6687 = vsel %vm1631, %v6651, 0
        %v6690 = vsel %vm1631, %v6653, 0
        %v6693 = vsel %vm1631, %v6655, 0
        %v6696 = vsel %vm1631, %v6657, 0
        %v6699 = vsel %vm1631, %v6659, 0
        %v6702 = vsel %vm1631, %v6661, 0
        %v6705 = vsel %vm1631, %v6663, 0
        %v6708 = vsel %vm1631, %v6665, 0
        %v6711 = vsel %vm1631, %v6667, 0
        %v6714 = vsel %vm1631, %v6669, 0
        %v6717 = vsel %vm1631, %v6671, 0
        %v6720 = vsel %vm1631, %v6673, 0
        %6722 = vmatprep.subr.bf16.mxu0 0
        %6723 = vmatpush1.bf16.xpose.msra.mxu0 %v6699
        %6724 = vmatprep.subr.bf16.mxu0 0
        %6725 = vmatpush1.bf16.xpose.msra.mxu0 %v6702
        %6726 = vmatprep.subr.bf16.mxu0 0
        %6727 = vmatpush1.bf16.xpose.msra.mxu0 %v6705
        %6728 = vmatprep.subr.bf16.mxu0 0
        %6729 = vmatpush1.bf16.xpose.msra.mxu0 %v6708
        %6730 = vmatprep.subr.bf16.mxu0 0
        %6731 = vmatpush1.bf16.xpose.msra.mxu0 %v6711
        %6732 = vmatprep.subr.bf16.mxu0 0
        %6733 = vmatpush1.bf16.xpose.msra.mxu0 %v6714
        %6734 = vmatprep.subr.bf16.mxu0 0
        %6735 = vmatpush1.bf16.xpose.msra.mxu0 %v6717
        %6736 = vmatprep.subr.bf16.mxu0 0
        %6737 = vmatpush1.bf16.xpose.msra.mxu0 %v6720
        %6738 = vmatprep.subr.bf16.mxu0 0
        %6739 = vmatpush1.bf16.xpose.msra.mxu0 0
        %6740 = vmatprep.subr.bf16.mxu0 0
        %6741 = vmatpush1.bf16.xpose.msra.mxu0 0
        %6742 = vmatprep.subr.bf16.mxu0 0
        %6743 = vmatpush1.bf16.xpose.msra.mxu0 0
        %6744 = vmatprep.subr.bf16.mxu0 0
        %6745 = vmatpush1.bf16.xpose.msra.mxu0 0
        %6746 = vmatprep.subr.bf16.mxu0 0
        %6747 = vmatpush1.bf16.xpose.msra.mxu0 0
        %6748 = vmatprep.subr.bf16.mxu0 0
        %6749 = vmatpush1.bf16.xpose.msra.mxu0 0
        %6750 = vmatprep.subr.bf16.mxu0 0
        %6751 = vmatpush1.bf16.xpose.msra.mxu0 0
        %6752 = vmatprep.subr.bf16.mxu0 0
        %6753 = vmatpush1.bf16.xpose.msra.mxu0 0
        %6754 = vmatprep.mubr.bf16.mxu0 0
        %6755 = vmatmul.mubr.bf16.gmra.mrb[0].mxu0 %v6675
        %v6756 = vpop.f32.mrb[0].mxu0
        %v6757 = vadd.f32 %v1115, %v6756
        %v6758 = vpop.f32.mrb[0].mxu0
        %v6759 = vpop.f32.mrb[0].mxu0
        %v6760 = vadd.f32 %v1116, %v6759
        %v6761 = vpop.f32.mrb[0].mxu0
        %6762 = vmatprep.mubr.bf16.mxu0 0
        %6763 = vmatmul.mubr.bf16.gmra.mrb[0].mxu0 %v6678
        %v6764 = vpop.f32.mrb[0].mxu0
        %v6765 = vadd.f32 %v1117, %v6764
        %v6766 = vpop.f32.mrb[0].mxu0
        %v6767 = vpop.f32.mrb[0].mxu0
        %v6768 = vadd.f32 %v1118, %v6767
        %v6769 = vpop.f32.mrb[0].mxu0
        %6770 = vmatprep.mubr.bf16.mxu0 0
        %6771 = vmatmul.mubr.bf16.gmra.mrb[0].mxu0 %v6681
        %v6772 = vpop.f32.mrb[0].mxu0
        %v6773 = vadd.f32 %v1119, %v6772
        %v6774 = vpop.f32.mrb[0].mxu0
        %v6775 = vpop.f32.mrb[0].mxu0
        %v6776 = vadd.f32 %v1120, %v6775
        %v6777 = vpop.f32.mrb[0].mxu0
        %6778 = vmatprep.mubr.bf16.mxu0 0
        %6779 = vmatmul.mubr.bf16.gmra.mrb[0].mxu0 %v6684
        %v6780 = vpop.f32.mrb[0].mxu0
        %v6781 = vadd.f32 %v1121, %v6780
        %v6782 = vpop.f32.mrb[0].mxu0
        %v6783 = vpop.f32.mrb[0].mxu0
        %v6784 = vadd.f32 %v1122, %v6783
        %v6785 = vpop.f32.mrb[0].mxu0
        %6786 = vmatprep.mubr.bf16.mxu0 0
        %6787 = vmatmul.mubr.bf16.gmra.mrb[0].mxu0 %v6687
        %v6788 = vpop.f32.mrb[0].mxu0
        %v6789 = vadd.f32 %v1123, %v6788
        %v6790 = vpop.f32.mrb[0].mxu0
        %v6791 = vpop.f32.mrb[0].mxu0
        %v6792 = vadd.f32 %v1124, %v6791
        %v6793 = vpop.f32.mrb[0].mxu0
        %6794 = vmatprep.mubr.bf16.mxu0 0
        %6795 = vmatmul.mubr.bf16.gmra.mrb[0].mxu0 %v6690
        %v6796 = vpop.f32.mrb[0].mxu0
        %v6797 = vadd.f32 %v1125, %v6796
        %v6798 = vpop.f32.mrb[0].mxu0
        %v6799 = vpop.f32.mrb[0].mxu0
        %v6800 = vadd.f32 %v1126, %v6799
        %v6801 = vpop.f32.mrb[0].mxu0
        %6802 = vmatprep.mubr.bf16.mxu0 0
        %6803 = vmatmul.mubr.bf16.gmra.mrb[0].mxu0 %v6693
        %v6804 = vpop.f32.mrb[0].mxu0
        %v6805 = vadd.f32 %v1127, %v6804
        %v6806 = vpop.f32.mrb[0].mxu0
        %v6807 = vpop.f32.mrb[0].mxu0
        %v6808 = vadd.f32 %v1128, %v6807
        %v6809 = vpop.f32.mrb[0].mxu0
        %6810 = vmatprep.mubr.bf16.mxu0 0
        %6811 = vmatmul.mubr.bf16.gmra.mrb[0].mxu0 %v6696
        %v6812 = vpop.f32.mrb[0].mxu0
        %v6813 = vadd.f32 %v1129, %v6812
        %v6814 = vpop.f32.mrb[0].mxu0
        %v6815 = vpop.f32.mrb[0].mxu0
        %v6816 = vadd.f32 %v1130, %v6815
        %v6817 = vpop.f32.mrb[0].mxu0
        %6818 = vdwg.mxu0
        %6819 = vmax.xlane.f32.xlu0 %v6757
        %v6820 = vpop.xlane.xlu0 %6819
        %6821 = vmax.xlane.f32.xlu0 %v6760
        %v6822 = vpop.xlane.xlu0 %6821
        %6823 = vmax.xlane.f32.xlu0 %v6765
        %v6824 = vpop.xlane.xlu0 %6823
        %6825 = vmax.xlane.f32.xlu0 %v6768
        %v6826 = vpop.xlane.xlu0 %6825
        %6827 = vmax.xlane.f32.xlu0 %v6773
        %v6828 = vpop.xlane.xlu0 %6827
        %6829 = vmax.xlane.f32.xlu0 %v6776
        %v6830 = vpop.xlane.xlu0 %6829
        %6831 = vmax.xlane.f32.xlu0 %v6781
        %v6832 = vpop.xlane.xlu0 %6831
        %6833 = vmax.xlane.f32.xlu0 %v6784
        %v6834 = vpop.xlane.xlu0 %6833
        %6835 = vmax.xlane.f32.xlu0 %v6789
        %v6836 = vpop.xlane.xlu0 %6835
        %6837 = vmax.xlane.f32.xlu0 %v6792
        %v6838 = vpop.xlane.xlu0 %6837
        %6839 = vmax.xlane.f32.xlu0 %v6797
        %v6840 = vpop.xlane.xlu0 %6839
        %6841 = vmax.xlane.f32.xlu0 %v6800
        %v6842 = vpop.xlane.xlu0 %6841
        %6843 = vmax.xlane.f32.xlu0 %v6805
        %v6844 = vpop.xlane.xlu0 %6843
        %6845 = vmax.xlane.f32.xlu0 %v6808
        %v6846 = vpop.xlane.xlu0 %6845
        %6847 = vmax.xlane.f32.xlu0 %v6813
        %v6848 = vpop.xlane.xlu0 %6847
        %6849 = vmax.xlane.f32.xlu0 %v6816
        %v6850 = vpop.xlane.xlu0 %6849
        %v6851 = vsub.f32 %v6757, %v6820
        %v6852 = vsub.f32 %v6760, %v6822
        %v6853 = vsub.f32 %v6765, %v6824
        %v6854 = vsub.f32 %v6768, %v6826
        %v6855 = vsub.f32 %v6773, %v6828
        %v6856 = vsub.f32 %v6776, %v6830
        %v6857 = vsub.f32 %v6781, %v6832
        %v6858 = vsub.f32 %v6784, %v6834
        %v6859 = vsub.f32 %v6789, %v6836
        %v6860 = vsub.f32 %v6792, %v6838
        %v6861 = vsub.f32 %v6797, %v6840
        %v6862 = vsub.f32 %v6800, %v6842
        %v6863 = vsub.f32 %v6805, %v6844
        %v6864 = vsub.f32 %v6808, %v6846
        %v6865 = vsub.f32 %v6813, %v6848
        %v6866 = vsub.f32 %v6816, %v6850
        %v6867 = vmul.f32 %v6851, 1.442695
        %v6868 = vpow.pop %v6867
        %v6869 = vmul.f32 %v6852, 1.442695
        %v6870 = vpow.pop %v6869
        %v6871 = vmul.f32 %v6853, 1.442695
        %v6872 = vpow.pop %v6871
        %v6873 = vmul.f32 %v6854, 1.442695
        %v6874 = vpow.pop %v6873
        %v6875 = vmul.f32 %v6855, 1.442695
        %v6876 = vpow.pop %v6875
        %v6877 = vmul.f32 %v6856, 1.442695
        %v6878 = vpow.pop %v6877
        %v6879 = vmul.f32 %v6857, 1.442695
        %v6880 = vpow.pop %v6879
        %v6881 = vmul.f32 %v6858, 1.442695
        %v6882 = vpow.pop %v6881
        %v6883 = vmul.f32 %v6859, 1.442695
        %v6884 = vpow.pop %v6883
        %v6885 = vmul.f32 %v6860, 1.442695
        %v6886 = vpow.pop %v6885
        %v6887 = vmul.f32 %v6861, 1.442695
        %v6888 = vpow.pop %v6887
        %v6889 = vmul.f32 %v6862, 1.442695
        %v6890 = vpow.pop %v6889
        %v6891 = vmul.f32 %v6863, 1.442695
        %v6892 = vpow.pop %v6891
        %v6893 = vmul.f32 %v6864, 1.442695
        %v6894 = vpow.pop %v6893
        %v6895 = vmul.f32 %v6865, 1.442695
        %v6896 = vpow.pop %v6895
        %v6897 = vmul.f32 %v6866, 1.442695
        %v6898 = vpow.pop %v6897
        %6899 = vadd.xlane.f32.xlu0 %v6868
        %v6900 = vpop.xlane.xlu0 %6899
        %6901 = vadd.xlane.f32.xlu0 %v6870
        %v6902 = vpop.xlane.xlu0 %6901
        %6903 = vadd.xlane.f32.xlu0 %v6872
        %v6904 = vpop.xlane.xlu0 %6903
        %6905 = vadd.xlane.f32.xlu0 %v6874
        %v6906 = vpop.xlane.xlu0 %6905
        %6907 = vadd.xlane.f32.xlu0 %v6876
        %v6908 = vpop.xlane.xlu0 %6907
        %6909 = vadd.xlane.f32.xlu0 %v6878
        %v6910 = vpop.xlane.xlu0 %6909
        %6911 = vadd.xlane.f32.xlu0 %v6880
        %v6912 = vpop.xlane.xlu0 %6911
        %6913 = vadd.xlane.f32.xlu0 %v6882
        %v6914 = vpop.xlane.xlu0 %6913
        %6915 = vadd.xlane.f32.xlu0 %v6884
        %v6916 = vpop.xlane.xlu0 %6915
        %6917 = vadd.xlane.f32.xlu0 %v6886
        %v6918 = vpop.xlane.xlu0 %6917
        %6919 = vadd.xlane.f32.xlu0 %v6888
        %v6920 = vpop.xlane.xlu0 %6919
        %6921 = vadd.xlane.f32.xlu0 %v6890
        %v6922 = vpop.xlane.xlu0 %6921
        %6923 = vadd.xlane.f32.xlu0 %v6892
        %v6924 = vpop.xlane.xlu0 %6923
        %6925 = vadd.xlane.f32.xlu0 %v6894
        %v6926 = vpop.xlane.xlu0 %6925
        %6927 = vadd.xlane.f32.xlu0 %v6896
        %v6928 = vpop.xlane.xlu0 %6927
        %6929 = vadd.xlane.f32.xlu0 %v6898
        %v6930 = vpop.xlane.xlu0 %6929
        %v6931 = vrcp.pop %v6900
        %v6932 = vrcp.pop %v6902
        %v6933 = vrcp.pop %v6904
        %v6934 = vrcp.pop %v6906
        %v6935 = vrcp.pop %v6908
        %v6936 = vrcp.pop %v6910
        %v6937 = vrcp.pop %v6912
        %v6938 = vrcp.pop %v6914
        %v6939 = vrcp.pop %v6916
        %v6940 = vrcp.pop %v6918
        %v6941 = vrcp.pop %v6920
        %v6942 = vrcp.pop %v6922
        %v6943 = vrcp.pop %v6924
        %v6944 = vrcp.pop %v6926
        %v6945 = vrcp.pop %v6928
        %v6946 = vrcp.pop %v6930
        %v6947 = vmul.f32 %v6868, %v6931
        %v6948 = vmul.f32 %v6870, %v6932
        %v6949 = vmul.f32 %v6872, %v6933
        %v6950 = vmul.f32 %v6874, %v6934
        %v6951 = vmul.f32 %v6876, %v6935
        %v6952 = vmul.f32 %v6878, %v6936
        %v6953 = vmul.f32 %v6880, %v6937
        %v6954 = vmul.f32 %v6882, %v6938
        %v6955 = vmul.f32 %v6884, %v6939
        %v6956 = vmul.f32 %v6886, %v6940
        %v6957 = vmul.f32 %v6888, %v6941
        %v6958 = vmul.f32 %v6890, %v6942
        %v6959 = vmul.f32 %v6892, %v6943
        %v6960 = vmul.f32 %v6894, %v6944
        %v6961 = vmul.f32 %v6896, %v6945
        %v6962 = vmul.f32 %v6898, %v6946
        %v6963 = vpack.c.bf16 %v6948, %v6947
        %v6964 = vpack.c.bf16 %v6950, %v6949
        %v6965 = vpack.c.bf16 %v6952, %v6951
        %v6966 = vpack.c.bf16 %v6954, %v6953
        %v6967 = vpack.c.bf16 %v6956, %v6955
        %v6968 = vpack.c.bf16 %v6958, %v6957
        %v6969 = vpack.c.bf16 %v6960, %v6959
        %v6970 = vpack.c.bf16 %v6962, %v6961
        %6971 = vrot.lane.b32.xlu0 %v5308, 80
        %v6972 = vpop.permute.xlu0 %6971
        %6973 = vrot.lane.b32.xlu0 %v5309, 80
        %v6974 = vpop.permute.xlu0 %6973
        %6975 = vrot.lane.b32.xlu0 %v5310, 80
        %v6976 = vpop.permute.xlu0 %6975
        %6977 = vrot.lane.b32.xlu0 %v5311, 80
        %v6978 = vpop.permute.xlu0 %6977
        %6979 = vrot.lane.b32.xlu0 %v5312, 80
        %v6980 = vpop.permute.xlu0 %6979
        %6981 = vrot.lane.b32.xlu0 %v5313, 80
        %v6982 = vpop.permute.xlu0 %6981
        %6983 = vrot.lane.b32.xlu0 %v5314, 80
        %v6984 = vpop.permute.xlu0 %6983
        %6985 = vrot.lane.b32.xlu0 %v5315, 80
        %v6986 = vpop.permute.xlu0 %6985
        %6995 = vmatprep.subr.bf16.mxu0 0
        %6996 = vmatpush1.bf16.msra.mxu0 %v6972
        %6997 = vmatprep.subr.bf16.mxu0 0
        %6998 = vmatpush1.bf16.msra.mxu0 %v6974
        %6999 = vmatprep.subr.bf16.mxu0 0
        %7000 = vmatpush1.bf16.msra.mxu0 %v6976
        %7001 = vmatprep.subr.bf16.mxu0 0
        %7002 = vmatpush1.bf16.msra.mxu0 %v6978
        %7003 = vmatprep.subr.bf16.mxu0 0
        %7004 = vmatpush1.bf16.msra.mxu0 %v6980
        %7005 = vmatprep.subr.bf16.mxu0 0
        %7006 = vmatpush1.bf16.msra.mxu0 %v6982
        %7007 = vmatprep.subr.bf16.mxu0 0
        %7008 = vmatpush1.bf16.msra.mxu0 %v6984
        %7009 = vmatprep.subr.bf16.mxu0 0
        %7010 = vmatpush1.bf16.msra.mxu0 %v6986
        %7011 = vmatprep.subr.bf16.mxu0 0
        %7012 = vmatpush1.bf16.msra.mxu0 0
        %7013 = vmatprep.subr.bf16.mxu0 0
        %7014 = vmatpush1.bf16.msra.mxu0 0
        %7015 = vmatprep.subr.bf16.mxu0 0
        %7016 = vmatpush1.bf16.msra.mxu0 0
        %7017 = vmatprep.subr.bf16.mxu0 0
        %7018 = vmatpush1.bf16.msra.mxu0 0
        %7019 = vmatprep.subr.bf16.mxu0 0
        %7020 = vmatpush1.bf16.msra.mxu0 0
        %7021 = vmatprep.subr.bf16.mxu0 0
        %7022 = vmatpush1.bf16.msra.mxu0 0
        %7023 = vmatprep.subr.bf16.mxu0 0
        %7024 = vmatpush1.bf16.msra.mxu0 0
        %7025 = vmatprep.subr.bf16.mxu0 0
        %7026 = vmatpush1.bf16.msra.mxu0 0
        %7027 = vmatprep.mubr.bf16.mxu0 0
        %7028 = vmatmul.mubr.bf16.gmra.mrb[0].mxu0 %v6963
        %v7029 = vpop.f32.mrb[0].mxu0
        %v7030 = vadd.f32 0.0, %v7029
        %v7031 = vpop.f32.mrb[0].mxu0
        %v7032 = vpop.f32.mrb[0].mxu0
        %v7033 = vadd.f32 0.0, %v7032
        %v7034 = vpop.f32.mrb[0].mxu0
        %7035 = vmatprep.mubr.bf16.mxu0 0
        %7036 = vmatmul.mubr.bf16.gmra.mrb[0].mxu0 %v6964
        %v7037 = vpop.f32.mrb[0].mxu0
        %v7038 = vadd.f32 0.0, %v7037
        %v7039 = vpop.f32.mrb[0].mxu0
        %v7040 = vpop.f32.mrb[0].mxu0
        %v7041 = vadd.f32 0.0, %v7040
        %v7042 = vpop.f32.mrb[0].mxu0
        %7043 = vmatprep.mubr.bf16.mxu0 0
        %7044 = vmatmul.mubr.bf16.gmra.mrb[0].mxu0 %v6965
        %v7045 = vpop.f32.mrb[0].mxu0
        %v7046 = vadd.f32 0.0, %v7045
        %v7047 = vpop.f32.mrb[0].mxu0
        %v7048 = vpop.f32.mrb[0].mxu0
        %v7049 = vadd.f32 0.0, %v7048
        %v7050 = vpop.f32.mrb[0].mxu0
        %7051 = vmatprep.mubr.bf16.mxu0 0
        %7052 = vmatmul.mubr.bf16.gmra.mrb[0].mxu0 %v6966
        %v7053 = vpop.f32.mrb[0].mxu0
        %v7054 = vadd.f32 0.0, %v7053
        %v7055 = vpop.f32.mrb[0].mxu0
        %v7056 = vpop.f32.mrb[0].mxu0
        %v7057 = vadd.f32 0.0, %v7056
        %v7058 = vpop.f32.mrb[0].mxu0
        %7059 = vmatprep.mubr.bf16.mxu0 0
        %7060 = vmatmul.mubr.bf16.gmra.mrb[0].mxu0 %v6967
        %v7061 = vpop.f32.mrb[0].mxu0
        %v7062 = vadd.f32 0.0, %v7061
        %v7063 = vpop.f32.mrb[0].mxu0
        %v7064 = vpop.f32.mrb[0].mxu0
        %v7065 = vadd.f32 0.0, %v7064
        %v7066 = vpop.f32.mrb[0].mxu0
        %7067 = vmatprep.mubr.bf16.mxu0 0
        %7068 = vmatmul.mubr.bf16.gmra.mrb[0].mxu0 %v6968
        %v7069 = vpop.f32.mrb[0].mxu0
        %v7070 = vadd.f32 0.0, %v7069
        %v7071 = vpop.f32.mrb[0].mxu0
        %v7072 = vpop.f32.mrb[0].mxu0
        %v7073 = vadd.f32 0.0, %v7072
        %v7074 = vpop.f32.mrb[0].mxu0
        %7075 = vmatprep.mubr.bf16.mxu0 0
        %7076 = vmatmul.mubr.bf16.gmra.mrb[0].mxu0 %v6969
        %v7077 = vpop.f32.mrb[0].mxu0
        %v7078 = vadd.f32 0.0, %v7077
        %v7079 = vpop.f32.mrb[0].mxu0
        %v7080 = vpop.f32.mrb[0].mxu0
        %v7081 = vadd.f32 0.0, %v7080
        %v7082 = vpop.f32.mrb[0].mxu0
        %7083 = vmatprep.mubr.bf16.mxu0 0
        %7084 = vmatmul.mubr.bf16.gmra.mrb[0].mxu0 %v6970
        %v7085 = vpop.f32.mrb[0].mxu0
        %v7086 = vadd.f32 0.0, %v7085
        %v7087 = vpop.f32.mrb[0].mxu0
        %v7088 = vpop.f32.mrb[0].mxu0
        %v7089 = vadd.f32 0.0, %v7088
        %v7090 = vpop.f32.mrb[0].mxu0
        %7091 = vdwg.mxu0
        %7108 = vrot.lane.b32.xlu0 %v6130, 16
        %v7109 = vpop.permute.xlu0 %7108
        %7110 = vrot.lane.b32.xlu0 %v6133, 16
        %v7111 = vpop.permute.xlu0 %7110
        %7112 = vrot.lane.b32.xlu0 %v6138, 16
        %v7113 = vpop.permute.xlu0 %7112
        %7114 = vrot.lane.b32.xlu0 %v6141, 16
        %v7115 = vpop.permute.xlu0 %7114
        %7116 = vrot.lane.b32.xlu0 %v6146, 16
        %v7117 = vpop.permute.xlu0 %7116
        %7118 = vrot.lane.b32.xlu0 %v6149, 16
        %v7119 = vpop.permute.xlu0 %7118
        %7120 = vrot.lane.b32.xlu0 %v6154, 16
        %v7121 = vpop.permute.xlu0 %7120
        %7122 = vrot.lane.b32.xlu0 %v6157, 16
        %v7123 = vpop.permute.xlu0 %7122
        %7124 = vrot.lane.b32.xlu0 %v6162, 16
        %v7125 = vpop.permute.xlu0 %7124
        %7126 = vrot.lane.b32.xlu0 %v6165, 16
        %v7127 = vpop.permute.xlu0 %7126
        %7128 = vrot.lane.b32.xlu0 %v6170, 16
        %v7129 = vpop.permute.xlu0 %7128
        %7130 = vrot.lane.b32.xlu0 %v6173, 16
        %v7131 = vpop.permute.xlu0 %7130
        %7132 = vrot.lane.b32.xlu0 %v6178, 16
        %v7133 = vpop.permute.xlu0 %7132
        %7134 = vrot.lane.b32.xlu0 %v6181, 16
        %v7135 = vpop.permute.xlu0 %7134
        %7136 = vrot.lane.b32.xlu0 %v6186, 16
        %v7137 = vpop.permute.xlu0 %7136
        %7138 = vrot.lane.b32.xlu0 %v6189, 16
        %v7139 = vpop.permute.xlu0 %7138
        %7172 = vrot.lane.b32.xlu0 %v6580, 32
        %v7173 = vpop.permute.xlu0 %7172
        %7174 = vrot.lane.b32.xlu0 %v6583, 32
        %v7175 = vpop.permute.xlu0 %7174
        %7176 = vrot.lane.b32.xlu0 %v6588, 32
        %v7177 = vpop.permute.xlu0 %7176
        %7178 = vrot.lane.b32.xlu0 %v6591, 32
        %v7179 = vpop.permute.xlu0 %7178
        %7180 = vrot.lane.b32.xlu0 %v6596, 32
        %v7181 = vpop.permute.xlu0 %7180
        %7182 = vrot.lane.b32.xlu0 %v6599, 32
        %v7183 = vpop.permute.xlu0 %7182
        %7184 = vrot.lane.b32.xlu0 %v6604, 32
        %v7185 = vpop.permute.xlu0 %7184
        %7186 = vrot.lane.b32.xlu0 %v6607, 32
        %v7187 = vpop.permute.xlu0 %7186
        %7188 = vrot.lane.b32.xlu0 %v6612, 32
        %v7189 = vpop.permute.xlu0 %7188
        %7190 = vrot.lane.b32.xlu0 %v6615, 32
        %v7191 = vpop.permute.xlu0 %7190
        %7192 = vrot.lane.b32.xlu0 %v6620, 32
        %v7193 = vpop.permute.xlu0 %7192
        %7194 = vrot.lane.b32.xlu0 %v6623, 32
        %v7195 = vpop.permute.xlu0 %7194
        %7196 = vrot.lane.b32.xlu0 %v6628, 32
        %v7197 = vpop.permute.xlu0 %7196
        %7198 = vrot.lane.b32.xlu0 %v6631, 32
        %v7199 = vpop.permute.xlu0 %7198
        %7200 = vrot.lane.b32.xlu0 %v6636, 32
        %v7201 = vpop.permute.xlu0 %7200
        %7202 = vrot.lane.b32.xlu0 %v6639, 32
        %v7203 = vpop.permute.xlu0 %7202
        %7236 = vrot.lane.b32.xlu0 %v7030, 48
        %v7237 = vpop.permute.xlu0 %7236
        %7238 = vrot.lane.b32.xlu0 %v7033, 48
        %v7239 = vpop.permute.xlu0 %7238
        %7240 = vrot.lane.b32.xlu0 %v7038, 48
        %v7241 = vpop.permute.xlu0 %7240
        %7242 = vrot.lane.b32.xlu0 %v7041, 48
        %v7243 = vpop.permute.xlu0 %7242
        %7244 = vrot.lane.b32.xlu0 %v7046, 48
        %v7245 = vpop.permute.xlu0 %7244
        %7246 = vrot.lane.b32.xlu0 %v7049, 48
        %v7247 = vpop.permute.xlu0 %7246
        %7248 = vrot.lane.b32.xlu0 %v7054, 48
        %v7249 = vpop.permute.xlu0 %7248
        %7250 = vrot.lane.b32.xlu0 %v7057, 48
        %v7251 = vpop.permute.xlu0 %7250
        %7252 = vrot.lane.b32.xlu0 %v7062, 48
        %v7253 = vpop.permute.xlu0 %7252
        %7254 = vrot.lane.b32.xlu0 %v7065, 48
        %v7255 = vpop.permute.xlu0 %7254
        %7256 = vrot.lane.b32.xlu0 %v7070, 48
        %v7257 = vpop.permute.xlu0 %7256
        %7258 = vrot.lane.b32.xlu0 %v7073, 48
        %v7259 = vpop.permute.xlu0 %7258
        %7260 = vrot.lane.b32.xlu0 %v7078, 48
        %v7261 = vpop.permute.xlu0 %7260
        %7262 = vrot.lane.b32.xlu0 %v7081, 48
        %v7263 = vpop.permute.xlu0 %7262
        %7264 = vrot.lane.b32.xlu0 %v7086, 48
        %v7265 = vpop.permute.xlu0 %7264
        %7266 = vrot.lane.b32.xlu0 %v7089, 48
        %v7267 = vpop.permute.xlu0 %7266
        %v7284 = vsel %vm1631, %v5672, %v7109
        %v7285 = vsel %vm1631, %v5675, %v7111
        %v7286 = vsel %vm1631, %v5680, %v7113
        %v7287 = vsel %vm1631, %v5683, %v7115
        %v7288 = vsel %vm1631, %v5688, %v7117
        %v7289 = vsel %vm1631, %v5691, %v7119
        %v7290 = vsel %vm1631, %v5696, %v7121
        %v7291 = vsel %vm1631, %v5699, %v7123
        %v7292 = vsel %vm1631, %v5704, %v7125
        %v7293 = vsel %vm1631, %v5707, %v7127
        %v7294 = vsel %vm1631, %v5712, %v7129
        %v7295 = vsel %vm1631, %v5715, %v7131
        %v7296 = vsel %vm1631, %v5720, %v7133
        %v7297 = vsel %vm1631, %v5723, %v7135
        %v7298 = vsel %vm1631, %v5728, %v7137
        %v7299 = vsel %vm1631, %v5731, %v7139
        %v7300 = vsel %vm3592, %v7284, %v7173
        %v7301 = vsel %vm3592, %v7285, %v7175
        %v7302 = vsel %vm3592, %v7286, %v7177
        %v7303 = vsel %vm3592, %v7287, %v7179
        %v7304 = vsel %vm3592, %v7288, %v7181
        %v7305 = vsel %vm3592, %v7289, %v7183
        %v7306 = vsel %vm3592, %v7290, %v7185
        %v7307 = vsel %vm3592, %v7291, %v7187
        %v7308 = vsel %vm3592, %v7292, %v7189
        %v7309 = vsel %vm3592, %v7293, %v7191
        %v7310 = vsel %vm3592, %v7294, %v7193
        %v7311 = vsel %vm3592, %v7295, %v7195
        %v7312 = vsel %vm3592, %v7296, %v7197
        %v7313 = vsel %vm3592, %v7297, %v7199
        %v7314 = vsel %vm3592, %v7298, %v7201
        %v7315 = vsel %vm3592, %v7299, %v7203
        %v7316 = vsel %vm3609, %v7300, %v7237
        %v7317 = vsel %vm3609, %v7301, %v7239
        %v7318 = vsel %vm3609, %v7302, %v7241
        %v7319 = vsel %vm3609, %v7303, %v7243
        %v7320 = vsel %vm3609, %v7304, %v7245
        %v7321 = vsel %vm3609, %v7305, %v7247
        %v7322 = vsel %vm3609, %v7306, %v7249
        %v7323 = vsel %vm3609, %v7307, %v7251
        %v7324 = vsel %vm3609, %v7308, %v7253
        %v7325 = vsel %vm3609, %v7309, %v7255
        %v7326 = vsel %vm3609, %v7310, %v7257
        %v7327 = vsel %vm3609, %v7311, %v7259
        %v7328 = vsel %vm3609, %v7312, %v7261
        %v7329 = vsel %vm3609, %v7313, %v7263
        %v7330 = vsel %vm3609, %v7314, %v7265
        %v7331 = vsel %vm3609, %v7315, %v7267
        %v7332 = vpack.c.bf16 %v7317, %v7316
        %v7333 = vpack.c.bf16 %v7319, %v7318
        %v7334 = vpack.c.bf16 %v7321, %v7320
        %v7335 = vpack.c.bf16 %v7323, %v7322
        %v7336 = vpack.c.bf16 %v7325, %v7324
        %v7337 = vpack.c.bf16 %v7327, %v7326
        %v7338 = vpack.c.bf16 %v7329, %v7328
        %v7339 = vpack.c.bf16 %v7331, %v7330
        %s7340 = scalar_lea.vmem %s7, 32
        %v7341 = vld [vmem:[%s7340] sm:$0xf]
        %v7342 = vld [vmem:[%s7340 + $0x4] sm:$0xf]
        %v7343 = vld [vmem:[%s7340 + $0x8] sm:$0xf]
        %v7344 = vld [vmem:[%s7340 + $0xc] sm:$0xf]
        %v7345 = vld [vmem:[%s7340 + $0x10] sm:$0xf]
        %v7346 = vld [vmem:[%s7340 + $0x14] sm:$0xf]
        %v7347 = vld [vmem:[%s7340 + $0x18] sm:$0xf]
        %v7348 = vld [vmem:[%s7340 + $0x1c] sm:$0xf]
        %v7357 = vunpack.c.l.b16 %v7341
        %v7358 = vunpack.c.l.b16 %v7342
        %v7359 = vunpack.c.l.b16 %v7343
        %v7360 = vunpack.c.l.b16 %v7344
        %v7361 = vunpack.c.l.b16 %v7345
        %v7362 = vunpack.c.l.b16 %v7346
        %v7363 = vunpack.c.l.b16 %v7347
        %v7364 = vunpack.c.l.b16 %v7348
        %v7365 = vpack.c.b16 %v7358, %v7357
        %v7366 = vpack.c.b16 %v7360, %v7359
        %v7367 = vpack.c.b16 %v7362, %v7361
        %v7368 = vpack.c.b16 %v7364, %v7363
        %v7374 = vsel %vm754, %v7332, 0
        %v7377 = vsel %vm754, %v7333, 0
        %v7380 = vsel %vm754, %v7334, 0
        %v7383 = vsel %vm754, %v7335, 0
        %v7386 = vsel %vm754, %v7336, 0
        %v7389 = vsel %vm754, %v7337, 0
        %v7392 = vsel %vm754, %v7338, 0
        %v7395 = vsel %vm754, %v7339, 0
        %7397 = vmatprep.subr.bf16.mxu0 0
        %7398 = vmatpush1.bf16.msra.mxu0 %v7365
        %7399 = vmatprep.subr.bf16.mxu0 0
        %7400 = vmatpush1.bf16.msra.mxu0 %v7366
        %7401 = vmatprep.subr.bf16.mxu0 0
        %7402 = vmatpush1.bf16.msra.mxu0 %v7367
        %7403 = vmatprep.subr.bf16.mxu0 0
        %7404 = vmatpush1.bf16.msra.mxu0 %v7368
        %7405 = vmatprep.subr.bf16.mxu0 0
        %7406 = vmatpush1.bf16.msra.mxu0 0
        %7407 = vmatprep.subr.bf16.mxu0 0
        %7408 = vmatpush1.bf16.msra.mxu0 0
        %7409 = vmatprep.subr.bf16.mxu0 0
        %7410 = vmatpush1.bf16.msra.mxu0 0
        %7411 = vmatprep.subr.bf16.mxu0 0
        %7412 = vmatpush1.bf16.msra.mxu0 0
        %7413 = vmatprep.subr.bf16.mxu0 0
        %7414 = vmatpush1.bf16.msra.mxu0 0
        %7415 = vmatprep.subr.bf16.mxu0 0
        %7416 = vmatpush1.bf16.msra.mxu0 0
        %7417 = vmatprep.subr.bf16.mxu0 0
        %7418 = vmatpush1.bf16.msra.mxu0 0
        %7419 = vmatprep.subr.bf16.mxu0 0
        %7420 = vmatpush1.bf16.msra.mxu0 0
        %7421 = vmatprep.subr.bf16.mxu0 0
        %7422 = vmatpush1.bf16.msra.mxu0 0
        %7423 = vmatprep.subr.bf16.mxu0 0
        %7424 = vmatpush1.bf16.msra.mxu0 0
        %7425 = vmatprep.subr.bf16.mxu0 0
        %7426 = vmatpush1.bf16.msra.mxu0 0
        %7427 = vmatprep.subr.bf16.mxu0 0
        %7428 = vmatpush1.bf16.msra.mxu0 0
        %7429 = vmatprep.mubr.bf16.mxu0 0
        %7430 = vmatmul.mubr.bf16.gmra.mrb[0].mxu0 %v7374
        %v7431 = vpop.f32.mrb[0].mxu0
        %v7432 = vadd.f32 0.0, %v7431
        %v7433 = vpop.f32.mrb[0].mxu0
        %v7434 = vpop.f32.mrb[0].mxu0
        %v7435 = vadd.f32 0.0, %v7434
        %v7436 = vpop.f32.mrb[0].mxu0
        %7437 = vmatprep.mubr.bf16.mxu0 0
        %7438 = vmatmul.mubr.bf16.gmra.mrb[0].mxu0 %v7377
        %v7439 = vpop.f32.mrb[0].mxu0
        %v7440 = vadd.f32 0.0, %v7439
        %v7441 = vpop.f32.mrb[0].mxu0
        %v7442 = vpop.f32.mrb[0].mxu0
        %v7443 = vadd.f32 0.0, %v7442
        %v7444 = vpop.f32.mrb[0].mxu0
        %7445 = vmatprep.mubr.bf16.mxu0 0
        %7446 = vmatmul.mubr.bf16.gmra.mrb[0].mxu0 %v7380
        %v7447 = vpop.f32.mrb[0].mxu0
        %v7448 = vadd.f32 0.0, %v7447
        %v7449 = vpop.f32.mrb[0].mxu0
        %v7450 = vpop.f32.mrb[0].mxu0
        %v7451 = vadd.f32 0.0, %v7450
        %v7452 = vpop.f32.mrb[0].mxu0
        %7453 = vmatprep.mubr.bf16.mxu0 0
        %7454 = vmatmul.mubr.bf16.gmra.mrb[0].mxu0 %v7383
        %v7455 = vpop.f32.mrb[0].mxu0
        %v7456 = vadd.f32 0.0, %v7455
        %v7457 = vpop.f32.mrb[0].mxu0
        %v7458 = vpop.f32.mrb[0].mxu0
        %v7459 = vadd.f32 0.0, %v7458
        %v7460 = vpop.f32.mrb[0].mxu0
        %7461 = vmatprep.mubr.bf16.mxu0 0
        %7462 = vmatmul.mubr.bf16.gmra.mrb[0].mxu0 %v7386
        %v7463 = vpop.f32.mrb[0].mxu0
        %v7464 = vadd.f32 0.0, %v7463
        %v7465 = vpop.f32.mrb[0].mxu0
        %v7466 = vpop.f32.mrb[0].mxu0
        %v7467 = vadd.f32 0.0, %v7466
        %v7468 = vpop.f32.mrb[0].mxu0
        %7469 = vmatprep.mubr.bf16.mxu0 0
        %7470 = vmatmul.mubr.bf16.gmra.mrb[0].mxu0 %v7389
        %v7471 = vpop.f32.mrb[0].mxu0
        %v7472 = vadd.f32 0.0, %v7471
        %v7473 = vpop.f32.mrb[0].mxu0
        %v7474 = vpop.f32.mrb[0].mxu0
        %v7475 = vadd.f32 0.0, %v7474
        %v7476 = vpop.f32.mrb[0].mxu0
        %7477 = vmatprep.mubr.bf16.mxu0 0
        %7478 = vmatmul.mubr.bf16.gmra.mrb[0].mxu0 %v7392
        %v7479 = vpop.f32.mrb[0].mxu0
        %v7480 = vadd.f32 0.0, %v7479
        %v7481 = vpop.f32.mrb[0].mxu0
        %v7482 = vpop.f32.mrb[0].mxu0
        %v7483 = vadd.f32 0.0, %v7482
        %v7484 = vpop.f32.mrb[0].mxu0
        %7485 = vmatprep.mubr.bf16.mxu0 0
        %7486 = vmatmul.mubr.bf16.gmra.mrb[0].mxu0 %v7395
        %v7487 = vpop.f32.mrb[0].mxu0
        %v7488 = vadd.f32 0.0, %v7487
        %v7489 = vpop.f32.mrb[0].mxu0
        %v7490 = vpop.f32.mrb[0].mxu0
        %v7491 = vadd.f32 0.0, %v7490
        %v7492 = vpop.f32.mrb[0].mxu0
        %7493 = vdwg.mxu0
        %v7494 = vadd.f32 %v4821, %v7432
        %v7495 = vadd.f32 %v4822, %v7435
        %v7496 = vadd.f32 %v4823, %v7440
        %v7497 = vadd.f32 %v4824, %v7443
        %v7498 = vadd.f32 %v4825, %v7448
        %v7499 = vadd.f32 %v4826, %v7451
        %v7500 = vadd.f32 %v4827, %v7456
        %v7501 = vadd.f32 %v4828, %v7459
        %v7502 = vadd.f32 %v4829, %v7464
        %v7503 = vadd.f32 %v4830, %v7467
        %v7504 = vadd.f32 %v4831, %v7472
        %v7505 = vadd.f32 %v4832, %v7475
        %v7506 = vadd.f32 %v4833, %v7480
        %v7507 = vadd.f32 %v4834, %v7483
        %v7508 = vadd.f32 %v4835, %v7488
        %v7509 = vadd.f32 %v4836, %v7491
        %s7510 = scalar_lea.vmem %s8, 1
        %v7511 = vld [vmem:[%s7510] sm:$0x1]
        %v7513 = vlaneseq
        %v7514 = vshrl.u32 %v7513, 7
        %v7515 = vsub.s32 0, %v7514
        %v7516 = vrot.slane %v7511, %v7515
        %v7518 = vadd.f32 %v7494, %v7516
        %v7519 = vadd.f32 %v7495, %v7516
        %v7520 = vadd.f32 %v7496, %v7516
        %v7521 = vadd.f32 %v7497, %v7516
        %v7522 = vadd.f32 %v7498, %v7516
        %v7523 = vadd.f32 %v7499, %v7516
        %v7524 = vadd.f32 %v7500, %v7516
        %v7525 = vadd.f32 %v7501, %v7516
        %v7526 = vadd.f32 %v7502, %v7516
        %v7527 = vadd.f32 %v7503, %v7516
        %v7528 = vadd.f32 %v7504, %v7516
        %v7529 = vadd.f32 %v7505, %v7516
        %v7530 = vadd.f32 %v7506, %v7516
        %v7531 = vadd.f32 %v7507, %v7516
        %v7532 = vadd.f32 %v7508, %v7516
        %v7533 = vadd.f32 %v7509, %v7516
        %s7534 = scalar_lea.vmem %s9, 1
        %v7535 = vld [vmem:[%s7534] sm:$0x1]
        %s7536 = scalar_lea.vmem %s10, 1
        %v7537 = vld [vmem:[%s7536] sm:$0x1]
        %v7538 = vsel %vm754, %v7518, 0.0
        %7539 = vadd.xlane.f32.xlu0 %v7538
        %v7540 = vpop.xlane.xlu0 %7539
        %v7541 = vsel %vm754, %v7519, 0.0
        %7542 = vadd.xlane.f32.xlu0 %v7541
        %v7543 = vpop.xlane.xlu0 %7542
        %v7544 = vsel %vm754, %v7520, 0.0
        %7545 = vadd.xlane.f32.xlu0 %v7544
        %v7546 = vpop.xlane.xlu0 %7545
        %v7547 = vsel %vm754, %v7521, 0.0
        %7548 = vadd.xlane.f32.xlu0 %v7547
        %v7549 = vpop.xlane.xlu0 %7548
        %v7550 = vsel %vm754, %v7522, 0.0
        %7551 = vadd.xlane.f32.xlu0 %v7550
        %v7552 = vpop.xlane.xlu0 %7551
        %v7553 = vsel %vm754, %v7523, 0.0
        %7554 = vadd.xlane.f32.xlu0 %v7553
        %v7555 = vpop.xlane.xlu0 %7554
        %v7556 = vsel %vm754, %v7524, 0.0
        %7557 = vadd.xlane.f32.xlu0 %v7556
        %v7558 = vpop.xlane.xlu0 %7557
        %v7559 = vsel %vm754, %v7525, 0.0
        %7560 = vadd.xlane.f32.xlu0 %v7559
        %v7561 = vpop.xlane.xlu0 %7560
        %v7562 = vsel %vm754, %v7526, 0.0
        %7563 = vadd.xlane.f32.xlu0 %v7562
        %v7564 = vpop.xlane.xlu0 %7563
        %v7565 = vsel %vm754, %v7527, 0.0
        %7566 = vadd.xlane.f32.xlu0 %v7565
        %v7567 = vpop.xlane.xlu0 %7566
        %v7568 = vsel %vm754, %v7528, 0.0
        %7569 = vadd.xlane.f32.xlu0 %v7568
        %v7570 = vpop.xlane.xlu0 %7569
        %v7571 = vsel %vm754, %v7529, 0.0
        %7572 = vadd.xlane.f32.xlu0 %v7571
        %v7573 = vpop.xlane.xlu0 %7572
        %v7574 = vsel %vm754, %v7530, 0.0
        %7575 = vadd.xlane.f32.xlu0 %v7574
        %v7576 = vpop.xlane.xlu0 %7575
        %v7577 = vsel %vm754, %v7531, 0.0
        %7578 = vadd.xlane.f32.xlu0 %v7577
        %v7579 = vpop.xlane.xlu0 %7578
        %v7580 = vsel %vm754, %v7532, 0.0
        %7581 = vadd.xlane.f32.xlu0 %v7580
        %v7582 = vpop.xlane.xlu0 %7581
        %v7583 = vsel %vm754, %v7533, 0.0
        %7584 = vadd.xlane.f32.xlu0 %v7583
        %v7585 = vpop.xlane.xlu0 %7584
        %v7586 = vmul.f32 %v7540, %v1181
        %v7587 = vmul.f32 %v7543, %v1181
        %v7588 = vmul.f32 %v7546, %v1181
        %v7589 = vmul.f32 %v7549, %v1181
        %v7590 = vmul.f32 %v7552, %v1181
        %v7591 = vmul.f32 %v7555, %v1181
        %v7592 = vmul.f32 %v7558, %v1181
        %v7593 = vmul.f32 %v7561, %v1181
        %v7594 = vmul.f32 %v7564, %v1181
        %v7595 = vmul.f32 %v7567, %v1181
        %v7596 = vmul.f32 %v7570, %v1181
        %v7597 = vmul.f32 %v7573, %v1181
        %v7598 = vmul.f32 %v7576, %v1181
        %v7599 = vmul.f32 %v7579, %v1181
        %v7600 = vmul.f32 %v7582, %v1181
        %v7601 = vmul.f32 %v7585, %v1181
        %v7602 = vsub.f32 %v7518, %v7586
        %v7603 = vsub.f32 %v7519, %v7587
        %v7604 = vsub.f32 %v7520, %v7588
        %v7605 = vsub.f32 %v7521, %v7589
        %v7606 = vsub.f32 %v7522, %v7590
        %v7607 = vsub.f32 %v7523, %v7591
        %v7608 = vsub.f32 %v7524, %v7592
        %v7609 = vsub.f32 %v7525, %v7593
        %v7610 = vsub.f32 %v7526, %v7594
        %v7611 = vsub.f32 %v7527, %v7595
        %v7612 = vsub.f32 %v7528, %v7596
        %v7613 = vsub.f32 %v7529, %v7597
        %v7614 = vsub.f32 %v7530, %v7598
        %v7615 = vsub.f32 %v7531, %v7599
        %v7616 = vsub.f32 %v7532, %v7600
        %v7617 = vsub.f32 %v7533, %v7601
        %v7618 = vmul.f32 %v7602, %v7602
        %v7619 = vmul.f32 %v7603, %v7603
        %v7620 = vmul.f32 %v7604, %v7604
        %v7621 = vmul.f32 %v7605, %v7605
        %v7622 = vmul.f32 %v7606, %v7606
        %v7623 = vmul.f32 %v7607, %v7607
        %v7624 = vmul.f32 %v7608, %v7608
        %v7625 = vmul.f32 %v7609, %v7609
        %v7626 = vmul.f32 %v7610, %v7610
        %v7627 = vmul.f32 %v7611, %v7611
        %v7628 = vmul.f32 %v7612, %v7612
        %v7629 = vmul.f32 %v7613, %v7613
        %v7630 = vmul.f32 %v7614, %v7614
        %v7631 = vmul.f32 %v7615, %v7615
        %v7632 = vmul.f32 %v7616, %v7616
        %v7633 = vmul.f32 %v7617, %v7617
        %v7634 = vsel %vm754, %v7618, 0.0
        %7635 = vadd.xlane.f32.xlu0 %v7634
        %v7636 = vpop.xlane.xlu0 %7635
        %v7637 = vsel %vm754, %v7619, 0.0
        %7638 = vadd.xlane.f32.xlu0 %v7637
        %v7639 = vpop.xlane.xlu0 %7638
        %v7640 = vsel %vm754, %v7620, 0.0
        %7641 = vadd.xlane.f32.xlu0 %v7640
        %v7642 = vpop.xlane.xlu0 %7641
        %v7643 = vsel %vm754, %v7621, 0.0
        %7644 = vadd.xlane.f32.xlu0 %v7643
        %v7645 = vpop.xlane.xlu0 %7644
        %v7646 = vsel %vm754, %v7622, 0.0
        %7647 = vadd.xlane.f32.xlu0 %v7646
        %v7648 = vpop.xlane.xlu0 %7647
        %v7649 = vsel %vm754, %v7623, 0.0
        %7650 = vadd.xlane.f32.xlu0 %v7649
        %v7651 = vpop.xlane.xlu0 %7650
        %v7652 = vsel %vm754, %v7624, 0.0
        %7653 = vadd.xlane.f32.xlu0 %v7652
        %v7654 = vpop.xlane.xlu0 %7653
        %v7655 = vsel %vm754, %v7625, 0.0
        %7656 = vadd.xlane.f32.xlu0 %v7655
        %v7657 = vpop.xlane.xlu0 %7656
        %v7658 = vsel %vm754, %v7626, 0.0
        %7659 = vadd.xlane.f32.xlu0 %v7658
        %v7660 = vpop.xlane.xlu0 %7659
        %v7661 = vsel %vm754, %v7627, 0.0
        %7662 = vadd.xlane.f32.xlu0 %v7661
        %v7663 = vpop.xlane.xlu0 %7662
        %v7664 = vsel %vm754, %v7628, 0.0
        %7665 = vadd.xlane.f32.xlu0 %v7664
        %v7666 = vpop.xlane.xlu0 %7665
        %v7667 = vsel %vm754, %v7629, 0.0
        %7668 = vadd.xlane.f32.xlu0 %v7667
        %v7669 = vpop.xlane.xlu0 %7668
        %v7670 = vsel %vm754, %v7630, 0.0
        %7671 = vadd.xlane.f32.xlu0 %v7670
        %v7672 = vpop.xlane.xlu0 %7671
        %v7673 = vsel %vm754, %v7631, 0.0
        %7674 = vadd.xlane.f32.xlu0 %v7673
        %v7675 = vpop.xlane.xlu0 %7674
        %v7676 = vsel %vm754, %v7632, 0.0
        %7677 = vadd.xlane.f32.xlu0 %v7676
        %v7678 = vpop.xlane.xlu0 %7677
        %v7679 = vsel %vm754, %v7633, 0.0
        %7680 = vadd.xlane.f32.xlu0 %v7679
        %v7681 = vpop.xlane.xlu0 %7680
        %v7682 = vmul.f32 %v7636, %v1181
        %v7683 = vmul.f32 %v7639, %v1181
        %v7684 = vmul.f32 %v7642, %v1181
        %v7685 = vmul.f32 %v7645, %v1181
        %v7686 = vmul.f32 %v7648, %v1181
        %v7687 = vmul.f32 %v7651, %v1181
        %v7688 = vmul.f32 %v7654, %v1181
        %v7689 = vmul.f32 %v7657, %v1181
        %v7690 = vmul.f32 %v7660, %v1181
        %v7691 = vmul.f32 %v7663, %v1181
        %v7692 = vmul.f32 %v7666, %v1181
        %v7693 = vmul.f32 %v7669, %v1181
        %v7694 = vmul.f32 %v7672, %v1181
        %v7695 = vmul.f32 %v7675, %v1181
        %v7696 = vmul.f32 %v7678, %v1181
        %v7697 = vmul.f32 %v7681, %v1181
        %v7698 = vadd.f32 %v7682, 1e-06
        %v7699 = vadd.f32 %v7683, 1e-06
        %v7700 = vadd.f32 %v7684, 1e-06
        %v7701 = vadd.f32 %v7685, 1e-06
        %v7702 = vadd.f32 %v7686, 1e-06
        %v7703 = vadd.f32 %v7687, 1e-06
        %v7704 = vadd.f32 %v7688, 1e-06
        %v7705 = vadd.f32 %v7689, 1e-06
        %v7706 = vadd.f32 %v7690, 1e-06
        %v7707 = vadd.f32 %v7691, 1e-06
        %v7708 = vadd.f32 %v7692, 1e-06
        %v7709 = vadd.f32 %v7693, 1e-06
        %v7710 = vadd.f32 %v7694, 1e-06
        %v7711 = vadd.f32 %v7695, 1e-06
        %v7712 = vadd.f32 %v7696, 1e-06
        %v7713 = vadd.f32 %v7697, 1e-06
        %v7714 = vrsqrt.pop %v7698
        %v7715 = vrsqrt.pop %v7699
        %v7716 = vrsqrt.pop %v7700
        %v7717 = vrsqrt.pop %v7701
        %v7718 = vrsqrt.pop %v7702
        %v7719 = vrsqrt.pop %v7703
        %v7720 = vrsqrt.pop %v7704
        %v7721 = vrsqrt.pop %v7705
        %v7722 = vrsqrt.pop %v7706
        %v7723 = vrsqrt.pop %v7707
        %v7724 = vrsqrt.pop %v7708
        %v7725 = vrsqrt.pop %v7709
        %v7726 = vrsqrt.pop %v7710
        %v7727 = vrsqrt.pop %v7711
        %v7728 = vrsqrt.pop %v7712
        %v7729 = vrsqrt.pop %v7713
        %v7730 = vmul.f32 %v7602, %v7714
        %v7731 = vmul.f32 %v7603, %v7715
        %v7732 = vmul.f32 %v7604, %v7716
        %v7733 = vmul.f32 %v7605, %v7717
        %v7734 = vmul.f32 %v7606, %v7718
        %v7735 = vmul.f32 %v7607, %v7719
        %v7736 = vmul.f32 %v7608, %v7720
        %v7737 = vmul.f32 %v7609, %v7721
        %v7738 = vmul.f32 %v7610, %v7722
        %v7739 = vmul.f32 %v7611, %v7723
        %v7740 = vmul.f32 %v7612, %v7724
        %v7741 = vmul.f32 %v7613, %v7725
        %v7742 = vmul.f32 %v7614, %v7726
        %v7743 = vmul.f32 %v7615, %v7727
        %v7744 = vmul.f32 %v7616, %v7728
        %v7745 = vmul.f32 %v7617, %v7729
        %v7747 = vlaneseq
        %v7748 = vshrl.u32 %v7747, 7
        %v7749 = vsub.s32 0, %v7748
        %v7750 = vrot.slane %v7535, %v7749
        %v7752 = vmul.f32 %v7730, %v7750
        %v7753 = vmul.f32 %v7731, %v7750
        %v7754 = vmul.f32 %v7732, %v7750
        %v7755 = vmul.f32 %v7733, %v7750
        %v7756 = vmul.f32 %v7734, %v7750
        %v7757 = vmul.f32 %v7735, %v7750
        %v7758 = vmul.f32 %v7736, %v7750
        %v7759 = vmul.f32 %v7737, %v7750
        %v7760 = vmul.f32 %v7738, %v7750
        %v7761 = vmul.f32 %v7739, %v7750
        %v7762 = vmul.f32 %v7740, %v7750
        %v7763 = vmul.f32 %v7741, %v7750
        %v7764 = vmul.f32 %v7742, %v7750
        %v7765 = vmul.f32 %v7743, %v7750
        %v7766 = vmul.f32 %v7744, %v7750
        %v7767 = vmul.f32 %v7745, %v7750
        %v7769 = vlaneseq
        %v7770 = vshrl.u32 %v7769, 7
        %v7771 = vsub.s32 0, %v7770
        %v7772 = vrot.slane %v7537, %v7771
        %v7774 = vadd.f32 %v7752, %v7772
        %v7775 = vadd.f32 %v7753, %v7772
        %v7776 = vadd.f32 %v7754, %v7772
        %v7777 = vadd.f32 %v7755, %v7772
        %v7778 = vadd.f32 %v7756, %v7772
        %v7779 = vadd.f32 %v7757, %v7772
        %v7780 = vadd.f32 %v7758, %v7772
        %v7781 = vadd.f32 %v7759, %v7772
        %v7782 = vadd.f32 %v7760, %v7772
        %v7783 = vadd.f32 %v7761, %v7772
        %v7784 = vadd.f32 %v7762, %v7772
        %v7785 = vadd.f32 %v7763, %v7772
        %v7786 = vadd.f32 %v7764, %v7772
        %v7787 = vadd.f32 %v7765, %v7772
        %v7788 = vadd.f32 %v7766, %v7772
        %v7789 = vadd.f32 %v7767, %v7772
        %v7790 = vpack.c.bf16 %v7775, %v7774
        %v7791 = vpack.c.bf16 %v7777, %v7776
        %v7792 = vpack.c.bf16 %v7779, %v7778
        %v7793 = vpack.c.bf16 %v7781, %v7780
        %v7794 = vpack.c.bf16 %v7783, %v7782
        %v7795 = vpack.c.bf16 %v7785, %v7784
        %v7796 = vpack.c.bf16 %v7787, %v7786
        %v7797 = vpack.c.bf16 %v7789, %v7788
        %s7798 = scalar_lea.vmem %s11, 64
        %v7799 = vld [vmem:[%s7798] sm:$0xff]
        %v7800 = vld [vmem:[%s7798 + $0x8] sm:$0xff]
        %v7801 = vld [vmem:[%s7798 + $0x10] sm:$0xff]
        %v7802 = vld [vmem:[%s7798 + $0x18] sm:$0xff]
        %v7803 = vld [vmem:[%s7798 + $0x20] sm:$0xff]
        %v7804 = vld [vmem:[%s7798 + $0x28] sm:$0xff]
        %v7805 = vld [vmem:[%s7798 + $0x30] sm:$0xff]
        %v7806 = vld [vmem:[%s7798 + $0x38] sm:$0xff]
        %s7807 = scalar_lea.vmem %s12, 2
        %v7808 = vld [vmem:[%s7807] sm:$0x3]
        %v7810 = vlaneseq
        %v7811 = vshrl.u32 %v7810, 7
        %v7812 = vsub.s32 0, %v7811
        %v7813 = vrot.slane %v7808, %v7812
        %v7814 = vlaneseq
        %v7815 = vshrl.u32 %v7814, 7
        %v7816 = vsub.s32 1, %v7815
        %v7817 = vrot.slane %v7808, %v7816
        %v7828 = vunpack.c.l.b16 %v7799
        %v7829 = vunpack.c.h.b16 %v7799
        %v7830 = vunpack.c.l.b16 %v7800
        %v7831 = vunpack.c.h.b16 %v7800
        %v7832 = vunpack.c.l.b16 %v7801
        %v7833 = vunpack.c.h.b16 %v7801
        %v7834 = vunpack.c.l.b16 %v7802
        %v7835 = vunpack.c.h.b16 %v7802
        %v7836 = vunpack.c.l.b16 %v7803
        %v7837 = vunpack.c.h.b16 %v7803
        %v7838 = vunpack.c.l.b16 %v7804
        %v7839 = vunpack.c.h.b16 %v7804
        %v7840 = vunpack.c.l.b16 %v7805
        %v7841 = vunpack.c.h.b16 %v7805
        %v7842 = vunpack.c.l.b16 %v7806
        %v7843 = vunpack.c.h.b16 %v7806
        %v7844 = vpack.c.b16 %v7830, %v7828
        %v7845 = vpack.c.b16 %v7831, %v7829
        %v7846 = vpack.c.b16 %v7834, %v7832
        %v7847 = vpack.c.b16 %v7835, %v7833
        %v7848 = vpack.c.b16 %v7838, %v7836
        %v7849 = vpack.c.b16 %v7839, %v7837
        %v7850 = vpack.c.b16 %v7842, %v7840
        %v7851 = vpack.c.b16 %v7843, %v7841
        %v7861 = vsel %vm754, %v7790, 0
        %v7864 = vsel %vm754, %v7791, 0
        %v7867 = vsel %vm754, %v7792, 0
        %v7870 = vsel %vm754, %v7793, 0
        %v7873 = vsel %vm754, %v7794, 0
        %v7876 = vsel %vm754, %v7795, 0
        %v7879 = vsel %vm754, %v7796, 0
        %v7882 = vsel %vm754, %v7797, 0
        %7884 = vmatprep.subr.bf16.mxu0 %v7845
        %7885 = vmatpush1.bf16.msra.mxu0 %v7844
        %7886 = vmatprep.subr.bf16.mxu0 %v7847
        %7887 = vmatpush1.bf16.msra.mxu0 %v7846
        %7888 = vmatprep.subr.bf16.mxu0 %v7849
        %7889 = vmatpush1.bf16.msra.mxu0 %v7848
        %7890 = vmatprep.subr.bf16.mxu0 %v7851
        %7891 = vmatpush1.bf16.msra.mxu0 %v7850
        %7892 = vmatprep.subr.bf16.mxu0 0
        %7893 = vmatpush1.bf16.msra.mxu0 0
        %7894 = vmatprep.subr.bf16.mxu0 0
        %7895 = vmatpush1.bf16.msra.mxu0 0
        %7896 = vmatprep.subr.bf16.mxu0 0
        %7897 = vmatpush1.bf16.msra.mxu0 0
        %7898 = vmatprep.subr.bf16.mxu0 0
        %7899 = vmatpush1.bf16.msra.mxu0 0
        %7900 = vmatprep.subr.bf16.mxu0 0
        %7901 = vmatpush1.bf16.msra.mxu0 0
        %7902 = vmatprep.subr.bf16.mxu0 0
        %7903 = vmatpush1.bf16.msra.mxu0 0
        %7904 = vmatprep.subr.bf16.mxu0 0
        %7905 = vmatpush1.bf16.msra.mxu0 0
        %7906 = vmatprep.subr.bf16.mxu0 0
        %7907 = vmatpush1.bf16.msra.mxu0 0
        %7908 = vmatprep.subr.bf16.mxu0 0
        %7909 = vmatpush1.bf16.msra.mxu0 0
        %7910 = vmatprep.subr.bf16.mxu0 0
        %7911 = vmatpush1.bf16.msra.mxu0 0
        %7912 = vmatprep.subr.bf16.mxu0 0
        %7913 = vmatpush1.bf16.msra.mxu0 0
        %7914 = vmatprep.subr.bf16.mxu0 0
        %7915 = vmatpush1.bf16.msra.mxu0 0
        %7916 = vmatprep.mubr.bf16.mxu0 0
        %7917 = vmatmul.mubr.bf16.gmra.mrb[0].mxu0 %v7861
        %v7918 = vpop.f32.mrb[0].mxu0
        %v7919 = vadd.f32 %v7813, %v7918
        %v7920 = vpop.f32.mrb[0].mxu0
        %v7921 = vadd.f32 %v7817, %v7920
        %v7922 = vpop.f32.mrb[0].mxu0
        %v7923 = vadd.f32 %v7813, %v7922
        %v7924 = vpop.f32.mrb[0].mxu0
        %v7925 = vadd.f32 %v7817, %v7924
        %7926 = vmatprep.mubr.bf16.mxu0 0
        %7927 = vmatmul.mubr.bf16.gmra.mrb[0].mxu0 %v7864
        %v7928 = vpop.f32.mrb[0].mxu0
        %v7929 = vadd.f32 %v7813, %v7928
        %v7930 = vpop.f32.mrb[0].mxu0
        %v7931 = vadd.f32 %v7817, %v7930
        %v7932 = vpop.f32.mrb[0].mxu0
        %v7933 = vadd.f32 %v7813, %v7932
        %v7934 = vpop.f32.mrb[0].mxu0
        %v7935 = vadd.f32 %v7817, %v7934
        %7936 = vmatprep.mubr.bf16.mxu0 0
        %7937 = vmatmul.mubr.bf16.gmra.mrb[0].mxu0 %v7867
        %v7938 = vpop.f32.mrb[0].mxu0
        %v7939 = vadd.f32 %v7813, %v7938
        %v7940 = vpop.f32.mrb[0].mxu0
        %v7941 = vadd.f32 %v7817, %v7940
        %v7942 = vpop.f32.mrb[0].mxu0
        %v7943 = vadd.f32 %v7813, %v7942
        %v7944 = vpop.f32.mrb[0].mxu0
        %v7945 = vadd.f32 %v7817, %v7944
        %7946 = vmatprep.mubr.bf16.mxu0 0
        %7947 = vmatmul.mubr.bf16.gmra.mrb[0].mxu0 %v7870
        %v7948 = vpop.f32.mrb[0].mxu0
        %v7949 = vadd.f32 %v7813, %v7948
        %v7950 = vpop.f32.mrb[0].mxu0
        %v7951 = vadd.f32 %v7817, %v7950
        %v7952 = vpop.f32.mrb[0].mxu0
        %v7953 = vadd.f32 %v7813, %v7952
        %v7954 = vpop.f32.mrb[0].mxu0
        %v7955 = vadd.f32 %v7817, %v7954
        %7956 = vmatprep.mubr.bf16.mxu0 0
        %7957 = vmatmul.mubr.bf16.gmra.mrb[0].mxu0 %v7873
        %v7958 = vpop.f32.mrb[0].mxu0
        %v7959 = vadd.f32 %v7813, %v7958
        %v7960 = vpop.f32.mrb[0].mxu0
        %v7961 = vadd.f32 %v7817, %v7960
        %v7962 = vpop.f32.mrb[0].mxu0
        %v7963 = vadd.f32 %v7813, %v7962
        %v7964 = vpop.f32.mrb[0].mxu0
        %v7965 = vadd.f32 %v7817, %v7964
        %7966 = vmatprep.mubr.bf16.mxu0 0
        %7967 = vmatmul.mubr.bf16.gmra.mrb[0].mxu0 %v7876
        %v7968 = vpop.f32.mrb[0].mxu0
        %v7969 = vadd.f32 %v7813, %v7968
        %v7970 = vpop.f32.mrb[0].mxu0
        %v7971 = vadd.f32 %v7817, %v7970
        %v7972 = vpop.f32.mrb[0].mxu0
        %v7973 = vadd.f32 %v7813, %v7972
        %v7974 = vpop.f32.mrb[0].mxu0
        %v7975 = vadd.f32 %v7817, %v7974
        %7976 = vmatprep.mubr.bf16.mxu0 0
        %7977 = vmatmul.mubr.bf16.gmra.mrb[0].mxu0 %v7879
        %v7978 = vpop.f32.mrb[0].mxu0
        %v7979 = vadd.f32 %v7813, %v7978
        %v7980 = vpop.f32.mrb[0].mxu0
        %v7981 = vadd.f32 %v7817, %v7980
        %v7982 = vpop.f32.mrb[0].mxu0
        %v7983 = vadd.f32 %v7813, %v7982
        %v7984 = vpop.f32.mrb[0].mxu0
        %v7985 = vadd.f32 %v7817, %v7984
        %7986 = vmatprep.mubr.bf16.mxu0 0
        %7987 = vmatmul.mubr.bf16.gmra.mrb[0].mxu0 %v7882
        %v7988 = vpop.f32.mrb[0].mxu0
        %v7989 = vadd.f32 %v7813, %v7988
        %v7990 = vpop.f32.mrb[0].mxu0
        %v7991 = vadd.f32 %v7817, %v7990
        %v7992 = vpop.f32.mrb[0].mxu0
        %v7993 = vadd.f32 %v7813, %v7992
        %v7994 = vpop.f32.mrb[0].mxu0
        %v7995 = vadd.f32 %v7817, %v7994
        %7996 = vdwg.mxu0
        %v7997 = vmul.f32 %v7919, %v7919
        %v7998 = vmul.f32 %v7921, %v7921
        %v7999 = vmul.f32 %v7923, %v7923
        %v8000 = vmul.f32 %v7925, %v7925
        %v8001 = vmul.f32 %v7929, %v7929
        %v8002 = vmul.f32 %v7931, %v7931
        %v8003 = vmul.f32 %v7933, %v7933
        %v8004 = vmul.f32 %v7935, %v7935
        %v8005 = vmul.f32 %v7939, %v7939
        %v8006 = vmul.f32 %v7941, %v7941
        %v8007 = vmul.f32 %v7943, %v7943
        %v8008 = vmul.f32 %v7945, %v7945
        %v8009 = vmul.f32 %v7949, %v7949
        %v8010 = vmul.f32 %v7951, %v7951
        %v8011 = vmul.f32 %v7953, %v7953
        %v8012 = vmul.f32 %v7955, %v7955
        %v8013 = vmul.f32 %v7959, %v7959
        %v8014 = vmul.f32 %v7961, %v7961
        %v8015 = vmul.f32 %v7963, %v7963
        %v8016 = vmul.f32 %v7965, %v7965
        %v8017 = vmul.f32 %v7969, %v7969
        %v8018 = vmul.f32 %v7971, %v7971
        %v8019 = vmul.f32 %v7973, %v7973
        %v8020 = vmul.f32 %v7975, %v7975
        %v8021 = vmul.f32 %v7979, %v7979
        %v8022 = vmul.f32 %v7981, %v7981
        %v8023 = vmul.f32 %v7983, %v7983
        %v8024 = vmul.f32 %v7985, %v7985
        %v8025 = vmul.f32 %v7989, %v7989
        %v8026 = vmul.f32 %v7991, %v7991
        %v8027 = vmul.f32 %v7993, %v7993
        %v8028 = vmul.f32 %v7995, %v7995
        %v8029 = vmul.f32 %v7919, %v7997
        %v8030 = vmul.f32 %v7921, %v7998
        %v8031 = vmul.f32 %v7923, %v7999
        %v8032 = vmul.f32 %v7925, %v8000
        %v8033 = vmul.f32 %v7929, %v8001
        %v8034 = vmul.f32 %v7931, %v8002
        %v8035 = vmul.f32 %v7933, %v8003
        %v8036 = vmul.f32 %v7935, %v8004
        %v8037 = vmul.f32 %v7939, %v8005
        %v8038 = vmul.f32 %v7941, %v8006
        %v8039 = vmul.f32 %v7943, %v8007
        %v8040 = vmul.f32 %v7945, %v8008
        %v8041 = vmul.f32 %v7949, %v8009
        %v8042 = vmul.f32 %v7951, %v8010
        %v8043 = vmul.f32 %v7953, %v8011
        %v8044 = vmul.f32 %v7955, %v8012
        %v8045 = vmul.f32 %v7959, %v8013
        %v8046 = vmul.f32 %v7961, %v8014
        %v8047 = vmul.f32 %v7963, %v8015
        %v8048 = vmul.f32 %v7965, %v8016
        %v8049 = vmul.f32 %v7969, %v8017
        %v8050 = vmul.f32 %v7971, %v8018
        %v8051 = vmul.f32 %v7973, %v8019
        %v8052 = vmul.f32 %v7975, %v8020
        %v8053 = vmul.f32 %v7979, %v8021
        %v8054 = vmul.f32 %v7981, %v8022
        %v8055 = vmul.f32 %v7983, %v8023
        %v8056 = vmul.f32 %v7985, %v8024
        %v8057 = vmul.f32 %v7989, %v8025
        %v8058 = vmul.f32 %v7991, %v8026
        %v8059 = vmul.f32 %v7993, %v8027
        %v8060 = vmul.f32 %v7995, %v8028
        %v8061 = vmul.f32 %v8029, 0.044715
        %v8062 = vmul.f32 %v8030, 0.044715
        %v8063 = vmul.f32 %v8031, 0.044715
        %v8064 = vmul.f32 %v8032, 0.044715
        %v8065 = vmul.f32 %v8033, 0.044715
        %v8066 = vmul.f32 %v8034, 0.044715
        %v8067 = vmul.f32 %v8035, 0.044715
        %v8068 = vmul.f32 %v8036, 0.044715
        %v8069 = vmul.f32 %v8037, 0.044715
        %v8070 = vmul.f32 %v8038, 0.044715
        %v8071 = vmul.f32 %v8039, 0.044715
        %v8072 = vmul.f32 %v8040, 0.044715
        %v8073 = vmul.f32 %v8041, 0.044715
        %v8074 = vmul.f32 %v8042, 0.044715
        %v8075 = vmul.f32 %v8043, 0.044715
        %v8076 = vmul.f32 %v8044, 0.044715
        %v8077 = vmul.f32 %v8045, 0.044715
        %v8078 = vmul.f32 %v8046, 0.044715
        %v8079 = vmul.f32 %v8047, 0.044715
        %v8080 = vmul.f32 %v8048, 0.044715
        %v8081 = vmul.f32 %v8049, 0.044715
        %v8082 = vmul.f32 %v8050, 0.044715
        %v8083 = vmul.f32 %v8051, 0.044715
        %v8084 = vmul.f32 %v8052, 0.044715
        %v8085 = vmul.f32 %v8053, 0.044715
        %v8086 = vmul.f32 %v8054, 0.044715
        %v8087 = vmul.f32 %v8055, 0.044715
        %v8088 = vmul.f32 %v8056, 0.044715
        %v8089 = vmul.f32 %v8057, 0.044715
        %v8090 = vmul.f32 %v8058, 0.044715
        %v8091 = vmul.f32 %v8059, 0.044715
        %v8092 = vmul.f32 %v8060, 0.044715
        %v8093 = vadd.f32 %v7919, %v8061
        %v8094 = vadd.f32 %v7921, %v8062
        %v8095 = vadd.f32 %v7923, %v8063
        %v8096 = vadd.f32 %v7925, %v8064
        %v8097 = vadd.f32 %v7929, %v8065
        %v8098 = vadd.f32 %v7931, %v8066
        %v8099 = vadd.f32 %v7933, %v8067
        %v8100 = vadd.f32 %v7935, %v8068
        %v8101 = vadd.f32 %v7939, %v8069
        %v8102 = vadd.f32 %v7941, %v8070
        %v8103 = vadd.f32 %v7943, %v8071
        %v8104 = vadd.f32 %v7945, %v8072
        %v8105 = vadd.f32 %v7949, %v8073
        %v8106 = vadd.f32 %v7951, %v8074
        %v8107 = vadd.f32 %v7953, %v8075
        %v8108 = vadd.f32 %v7955, %v8076
        %v8109 = vadd.f32 %v7959, %v8077
        %v8110 = vadd.f32 %v7961, %v8078
        %v8111 = vadd.f32 %v7963, %v8079
        %v8112 = vadd.f32 %v7965, %v8080
        %v8113 = vadd.f32 %v7969, %v8081
        %v8114 = vadd.f32 %v7971, %v8082
        %v8115 = vadd.f32 %v7973, %v8083
        %v8116 = vadd.f32 %v7975, %v8084
        %v8117 = vadd.f32 %v7979, %v8085
        %v8118 = vadd.f32 %v7981, %v8086
        %v8119 = vadd.f32 %v7983, %v8087
        %v8120 = vadd.f32 %v7985, %v8088
        %v8121 = vadd.f32 %v7989, %v8089
        %v8122 = vadd.f32 %v7991, %v8090
        %v8123 = vadd.f32 %v7993, %v8091
        %v8124 = vadd.f32 %v7995, %v8092
        %v8125 = vmul.f32 %v8093, 0.7978846
        %v8126 = vmul.f32 %v8094, 0.7978846
        %v8127 = vmul.f32 %v8095, 0.7978846
        %v8128 = vmul.f32 %v8096, 0.7978846
        %v8129 = vmul.f32 %v8097, 0.7978846
        %v8130 = vmul.f32 %v8098, 0.7978846
        %v8131 = vmul.f32 %v8099, 0.7978846
        %v8132 = vmul.f32 %v8100, 0.7978846
        %v8133 = vmul.f32 %v8101, 0.7978846
        %v8134 = vmul.f32 %v8102, 0.7978846
        %v8135 = vmul.f32 %v8103, 0.7978846
        %v8136 = vmul.f32 %v8104, 0.7978846
        %v8137 = vmul.f32 %v8105, 0.7978846
        %v8138 = vmul.f32 %v8106, 0.7978846
        %v8139 = vmul.f32 %v8107, 0.7978846
        %v8140 = vmul.f32 %v8108, 0.7978846
        %v8141 = vmul.f32 %v8109, 0.7978846
        %v8142 = vmul.f32 %v8110, 0.7978846
        %v8143 = vmul.f32 %v8111, 0.7978846
        %v8144 = vmul.f32 %v8112, 0.7978846
        %v8145 = vmul.f32 %v8113, 0.7978846
        %v8146 = vmul.f32 %v8114, 0.7978846
        %v8147 = vmul.f32 %v8115, 0.7978846
        %v8148 = vmul.f32 %v8116, 0.7978846
        %v8149 = vmul.f32 %v8117, 0.7978846
        %v8150 = vmul.f32 %v8118, 0.7978846
        %v8151 = vmul.f32 %v8119, 0.7978846
        %v8152 = vmul.f32 %v8120, 0.7978846
        %v8153 = vmul.f32 %v8121, 0.7978846
        %v8154 = vmul.f32 %v8122, 0.7978846
        %v8155 = vmul.f32 %v8123, 0.7978846
        %v8156 = vmul.f32 %v8124, 0.7978846
        %v8157 = vtanh.pop %v8125
        %v8158 = vtanh.pop %v8126
        %v8159 = vtanh.pop %v8127
        %v8160 = vtanh.pop %v8128
        %v8161 = vtanh.pop %v8129
        %v8162 = vtanh.pop %v8130
        %v8163 = vtanh.pop %v8131
        %v8164 = vtanh.pop %v8132
        %v8165 = vtanh.pop %v8133
        %v8166 = vtanh.pop %v8134
        %v8167 = vtanh.pop %v8135
        %v8168 = vtanh.pop %v8136
        %v8169 = vtanh.pop %v8137
        %v8170 = vtanh.pop %v8138
        %v8171 = vtanh.pop %v8139
        %v8172 = vtanh.pop %v8140
        %v8173 = vtanh.pop %v8141
        %v8174 = vtanh.pop %v8142
        %v8175 = vtanh.pop %v8143
        %v8176 = vtanh.pop %v8144
        %v8177 = vtanh.pop %v8145
        %v8178 = vtanh.pop %v8146
        %v8179 = vtanh.pop %v8147
        %v8180 = vtanh.pop %v8148
        %v8181 = vtanh.pop %v8149
        %v8182 = vtanh.pop %v8150
        %v8183 = vtanh.pop %v8151
        %v8184 = vtanh.pop %v8152
        %v8185 = vtanh.pop %v8153
        %v8186 = vtanh.pop %v8154
        %v8187 = vtanh.pop %v8155
        %v8188 = vtanh.pop %v8156
        %v8189 = vadd.f32 %v8157, 1.0
        %v8190 = vadd.f32 %v8158, 1.0
        %v8191 = vadd.f32 %v8159, 1.0
        %v8192 = vadd.f32 %v8160, 1.0
        %v8193 = vadd.f32 %v8161, 1.0
        %v8194 = vadd.f32 %v8162, 1.0
        %v8195 = vadd.f32 %v8163, 1.0
        %v8196 = vadd.f32 %v8164, 1.0
        %v8197 = vadd.f32 %v8165, 1.0
        %v8198 = vadd.f32 %v8166, 1.0
        %v8199 = vadd.f32 %v8167, 1.0
        %v8200 = vadd.f32 %v8168, 1.0
        %v8201 = vadd.f32 %v8169, 1.0
        %v8202 = vadd.f32 %v8170, 1.0
        %v8203 = vadd.f32 %v8171, 1.0
        %v8204 = vadd.f32 %v8172, 1.0
        %v8205 = vadd.f32 %v8173, 1.0
        %v8206 = vadd.f32 %v8174, 1.0
        %v8207 = vadd.f32 %v8175, 1.0
        %v8208 = vadd.f32 %v8176, 1.0
        %v8209 = vadd.f32 %v8177, 1.0
        %v8210 = vadd.f32 %v8178, 1.0
        %v8211 = vadd.f32 %v8179, 1.0
        %v8212 = vadd.f32 %v8180, 1.0
        %v8213 = vadd.f32 %v8181, 1.0
        %v8214 = vadd.f32 %v8182, 1.0
        %v8215 = vadd.f32 %v8183, 1.0
        %v8216 = vadd.f32 %v8184, 1.0
        %v8217 = vadd.f32 %v8185, 1.0
        %v8218 = vadd.f32 %v8186, 1.0
        %v8219 = vadd.f32 %v8187, 1.0
        %v8220 = vadd.f32 %v8188, 1.0
        %v8221 = vmul.f32 %v8189, 0.5
        %v8222 = vmul.f32 %v8190, 0.5
        %v8223 = vmul.f32 %v8191, 0.5
        %v8224 = vmul.f32 %v8192, 0.5
        %v8225 = vmul.f32 %v8193, 0.5
        %v8226 = vmul.f32 %v8194, 0.5
        %v8227 = vmul.f32 %v8195, 0.5
        %v8228 = vmul.f32 %v8196, 0.5
        %v8229 = vmul.f32 %v8197, 0.5
        %v8230 = vmul.f32 %v8198, 0.5
        %v8231 = vmul.f32 %v8199, 0.5
        %v8232 = vmul.f32 %v8200, 0.5
        %v8233 = vmul.f32 %v8201, 0.5
        %v8234 = vmul.f32 %v8202, 0.5
        %v8235 = vmul.f32 %v8203, 0.5
        %v8236 = vmul.f32 %v8204, 0.5
        %v8237 = vmul.f32 %v8205, 0.5
        %v8238 = vmul.f32 %v8206, 0.5
        %v8239 = vmul.f32 %v8207, 0.5
        %v8240 = vmul.f32 %v8208, 0.5
        %v8241 = vmul.f32 %v8209, 0.5
        %v8242 = vmul.f32 %v8210, 0.5
        %v8243 = vmul.f32 %v8211, 0.5
        %v8244 = vmul.f32 %v8212, 0.5
        %v8245 = vmul.f32 %v8213, 0.5
        %v8246 = vmul.f32 %v8214, 0.5
        %v8247 = vmul.f32 %v8215, 0.5
        %v8248 = vmul.f32 %v8216, 0.5
        %v8249 = vmul.f32 %v8217, 0.5
        %v8250 = vmul.f32 %v8218, 0.5
        %v8251 = vmul.f32 %v8219, 0.5
        %v8252 = vmul.f32 %v8220, 0.5
        %v8253 = vmul.f32 %v7919, %v8221
        %v8254 = vmul.f32 %v7921, %v8222
        %v8255 = vmul.f32 %v7923, %v8223
        %v8256 = vmul.f32 %v7925, %v8224
        %v8257 = vmul.f32 %v7929, %v8225
        %v8258 = vmul.f32 %v7931, %v8226
        %v8259 = vmul.f32 %v7933, %v8227
        %v8260 = vmul.f32 %v7935, %v8228
        %v8261 = vmul.f32 %v7939, %v8229
        %v8262 = vmul.f32 %v7941, %v8230
        %v8263 = vmul.f32 %v7943, %v8231
        %v8264 = vmul.f32 %v7945, %v8232
        %v8265 = vmul.f32 %v7949, %v8233
        %v8266 = vmul.f32 %v7951, %v8234
        %v8267 = vmul.f32 %v7953, %v8235
        %v8268 = vmul.f32 %v7955, %v8236
        %v8269 = vmul.f32 %v7959, %v8237
        %v8270 = vmul.f32 %v7961, %v8238
        %v8271 = vmul.f32 %v7963, %v8239
        %v8272 = vmul.f32 %v7965, %v8240
        %v8273 = vmul.f32 %v7969, %v8241
        %v8274 = vmul.f32 %v7971, %v8242
        %v8275 = vmul.f32 %v7973, %v8243
        %v8276 = vmul.f32 %v7975, %v8244
        %v8277 = vmul.f32 %v7979, %v8245
        %v8278 = vmul.f32 %v7981, %v8246
        %v8279 = vmul.f32 %v7983, %v8247
        %v8280 = vmul.f32 %v7985, %v8248
        %v8281 = vmul.f32 %v7989, %v8249
        %v8282 = vmul.f32 %v7991, %v8250
        %v8283 = vmul.f32 %v7993, %v8251
        %v8284 = vmul.f32 %v7995, %v8252
        %v8285 = vpack.c.bf16 %v8255, %v8253
        %v8286 = vpack.c.bf16 %v8256, %v8254
        %v8287 = vpack.c.bf16 %v8259, %v8257
        %v8288 = vpack.c.bf16 %v8260, %v8258
        %v8289 = vpack.c.bf16 %v8263, %v8261
        %v8290 = vpack.c.bf16 %v8264, %v8262
        %v8291 = vpack.c.bf16 %v8267, %v8265
        %v8292 = vpack.c.bf16 %v8268, %v8266
        %v8293 = vpack.c.bf16 %v8271, %v8269
        %v8294 = vpack.c.bf16 %v8272, %v8270
        %v8295 = vpack.c.bf16 %v8275, %v8273
        %v8296 = vpack.c.bf16 %v8276, %v8274
        %v8297 = vpack.c.bf16 %v8279, %v8277
        %v8298 = vpack.c.bf16 %v8280, %v8278
        %v8299 = vpack.c.bf16 %v8283, %v8281
        %v8300 = vpack.c.bf16 %v8284, %v8282
        %s8301 = scalar_lea.vmem %s13, 128
        %v8302 = vld [vmem:[%s8301] sm:$0xf]
        %v8303 = vld [vmem:[%s8301 + $0x4] sm:$0xf]
        %v8304 = vld [vmem:[%s8301 + $0x8] sm:$0xf]
        %v8305 = vld [vmem:[%s8301 + $0xc] sm:$0xf]
        %v8306 = vld [vmem:[%s8301 + $0x10] sm:$0xf]
        %v8307 = vld [vmem:[%s8301 + $0x14] sm:$0xf]
        %v8308 = vld [vmem:[%s8301 + $0x18] sm:$0xf]
        %v8309 = vld [vmem:[%s8301 + $0x1c] sm:$0xf]
        %v8310 = vld [vmem:[%s8301 + $0x20] sm:$0xf]
        %v8311 = vld [vmem:[%s8301 + $0x24] sm:$0xf]
        %v8312 = vld [vmem:[%s8301 + $0x28] sm:$0xf]
        %v8313 = vld [vmem:[%s8301 + $0x2c] sm:$0xf]
        %v8314 = vld [vmem:[%s8301 + $0x30] sm:$0xf]
        %v8315 = vld [vmem:[%s8301 + $0x34] sm:$0xf]
        %v8316 = vld [vmem:[%s8301 + $0x38] sm:$0xf]
        %v8317 = vld [vmem:[%s8301 + $0x3c] sm:$0xf]
        %v8318 = vld [vmem:[%s8301 + $0x40] sm:$0xf]
        %v8319 = vld [vmem:[%s8301 + $0x44] sm:$0xf]
        %v8320 = vld [vmem:[%s8301 + $0x48] sm:$0xf]
        %v8321 = vld [vmem:[%s8301 + $0x4c] sm:$0xf]
        %v8322 = vld [vmem:[%s8301 + $0x50] sm:$0xf]
        %v8323 = vld [vmem:[%s8301 + $0x54] sm:$0xf]
        %v8324 = vld [vmem:[%s8301 + $0x58] sm:$0xf]
        %v8325 = vld [vmem:[%s8301 + $0x5c] sm:$0xf]
        %v8326 = vld [vmem:[%s8301 + $0x60] sm:$0xf]
        %v8327 = vld [vmem:[%s8301 + $0x64] sm:$0xf]
        %v8328 = vld [vmem:[%s8301 + $0x68] sm:$0xf]
        %v8329 = vld [vmem:[%s8301 + $0x6c] sm:$0xf]
        %v8330 = vld [vmem:[%s8301 + $0x70] sm:$0xf]
        %v8331 = vld [vmem:[%s8301 + $0x74] sm:$0xf]
        %v8332 = vld [vmem:[%s8301 + $0x78] sm:$0xf]
        %v8333 = vld [vmem:[%s8301 + $0x7c] sm:$0xf]
        %s8334 = scalar_lea.vmem %s14, 1
        %v8335 = vld [vmem:[%s8334] sm:$0x1]
        %v8337 = vlaneseq
        %v8338 = vshrl.u32 %v8337, 7
        %v8339 = vsub.s32 0, %v8338
        %v8340 = vrot.slane %v8335, %v8339
        %v8374 = vunpack.c.l.b16 %v8302
        %v8375 = vunpack.c.l.b16 %v8303
        %v8376 = vunpack.c.l.b16 %v8304
        %v8377 = vunpack.c.l.b16 %v8305
        %v8378 = vunpack.c.l.b16 %v8306
        %v8379 = vunpack.c.l.b16 %v8307
        %v8380 = vunpack.c.l.b16 %v8308
        %v8381 = vunpack.c.l.b16 %v8309
        %v8382 = vunpack.c.l.b16 %v8310
        %v8383 = vunpack.c.l.b16 %v8311
        %v8384 = vunpack.c.l.b16 %v8312
        %v8385 = vunpack.c.l.b16 %v8313
        %v8386 = vunpack.c.l.b16 %v8314
        %v8387 = vunpack.c.l.b16 %v8315
        %v8388 = vunpack.c.l.b16 %v8316
        %v8389 = vunpack.c.l.b16 %v8317
        %v8390 = vunpack.c.l.b16 %v8318
        %v8391 = vunpack.c.l.b16 %v8319
        %v8392 = vunpack.c.l.b16 %v8320
        %v8393 = vunpack.c.l.b16 %v8321
        %v8394 = vunpack.c.l.b16 %v8322
        %v8395 = vunpack.c.l.b16 %v8323
        %v8396 = vunpack.c.l.b16 %v8324
        %v8397 = vunpack.c.l.b16 %v8325
        %v8398 = vunpack.c.l.b16 %v8326
        %v8399 = vunpack.c.l.b16 %v8327
        %v8400 = vunpack.c.l.b16 %v8328
        %v8401 = vunpack.c.l.b16 %v8329
        %v8402 = vunpack.c.l.b16 %v8330
        %v8403 = vunpack.c.l.b16 %v8331
        %v8404 = vunpack.c.l.b16 %v8332
        %v8405 = vunpack.c.l.b16 %v8333
        %v8406 = vpack.c.b16 %v8375, %v8374
        %v8407 = vpack.c.b16 %v8377, %v8376
        %v8408 = vpack.c.b16 %v8379, %v8378
        %v8409 = vpack.c.b16 %v8381, %v8380
        %v8410 = vpack.c.b16 %v8383, %v8382
        %v8411 = vpack.c.b16 %v8385, %v8384
        %v8412 = vpack.c.b16 %v8387, %v8386
        %v8413 = vpack.c.b16 %v8389, %v8388
        %v8414 = vpack.c.b16 %v8391, %v8390
        %v8415 = vpack.c.b16 %v8393, %v8392
        %v8416 = vpack.c.b16 %v8395, %v8394
        %v8417 = vpack.c.b16 %v8397, %v8396
        %v8418 = vpack.c.b16 %v8399, %v8398
        %v8419 = vpack.c.b16 %v8401, %v8400
        %v8420 = vpack.c.b16 %v8403, %v8402
        %v8421 = vpack.c.b16 %v8405, %v8404
        %8438 = vmatprep.subr.bf16.mxu0 0
        %8439 = vmatpush1.bf16.msra.mxu0 %v8406
        %8440 = vmatprep.subr.bf16.mxu0 0
        %8441 = vmatpush1.bf16.msra.mxu0 %v8407
        %8442 = vmatprep.subr.bf16.mxu0 0
        %8443 = vmatpush1.bf16.msra.mxu0 %v8408
        %8444 = vmatprep.subr.bf16.mxu0 0
        %8445 = vmatpush1.bf16.msra.mxu0 %v8409
        %8446 = vmatprep.subr.bf16.mxu0 0
        %8447 = vmatpush1.bf16.msra.mxu0 %v8410
        %8448 = vmatprep.subr.bf16.mxu0 0
        %8449 = vmatpush1.bf16.msra.mxu0 %v8411
        %8450 = vmatprep.subr.bf16.mxu0 0
        %8451 = vmatpush1.bf16.msra.mxu0 %v8412
        %8452 = vmatprep.subr.bf16.mxu0 0
        %8453 = vmatpush1.bf16.msra.mxu0 %v8413
        %8454 = vmatprep.subr.bf16.mxu0 0
        %8455 = vmatpush1.bf16.msra.mxu0 %v8414
        %8456 = vmatprep.subr.bf16.mxu0 0
        %8457 = vmatpush1.bf16.msra.mxu0 %v8415
        %8458 = vmatprep.subr.bf16.mxu0 0
        %8459 = vmatpush1.bf16.msra.mxu0 %v8416
        %8460 = vmatprep.subr.bf16.mxu0 0
        %8461 = vmatpush1.bf16.msra.mxu0 %v8417
        %8462 = vmatprep.subr.bf16.mxu0 0
        %8463 = vmatpush1.bf16.msra.mxu0 %v8418
        %8464 = vmatprep.subr.bf16.mxu0 0
        %8465 = vmatpush1.bf16.msra.mxu0 %v8419
        %8466 = vmatprep.subr.bf16.mxu0 0
        %8467 = vmatpush1.bf16.msra.mxu0 %v8420
        %8468 = vmatprep.subr.bf16.mxu0 0
        %8469 = vmatpush1.bf16.msra.mxu0 %v8421
        %8470 = vmatprep.mubr.bf16.mxu0 %v8286
        %8471 = vmatmul.mubr.bf16.gmra.mrb[0].mxu0 %v8285
        %v8472 = vpop.f32.mrb[0].mxu0
        %v8473 = vadd.f32 %v8340, %v8472
        %v8474 = vpop.f32.mrb[0].mxu0
        %v8475 = vpop.f32.mrb[0].mxu0
        %v8476 = vadd.f32 %v8340, %v8475
        %v8477 = vpop.f32.mrb[0].mxu0
        %8478 = vmatprep.mubr.bf16.mxu0 %v8288
        %8479 = vmatmul.mubr.bf16.gmra.mrb[0].mxu0 %v8287
        %v8480 = vpop.f32.mrb[0].mxu0
        %v8481 = vadd.f32 %v8340, %v8480
        %v8482 = vpop.f32.mrb[0].mxu0
        %v8483 = vpop.f32.mrb[0].mxu0
        %v8484 = vadd.f32 %v8340, %v8483
        %v8485 = vpop.f32.mrb[0].mxu0
        %8486 = vmatprep.mubr.bf16.mxu0 %v8290
        %8487 = vmatmul.mubr.bf16.gmra.mrb[0].mxu0 %v8289
        %v8488 = vpop.f32.mrb[0].mxu0
        %v8489 = vadd.f32 %v8340, %v8488
        %v8490 = vpop.f32.mrb[0].mxu0
        %v8491 = vpop.f32.mrb[0].mxu0
        %v8492 = vadd.f32 %v8340, %v8491
        %v8493 = vpop.f32.mrb[0].mxu0
        %8494 = vmatprep.mubr.bf16.mxu0 %v8292
        %8495 = vmatmul.mubr.bf16.gmra.mrb[0].mxu0 %v8291
        %v8496 = vpop.f32.mrb[0].mxu0
        %v8497 = vadd.f32 %v8340, %v8496
        %v8498 = vpop.f32.mrb[0].mxu0
        %v8499 = vpop.f32.mrb[0].mxu0
        %v8500 = vadd.f32 %v8340, %v8499
        %v8501 = vpop.f32.mrb[0].mxu0
        %8502 = vmatprep.mubr.bf16.mxu0 %v8294
        %8503 = vmatmul.mubr.bf16.gmra.mrb[0].mxu0 %v8293
        %v8504 = vpop.f32.mrb[0].mxu0
        %v8505 = vadd.f32 %v8340, %v8504
        %v8506 = vpop.f32.mrb[0].mxu0
        %v8507 = vpop.f32.mrb[0].mxu0
        %v8508 = vadd.f32 %v8340, %v8507
        %v8509 = vpop.f32.mrb[0].mxu0
        %8510 = vmatprep.mubr.bf16.mxu0 %v8296
        %8511 = vmatmul.mubr.bf16.gmra.mrb[0].mxu0 %v8295
        %v8512 = vpop.f32.mrb[0].mxu0
        %v8513 = vadd.f32 %v8340, %v8512
        %v8514 = vpop.f32.mrb[0].mxu0
        %v8515 = vpop.f32.mrb[0].mxu0
        %v8516 = vadd.f32 %v8340, %v8515
        %v8517 = vpop.f32.mrb[0].mxu0
        %8518 = vmatprep.mubr.bf16.mxu0 %v8298
        %8519 = vmatmul.mubr.bf16.gmra.mrb[0].mxu0 %v8297
        %v8520 = vpop.f32.mrb[0].mxu0
        %v8521 = vadd.f32 %v8340, %v8520
        %v8522 = vpop.f32.mrb[0].mxu0
        %v8523 = vpop.f32.mrb[0].mxu0
        %v8524 = vadd.f32 %v8340, %v8523
        %v8525 = vpop.f32.mrb[0].mxu0
        %8526 = vmatprep.mubr.bf16.mxu0 %v8300
        %8527 = vmatmul.mubr.bf16.gmra.mrb[0].mxu0 %v8299
        %v8528 = vpop.f32.mrb[0].mxu0
        %v8529 = vadd.f32 %v8340, %v8528
        %v8530 = vpop.f32.mrb[0].mxu0
        %v8531 = vpop.f32.mrb[0].mxu0
        %v8532 = vadd.f32 %v8340, %v8531
        %v8533 = vpop.f32.mrb[0].mxu0
        %8534 = vdwg.mxu0
        %v8535 = vadd.f32 %v7518, %v8473
        %v8536 = vadd.f32 %v7519, %v8476
        %v8537 = vadd.f32 %v7520, %v8481
        %v8538 = vadd.f32 %v7521, %v8484
        %v8539 = vadd.f32 %v7522, %v8489
        %v8540 = vadd.f32 %v7523, %v8492
        %v8541 = vadd.f32 %v7524, %v8497
        %v8542 = vadd.f32 %v7525, %v8500
        %v8543 = vadd.f32 %v7526, %v8505
        %v8544 = vadd.f32 %v7527, %v8508
        %v8545 = vadd.f32 %v7528, %v8513
        %v8546 = vadd.f32 %v7529, %v8516
        %v8547 = vadd.f32 %v7530, %v8521
        %v8548 = vadd.f32 %v7531, %v8524
        %v8549 = vadd.f32 %v7532, %v8529
        %v8550 = vadd.f32 %v7533, %v8532
        %v8551 = vld [vmem:[%s15] sm:$0x1]
        %v8552 = vld [vmem:[%s16] sm:$0x1]
        %v8553 = vsel %vm754, %v8535, 0.0
        %8554 = vadd.xlane.f32.xlu0 %v8553
        %v8555 = vpop.xlane.xlu0 %8554
        %v8556 = vsel %vm754, %v8536, 0.0
        %8557 = vadd.xlane.f32.xlu0 %v8556
        %v8558 = vpop.xlane.xlu0 %8557
        %v8559 = vsel %vm754, %v8537, 0.0
        %8560 = vadd.xlane.f32.xlu0 %v8559
        %v8561 = vpop.xlane.xlu0 %8560
        %v8562 = vsel %vm754, %v8538, 0.0
        %8563 = vadd.xlane.f32.xlu0 %v8562
        %v8564 = vpop.xlane.xlu0 %8563
        %v8565 = vsel %vm754, %v8539, 0.0
        %8566 = vadd.xlane.f32.xlu0 %v8565
        %v8567 = vpop.xlane.xlu0 %8566
        %v8568 = vsel %vm754, %v8540, 0.0
        %8569 = vadd.xlane.f32.xlu0 %v8568
        %v8570 = vpop.xlane.xlu0 %8569
        %v8571 = vsel %vm754, %v8541, 0.0
        %8572 = vadd.xlane.f32.xlu0 %v8571
        %v8573 = vpop.xlane.xlu0 %8572
        %v8574 = vsel %vm754, %v8542, 0.0
        %8575 = vadd.xlane.f32.xlu0 %v8574
        %v8576 = vpop.xlane.xlu0 %8575
        %v8577 = vsel %vm754, %v8543, 0.0
        %8578 = vadd.xlane.f32.xlu0 %v8577
        %v8579 = vpop.xlane.xlu0 %8578
        %v8580 = vsel %vm754, %v8544, 0.0
        %8581 = vadd.xlane.f32.xlu0 %v8580
        %v8582 = vpop.xlane.xlu0 %8581
        %v8583 = vsel %vm754, %v8545, 0.0
        %8584 = vadd.xlane.f32.xlu0 %v8583
        %v8585 = vpop.xlane.xlu0 %8584
        %v8586 = vsel %vm754, %v8546, 0.0
        %8587 = vadd.xlane.f32.xlu0 %v8586
        %v8588 = vpop.xlane.xlu0 %8587
        %v8589 = vsel %vm754, %v8547, 0.0
        %8590 = vadd.xlane.f32.xlu0 %v8589
        %v8591 = vpop.xlane.xlu0 %8590
        %v8592 = vsel %vm754, %v8548, 0.0
        %8593 = vadd.xlane.f32.xlu0 %v8592
        %v8594 = vpop.xlane.xlu0 %8593
        %v8595 = vsel %vm754, %v8549, 0.0
        %8596 = vadd.xlane.f32.xlu0 %v8595
        %v8597 = vpop.xlane.xlu0 %8596
        %v8598 = vsel %vm754, %v8550, 0.0
        %8599 = vadd.xlane.f32.xlu0 %v8598
        %v8600 = vpop.xlane.xlu0 %8599
        %v8601 = vmul.f32 %v8555, %v1181
        %v8602 = vmul.f32 %v8558, %v1181
        %v8603 = vmul.f32 %v8561, %v1181
        %v8604 = vmul.f32 %v8564, %v1181
        %v8605 = vmul.f32 %v8567, %v1181
        %v8606 = vmul.f32 %v8570, %v1181
        %v8607 = vmul.f32 %v8573, %v1181
        %v8608 = vmul.f32 %v8576, %v1181
        %v8609 = vmul.f32 %v8579, %v1181
        %v8610 = vmul.f32 %v8582, %v1181
        %v8611 = vmul.f32 %v8585, %v1181
        %v8612 = vmul.f32 %v8588, %v1181
        %v8613 = vmul.f32 %v8591, %v1181
        %v8614 = vmul.f32 %v8594, %v1181
        %v8615 = vmul.f32 %v8597, %v1181
        %v8616 = vmul.f32 %v8600, %v1181
        %v8617 = vsub.f32 %v8535, %v8601
        %v8618 = vsub.f32 %v8536, %v8602
        %v8619 = vsub.f32 %v8537, %v8603
        %v8620 = vsub.f32 %v8538, %v8604
        %v8621 = vsub.f32 %v8539, %v8605
        %v8622 = vsub.f32 %v8540, %v8606
        %v8623 = vsub.f32 %v8541, %v8607
        %v8624 = vsub.f32 %v8542, %v8608
        %v8625 = vsub.f32 %v8543, %v8609
        %v8626 = vsub.f32 %v8544, %v8610
        %v8627 = vsub.f32 %v8545, %v8611
        %v8628 = vsub.f32 %v8546, %v8612
        %v8629 = vsub.f32 %v8547, %v8613
        %v8630 = vsub.f32 %v8548, %v8614
        %v8631 = vsub.f32 %v8549, %v8615
        %v8632 = vsub.f32 %v8550, %v8616
        %v8633 = vmul.f32 %v8617, %v8617
        %v8634 = vmul.f32 %v8618, %v8618
        %v8635 = vmul.f32 %v8619, %v8619
        %v8636 = vmul.f32 %v8620, %v8620
        %v8637 = vmul.f32 %v8621, %v8621
        %v8638 = vmul.f32 %v8622, %v8622
        %v8639 = vmul.f32 %v8623, %v8623
        %v8640 = vmul.f32 %v8624, %v8624
        %v8641 = vmul.f32 %v8625, %v8625
        %v8642 = vmul.f32 %v8626, %v8626
        %v8643 = vmul.f32 %v8627, %v8627
        %v8644 = vmul.f32 %v8628, %v8628
        %v8645 = vmul.f32 %v8629, %v8629
        %v8646 = vmul.f32 %v8630, %v8630
        %v8647 = vmul.f32 %v8631, %v8631
        %v8648 = vmul.f32 %v8632, %v8632
        %v8649 = vsel %vm754, %v8633, 0.0
        %8650 = vadd.xlane.f32.xlu0 %v8649
        %v8651 = vpop.xlane.xlu0 %8650
        %v8652 = vsel %vm754, %v8634, 0.0
        %8653 = vadd.xlane.f32.xlu0 %v8652
        %v8654 = vpop.xlane.xlu0 %8653
        %v8655 = vsel %vm754, %v8635, 0.0
        %8656 = vadd.xlane.f32.xlu0 %v8655
        %v8657 = vpop.xlane.xlu0 %8656
        %v8658 = vsel %vm754, %v8636, 0.0
        %8659 = vadd.xlane.f32.xlu0 %v8658
        %v8660 = vpop.xlane.xlu0 %8659
        %v8661 = vsel %vm754, %v8637, 0.0
        %8662 = vadd.xlane.f32.xlu0 %v8661
        %v8663 = vpop.xlane.xlu0 %8662
        %v8664 = vsel %vm754, %v8638, 0.0
        %8665 = vadd.xlane.f32.xlu0 %v8664
        %v8666 = vpop.xlane.xlu0 %8665
        %v8667 = vsel %vm754, %v8639, 0.0
        %8668 = vadd.xlane.f32.xlu0 %v8667
        %v8669 = vpop.xlane.xlu0 %8668
        %v8670 = vsel %vm754, %v8640, 0.0
        %8671 = vadd.xlane.f32.xlu0 %v8670
        %v8672 = vpop.xlane.xlu0 %8671
        %v8673 = vsel %vm754, %v8641, 0.0
        %8674 = vadd.xlane.f32.xlu0 %v8673
        %v8675 = vpop.xlane.xlu0 %8674
        %v8676 = vsel %vm754, %v8642, 0.0
        %8677 = vadd.xlane.f32.xlu0 %v8676
        %v8678 = vpop.xlane.xlu0 %8677
        %v8679 = vsel %vm754, %v8643, 0.0
        %8680 = vadd.xlane.f32.xlu0 %v8679
        %v8681 = vpop.xlane.xlu0 %8680
        %v8682 = vsel %vm754, %v8644, 0.0
        %8683 = vadd.xlane.f32.xlu0 %v8682
        %v8684 = vpop.xlane.xlu0 %8683
        %v8685 = vsel %vm754, %v8645, 0.0
        %8686 = vadd.xlane.f32.xlu0 %v8685
        %v8687 = vpop.xlane.xlu0 %8686
        %v8688 = vsel %vm754, %v8646, 0.0
        %8689 = vadd.xlane.f32.xlu0 %v8688
        %v8690 = vpop.xlane.xlu0 %8689
        %v8691 = vsel %vm754, %v8647, 0.0
        %8692 = vadd.xlane.f32.xlu0 %v8691
        %v8693 = vpop.xlane.xlu0 %8692
        %v8694 = vsel %vm754, %v8648, 0.0
        %8695 = vadd.xlane.f32.xlu0 %v8694
        %v8696 = vpop.xlane.xlu0 %8695
        %v8697 = vmul.f32 %v8651, %v1181
        %v8698 = vmul.f32 %v8654, %v1181
        %v8699 = vmul.f32 %v8657, %v1181
        %v8700 = vmul.f32 %v8660, %v1181
        %v8701 = vmul.f32 %v8663, %v1181
        %v8702 = vmul.f32 %v8666, %v1181
        %v8703 = vmul.f32 %v8669, %v1181
        %v8704 = vmul.f32 %v8672, %v1181
        %v8705 = vmul.f32 %v8675, %v1181
        %v8706 = vmul.f32 %v8678, %v1181
        %v8707 = vmul.f32 %v8681, %v1181
        %v8708 = vmul.f32 %v8684, %v1181
        %v8709 = vmul.f32 %v8687, %v1181
        %v8710 = vmul.f32 %v8690, %v1181
        %v8711 = vmul.f32 %v8693, %v1181
        %v8712 = vmul.f32 %v8696, %v1181
        %v8713 = vadd.f32 %v8697, 1e-06
        %v8714 = vadd.f32 %v8698, 1e-06
        %v8715 = vadd.f32 %v8699, 1e-06
        %v8716 = vadd.f32 %v8700, 1e-06
        %v8717 = vadd.f32 %v8701, 1e-06
        %v8718 = vadd.f32 %v8702, 1e-06
        %v8719 = vadd.f32 %v8703, 1e-06
        %v8720 = vadd.f32 %v8704, 1e-06
        %v8721 = vadd.f32 %v8705, 1e-06
        %v8722 = vadd.f32 %v8706, 1e-06
        %v8723 = vadd.f32 %v8707, 1e-06
        %v8724 = vadd.f32 %v8708, 1e-06
        %v8725 = vadd.f32 %v8709, 1e-06
        %v8726 = vadd.f32 %v8710, 1e-06
        %v8727 = vadd.f32 %v8711, 1e-06
        %v8728 = vadd.f32 %v8712, 1e-06
        %v8729 = vrsqrt.pop %v8713
        %v8730 = vrsqrt.pop %v8714
        %v8731 = vrsqrt.pop %v8715
        %v8732 = vrsqrt.pop %v8716
        %v8733 = vrsqrt.pop %v8717
        %v8734 = vrsqrt.pop %v8718
        %v8735 = vrsqrt.pop %v8719
        %v8736 = vrsqrt.pop %v8720
        %v8737 = vrsqrt.pop %v8721
        %v8738 = vrsqrt.pop %v8722
        %v8739 = vrsqrt.pop %v8723
        %v8740 = vrsqrt.pop %v8724
        %v8741 = vrsqrt.pop %v8725
        %v8742 = vrsqrt.pop %v8726
        %v8743 = vrsqrt.pop %v8727
        %v8744 = vrsqrt.pop %v8728
        %v8745 = vmul.f32 %v8617, %v8729
        %v8746 = vmul.f32 %v8618, %v8730
        %v8747 = vmul.f32 %v8619, %v8731
        %v8748 = vmul.f32 %v8620, %v8732
        %v8749 = vmul.f32 %v8621, %v8733
        %v8750 = vmul.f32 %v8622, %v8734
        %v8751 = vmul.f32 %v8623, %v8735
        %v8752 = vmul.f32 %v8624, %v8736
        %v8753 = vmul.f32 %v8625, %v8737
        %v8754 = vmul.f32 %v8626, %v8738
        %v8755 = vmul.f32 %v8627, %v8739
        %v8756 = vmul.f32 %v8628, %v8740
        %v8757 = vmul.f32 %v8629, %v8741
        %v8758 = vmul.f32 %v8630, %v8742
        %v8759 = vmul.f32 %v8631, %v8743
        %v8760 = vmul.f32 %v8632, %v8744
        %v8762 = vlaneseq
        %v8763 = vshrl.u32 %v8762, 7
        %v8764 = vsub.s32 0, %v8763
        %v8765 = vrot.slane %v8551, %v8764
        %v8767 = vmul.f32 %v8745, %v8765
        %v8768 = vmul.f32 %v8746, %v8765
        %v8769 = vmul.f32 %v8747, %v8765
        %v8770 = vmul.f32 %v8748, %v8765
        %v8771 = vmul.f32 %v8749, %v8765
        %v8772 = vmul.f32 %v8750, %v8765
        %v8773 = vmul.f32 %v8751, %v8765
        %v8774 = vmul.f32 %v8752, %v8765
        %v8775 = vmul.f32 %v8753, %v8765
        %v8776 = vmul.f32 %v8754, %v8765
        %v8777 = vmul.f32 %v8755, %v8765
        %v8778 = vmul.f32 %v8756, %v8765
        %v8779 = vmul.f32 %v8757, %v8765
        %v8780 = vmul.f32 %v8758, %v8765
        %v8781 = vmul.f32 %v8759, %v8765
        %v8782 = vmul.f32 %v8760, %v8765
        %v8784 = vlaneseq
        %v8785 = vshrl.u32 %v8784, 7
        %v8786 = vsub.s32 0, %v8785
        %v8787 = vrot.slane %v8552, %v8786
        %v8789 = vadd.f32 %v8767, %v8787
        %v8790 = vadd.f32 %v8768, %v8787
        %v8791 = vadd.f32 %v8769, %v8787
        %v8792 = vadd.f32 %v8770, %v8787
        %v8793 = vadd.f32 %v8771, %v8787
        %v8794 = vadd.f32 %v8772, %v8787
        %v8795 = vadd.f32 %v8773, %v8787
        %v8796 = vadd.f32 %v8774, %v8787
        %v8797 = vadd.f32 %v8775, %v8787
        %v8798 = vadd.f32 %v8776, %v8787
        %v8799 = vadd.f32 %v8777, %v8787
        %v8800 = vadd.f32 %v8778, %v8787
        %v8801 = vadd.f32 %v8779, %v8787
        %v8802 = vadd.f32 %v8780, %v8787
        %v8803 = vadd.f32 %v8781, %v8787
        %v8804 = vadd.f32 %v8782, %v8787
        %8809 = vrot.lane.b32.xlu0 %v8793, 64
        %v8810 = vpop.permute.xlu0 %8809
        %8811 = vrot.lane.b32.xlu0 %v8794, 64
        %v8812 = vpop.permute.xlu0 %8811
        %8813 = vrot.lane.b32.xlu0 %v8795, 64
        %v8814 = vpop.permute.xlu0 %8813
        %8815 = vrot.lane.b32.xlu0 %v8796, 64
        %v8816 = vpop.permute.xlu0 %8815
        %8825 = vrot.lane.b32.xlu0 %v8801, 64
        %v8826 = vpop.permute.xlu0 %8825
        %8827 = vrot.lane.b32.xlu0 %v8802, 64
        %v8828 = vpop.permute.xlu0 %8827
        %8829 = vrot.lane.b32.xlu0 %v8803, 64
        %v8830 = vpop.permute.xlu0 %8829
        %8831 = vrot.lane.b32.xlu0 %v8804, 64
        %v8832 = vpop.permute.xlu0 %8831
        %v8837 = vsel %vm754, %v8789, %v8810
        %v8838 = vsel %vm754, %v8790, %v8812
        %v8839 = vsel %vm754, %v8791, %v8814
        %v8840 = vsel %vm754, %v8792, %v8816
        %v8841 = vsel %vm754, %v8797, %v8826
        %v8842 = vsel %vm754, %v8798, %v8828
        %v8843 = vsel %vm754, %v8799, %v8830
        %v8844 = vsel %vm754, %v8800, %v8832
        %8845 = vst [vmem:[%s544] sm:$0xff] %v8837
        %8846 = vst [vmem:[%s544 + $0x8] sm:$0xff] %v8841
        %8847 = vst [vmem:[%s544 + $0x10] sm:$0xff] %v8838
        %8848 = vst [vmem:[%s544 + $0x18] sm:$0xff] %v8842
        %8849 = vst [vmem:[%s544 + $0x20] sm:$0xff] %v8839
        %8850 = vst [vmem:[%s544 + $0x28] sm:$0xff] %v8843
        %8851 = vst [vmem:[%s544 + $0x30] sm:$0xff] %v8840
        %8852 = vst [vmem:[%s544 + $0x38] sm:$0xff] %v8844
        %s8853 = sand.u32 %s401, 1
        %s8854 = scalar_lea.sflag [#allocation3], %s8853
        %s8855 = sand.u32 %s401, 1
        %s8856 = smul.addr %s8855, 64
        %s8857 = scalar_lea.vmem [#allocation2], %s8856
        // Predicated region
        $region89: #{tpu_custom_call.1} parent=87 // pred_check
          %p8858 = pneg %p411
        $region90: #{tpu_custom_call.1} parent=87 // pred_check_branch
          %8860 = sbr.rel (%p8858) target = $region92
        $region91: #{tpu_custom_call.1} parent=87 // pred_region
          %s8861 = smul.u32 4, %s31
          %s8863 = ssub.s32 1024, 1024
          %8864 = vsyncadd %s8854, %s8863
          %s8865 = smul.addr %s8861, 2
          %s8866 = smul.addr %s8865, 128
          %s8867 = scalar_lea.hbm %s17, %s8866
          %s8868 = sshll.u32 %s8857, 4
          %s8869 = int_to_ptr.vmem [resolvable:$true] %s8868
          %8874 = dma.vmem_to_hbm [thread:$0]  %s8869, 1024, %s8867, %s8854, 256, 256, 16
        $region92: #{tpu_custom_call.1} parent=87 // pred_fallthru
          _
      $region88: #{tpu_custom_call.1} parent=5 // pred_fallthru
        _
      %p8875 = scmp.le.s32.totalorder 2, %s26
      // Predicated region
      $region93: #{tpu_custom_call.1} parent=5 // pred_check
        %p8876 = pneg %p8875
      $region94: #{tpu_custom_call.1} parent=5 // pred_check_branch
        %8878 = sbr.rel (%p8876) target = $region96
      $region95: #{tpu_custom_call.1} parent=5 // pred_region
        %s8879 = ssub.s32 %s26, 2
        // Predicated region
        $region97: #{tpu_custom_call.1} parent=95 // pred_check
          %p8880 = pneg %p417
        $region98: #{tpu_custom_call.1} parent=95 // pred_check_branch
          %8882 = sbr.rel (%p8880) target = $region100
        $region99: #{tpu_custom_call.1} parent=95 // pred_region
          %s8883 = sand.u32 %s402, 1
          %s8884 = scalar_lea.sflag [#allocation3], %s8883
          %s8885 = sand.u32 %s402, 1
          %s8886 = smul.addr %s8885, 64
          %s8887 = scalar_lea.vmem [#allocation2], %s8886
          %8888 = dma.done %s8884, 1024
        $region100: #{tpu_custom_call.1} parent=95 // pred_fallthru
          _
      $region96: #{tpu_custom_call.1} parent=5 // pred_fallthru
        _
    $region6: #{tpu_custom_call.1} parent=1 // loop_footer
      %s30 = sadd.s32 1, %s26
    $region7: #{tpu_custom_call.1} parent=1 // loop_footer_branch
      %25 = sbr.rel target = $region3
    $region8: #{tpu_custom_call.1} parent=1 // loop_exit
      _
    %8889 = vsyncpa [#allocation3], 1
    %s8890 = scalar_lea.sflag [#allocation3], 1
    %8891 = vsyncpa %s8890, 1

</llo_original>
